<compile_context>
chip_gen: v7x
topology: tpu7x:2x2x1
jax: 0.10.0
libtpu: 0.0.40
codegen_flags: <defaults>
</compile_context>

<pallas_src>
import jax
import jax.numpy as jnp
from jax.experimental import pallas as pl
from jax.experimental.pallas import tpu as pltpu


# ---------------------------------------------------------------------------
# Fused kernel: conv1 + relu + conv2 + relu + pool(matmul) + flatten + fc
# ---------------------------------------------------------------------------
def _fused_decoder_kernel(x_ref, w1_ref, b1_ref, w2_ref, b2_ref,
                          pool_ref, wfc_ref, bfc_ref,
                          o_ref, xp_ref, h1p_ref):
    # x_ref   : (B, S, M, C)          input, NHWC
    # w1_ref  : (9*C,  C1)            conv1 weight, im2col layout (tap-major, cin-minor)
    # b1_ref  : (1, C1)
    # w2_ref  : (9*C1, C2)            conv2 weight, im2col layout
    # b2_ref  : (1, C2)
    # pool_ref: (B*P, B*S*M)          block-diagonal adaptive-avg-pool matrix
    # wfc_ref : (num_cls, P, C2)      FC weight reordered to (pooled-pos, channel)
    # bfc_ref : (1, num_cls)
    # o_ref   : (B, num_cls)
    # xp_ref  : (B, S+2, M+2, C)      VMEM scratch: zero-padded input
    # h1p_ref : (B, S+2, M+2, C1)     VMEM scratch: zero-padded conv1 output
    B, S, M, C = x_ref.shape
    C1 = w1_ref.shape[1]
    C2 = w2_ref.shape[1]
    K = o_ref.shape[1]
    P = wfc_ref.shape[1]
    R = B * S * M

    # ---- conv1: in-kernel zero pad + im2col + one MXU matmul + bias + relu ----
    xp_ref[...] = jnp.zeros_like(xp_ref)
    xp_ref[:, 1:S + 1, 1:M + 1, :] = x_ref[...]

    taps = []
    for dh in range(3):
        for dw in range(3):
            win = xp_ref[:, dh:dh + S, dw:dw + M, :]            # (B, S, M, C)
            taps.append(win.reshape(R, C))                      # leading-dim merge only
    patch1 = jnp.concatenate(taps, axis=1)                      # (R, 9*C)
    h1 = jnp.dot(patch1, w1_ref[...], preferred_element_type=jnp.float32)
    h1 = jnp.maximum(h1 + b1_ref[...], 0.0)                     # (R, C1)

    # ---- conv2: same scheme, K = 9*C1 ----
    h1p_ref[...] = jnp.zeros_like(h1p_ref)
    h1p_ref[:, 1:S + 1, 1:M + 1, :] = h1.reshape(B, S, M, C1)   # leading-dim split only

    taps = []
    for dh in range(3):
        for dw in range(3):
            win = h1p_ref[:, dh:dh + S, dw:dw + M, :]           # (B, S, M, C1)
            taps.append(win.reshape(R, C1))
    patch2 = jnp.concatenate(taps, axis=1)                      # (R, 9*C1)
    h2 = jnp.dot(patch2, w2_ref[...], preferred_element_type=jnp.float32)
    h2 = jnp.maximum(h2 + b2_ref[...], 0.0)                     # (R, C2)

    # ---- adaptive avg pool: one MXU matmul with a block-diagonal pool matrix ----
    pooled = jnp.dot(pool_ref[...], h2,
                     preferred_element_type=jnp.float32)        # (B*P, C2)
    pooled3 = pooled.reshape(B, P, C2)                          # leading-dim split only

    # ---- flatten + fc (torch NCHW flatten order baked into wfc at prep time) ----
    # out[b, k] = sum_{p, c} pooled3[b, p, c] * wfc[k, p, c] + bfc[k]
    cols = []
    for k in range(K):
        prod = pooled3 * wfc_ref[k]                             # (B, P, C2)
        s = jnp.sum(prod, axis=2)                               # (B, P)
        s = jnp.sum(s, axis=1, keepdims=True)                   # (B, 1)
        cols.append(s)
    out = jnp.concatenate(cols, axis=1) + bfc_ref[...]          # (B, num_cls)
    # TODO(synk): nn.Dropout(0.2) is identity in eval mode; training-mode RNG masking omitted.
    o_ref[...] = out.astype(o_ref.dtype)


# ---------------------------------------------------------------------------
# Wrapper: single pallas_call, everything resident in VMEM
# ---------------------------------------------------------------------------
def cnn_decoder_forward(x_nchw, params):
    B, C, S, M = x_nchw.shape
    C1 = params["b1"].shape[1]
    num_cls = params["bfc"].shape[1]

    x_nhwc = jnp.transpose(x_nchw, (0, 2, 3, 1))                # layout glue only

    vmem = pltpu.MemorySpace.VMEM
    return pl.pallas_call(
        _fused_decoder_kernel,
        out_shape=jax.ShapeDtypeStruct((B, num_cls), x_nchw.dtype),
        in_specs=[pl.BlockSpec(memory_space=vmem)] * 8,
        out_specs=pl.BlockSpec(memory_space=vmem),
        scratch_shapes=[
            pltpu.VMEM((B, S + 2, M + 2, C), jnp.float32),      # padded input
            pltpu.VMEM((B, S + 2, M + 2, C1), jnp.float32),     # padded conv1 output
        ],
    )(x_nhwc, params["w1"], params["b1"], params["w2"], params["b2"],
      params["pool"], params["wfc"], params["bfc"])


# ---------------------------------------------------------------------------
# Parameter preparation (one-time, outside the kernel):
#   - conv weights -> im2col layout (tap-major, cin-minor) matching the kernel
#   - adaptive avg pool -> block-diagonal pooling matrix (one MXU matmul)
#   - FC weight reordered from torch NCHW-flatten order to (pooled-pos, channel)
# ---------------------------------------------------------------------------
def prepare_params(tw1, tb1, tw2, tb2, twfc, tbfc, B, S, M, n):
    m2 = M // 2
    assert S % n == 0 and M % m2 == 0, "divisible case only (exactly matches torch)"
    kh, kw = S // n, M // m2
    C = tw1.shape[1]
    C1 = tw1.shape[0]
    C2 = tw2.shape[0]
    num_cls = twfc.shape[0]
    P = n * m2

    # im2col weight: w[(dh*3+dw)*Cin + c, o] = torch_w[o, c, dh, dw]
    w1 = jnp.transpose(tw1, (2, 3, 1, 0)).reshape(9 * C, C1)
    w2 = jnp.transpose(tw2, (2, 3, 1, 0)).reshape(9 * C1, C2)

    # Adaptive-avg-pool matrix (divisible case): Pm[p, s*M+m] = 1/(kh*kw) iff
    # (s//kh)*m2 + (m//kw) == p.  Block-diagonal over batch.
    s_idx = jnp.arange(S)
    m_idx = jnp.arange(M)
    p_of = ((s_idx[:, None] // kh) * m2 + (m_idx[None, :] // kw)).reshape(S * M)
    Pm = (jnp.arange(P)[:, None] == p_of[None, :]).astype(jnp.float32) / float(kh * kw)
    pool_blk = jnp.kron(jnp.eye(B, dtype=jnp.float32), Pm)      # (B*P, B*S*M)

    # torch flatten index is c*P + p  ->  reorder to [k, p, c]
    wfc_pc = jnp.transpose(twfc.reshape(num_cls, C2, P), (0, 2, 1))  # (K, P, C2)

    return {
        "w1": w1, "b1": tb1.reshape(1, -1),
        "w2": w2, "b2": tb2.reshape(1, -1),
        "pool": pool_blk,
        "wfc": wfc_pc, "bfc": tbfc.reshape(1, -1),
    }


# ---------------------------------------------------------------------------
# Pure-JAX reference (correctness check only)
# ---------------------------------------------------------------------------
def reference_forward(x, tw1, tb1, tw2, tb2, twfc, tbfc, n, m2):
    def conv(h, w, b):
        y = jax.lax.conv_general_dilated(
            h, w, window_strides=(1, 1), padding=((1, 1), (1, 1)),
            dimension_numbers=("NCHW", "OIHW", "NCHW"))
        return jax.nn.relu(y + b[None, :, None, None])

    h = conv(x, tw1, tb1)
    h = conv(h, tw2, tb2)
    B, C, H, W = h.shape
    kh, kw = H // n, W // m2
    p = h.reshape(B, C, n, kh, m2, kw).mean(axis=(3, 5))
    flat = p.reshape(B, -1)
    return flat @ twfc.T + tbfc[None, :]


if __name__ == "__main__":
    # Small shapes consistent with the module: x = [B, C, S, M]
    B, C, S, M = 2, 4, 16, 16
    n_cf = 4                  # CF_second
    num_cls = 5
    m2 = M // 2
    dtype = jnp.float32

    key = jax.random.PRNGKey(0)
    kx, k1, k2, k3, k4, k5, k6 = jax.random.split(key, 7)

    x = jax.random.normal(kx, (B, C, S, M), dtype)

    # Deterministic parameter init in PyTorch layouts, converted for the kernel.
    tw1 = 0.1 * jax.random.normal(k1, (32, C, 3, 3), dtype)       # Conv2d weight (O,I,kH,kW)
    tb1 = 0.1 * jax.random.normal(k2, (32,), dtype)
    tw2 = 0.1 * jax.random.normal(k3, (64, 32, 3, 3), dtype)
    tb2 = 0.1 * jax.random.normal(k4, (64,), dtype)
    F = 64 * n_cf * m2
    twfc = 0.02 * jax.random.normal(k5, (num_cls, F), dtype)      # Linear weight (out, in)
    tbfc = 0.02 * jax.random.normal(k6, (num_cls,), dtype)

    params = prepare_params(tw1, tb1, tw2, tb2, twfc, tbfc, B, S, M, n_cf)

    fwd = jax.jit(cnn_decoder_forward)
    out = jax.block_until_ready(fwd(x, params))
    assert out.shape == (B, num_cls)

    ref = reference_forward(x, tw1, tb1, tw2, tb2, twfc, tbfc, n_cf, m2)
    # Tolerance accounts for MXU default f32 matmul precision + different
    # (pool-as-matmul) summation order vs. the XLA conv reference.
    assert jnp.allclose(out, ref, rtol=2e-2, atol=2e-2), "mismatch vs JAX reference"

    print("KERNEL_OK")
</pallas_src>

<mosaic_0001>
module attributes {stable_mosaic.version = 11 : i64} {
  func.func @_fused_decoder_kernel(%arg0: memref<2x16x16x4xf32, #tpu.memory_space<vmem>>, %arg1: memref<36x32xf32, #tpu.memory_space<vmem>>, %arg2: memref<1x32xf32, #tpu.memory_space<vmem>>, %arg3: memref<288x64xf32, #tpu.memory_space<vmem>>, %arg4: memref<1x64xf32, #tpu.memory_space<vmem>>, %arg5: memref<64x512xf32, #tpu.memory_space<vmem>>, %arg6: memref<5x32x64xf32, #tpu.memory_space<vmem>>, %arg7: memref<1x5xf32, #tpu.memory_space<vmem>>, %arg8: memref<2x5xf32, #tpu.memory_space<vmem>>, %arg9: memref<2x18x18x4xf32, #tpu.memory_space<vmem>>, %arg10: memref<2x18x18x32xf32, #tpu.memory_space<vmem>>) attributes {dimension_semantics = [], scalar_prefetch = 0 : i64, scratch_operands = 2 : i64, tpu.core_type = #tpu.core_type<tc>} {
    %cst = arith.constant 0.000000e+00 : f32
    %0 = vector.broadcast %cst : f32 to vector<2x18x18x4xf32>
    %c0 = arith.constant 0 : index
    %c0_0 = arith.constant 0 : index
    %c0_1 = arith.constant 0 : index
    %c0_2 = arith.constant 0 : index
    %1 = vector.load %arg9[%c0, %c0_0, %c0_1, %c0_2] : memref<2x18x18x4xf32, #tpu.memory_space<vmem>>, vector<2x18x18x4xf32>
    tpu.vector_store %arg9[%c0, %c0_0, %c0_1, %c0_2], %0 {strides = array<i32>} : memref<2x18x18x4xf32, #tpu.memory_space<vmem>>, vector<2x18x18x4xf32>,
    %c0_3 = arith.constant 0 : index
    %c0_4 = arith.constant 0 : index
    %c0_5 = arith.constant 0 : index
    %c0_6 = arith.constant 0 : index
    %2 = vector.load %arg0[%c0_3, %c0_4, %c0_5, %c0_6] : memref<2x16x16x4xf32, #tpu.memory_space<vmem>>, vector<2x16x16x4xf32>
    %c0_7 = arith.constant 0 : index
    %c1 = arith.constant 1 : index
    %c1_8 = arith.constant 1 : index
    %c0_9 = arith.constant 0 : index
    %3 = vector.load %arg9[%c0_7, %c1, %c1_8, %c0_9] : memref<2x18x18x4xf32, #tpu.memory_space<vmem>>, vector<2x16x16x4xf32>
    tpu.vector_store %arg9[%c0_7, %c1, %c1_8, %c0_9], %2 {strides = array<i32>} : memref<2x18x18x4xf32, #tpu.memory_space<vmem>>, vector<2x16x16x4xf32>,
    %c0_10 = arith.constant 0 : index
    %c0_11 = arith.constant 0 : index
    %c0_12 = arith.constant 0 : index
    %c0_13 = arith.constant 0 : index
    %4 = vector.load %arg9[%c0_10, %c0_11, %c0_12, %c0_13] : memref<2x18x18x4xf32, #tpu.memory_space<vmem>>, vector<2x16x16x4xf32>
    %5 = vector.shape_cast %4 : vector<2x16x16x4xf32> to vector<512x4xf32>
    %c0_14 = arith.constant 0 : index
    %c0_15 = arith.constant 0 : index
    %c1_16 = arith.constant 1 : index
    %c0_17 = arith.constant 0 : index
    %6 = vector.load %arg9[%c0_14, %c0_15, %c1_16, %c0_17] : memref<2x18x18x4xf32, #tpu.memory_space<vmem>>, vector<2x16x16x4xf32>
    %7 = vector.shape_cast %6 : vector<2x16x16x4xf32> to vector<512x4xf32>
    %c0_18 = arith.constant 0 : index
    %c0_19 = arith.constant 0 : index
    %c2 = arith.constant 2 : index
    %c0_20 = arith.constant 0 : index
    %8 = vector.load %arg9[%c0_18, %c0_19, %c2, %c0_20] : memref<2x18x18x4xf32, #tpu.memory_space<vmem>>, vector<2x16x16x4xf32>
    %9 = vector.shape_cast %8 : vector<2x16x16x4xf32> to vector<512x4xf32>
    %c0_21 = arith.constant 0 : index
    %c1_22 = arith.constant 1 : index
    %c0_23 = arith.constant 0 : index
    %c0_24 = arith.constant 0 : index
    %10 = vector.load %arg9[%c0_21, %c1_22, %c0_23, %c0_24] : memref<2x18x18x4xf32, #tpu.memory_space<vmem>>, vector<2x16x16x4xf32>
    %11 = vector.shape_cast %10 : vector<2x16x16x4xf32> to vector<512x4xf32>
    %c0_25 = arith.constant 0 : index
    %c1_26 = arith.constant 1 : index
    %c1_27 = arith.constant 1 : index
    %c0_28 = arith.constant 0 : index
    %12 = vector.load %arg9[%c0_25, %c1_26, %c1_27, %c0_28] : memref<2x18x18x4xf32, #tpu.memory_space<vmem>>, vector<2x16x16x4xf32>
    %13 = vector.shape_cast %12 : vector<2x16x16x4xf32> to vector<512x4xf32>
    %c0_29 = arith.constant 0 : index
    %c1_30 = arith.constant 1 : index
    %c2_31 = arith.constant 2 : index
    %c0_32 = arith.constant 0 : index
    %14 = vector.load %arg9[%c0_29, %c1_30, %c2_31, %c0_32] : memref<2x18x18x4xf32, #tpu.memory_space<vmem>>, vector<2x16x16x4xf32>
    %15 = vector.shape_cast %14 : vector<2x16x16x4xf32> to vector<512x4xf32>
    %c0_33 = arith.constant 0 : index
    %c2_34 = arith.constant 2 : index
    %c0_35 = arith.constant 0 : index
    %c0_36 = arith.constant 0 : index
    %16 = vector.load %arg9[%c0_33, %c2_34, %c0_35, %c0_36] : memref<2x18x18x4xf32, #tpu.memory_space<vmem>>, vector<2x16x16x4xf32>
    %17 = vector.shape_cast %16 : vector<2x16x16x4xf32> to vector<512x4xf32>
    %c0_37 = arith.constant 0 : index
    %c2_38 = arith.constant 2 : index
    %c1_39 = arith.constant 1 : index
    %c0_40 = arith.constant 0 : index
    %18 = vector.load %arg9[%c0_37, %c2_38, %c1_39, %c0_40] : memref<2x18x18x4xf32, #tpu.memory_space<vmem>>, vector<2x16x16x4xf32>
    %19 = vector.shape_cast %18 : vector<2x16x16x4xf32> to vector<512x4xf32>
    %c0_41 = arith.constant 0 : index
    %c2_42 = arith.constant 2 : index
    %c2_43 = arith.constant 2 : index
    %c0_44 = arith.constant 0 : index
    %20 = vector.load %arg9[%c0_41, %c2_42, %c2_43, %c0_44] : memref<2x18x18x4xf32, #tpu.memory_space<vmem>>, vector<2x16x16x4xf32>
    %21 = vector.shape_cast %20 : vector<2x16x16x4xf32> to vector<512x4xf32>
    %22 = tpu.concatenate %5, %7, %9, %11, %13, %15, %17, %19, %21 in 1 : vector<512x4xf32>, vector<512x4xf32>, vector<512x4xf32>, vector<512x4xf32>, vector<512x4xf32>, vector<512x4xf32>, vector<512x4xf32>, vector<512x4xf32>, vector<512x4xf32> -> vector<512x36xf32>
    %c0_45 = arith.constant 0 : index
    %c0_46 = arith.constant 0 : index
    %23 = vector.load %arg1[%c0_45, %c0_46] : memref<36x32xf32, #tpu.memory_space<vmem>>, vector<36x32xf32>
    %cst_47 = arith.constant dense<0.000000e+00> : vector<512x32xf32>
    %24 = tpu.matmul %22, %23, %cst_47 {dimension_numbers = #tpu.dot_dimension_numbers<[1], [0], [0], [1], [0, 0, 1, 1], [], []>} : vector<512x36xf32>, vector<36x32xf32>, vector<512x32xf32> -> vector<512x32xf32>
    %c0_48 = arith.constant 0 : index
    %c0_49 = arith.constant 0 : index
    %25 = vector.load %arg2[%c0_48, %c0_49] : memref<1x32xf32, #tpu.memory_space<vmem>>, vector<1x32xf32>
    %26 = vector.broadcast %25 : vector<1x32xf32> to vector<512x32xf32>
    %27 = arith.addf %24, %26 : vector<512x32xf32>
    %cst_50 = arith.constant 0.000000e+00 : f32
    %28 = vector.broadcast %cst_50 : f32 to vector<512x32xf32>
    %29 = arith.maximumf %27, %28 : vector<512x32xf32>
    %cst_51 = arith.constant 0.000000e+00 : f32
    %30 = vector.broadcast %cst_51 : f32 to vector<2x18x18x32xf32>
    %c0_52 = arith.constant 0 : index
    %c0_53 = arith.constant 0 : index
    %c0_54 = arith.constant 0 : index
    %c0_55 = arith.constant 0 : index
    %31 = vector.load %arg10[%c0_52, %c0_53, %c0_54, %c0_55] : memref<2x18x18x32xf32, #tpu.memory_space<vmem>>, vector<2x18x18x32xf32>
    tpu.vector_store %arg10[%c0_52, %c0_53, %c0_54, %c0_55], %30 {strides = array<i32>} : memref<2x18x18x32xf32, #tpu.memory_space<vmem>>, vector<2x18x18x32xf32>,
    %32 = vector.shape_cast %29 : vector<512x32xf32> to vector<2x16x16x32xf32>
    %c0_56 = arith.constant 0 : index
    %c1_57 = arith.constant 1 : index
    %c1_58 = arith.constant 1 : index
    %c0_59 = arith.constant 0 : index
    %33 = vector.load %arg10[%c0_56, %c1_57, %c1_58, %c0_59] : memref<2x18x18x32xf32, #tpu.memory_space<vmem>>, vector<2x16x16x32xf32>
    tpu.vector_store %arg10[%c0_56, %c1_57, %c1_58, %c0_59], %32 {strides = array<i32>} : memref<2x18x18x32xf32, #tpu.memory_space<vmem>>, vector<2x16x16x32xf32>,
    %c0_60 = arith.constant 0 : index
    %c0_61 = arith.constant 0 : index
    %c0_62 = arith.constant 0 : index
    %c0_63 = arith.constant 0 : index
    %34 = vector.load %arg10[%c0_60, %c0_61, %c0_62, %c0_63] : memref<2x18x18x32xf32, #tpu.memory_space<vmem>>, vector<2x16x16x32xf32>
    %35 = vector.shape_cast %34 : vector<2x16x16x32xf32> to vector<512x32xf32>
    %c0_64 = arith.constant 0 : index
    %c0_65 = arith.constant 0 : index
    %c1_66 = arith.constant 1 : index
    %c0_67 = arith.constant 0 : index
    %36 = vector.load %arg10[%c0_64, %c0_65, %c1_66, %c0_67] : memref<2x18x18x32xf32, #tpu.memory_space<vmem>>, vector<2x16x16x32xf32>
    %37 = vector.shape_cast %36 : vector<2x16x16x32xf32> to vector<512x32xf32>
    %c0_68 = arith.constant 0 : index
    %c0_69 = arith.constant 0 : index
    %c2_70 = arith.constant 2 : index
    %c0_71 = arith.constant 0 : index
    %38 = vector.load %arg10[%c0_68, %c0_69, %c2_70, %c0_71] : memref<2x18x18x32xf32, #tpu.memory_space<vmem>>, vector<2x16x16x32xf32>
    %39 = vector.shape_cast %38 : vector<2x16x16x32xf32> to vector<512x32xf32>
    %c0_72 = arith.constant 0 : index
    %c1_73 = arith.constant 1 : index
    %c0_74 = arith.constant 0 : index
    %c0_75 = arith.constant 0 : index
    %40 = vector.load %arg10[%c0_72, %c1_73, %c0_74, %c0_75] : memref<2x18x18x32xf32, #tpu.memory_space<vmem>>, vector<2x16x16x32xf32>
    %41 = vector.shape_cast %40 : vector<2x16x16x32xf32> to vector<512x32xf32>
    %c0_76 = arith.constant 0 : index
    %c1_77 = arith.constant 1 : index
    %c1_78 = arith.constant 1 : index
    %c0_79 = arith.constant 0 : index
    %42 = vector.load %arg10[%c0_76, %c1_77, %c1_78, %c0_79] : memref<2x18x18x32xf32, #tpu.memory_space<vmem>>, vector<2x16x16x32xf32>
    %43 = vector.shape_cast %42 : vector<2x16x16x32xf32> to vector<512x32xf32>
    %c0_80 = arith.constant 0 : index
    %c1_81 = arith.constant 1 : index
    %c2_82 = arith.constant 2 : index
    %c0_83 = arith.constant 0 : index
    %44 = vector.load %arg10[%c0_80, %c1_81, %c2_82, %c0_83] : memref<2x18x18x32xf32, #tpu.memory_space<vmem>>, vector<2x16x16x32xf32>
    %45 = vector.shape_cast %44 : vector<2x16x16x32xf32> to vector<512x32xf32>
    %c0_84 = arith.constant 0 : index
    %c2_85 = arith.constant 2 : index
    %c0_86 = arith.constant 0 : index
    %c0_87 = arith.constant 0 : index
    %46 = vector.load %arg10[%c0_84, %c2_85, %c0_86, %c0_87] : memref<2x18x18x32xf32, #tpu.memory_space<vmem>>, vector<2x16x16x32xf32>
    %47 = vector.shape_cast %46 : vector<2x16x16x32xf32> to vector<512x32xf32>
    %c0_88 = arith.constant 0 : index
    %c2_89 = arith.constant 2 : index
    %c1_90 = arith.constant 1 : index
    %c0_91 = arith.constant 0 : index
    %48 = vector.load %arg10[%c0_88, %c2_89, %c1_90, %c0_91] : memref<2x18x18x32xf32, #tpu.memory_space<vmem>>, vector<2x16x16x32xf32>
    %49 = vector.shape_cast %48 : vector<2x16x16x32xf32> to vector<512x32xf32>
    %c0_92 = arith.constant 0 : index
    %c2_93 = arith.constant 2 : index
    %c2_94 = arith.constant 2 : index
    %c0_95 = arith.constant 0 : index
    %50 = vector.load %arg10[%c0_92, %c2_93, %c2_94, %c0_95] : memref<2x18x18x32xf32, #tpu.memory_space<vmem>>, vector<2x16x16x32xf32>
    %51 = vector.shape_cast %50 : vector<2x16x16x32xf32> to vector<512x32xf32>
    %52 = tpu.concatenate %35, %37, %39, %41, %43, %45, %47, %49, %51 in 1 : vector<512x32xf32>, vector<512x32xf32>, vector<512x32xf32>, vector<512x32xf32>, vector<512x32xf32>, vector<512x32xf32>, vector<512x32xf32>, vector<512x32xf32>, vector<512x32xf32> -> vector<512x288xf32>
    %c0_96 = arith.constant 0 : index
    %c0_97 = arith.constant 0 : index
    %53 = vector.load %arg3[%c0_96, %c0_97] : memref<288x64xf32, #tpu.memory_space<vmem>>, vector<288x64xf32>
    %cst_98 = arith.constant dense<0.000000e+00> : vector<512x64xf32>
    %54 = tpu.matmul %52, %53, %cst_98 {dimension_numbers = #tpu.dot_dimension_numbers<[1], [0], [0], [1], [0, 0, 1, 1], [], []>} : vector<512x288xf32>, vector<288x64xf32>, vector<512x64xf32> -> vector<512x64xf32>
    %c0_99 = arith.constant 0 : index
    %c0_100 = arith.constant 0 : index
    %55 = vector.load %arg4[%c0_99, %c0_100] : memref<1x64xf32, #tpu.memory_space<vmem>>, vector<1x64xf32>
    %56 = vector.broadcast %55 : vector<1x64xf32> to vector<512x64xf32>
    %57 = arith.addf %54, %56 : vector<512x64xf32>
    %cst_101 = arith.constant 0.000000e+00 : f32
    %58 = vector.broadcast %cst_101 : f32 to vector<512x64xf32>
    %59 = arith.maximumf %57, %58 : vector<512x64xf32>
    %c0_102 = arith.constant 0 : index
    %c0_103 = arith.constant 0 : index
    %60 = vector.load %arg5[%c0_102, %c0_103] : memref<64x512xf32, #tpu.memory_space<vmem>>, vector<64x512xf32>
    %cst_104 = arith.constant dense<0.000000e+00> : vector<64x64xf32>
    %61 = tpu.matmul %60, %59, %cst_104 {dimension_numbers = #tpu.dot_dimension_numbers<[1], [0], [0], [1], [0, 0, 1, 1], [], []>} : vector<64x512xf32>, vector<512x64xf32>, vector<64x64xf32> -> vector<64x64xf32>
    %62 = vector.shape_cast %61 : vector<64x64xf32> to vector<2x32x64xf32>
    %c0_105 = arith.constant 0 : index
    %c0_106 = arith.constant 0 : index
    %c0_107 = arith.constant 0 : index
    %63 = vector.load %arg6[%c0_105, %c0_106, %c0_107] : memref<5x32x64xf32, #tpu.memory_space<vmem>>, vector<1x32x64xf32>
    %64 = vector.shape_cast %63 : vector<1x32x64xf32> to vector<32x64xf32>
    %65 = vector.shape_cast %64 : vector<32x64xf32> to vector<1x32x64xf32>
    %66 = vector.broadcast %65 : vector<1x32x64xf32> to vector<2x32x64xf32>
    %67 = arith.mulf %62, %66 : vector<2x32x64xf32>
    %cst_108 = arith.constant dense<0.000000e+00> : vector<2x32xf32>
    %68 = vector.multi_reduction <add>, %67, %cst_108 [2] : vector<2x32x64xf32> to vector<2x32xf32>
    %cst_109 = arith.constant dense<0.000000e+00> : vector<2xf32>
    %69 = vector.multi_reduction <add>, %68, %cst_109 [1] : vector<2x32xf32> to vector<2xf32>
    %70 = vector.shape_cast %69 : vector<2xf32> to vector<2x1xf32>
    %c1_110 = arith.constant 1 : index
    %c0_111 = arith.constant 0 : index
    %c0_112 = arith.constant 0 : index
    %71 = vector.load %arg6[%c1_110, %c0_111, %c0_112] : memref<5x32x64xf32, #tpu.memory_space<vmem>>, vector<1x32x64xf32>
    %72 = vector.shape_cast %71 : vector<1x32x64xf32> to vector<32x64xf32>
    %73 = vector.shape_cast %72 : vector<32x64xf32> to vector<1x32x64xf32>
    %74 = vector.broadcast %73 : vector<1x32x64xf32> to vector<2x32x64xf32>
    %75 = arith.mulf %62, %74 : vector<2x32x64xf32>
    %cst_113 = arith.constant dense<0.000000e+00> : vector<2x32xf32>
    %76 = vector.multi_reduction <add>, %75, %cst_113 [2] : vector<2x32x64xf32> to vector<2x32xf32>
    %cst_114 = arith.constant dense<0.000000e+00> : vector<2xf32>
    %77 = vector.multi_reduction <add>, %76, %cst_114 [1] : vector<2x32xf32> to vector<2xf32>
    %78 = vector.shape_cast %77 : vector<2xf32> to vector<2x1xf32>
    %c2_115 = arith.constant 2 : index
    %c0_116 = arith.constant 0 : index
    %c0_117 = arith.constant 0 : index
    %79 = vector.load %arg6[%c2_115, %c0_116, %c0_117] : memref<5x32x64xf32, #tpu.memory_space<vmem>>, vector<1x32x64xf32>
    %80 = vector.shape_cast %79 : vector<1x32x64xf32> to vector<32x64xf32>
    %81 = vector.shape_cast %80 : vector<32x64xf32> to vector<1x32x64xf32>
    %82 = vector.broadcast %81 : vector<1x32x64xf32> to vector<2x32x64xf32>
    %83 = arith.mulf %62, %82 : vector<2x32x64xf32>
    %cst_118 = arith.constant dense<0.000000e+00> : vector<2x32xf32>
    %84 = vector.multi_reduction <add>, %83, %cst_118 [2] : vector<2x32x64xf32> to vector<2x32xf32>
    %cst_119 = arith.constant dense<0.000000e+00> : vector<2xf32>
    %85 = vector.multi_reduction <add>, %84, %cst_119 [1] : vector<2x32xf32> to vector<2xf32>
    %86 = vector.shape_cast %85 : vector<2xf32> to vector<2x1xf32>
    %c3 = arith.constant 3 : index
    %c0_120 = arith.constant 0 : index
    %c0_121 = arith.constant 0 : index
    %87 = vector.load %arg6[%c3, %c0_120, %c0_121] : memref<5x32x64xf32, #tpu.memory_space<vmem>>, vector<1x32x64xf32>
    %88 = vector.shape_cast %87 : vector<1x32x64xf32> to vector<32x64xf32>
    %89 = vector.shape_cast %88 : vector<32x64xf32> to vector<1x32x64xf32>
    %90 = vector.broadcast %89 : vector<1x32x64xf32> to vector<2x32x64xf32>
    %91 = arith.mulf %62, %90 : vector<2x32x64xf32>
    %cst_122 = arith.constant dense<0.000000e+00> : vector<2x32xf32>
    %92 = vector.multi_reduction <add>, %91, %cst_122 [2] : vector<2x32x64xf32> to vector<2x32xf32>
    %cst_123 = arith.constant dense<0.000000e+00> : vector<2xf32>
    %93 = vector.multi_reduction <add>, %92, %cst_123 [1] : vector<2x32xf32> to vector<2xf32>
    %94 = vector.shape_cast %93 : vector<2xf32> to vector<2x1xf32>
    %c4 = arith.constant 4 : index
    %c0_124 = arith.constant 0 : index
    %c0_125 = arith.constant 0 : index
    %95 = vector.load %arg6[%c4, %c0_124, %c0_125] : memref<5x32x64xf32, #tpu.memory_space<vmem>>, vector<1x32x64xf32>
    %96 = vector.shape_cast %95 : vector<1x32x64xf32> to vector<32x64xf32>
    %97 = vector.shape_cast %96 : vector<32x64xf32> to vector<1x32x64xf32>
    %98 = vector.broadcast %97 : vector<1x32x64xf32> to vector<2x32x64xf32>
    %99 = arith.mulf %62, %98 : vector<2x32x64xf32>
    %cst_126 = arith.constant dense<0.000000e+00> : vector<2x32xf32>
    %100 = vector.multi_reduction <add>, %99, %cst_126 [2] : vector<2x32x64xf32> to vector<2x32xf32>
    %cst_127 = arith.constant dense<0.000000e+00> : vector<2xf32>
    %101 = vector.multi_reduction <add>, %100, %cst_127 [1] : vector<2x32xf32> to vector<2xf32>
    %102 = vector.shape_cast %101 : vector<2xf32> to vector<2x1xf32>
    %103 = tpu.concatenate %70, %78, %86, %94, %102 in 1 : vector<2x1xf32>, vector<2x1xf32>, vector<2x1xf32>, vector<2x1xf32>, vector<2x1xf32> -> vector<2x5xf32>
    %c0_128 = arith.constant 0 : index
    %c0_129 = arith.constant 0 : index
    %104 = vector.load %arg7[%c0_128, %c0_129] : memref<1x5xf32, #tpu.memory_space<vmem>>, vector<1x5xf32>
    %105 = vector.broadcast %104 : vector<1x5xf32> to vector<2x5xf32>
    %106 = arith.addf %103, %105 : vector<2x5xf32>
    %c0_130 = arith.constant 0 : index
    %c0_131 = arith.constant 0 : index
    %107 = vector.load %arg8[%c0_130, %c0_131] : memref<2x5xf32, #tpu.memory_space<vmem>>, vector<2x5xf32>
    tpu.vector_store %arg8[%c0_130, %c0_131], %106 {strides = array<i32>} : memref<2x5xf32, #tpu.memory_space<vmem>>, vector<2x5xf32>,
    return
  }
}

</mosaic_0001>

<llo_original>
// kernel: cnn_decoder_forward.1
$region0: #{cnn_decoder_forward.1}
  #allocation0 [shape = 'u32[]', space=smem, size = 0x4, offset = 0x4, fixed_abs, tag = 'smem constant byte address 0x4 - core index']
  #allocation1 [shape = 'u32[144,128]{1,0:T(1,128)}', space=vmem, size = 0x12000, scoped, tag = 'internal scratch']
  #allocation2 [shape = 'f32[2,18,18,4]{3,2,1,0:T(8,128)}', space=vmem, size = 0x6c000, scoped, tag = 'scratch operand']
  #allocation3 [shape = 'f32[2,18,18,32]{3,2,1,0:T(8,128)}', space=vmem, size = 0x6c000, scoped, tag = 'scratch operand']
  %s0 = inlined_call_operand.vmem [shape: f32[2,16,16,4], index: 0, kind: input, shape index: {}]
  %s1 = inlined_call_operand.vmem [shape: f32[36,32], index: 1, kind: input, shape index: {}]
  %s2 = inlined_call_operand.vmem [shape: f32[1,32], index: 2, kind: input, shape index: {}]
  %s3 = inlined_call_operand.vmem [shape: f32[288,64], index: 3, kind: input, shape index: {}]
  %s4 = inlined_call_operand.vmem [shape: f32[1,64], index: 4, kind: input, shape index: {}]
  %s5 = inlined_call_operand.vmem [shape: f32[64,512], index: 5, kind: input, shape index: {}]
  %s6 = inlined_call_operand.vmem [shape: f32[5,32,64], index: 6, kind: input, shape index: {}]
  %s7 = inlined_call_operand.vmem [shape: f32[1,5], index: 7, kind: input, shape index: {}]
  %s8 = inlined_call_operand.hbm [shape: f32[2,5], index: 8, kind: output, shape index: {}]
  %s9 = sld [smem:[#allocation0]]
  $region42: #{cnn_decoder_forward.1} parent=0
    _
  %s11 = ssub.s32 1, %s9
  %s12 = scalar_select 0, %s11, %s9
  $region1: #{cnn_decoder_forward.1} parent=0
    #allocation4 [shape = 'u8[1024]{0}', space=vmem, size = 0x400, scoped, tag = 'output window, operand 0, single buffered']
    #allocation5 [shape = 's32[1]{0}', space=sflag, size = 0x4, scoped, tag = 'scoped memory for cnn_decoder_forward.1']
    %13 = vsyncpa [#allocation5], 0
    // Predicated region
    $region2: #{cnn_decoder_forward.1} parent=1 // pred_check
      _
    $region3: #{cnn_decoder_forward.1} parent=1 // pred_check_branch
      %15 = sbr.rel (0) target = $region5
    $region4: #{cnn_decoder_forward.1} parent=1 // pred_region
      _
    $region5: #{cnn_decoder_forward.1} parent=1 // pred_fallthru
      _
    // Predicated region
    $region6: #{cnn_decoder_forward.1} parent=1 // pred_check
      _
    $region7: #{cnn_decoder_forward.1} parent=1 // pred_check_branch
      %17 = sbr.rel (0) target = $region9
    $region8: #{cnn_decoder_forward.1} parent=1 // pred_region
      _
    $region9: #{cnn_decoder_forward.1} parent=1 // pred_fallthru
      _
    // Predicated region
    $region10: #{cnn_decoder_forward.1} parent=1 // pred_check
      _
    $region11: #{cnn_decoder_forward.1} parent=1 // pred_check_branch
      %19 = sbr.rel (0) target = $region13
    $region12: #{cnn_decoder_forward.1} parent=1 // pred_region
      _
    $region13: #{cnn_decoder_forward.1} parent=1 // pred_fallthru
      _
    // Predicated region
    $region14: #{cnn_decoder_forward.1} parent=1 // pred_check
      _
    $region15: #{cnn_decoder_forward.1} parent=1 // pred_check_branch
      %21 = sbr.rel (0) target = $region17
    $region16: #{cnn_decoder_forward.1} parent=1 // pred_region
      _
    $region17: #{cnn_decoder_forward.1} parent=1 // pred_fallthru
      _
    // Predicated region
    $region18: #{cnn_decoder_forward.1} parent=1 // pred_check
      _
    $region19: #{cnn_decoder_forward.1} parent=1 // pred_check_branch
      %23 = sbr.rel (0) target = $region21
    $region20: #{cnn_decoder_forward.1} parent=1 // pred_region
      _
    $region21: #{cnn_decoder_forward.1} parent=1 // pred_fallthru
      _
    // Predicated region
    $region22: #{cnn_decoder_forward.1} parent=1 // pred_check
      _
    $region23: #{cnn_decoder_forward.1} parent=1 // pred_check_branch
      %25 = sbr.rel (0) target = $region25
    $region24: #{cnn_decoder_forward.1} parent=1 // pred_region
      _
    $region25: #{cnn_decoder_forward.1} parent=1 // pred_fallthru
      _
    // Predicated region
    $region26: #{cnn_decoder_forward.1} parent=1 // pred_check
      _
    $region27: #{cnn_decoder_forward.1} parent=1 // pred_check_branch
      %27 = sbr.rel (0) target = $region29
    $region28: #{cnn_decoder_forward.1} parent=1 // pred_region
      _
    $region29: #{cnn_decoder_forward.1} parent=1 // pred_fallthru
      _
    // Predicated region
    $region30: #{cnn_decoder_forward.1} parent=1 // pred_check
      _
    $region31: #{cnn_decoder_forward.1} parent=1 // pred_check_branch
      %29 = sbr.rel (0) target = $region33
    $region32: #{cnn_decoder_forward.1} parent=1 // pred_region
      _
    $region33: #{cnn_decoder_forward.1} parent=1 // pred_fallthru
      _
    %vm30 = vcmask 31744
    %31 = vst.msk [vmem:[#allocation2] sm:$0xff] %vm30, 0.0
    %32 = vst.msk [vmem:[#allocation2 + $0x8] sm:$0xff] %vm30, 0.0
    %vm33 = vcmask 25600
    %34 = vst.msk [vmem:[#allocation2 + $0x10] sm:$0x3] %vm33, 0.0
    %35 = vst.msk [vmem:[#allocation2 + $0x18] sm:$0xff] %vm30, 0.0
    %36 = vst.msk [vmem:[#allocation2 + $0x20] sm:$0xff] %vm30, 0.0
    %37 = vst.msk [vmem:[#allocation2 + $0x28] sm:$0x3] %vm33, 0.0
    %38 = vst.msk [vmem:[#allocation2 + $0x30] sm:$0xff] %vm30, 0.0
    %39 = vst.msk [vmem:[#allocation2 + $0x38] sm:$0xff] %vm30, 0.0
    %40 = vst.msk [vmem:[#allocation2 + $0x40] sm:$0x3] %vm33, 0.0
    %41 = vst.msk [vmem:[#allocation2 + $0x48] sm:$0xff] %vm30, 0.0
    %42 = vst.msk [vmem:[#allocation2 + $0x50] sm:$0xff] %vm30, 0.0
    %43 = vst.msk [vmem:[#allocation2 + $0x58] sm:$0x3] %vm33, 0.0
    %44 = vst.msk [vmem:[#allocation2 + $0x60] sm:$0xff] %vm30, 0.0
    %45 = vst.msk [vmem:[#allocation2 + $0x68] sm:$0xff] %vm30, 0.0
    %46 = vst.msk [vmem:[#allocation2 + $0x70] sm:$0x3] %vm33, 0.0
    %47 = vst.msk [vmem:[#allocation2 + $0x78] sm:$0xff] %vm30, 0.0
    %48 = vst.msk [vmem:[#allocation2 + $0x80] sm:$0xff] %vm30, 0.0
    %49 = vst.msk [vmem:[#allocation2 + $0x88] sm:$0x3] %vm33, 0.0
    %50 = vst.msk [vmem:[#allocation2 + $0x90] sm:$0xff] %vm30, 0.0
    %51 = vst.msk [vmem:[#allocation2 + $0x98] sm:$0xff] %vm30, 0.0
    %52 = vst.msk [vmem:[#allocation2 + $0xa0] sm:$0x3] %vm33, 0.0
    %53 = vst.msk [vmem:[#allocation2 + $0xa8] sm:$0xff] %vm30, 0.0
    %54 = vst.msk [vmem:[#allocation2 + $0xb0] sm:$0xff] %vm30, 0.0
    %55 = vst.msk [vmem:[#allocation2 + $0xb8] sm:$0x3] %vm33, 0.0
    %56 = vst.msk [vmem:[#allocation2 + $0xc0] sm:$0xff] %vm30, 0.0
    %57 = vst.msk [vmem:[#allocation2 + $0xc8] sm:$0xff] %vm30, 0.0
    %58 = vst.msk [vmem:[#allocation2 + $0xd0] sm:$0x3] %vm33, 0.0
    %59 = vst.msk [vmem:[#allocation2 + $0xd8] sm:$0xff] %vm30, 0.0
    %60 = vst.msk [vmem:[#allocation2 + $0xe0] sm:$0xff] %vm30, 0.0
    %61 = vst.msk [vmem:[#allocation2 + $0xe8] sm:$0x3] %vm33, 0.0
    %62 = vst.msk [vmem:[#allocation2 + $0xf0] sm:$0xff] %vm30, 0.0
    %63 = vst.msk [vmem:[#allocation2 + $0xf8] sm:$0xff] %vm30, 0.0
    %64 = vst.msk [vmem:[#allocation2 + $0x100] sm:$0x3] %vm33, 0.0
    %65 = vst.msk [vmem:[#allocation2 + $0x108] sm:$0xff] %vm30, 0.0
    %66 = vst.msk [vmem:[#allocation2 + $0x110] sm:$0xff] %vm30, 0.0
    %67 = vst.msk [vmem:[#allocation2 + $0x118] sm:$0x3] %vm33, 0.0
    %68 = vst.msk [vmem:[#allocation2 + $0x120] sm:$0xff] %vm30, 0.0
    %69 = vst.msk [vmem:[#allocation2 + $0x128] sm:$0xff] %vm30, 0.0
    %70 = vst.msk [vmem:[#allocation2 + $0x130] sm:$0x3] %vm33, 0.0
    %71 = vst.msk [vmem:[#allocation2 + $0x138] sm:$0xff] %vm30, 0.0
    %72 = vst.msk [vmem:[#allocation2 + $0x140] sm:$0xff] %vm30, 0.0
    %73 = vst.msk [vmem:[#allocation2 + $0x148] sm:$0x3] %vm33, 0.0
    %74 = vst.msk [vmem:[#allocation2 + $0x150] sm:$0xff] %vm30, 0.0
    %75 = vst.msk [vmem:[#allocation2 + $0x158] sm:$0xff] %vm30, 0.0
    %76 = vst.msk [vmem:[#allocation2 + $0x160] sm:$0x3] %vm33, 0.0
    %77 = vst.msk [vmem:[#allocation2 + $0x168] sm:$0xff] %vm30, 0.0
    %78 = vst.msk [vmem:[#allocation2 + $0x170] sm:$0xff] %vm30, 0.0
    %79 = vst.msk [vmem:[#allocation2 + $0x178] sm:$0x3] %vm33, 0.0
    %80 = vst.msk [vmem:[#allocation2 + $0x180] sm:$0xff] %vm30, 0.0
    %81 = vst.msk [vmem:[#allocation2 + $0x188] sm:$0xff] %vm30, 0.0
    %82 = vst.msk [vmem:[#allocation2 + $0x190] sm:$0x3] %vm33, 0.0
    %83 = vst.msk [vmem:[#allocation2 + $0x198] sm:$0xff] %vm30, 0.0
    %84 = vst.msk [vmem:[#allocation2 + $0x1a0] sm:$0xff] %vm30, 0.0
    %85 = vst.msk [vmem:[#allocation2 + $0x1a8] sm:$0x3] %vm33, 0.0
    %86 = vst.msk [vmem:[#allocation2 + $0x1b0] sm:$0xff] %vm30, 0.0
    %87 = vst.msk [vmem:[#allocation2 + $0x1b8] sm:$0xff] %vm30, 0.0
    %88 = vst.msk [vmem:[#allocation2 + $0x1c0] sm:$0x3] %vm33, 0.0
    %89 = vst.msk [vmem:[#allocation2 + $0x1c8] sm:$0xff] %vm30, 0.0
    %90 = vst.msk [vmem:[#allocation2 + $0x1d0] sm:$0xff] %vm30, 0.0
    %91 = vst.msk [vmem:[#allocation2 + $0x1d8] sm:$0x3] %vm33, 0.0
    %92 = vst.msk [vmem:[#allocation2 + $0x1e0] sm:$0xff] %vm30, 0.0
    %93 = vst.msk [vmem:[#allocation2 + $0x1e8] sm:$0xff] %vm30, 0.0
    %94 = vst.msk [vmem:[#allocation2 + $0x1f0] sm:$0x3] %vm33, 0.0
    %95 = vst.msk [vmem:[#allocation2 + $0x1f8] sm:$0xff] %vm30, 0.0
    %96 = vst.msk [vmem:[#allocation2 + $0x200] sm:$0xff] %vm30, 0.0
    %97 = vst.msk [vmem:[#allocation2 + $0x208] sm:$0x3] %vm33, 0.0
    %98 = vst.msk [vmem:[#allocation2 + $0x210] sm:$0xff] %vm30, 0.0
    %99 = vst.msk [vmem:[#allocation2 + $0x218] sm:$0xff] %vm30, 0.0
    %100 = vst.msk [vmem:[#allocation2 + $0x220] sm:$0x3] %vm33, 0.0
    %101 = vst.msk [vmem:[#allocation2 + $0x228] sm:$0xff] %vm30, 0.0
    %102 = vst.msk [vmem:[#allocation2 + $0x230] sm:$0xff] %vm30, 0.0
    %103 = vst.msk [vmem:[#allocation2 + $0x238] sm:$0x3] %vm33, 0.0
    %104 = vst.msk [vmem:[#allocation2 + $0x240] sm:$0xff] %vm30, 0.0
    %105 = vst.msk [vmem:[#allocation2 + $0x248] sm:$0xff] %vm30, 0.0
    %106 = vst.msk [vmem:[#allocation2 + $0x250] sm:$0x3] %vm33, 0.0
    %107 = vst.msk [vmem:[#allocation2 + $0x258] sm:$0xff] %vm30, 0.0
    %108 = vst.msk [vmem:[#allocation2 + $0x260] sm:$0xff] %vm30, 0.0
    %109 = vst.msk [vmem:[#allocation2 + $0x268] sm:$0x3] %vm33, 0.0
    %110 = vst.msk [vmem:[#allocation2 + $0x270] sm:$0xff] %vm30, 0.0
    %111 = vst.msk [vmem:[#allocation2 + $0x278] sm:$0xff] %vm30, 0.0
    %112 = vst.msk [vmem:[#allocation2 + $0x280] sm:$0x3] %vm33, 0.0
    %113 = vst.msk [vmem:[#allocation2 + $0x288] sm:$0xff] %vm30, 0.0
    %114 = vst.msk [vmem:[#allocation2 + $0x290] sm:$0xff] %vm30, 0.0
    %115 = vst.msk [vmem:[#allocation2 + $0x298] sm:$0x3] %vm33, 0.0
    %116 = vst.msk [vmem:[#allocation2 + $0x2a0] sm:$0xff] %vm30, 0.0
    %117 = vst.msk [vmem:[#allocation2 + $0x2a8] sm:$0xff] %vm30, 0.0
    %118 = vst.msk [vmem:[#allocation2 + $0x2b0] sm:$0x3] %vm33, 0.0
    %119 = vst.msk [vmem:[#allocation2 + $0x2b8] sm:$0xff] %vm30, 0.0
    %120 = vst.msk [vmem:[#allocation2 + $0x2c0] sm:$0xff] %vm30, 0.0
    %121 = vst.msk [vmem:[#allocation2 + $0x2c8] sm:$0x3] %vm33, 0.0
    %122 = vst.msk [vmem:[#allocation2 + $0x2d0] sm:$0xff] %vm30, 0.0
    %123 = vst.msk [vmem:[#allocation2 + $0x2d8] sm:$0xff] %vm30, 0.0
    %124 = vst.msk [vmem:[#allocation2 + $0x2e0] sm:$0x3] %vm33, 0.0
    %125 = vst.msk [vmem:[#allocation2 + $0x2e8] sm:$0xff] %vm30, 0.0
    %126 = vst.msk [vmem:[#allocation2 + $0x2f0] sm:$0xff] %vm30, 0.0
    %127 = vst.msk [vmem:[#allocation2 + $0x2f8] sm:$0x3] %vm33, 0.0
    %128 = vst.msk [vmem:[#allocation2 + $0x300] sm:$0xff] %vm30, 0.0
    %129 = vst.msk [vmem:[#allocation2 + $0x308] sm:$0xff] %vm30, 0.0
    %130 = vst.msk [vmem:[#allocation2 + $0x310] sm:$0x3] %vm33, 0.0
    %131 = vst.msk [vmem:[#allocation2 + $0x318] sm:$0xff] %vm30, 0.0
    %132 = vst.msk [vmem:[#allocation2 + $0x320] sm:$0xff] %vm30, 0.0
    %133 = vst.msk [vmem:[#allocation2 + $0x328] sm:$0x3] %vm33, 0.0
    %134 = vst.msk [vmem:[#allocation2 + $0x330] sm:$0xff] %vm30, 0.0
    %135 = vst.msk [vmem:[#allocation2 + $0x338] sm:$0xff] %vm30, 0.0
    %136 = vst.msk [vmem:[#allocation2 + $0x340] sm:$0x3] %vm33, 0.0
    %137 = vst.msk [vmem:[#allocation2 + $0x348] sm:$0xff] %vm30, 0.0
    %138 = vst.msk [vmem:[#allocation2 + $0x350] sm:$0xff] %vm30, 0.0
    %139 = vst.msk [vmem:[#allocation2 + $0x358] sm:$0x3] %vm33, 0.0
    %v140 = vld [vmem:[%s0] sm:$0xff]
    %v141 = vld [vmem:[%s0 + $0x8] sm:$0xff]
    %v142 = vld [vmem:[%s0 + $0x10] sm:$0xff]
    %v143 = vld [vmem:[%s0 + $0x18] sm:$0xff]
    %v144 = vld [vmem:[%s0 + $0x20] sm:$0xff]
    %v145 = vld [vmem:[%s0 + $0x28] sm:$0xff]
    %v146 = vld [vmem:[%s0 + $0x30] sm:$0xff]
    %v147 = vld [vmem:[%s0 + $0x38] sm:$0xff]
    %v148 = vld [vmem:[%s0 + $0x40] sm:$0xff]
    %v149 = vld [vmem:[%s0 + $0x48] sm:$0xff]
    %v150 = vld [vmem:[%s0 + $0x50] sm:$0xff]
    %v151 = vld [vmem:[%s0 + $0x58] sm:$0xff]
    %v152 = vld [vmem:[%s0 + $0x60] sm:$0xff]
    %v153 = vld [vmem:[%s0 + $0x68] sm:$0xff]
    %v154 = vld [vmem:[%s0 + $0x70] sm:$0xff]
    %v155 = vld [vmem:[%s0 + $0x78] sm:$0xff]
    %v156 = vld [vmem:[%s0 + $0x80] sm:$0xff]
    %v157 = vld [vmem:[%s0 + $0x88] sm:$0xff]
    %v158 = vld [vmem:[%s0 + $0x90] sm:$0xff]
    %v159 = vld [vmem:[%s0 + $0x98] sm:$0xff]
    %v160 = vld [vmem:[%s0 + $0xa0] sm:$0xff]
    %v161 = vld [vmem:[%s0 + $0xa8] sm:$0xff]
    %v162 = vld [vmem:[%s0 + $0xb0] sm:$0xff]
    %v163 = vld [vmem:[%s0 + $0xb8] sm:$0xff]
    %v164 = vld [vmem:[%s0 + $0xc0] sm:$0xff]
    %v165 = vld [vmem:[%s0 + $0xc8] sm:$0xff]
    %v166 = vld [vmem:[%s0 + $0xd0] sm:$0xff]
    %v167 = vld [vmem:[%s0 + $0xd8] sm:$0xff]
    %v168 = vld [vmem:[%s0 + $0xe0] sm:$0xff]
    %v169 = vld [vmem:[%s0 + $0xe8] sm:$0xff]
    %v170 = vld [vmem:[%s0 + $0xf0] sm:$0xff]
    %v171 = vld [vmem:[%s0 + $0xf8] sm:$0xff]
    %v172 = vld [vmem:[%s0 + $0x100] sm:$0xff]
    %v173 = vld [vmem:[%s0 + $0x108] sm:$0xff]
    %v174 = vld [vmem:[%s0 + $0x110] sm:$0xff]
    %v175 = vld [vmem:[%s0 + $0x118] sm:$0xff]
    %v176 = vld [vmem:[%s0 + $0x120] sm:$0xff]
    %v177 = vld [vmem:[%s0 + $0x128] sm:$0xff]
    %v178 = vld [vmem:[%s0 + $0x130] sm:$0xff]
    %v179 = vld [vmem:[%s0 + $0x138] sm:$0xff]
    %v180 = vld [vmem:[%s0 + $0x140] sm:$0xff]
    %v181 = vld [vmem:[%s0 + $0x148] sm:$0xff]
    %v182 = vld [vmem:[%s0 + $0x150] sm:$0xff]
    %v183 = vld [vmem:[%s0 + $0x158] sm:$0xff]
    %v184 = vld [vmem:[%s0 + $0x160] sm:$0xff]
    %v185 = vld [vmem:[%s0 + $0x168] sm:$0xff]
    %v186 = vld [vmem:[%s0 + $0x170] sm:$0xff]
    %v187 = vld [vmem:[%s0 + $0x178] sm:$0xff]
    %v188 = vld [vmem:[%s0 + $0x180] sm:$0xff]
    %v189 = vld [vmem:[%s0 + $0x188] sm:$0xff]
    %v190 = vld [vmem:[%s0 + $0x190] sm:$0xff]
    %v191 = vld [vmem:[%s0 + $0x198] sm:$0xff]
    %v192 = vld [vmem:[%s0 + $0x1a0] sm:$0xff]
    %v193 = vld [vmem:[%s0 + $0x1a8] sm:$0xff]
    %v194 = vld [vmem:[%s0 + $0x1b0] sm:$0xff]
    %v195 = vld [vmem:[%s0 + $0x1b8] sm:$0xff]
    %v196 = vld [vmem:[%s0 + $0x1c0] sm:$0xff]
    %v197 = vld [vmem:[%s0 + $0x1c8] sm:$0xff]
    %v198 = vld [vmem:[%s0 + $0x1d0] sm:$0xff]
    %v199 = vld [vmem:[%s0 + $0x1d8] sm:$0xff]
    %v200 = vld [vmem:[%s0 + $0x1e0] sm:$0xff]
    %v201 = vld [vmem:[%s0 + $0x1e8] sm:$0xff]
    %v202 = vld [vmem:[%s0 + $0x1f0] sm:$0xff]
    %v203 = vld [vmem:[%s0 + $0x1f8] sm:$0xff]
    %s204 = scalar_lea.vmem [#allocation2], 24
    %205 = vst.msk [vmem:[%s204 + $0x1] sm:$0xff] %vm30, %v140
    %206 = vst.msk [vmem:[%s204 + $0x9] sm:$0xff] %vm30, %v141
    %207 = vst.msk [vmem:[%s204 + $0x19] sm:$0xff] %vm30, %v142
    %208 = vst.msk [vmem:[%s204 + $0x21] sm:$0xff] %vm30, %v143
    %209 = vst.msk [vmem:[%s204 + $0x31] sm:$0xff] %vm30, %v144
    %210 = vst.msk [vmem:[%s204 + $0x39] sm:$0xff] %vm30, %v145
    %211 = vst.msk [vmem:[%s204 + $0x49] sm:$0xff] %vm30, %v146
    %212 = vst.msk [vmem:[%s204 + $0x51] sm:$0xff] %vm30, %v147
    %213 = vst.msk [vmem:[%s204 + $0x61] sm:$0xff] %vm30, %v148
    %214 = vst.msk [vmem:[%s204 + $0x69] sm:$0xff] %vm30, %v149
    %215 = vst.msk [vmem:[%s204 + $0x79] sm:$0xff] %vm30, %v150
    %216 = vst.msk [vmem:[%s204 + $0x81] sm:$0xff] %vm30, %v151
    %217 = vst.msk [vmem:[%s204 + $0x91] sm:$0xff] %vm30, %v152
    %218 = vst.msk [vmem:[%s204 + $0x99] sm:$0xff] %vm30, %v153
    %219 = vst.msk [vmem:[%s204 + $0xa9] sm:$0xff] %vm30, %v154
    %220 = vst.msk [vmem:[%s204 + $0xb1] sm:$0xff] %vm30, %v155
    %221 = vst.msk [vmem:[%s204 + $0xc1] sm:$0xff] %vm30, %v156
    %222 = vst.msk [vmem:[%s204 + $0xc9] sm:$0xff] %vm30, %v157
    %223 = vst.msk [vmem:[%s204 + $0xd9] sm:$0xff] %vm30, %v158
    %224 = vst.msk [vmem:[%s204 + $0xe1] sm:$0xff] %vm30, %v159
    %225 = vst.msk [vmem:[%s204 + $0xf1] sm:$0xff] %vm30, %v160
    %226 = vst.msk [vmem:[%s204 + $0xf9] sm:$0xff] %vm30, %v161
    %227 = vst.msk [vmem:[%s204 + $0x109] sm:$0xff] %vm30, %v162
    %228 = vst.msk [vmem:[%s204 + $0x111] sm:$0xff] %vm30, %v163
    %229 = vst.msk [vmem:[%s204 + $0x121] sm:$0xff] %vm30, %v164
    %230 = vst.msk [vmem:[%s204 + $0x129] sm:$0xff] %vm30, %v165
    %231 = vst.msk [vmem:[%s204 + $0x139] sm:$0xff] %vm30, %v166
    %232 = vst.msk [vmem:[%s204 + $0x141] sm:$0xff] %vm30, %v167
    %233 = vst.msk [vmem:[%s204 + $0x151] sm:$0xff] %vm30, %v168
    %234 = vst.msk [vmem:[%s204 + $0x159] sm:$0xff] %vm30, %v169
    %235 = vst.msk [vmem:[%s204 + $0x169] sm:$0xff] %vm30, %v170
    %236 = vst.msk [vmem:[%s204 + $0x171] sm:$0xff] %vm30, %v171
    %237 = vst.msk [vmem:[%s204 + $0x1b1] sm:$0xff] %vm30, %v172
    %238 = vst.msk [vmem:[%s204 + $0x1b9] sm:$0xff] %vm30, %v173
    %239 = vst.msk [vmem:[%s204 + $0x1c9] sm:$0xff] %vm30, %v174
    %240 = vst.msk [vmem:[%s204 + $0x1d1] sm:$0xff] %vm30, %v175
    %241 = vst.msk [vmem:[%s204 + $0x1e1] sm:$0xff] %vm30, %v176
    %242 = vst.msk [vmem:[%s204 + $0x1e9] sm:$0xff] %vm30, %v177
    %243 = vst.msk [vmem:[%s204 + $0x1f9] sm:$0xff] %vm30, %v178
    %244 = vst.msk [vmem:[%s204 + $0x201] sm:$0xff] %vm30, %v179
    %245 = vst.msk [vmem:[%s204 + $0x211] sm:$0xff] %vm30, %v180
    %246 = vst.msk [vmem:[%s204 + $0x219] sm:$0xff] %vm30, %v181
    %247 = vst.msk [vmem:[%s204 + $0x229] sm:$0xff] %vm30, %v182
    %248 = vst.msk [vmem:[%s204 + $0x231] sm:$0xff] %vm30, %v183
    %249 = vst.msk [vmem:[%s204 + $0x241] sm:$0xff] %vm30, %v184
    %250 = vst.msk [vmem:[%s204 + $0x249] sm:$0xff] %vm30, %v185
    %251 = vst.msk [vmem:[%s204 + $0x259] sm:$0xff] %vm30, %v186
    %252 = vst.msk [vmem:[%s204 + $0x261] sm:$0xff] %vm30, %v187
    %253 = vst.msk [vmem:[%s204 + $0x271] sm:$0xff] %vm30, %v188
    %254 = vst.msk [vmem:[%s204 + $0x279] sm:$0xff] %vm30, %v189
    %255 = vst.msk [vmem:[%s204 + $0x289] sm:$0xff] %vm30, %v190
    %256 = vst.msk [vmem:[%s204 + $0x291] sm:$0xff] %vm30, %v191
    %257 = vst.msk [vmem:[%s204 + $0x2a1] sm:$0xff] %vm30, %v192
    %258 = vst.msk [vmem:[%s204 + $0x2a9] sm:$0xff] %vm30, %v193
    %259 = vst.msk [vmem:[%s204 + $0x2b9] sm:$0xff] %vm30, %v194
    %260 = vst.msk [vmem:[%s204 + $0x2c1] sm:$0xff] %vm30, %v195
    %261 = vst.msk [vmem:[%s204 + $0x2d1] sm:$0xff] %vm30, %v196
    %262 = vst.msk [vmem:[%s204 + $0x2d9] sm:$0xff] %vm30, %v197
    %263 = vst.msk [vmem:[%s204 + $0x2e9] sm:$0xff] %vm30, %v198
    %264 = vst.msk [vmem:[%s204 + $0x2f1] sm:$0xff] %vm30, %v199
    %265 = vst.msk [vmem:[%s204 + $0x301] sm:$0xff] %vm30, %v200
    %266 = vst.msk [vmem:[%s204 + $0x309] sm:$0xff] %vm30, %v201
    %267 = vst.msk [vmem:[%s204 + $0x319] sm:$0xff] %vm30, %v202
    %268 = vst.msk [vmem:[%s204 + $0x321] sm:$0xff] %vm30, %v203
    %v269 = vld [vmem:[#allocation2] sm:$0xff]
    %v270 = vld [vmem:[#allocation2 + $0x8] sm:$0xff]
    %v271 = vld [vmem:[#allocation2 + $0x18] sm:$0xff]
    %v272 = vld [vmem:[#allocation2 + $0x20] sm:$0xff]
    %v273 = vld [vmem:[#allocation2 + $0x30] sm:$0xff]
    %v274 = vld [vmem:[#allocation2 + $0x38] sm:$0xff]
    %v275 = vld [vmem:[#allocation2 + $0x48] sm:$0xff]
    %v276 = vld [vmem:[#allocation2 + $0x50] sm:$0xff]
    %v277 = vld [vmem:[#allocation2 + $0x60] sm:$0xff]
    %v278 = vld [vmem:[#allocation2 + $0x68] sm:$0xff]
    %v279 = vld [vmem:[#allocation2 + $0x78] sm:$0xff]
    %v280 = vld [vmem:[#allocation2 + $0x80] sm:$0xff]
    %v281 = vld [vmem:[#allocation2 + $0x90] sm:$0xff]
    %v282 = vld [vmem:[#allocation2 + $0x98] sm:$0xff]
    %v283 = vld [vmem:[#allocation2 + $0xa8] sm:$0xff]
    %v284 = vld [vmem:[#allocation2 + $0xb0] sm:$0xff]
    %v285 = vld [vmem:[#allocation2 + $0xc0] sm:$0xff]
    %v286 = vld [vmem:[#allocation2 + $0xc8] sm:$0xff]
    %v287 = vld [vmem:[#allocation2 + $0xd8] sm:$0xff]
    %v288 = vld [vmem:[#allocation2 + $0xe0] sm:$0xff]
    %v289 = vld [vmem:[#allocation2 + $0xf0] sm:$0xff]
    %v290 = vld [vmem:[#allocation2 + $0xf8] sm:$0xff]
    %v291 = vld [vmem:[#allocation2 + $0x108] sm:$0xff]
    %v292 = vld [vmem:[#allocation2 + $0x110] sm:$0xff]
    %v293 = vld [vmem:[#allocation2 + $0x120] sm:$0xff]
    %v294 = vld [vmem:[#allocation2 + $0x128] sm:$0xff]
    %v295 = vld [vmem:[#allocation2 + $0x138] sm:$0xff]
    %v296 = vld [vmem:[#allocation2 + $0x140] sm:$0xff]
    %v297 = vld [vmem:[#allocation2 + $0x150] sm:$0xff]
    %v298 = vld [vmem:[#allocation2 + $0x158] sm:$0xff]
    %v299 = vld [vmem:[#allocation2 + $0x168] sm:$0xff]
    %v300 = vld [vmem:[#allocation2 + $0x170] sm:$0xff]
    %v301 = vld [vmem:[#allocation2 + $0x1b0] sm:$0xff]
    %v302 = vld [vmem:[#allocation2 + $0x1b8] sm:$0xff]
    %v303 = vld [vmem:[#allocation2 + $0x1c8] sm:$0xff]
    %v304 = vld [vmem:[#allocation2 + $0x1d0] sm:$0xff]
    %v305 = vld [vmem:[#allocation2 + $0x1e0] sm:$0xff]
    %v306 = vld [vmem:[#allocation2 + $0x1e8] sm:$0xff]
    %v307 = vld [vmem:[#allocation2 + $0x1f8] sm:$0xff]
    %v308 = vld [vmem:[#allocation2 + $0x200] sm:$0xff]
    %v309 = vld [vmem:[#allocation2 + $0x210] sm:$0xff]
    %v310 = vld [vmem:[#allocation2 + $0x218] sm:$0xff]
    %v311 = vld [vmem:[#allocation2 + $0x228] sm:$0xff]
    %v312 = vld [vmem:[#allocation2 + $0x230] sm:$0xff]
    %v313 = vld [vmem:[#allocation2 + $0x240] sm:$0xff]
    %v314 = vld [vmem:[#allocation2 + $0x248] sm:$0xff]
    %v315 = vld [vmem:[#allocation2 + $0x258] sm:$0xff]
    %v316 = vld [vmem:[#allocation2 + $0x260] sm:$0xff]
    %v317 = vld [vmem:[#allocation2 + $0x270] sm:$0xff]
    %v318 = vld [vmem:[#allocation2 + $0x278] sm:$0xff]
    %v319 = vld [vmem:[#allocation2 + $0x288] sm:$0xff]
    %v320 = vld [vmem:[#allocation2 + $0x290] sm:$0xff]
    %v321 = vld [vmem:[#allocation2 + $0x2a0] sm:$0xff]
    %v322 = vld [vmem:[#allocation2 + $0x2a8] sm:$0xff]
    %v323 = vld [vmem:[#allocation2 + $0x2b8] sm:$0xff]
    %v324 = vld [vmem:[#allocation2 + $0x2c0] sm:$0xff]
    %v325 = vld [vmem:[#allocation2 + $0x2d0] sm:$0xff]
    %v326 = vld [vmem:[#allocation2 + $0x2d8] sm:$0xff]
    %v327 = vld [vmem:[#allocation2 + $0x2e8] sm:$0xff]
    %v328 = vld [vmem:[#allocation2 + $0x2f0] sm:$0xff]
    %v329 = vld [vmem:[#allocation2 + $0x300] sm:$0xff]
    %v330 = vld [vmem:[#allocation2 + $0x308] sm:$0xff]
    %v331 = vld [vmem:[#allocation2 + $0x318] sm:$0xff]
    %v332 = vld [vmem:[#allocation2 + $0x320] sm:$0xff]
    %v333 = vld [vmem:[#allocation2 + $0x1] sm:$0xff]
    %v334 = vld [vmem:[#allocation2 + $0x9] sm:$0xff]
    %v335 = vld [vmem:[#allocation2 + $0x19] sm:$0xff]
    %v336 = vld [vmem:[#allocation2 + $0x21] sm:$0xff]
    %v337 = vld [vmem:[#allocation2 + $0x31] sm:$0xff]
    %v338 = vld [vmem:[#allocation2 + $0x39] sm:$0xff]
    %v339 = vld [vmem:[#allocation2 + $0x49] sm:$0xff]
    %v340 = vld [vmem:[#allocation2 + $0x51] sm:$0xff]
    %v341 = vld [vmem:[#allocation2 + $0x61] sm:$0xff]
    %v342 = vld [vmem:[#allocation2 + $0x69] sm:$0xff]
    %v343 = vld [vmem:[#allocation2 + $0x79] sm:$0xff]
    %v344 = vld [vmem:[#allocation2 + $0x81] sm:$0xff]
    %v345 = vld [vmem:[#allocation2 + $0x91] sm:$0xff]
    %v346 = vld [vmem:[#allocation2 + $0x99] sm:$0xff]
    %v347 = vld [vmem:[#allocation2 + $0xa9] sm:$0xff]
    %v348 = vld [vmem:[#allocation2 + $0xb1] sm:$0xff]
    %v349 = vld [vmem:[#allocation2 + $0xc1] sm:$0xff]
    %v350 = vld [vmem:[#allocation2 + $0xc9] sm:$0xff]
    %v351 = vld [vmem:[#allocation2 + $0xd9] sm:$0xff]
    %v352 = vld [vmem:[#allocation2 + $0xe1] sm:$0xff]
    %v353 = vld [vmem:[#allocation2 + $0xf1] sm:$0xff]
    %v354 = vld [vmem:[#allocation2 + $0xf9] sm:$0xff]
    %v355 = vld [vmem:[#allocation2 + $0x109] sm:$0xff]
    %v356 = vld [vmem:[#allocation2 + $0x111] sm:$0xff]
    %v357 = vld [vmem:[#allocation2 + $0x121] sm:$0xff]
    %v358 = vld [vmem:[#allocation2 + $0x129] sm:$0xff]
    %v359 = vld [vmem:[#allocation2 + $0x139] sm:$0xff]
    %v360 = vld [vmem:[#allocation2 + $0x141] sm:$0xff]
    %v361 = vld [vmem:[#allocation2 + $0x151] sm:$0xff]
    %v362 = vld [vmem:[#allocation2 + $0x159] sm:$0xff]
    %v363 = vld [vmem:[#allocation2 + $0x169] sm:$0xff]
    %v364 = vld [vmem:[#allocation2 + $0x171] sm:$0xff]
    %v365 = vld [vmem:[#allocation2 + $0x1b1] sm:$0xff]
    %v366 = vld [vmem:[#allocation2 + $0x1b9] sm:$0xff]
    %v367 = vld [vmem:[#allocation2 + $0x1c9] sm:$0xff]
    %v368 = vld [vmem:[#allocation2 + $0x1d1] sm:$0xff]
    %v369 = vld [vmem:[#allocation2 + $0x1e1] sm:$0xff]
    %v370 = vld [vmem:[#allocation2 + $0x1e9] sm:$0xff]
    %v371 = vld [vmem:[#allocation2 + $0x1f9] sm:$0xff]
    %v372 = vld [vmem:[#allocation2 + $0x201] sm:$0xff]
    %v373 = vld [vmem:[#allocation2 + $0x211] sm:$0xff]
    %v374 = vld [vmem:[#allocation2 + $0x219] sm:$0xff]
    %v375 = vld [vmem:[#allocation2 + $0x229] sm:$0xff]
    %v376 = vld [vmem:[#allocation2 + $0x231] sm:$0xff]
    %v377 = vld [vmem:[#allocation2 + $0x241] sm:$0xff]
    %v378 = vld [vmem:[#allocation2 + $0x249] sm:$0xff]
    %v379 = vld [vmem:[#allocation2 + $0x259] sm:$0xff]
    %v380 = vld [vmem:[#allocation2 + $0x261] sm:$0xff]
    %v381 = vld [vmem:[#allocation2 + $0x271] sm:$0xff]
    %v382 = vld [vmem:[#allocation2 + $0x279] sm:$0xff]
    %v383 = vld [vmem:[#allocation2 + $0x289] sm:$0xff]
    %v384 = vld [vmem:[#allocation2 + $0x291] sm:$0xff]
    %v385 = vld [vmem:[#allocation2 + $0x2a1] sm:$0xff]
    %v386 = vld [vmem:[#allocation2 + $0x2a9] sm:$0xff]
    %v387 = vld [vmem:[#allocation2 + $0x2b9] sm:$0xff]
    %v388 = vld [vmem:[#allocation2 + $0x2c1] sm:$0xff]
    %v389 = vld [vmem:[#allocation2 + $0x2d1] sm:$0xff]
    %v390 = vld [vmem:[#allocation2 + $0x2d9] sm:$0xff]
    %v391 = vld [vmem:[#allocation2 + $0x2e9] sm:$0xff]
    %v392 = vld [vmem:[#allocation2 + $0x2f1] sm:$0xff]
    %v393 = vld [vmem:[#allocation2 + $0x301] sm:$0xff]
    %v394 = vld [vmem:[#allocation2 + $0x309] sm:$0xff]
    %v395 = vld [vmem:[#allocation2 + $0x319] sm:$0xff]
    %v396 = vld [vmem:[#allocation2 + $0x321] sm:$0xff]
    %v397 = vld [vmem:[#allocation2 + $0x2] sm:$0xff]
    %v398 = vld [vmem:[#allocation2 + $0xa] sm:$0xff]
    %v399 = vld [vmem:[#allocation2 + $0x1a] sm:$0xff]
    %v400 = vld [vmem:[#allocation2 + $0x22] sm:$0xff]
    %v401 = vld [vmem:[#allocation2 + $0x32] sm:$0xff]
    %v402 = vld [vmem:[#allocation2 + $0x3a] sm:$0xff]
    %v403 = vld [vmem:[#allocation2 + $0x4a] sm:$0xff]
    %v404 = vld [vmem:[#allocation2 + $0x52] sm:$0xff]
    %v405 = vld [vmem:[#allocation2 + $0x62] sm:$0xff]
    %v406 = vld [vmem:[#allocation2 + $0x6a] sm:$0xff]
    %v407 = vld [vmem:[#allocation2 + $0x7a] sm:$0xff]
    %v408 = vld [vmem:[#allocation2 + $0x82] sm:$0xff]
    %v409 = vld [vmem:[#allocation2 + $0x92] sm:$0xff]
    %v410 = vld [vmem:[#allocation2 + $0x9a] sm:$0xff]
    %v411 = vld [vmem:[#allocation2 + $0xaa] sm:$0xff]
    %v412 = vld [vmem:[#allocation2 + $0xb2] sm:$0xff]
    %v413 = vld [vmem:[#allocation2 + $0xc2] sm:$0xff]
    %v414 = vld [vmem:[#allocation2 + $0xca] sm:$0xff]
    %v415 = vld [vmem:[#allocation2 + $0xda] sm:$0xff]
    %v416 = vld [vmem:[#allocation2 + $0xe2] sm:$0xff]
    %v417 = vld [vmem:[#allocation2 + $0xf2] sm:$0xff]
    %v418 = vld [vmem:[#allocation2 + $0xfa] sm:$0xff]
    %v419 = vld [vmem:[#allocation2 + $0x10a] sm:$0xff]
    %v420 = vld [vmem:[#allocation2 + $0x112] sm:$0xff]
    %v421 = vld [vmem:[#allocation2 + $0x122] sm:$0xff]
    %v422 = vld [vmem:[#allocation2 + $0x12a] sm:$0xff]
    %v423 = vld [vmem:[#allocation2 + $0x13a] sm:$0xff]
    %v424 = vld [vmem:[#allocation2 + $0x142] sm:$0xff]
    %v425 = vld [vmem:[#allocation2 + $0x152] sm:$0xff]
    %v426 = vld [vmem:[#allocation2 + $0x15a] sm:$0xff]
    %v427 = vld [vmem:[#allocation2 + $0x16a] sm:$0xff]
    %v428 = vld [vmem:[#allocation2 + $0x172] sm:$0xff]
    %v429 = vld [vmem:[#allocation2 + $0x1b2] sm:$0xff]
    %v430 = vld [vmem:[#allocation2 + $0x1ba] sm:$0xff]
    %v431 = vld [vmem:[#allocation2 + $0x1ca] sm:$0xff]
    %v432 = vld [vmem:[#allocation2 + $0x1d2] sm:$0xff]
    %v433 = vld [vmem:[#allocation2 + $0x1e2] sm:$0xff]
    %v434 = vld [vmem:[#allocation2 + $0x1ea] sm:$0xff]
    %v435 = vld [vmem:[#allocation2 + $0x1fa] sm:$0xff]
    %v436 = vld [vmem:[#allocation2 + $0x202] sm:$0xff]
    %v437 = vld [vmem:[#allocation2 + $0x212] sm:$0xff]
    %v438 = vld [vmem:[#allocation2 + $0x21a] sm:$0xff]
    %v439 = vld [vmem:[#allocation2 + $0x22a] sm:$0xff]
    %v440 = vld [vmem:[#allocation2 + $0x232] sm:$0xff]
    %v441 = vld [vmem:[#allocation2 + $0x242] sm:$0xff]
    %v442 = vld [vmem:[#allocation2 + $0x24a] sm:$0xff]
    %v443 = vld [vmem:[#allocation2 + $0x25a] sm:$0xff]
    %v444 = vld [vmem:[#allocation2 + $0x262] sm:$0xff]
    %v445 = vld [vmem:[#allocation2 + $0x272] sm:$0xff]
    %v446 = vld [vmem:[#allocation2 + $0x27a] sm:$0xff]
    %v447 = vld [vmem:[#allocation2 + $0x28a] sm:$0xff]
    %v448 = vld [vmem:[#allocation2 + $0x292] sm:$0xff]
    %v449 = vld [vmem:[#allocation2 + $0x2a2] sm:$0xff]
    %v450 = vld [vmem:[#allocation2 + $0x2aa] sm:$0xff]
    %v451 = vld [vmem:[#allocation2 + $0x2ba] sm:$0xff]
    %v452 = vld [vmem:[#allocation2 + $0x2c2] sm:$0xff]
    %v453 = vld [vmem:[#allocation2 + $0x2d2] sm:$0xff]
    %v454 = vld [vmem:[#allocation2 + $0x2da] sm:$0xff]
    %v455 = vld [vmem:[#allocation2 + $0x2ea] sm:$0xff]
    %v456 = vld [vmem:[#allocation2 + $0x2f2] sm:$0xff]
    %v457 = vld [vmem:[#allocation2 + $0x302] sm:$0xff]
    %v458 = vld [vmem:[#allocation2 + $0x30a] sm:$0xff]
    %v459 = vld [vmem:[#allocation2 + $0x31a] sm:$0xff]
    %v460 = vld [vmem:[#allocation2 + $0x322] sm:$0xff]
    %v461 = vld [vmem:[%s204] sm:$0xff]
    %v462 = vld [vmem:[%s204 + $0x8] sm:$0xff]
    %v463 = vld [vmem:[%s204 + $0x18] sm:$0xff]
    %v464 = vld [vmem:[%s204 + $0x20] sm:$0xff]
    %v465 = vld [vmem:[%s204 + $0x30] sm:$0xff]
    %v466 = vld [vmem:[%s204 + $0x38] sm:$0xff]
    %v467 = vld [vmem:[%s204 + $0x48] sm:$0xff]
    %v468 = vld [vmem:[%s204 + $0x50] sm:$0xff]
    %v469 = vld [vmem:[%s204 + $0x60] sm:$0xff]
    %v470 = vld [vmem:[%s204 + $0x68] sm:$0xff]
    %v471 = vld [vmem:[%s204 + $0x78] sm:$0xff]
    %v472 = vld [vmem:[%s204 + $0x80] sm:$0xff]
    %v473 = vld [vmem:[%s204 + $0x90] sm:$0xff]
    %v474 = vld [vmem:[%s204 + $0x98] sm:$0xff]
    %v475 = vld [vmem:[%s204 + $0xa8] sm:$0xff]
    %v476 = vld [vmem:[%s204 + $0xb0] sm:$0xff]
    %v477 = vld [vmem:[%s204 + $0xc0] sm:$0xff]
    %v478 = vld [vmem:[%s204 + $0xc8] sm:$0xff]
    %v479 = vld [vmem:[%s204 + $0xd8] sm:$0xff]
    %v480 = vld [vmem:[%s204 + $0xe0] sm:$0xff]
    %v481 = vld [vmem:[%s204 + $0xf0] sm:$0xff]
    %v482 = vld [vmem:[%s204 + $0xf8] sm:$0xff]
    %v483 = vld [vmem:[%s204 + $0x108] sm:$0xff]
    %v484 = vld [vmem:[%s204 + $0x110] sm:$0xff]
    %v485 = vld [vmem:[%s204 + $0x120] sm:$0xff]
    %v486 = vld [vmem:[%s204 + $0x128] sm:$0xff]
    %v487 = vld [vmem:[%s204 + $0x138] sm:$0xff]
    %v488 = vld [vmem:[%s204 + $0x140] sm:$0xff]
    %v489 = vld [vmem:[%s204 + $0x150] sm:$0xff]
    %v490 = vld [vmem:[%s204 + $0x158] sm:$0xff]
    %v491 = vld [vmem:[%s204 + $0x168] sm:$0xff]
    %v492 = vld [vmem:[%s204 + $0x170] sm:$0xff]
    %v493 = vld [vmem:[%s204 + $0x1b0] sm:$0xff]
    %v494 = vld [vmem:[%s204 + $0x1b8] sm:$0xff]
    %v495 = vld [vmem:[%s204 + $0x1c8] sm:$0xff]
    %v496 = vld [vmem:[%s204 + $0x1d0] sm:$0xff]
    %v497 = vld [vmem:[%s204 + $0x1e0] sm:$0xff]
    %v498 = vld [vmem:[%s204 + $0x1e8] sm:$0xff]
    %v499 = vld [vmem:[%s204 + $0x1f8] sm:$0xff]
    %v500 = vld [vmem:[%s204 + $0x200] sm:$0xff]
    %v501 = vld [vmem:[%s204 + $0x210] sm:$0xff]
    %v502 = vld [vmem:[%s204 + $0x218] sm:$0xff]
    %v503 = vld [vmem:[%s204 + $0x228] sm:$0xff]
    %v504 = vld [vmem:[%s204 + $0x230] sm:$0xff]
    %v505 = vld [vmem:[%s204 + $0x240] sm:$0xff]
    %v506 = vld [vmem:[%s204 + $0x248] sm:$0xff]
    %v507 = vld [vmem:[%s204 + $0x258] sm:$0xff]
    %v508 = vld [vmem:[%s204 + $0x260] sm:$0xff]
    %v509 = vld [vmem:[%s204 + $0x270] sm:$0xff]
    %v510 = vld [vmem:[%s204 + $0x278] sm:$0xff]
    %v511 = vld [vmem:[%s204 + $0x288] sm:$0xff]
    %v512 = vld [vmem:[%s204 + $0x290] sm:$0xff]
    %v513 = vld [vmem:[%s204 + $0x2a0] sm:$0xff]
    %v514 = vld [vmem:[%s204 + $0x2a8] sm:$0xff]
    %v515 = vld [vmem:[%s204 + $0x2b8] sm:$0xff]
    %v516 = vld [vmem:[%s204 + $0x2c0] sm:$0xff]
    %v517 = vld [vmem:[%s204 + $0x2d0] sm:$0xff]
    %v518 = vld [vmem:[%s204 + $0x2d8] sm:$0xff]
    %v519 = vld [vmem:[%s204 + $0x2e8] sm:$0xff]
    %v520 = vld [vmem:[%s204 + $0x2f0] sm:$0xff]
    %v521 = vld [vmem:[%s204 + $0x300] sm:$0xff]
    %v522 = vld [vmem:[%s204 + $0x308] sm:$0xff]
    %v523 = vld [vmem:[%s204 + $0x318] sm:$0xff]
    %v524 = vld [vmem:[%s204 + $0x320] sm:$0xff]
    %v525 = vld [vmem:[%s204 + $0x1] sm:$0xff]
    %v526 = vld [vmem:[%s204 + $0x9] sm:$0xff]
    %v527 = vld [vmem:[%s204 + $0x19] sm:$0xff]
    %v528 = vld [vmem:[%s204 + $0x21] sm:$0xff]
    %v529 = vld [vmem:[%s204 + $0x31] sm:$0xff]
    %v530 = vld [vmem:[%s204 + $0x39] sm:$0xff]
    %v531 = vld [vmem:[%s204 + $0x49] sm:$0xff]
    %v532 = vld [vmem:[%s204 + $0x51] sm:$0xff]
    %v533 = vld [vmem:[%s204 + $0x61] sm:$0xff]
    %v534 = vld [vmem:[%s204 + $0x69] sm:$0xff]
    %v535 = vld [vmem:[%s204 + $0x79] sm:$0xff]
    %v536 = vld [vmem:[%s204 + $0x81] sm:$0xff]
    %v537 = vld [vmem:[%s204 + $0x91] sm:$0xff]
    %v538 = vld [vmem:[%s204 + $0x99] sm:$0xff]
    %v539 = vld [vmem:[%s204 + $0xa9] sm:$0xff]
    %v540 = vld [vmem:[%s204 + $0xb1] sm:$0xff]
    %v541 = vld [vmem:[%s204 + $0xc1] sm:$0xff]
    %v542 = vld [vmem:[%s204 + $0xc9] sm:$0xff]
    %v543 = vld [vmem:[%s204 + $0xd9] sm:$0xff]
    %v544 = vld [vmem:[%s204 + $0xe1] sm:$0xff]
    %v545 = vld [vmem:[%s204 + $0xf1] sm:$0xff]
    %v546 = vld [vmem:[%s204 + $0xf9] sm:$0xff]
    %v547 = vld [vmem:[%s204 + $0x109] sm:$0xff]
    %v548 = vld [vmem:[%s204 + $0x111] sm:$0xff]
    %v549 = vld [vmem:[%s204 + $0x121] sm:$0xff]
    %v550 = vld [vmem:[%s204 + $0x129] sm:$0xff]
    %v551 = vld [vmem:[%s204 + $0x139] sm:$0xff]
    %v552 = vld [vmem:[%s204 + $0x141] sm:$0xff]
    %v553 = vld [vmem:[%s204 + $0x151] sm:$0xff]
    %v554 = vld [vmem:[%s204 + $0x159] sm:$0xff]
    %v555 = vld [vmem:[%s204 + $0x169] sm:$0xff]
    %v556 = vld [vmem:[%s204 + $0x171] sm:$0xff]
    %v557 = vld [vmem:[%s204 + $0x1b1] sm:$0xff]
    %v558 = vld [vmem:[%s204 + $0x1b9] sm:$0xff]
    %v559 = vld [vmem:[%s204 + $0x1c9] sm:$0xff]
    %v560 = vld [vmem:[%s204 + $0x1d1] sm:$0xff]
    %v561 = vld [vmem:[%s204 + $0x1e1] sm:$0xff]
    %v562 = vld [vmem:[%s204 + $0x1e9] sm:$0xff]
    %v563 = vld [vmem:[%s204 + $0x1f9] sm:$0xff]
    %v564 = vld [vmem:[%s204 + $0x201] sm:$0xff]
    %v565 = vld [vmem:[%s204 + $0x211] sm:$0xff]
    %v566 = vld [vmem:[%s204 + $0x219] sm:$0xff]
    %v567 = vld [vmem:[%s204 + $0x229] sm:$0xff]
    %v568 = vld [vmem:[%s204 + $0x231] sm:$0xff]
    %v569 = vld [vmem:[%s204 + $0x241] sm:$0xff]
    %v570 = vld [vmem:[%s204 + $0x249] sm:$0xff]
    %v571 = vld [vmem:[%s204 + $0x259] sm:$0xff]
    %v572 = vld [vmem:[%s204 + $0x261] sm:$0xff]
    %v573 = vld [vmem:[%s204 + $0x271] sm:$0xff]
    %v574 = vld [vmem:[%s204 + $0x279] sm:$0xff]
    %v575 = vld [vmem:[%s204 + $0x289] sm:$0xff]
    %v576 = vld [vmem:[%s204 + $0x291] sm:$0xff]
    %v577 = vld [vmem:[%s204 + $0x2a1] sm:$0xff]
    %v578 = vld [vmem:[%s204 + $0x2a9] sm:$0xff]
    %v579 = vld [vmem:[%s204 + $0x2b9] sm:$0xff]
    %v580 = vld [vmem:[%s204 + $0x2c1] sm:$0xff]
    %v581 = vld [vmem:[%s204 + $0x2d1] sm:$0xff]
    %v582 = vld [vmem:[%s204 + $0x2d9] sm:$0xff]
    %v583 = vld [vmem:[%s204 + $0x2e9] sm:$0xff]
    %v584 = vld [vmem:[%s204 + $0x2f1] sm:$0xff]
    %v585 = vld [vmem:[%s204 + $0x301] sm:$0xff]
    %v586 = vld [vmem:[%s204 + $0x309] sm:$0xff]
    %v587 = vld [vmem:[%s204 + $0x319] sm:$0xff]
    %v588 = vld [vmem:[%s204 + $0x321] sm:$0xff]
    %v589 = vld [vmem:[%s204 + $0x2] sm:$0xff]
    %v590 = vld [vmem:[%s204 + $0xa] sm:$0xff]
    %v591 = vld [vmem:[%s204 + $0x1a] sm:$0xff]
    %v592 = vld [vmem:[%s204 + $0x22] sm:$0xff]
    %v593 = vld [vmem:[%s204 + $0x32] sm:$0xff]
    %v594 = vld [vmem:[%s204 + $0x3a] sm:$0xff]
    %v595 = vld [vmem:[%s204 + $0x4a] sm:$0xff]
    %v596 = vld [vmem:[%s204 + $0x52] sm:$0xff]
    %v597 = vld [vmem:[%s204 + $0x62] sm:$0xff]
    %v598 = vld [vmem:[%s204 + $0x6a] sm:$0xff]
    %v599 = vld [vmem:[%s204 + $0x7a] sm:$0xff]
    %v600 = vld [vmem:[%s204 + $0x82] sm:$0xff]
    %v601 = vld [vmem:[%s204 + $0x92] sm:$0xff]
    %v602 = vld [vmem:[%s204 + $0x9a] sm:$0xff]
    %v603 = vld [vmem:[%s204 + $0xaa] sm:$0xff]
    %v604 = vld [vmem:[%s204 + $0xb2] sm:$0xff]
    %v605 = vld [vmem:[%s204 + $0xc2] sm:$0xff]
    %v606 = vld [vmem:[%s204 + $0xca] sm:$0xff]
    %v607 = vld [vmem:[%s204 + $0xda] sm:$0xff]
    %v608 = vld [vmem:[%s204 + $0xe2] sm:$0xff]
    %v609 = vld [vmem:[%s204 + $0xf2] sm:$0xff]
    %v610 = vld [vmem:[%s204 + $0xfa] sm:$0xff]
    %v611 = vld [vmem:[%s204 + $0x10a] sm:$0xff]
    %v612 = vld [vmem:[%s204 + $0x112] sm:$0xff]
    %v613 = vld [vmem:[%s204 + $0x122] sm:$0xff]
    %v614 = vld [vmem:[%s204 + $0x12a] sm:$0xff]
    %v615 = vld [vmem:[%s204 + $0x13a] sm:$0xff]
    %v616 = vld [vmem:[%s204 + $0x142] sm:$0xff]
    %v617 = vld [vmem:[%s204 + $0x152] sm:$0xff]
    %v618 = vld [vmem:[%s204 + $0x15a] sm:$0xff]
    %v619 = vld [vmem:[%s204 + $0x16a] sm:$0xff]
    %v620 = vld [vmem:[%s204 + $0x172] sm:$0xff]
    %v621 = vld [vmem:[%s204 + $0x1b2] sm:$0xff]
    %v622 = vld [vmem:[%s204 + $0x1ba] sm:$0xff]
    %v623 = vld [vmem:[%s204 + $0x1ca] sm:$0xff]
    %v624 = vld [vmem:[%s204 + $0x1d2] sm:$0xff]
    %v625 = vld [vmem:[%s204 + $0x1e2] sm:$0xff]
    %v626 = vld [vmem:[%s204 + $0x1ea] sm:$0xff]
    %v627 = vld [vmem:[%s204 + $0x1fa] sm:$0xff]
    %v628 = vld [vmem:[%s204 + $0x202] sm:$0xff]
    %v629 = vld [vmem:[%s204 + $0x212] sm:$0xff]
    %v630 = vld [vmem:[%s204 + $0x21a] sm:$0xff]
    %v631 = vld [vmem:[%s204 + $0x22a] sm:$0xff]
    %v632 = vld [vmem:[%s204 + $0x232] sm:$0xff]
    %v633 = vld [vmem:[%s204 + $0x242] sm:$0xff]
    %v634 = vld [vmem:[%s204 + $0x24a] sm:$0xff]
    %v635 = vld [vmem:[%s204 + $0x25a] sm:$0xff]
    %v636 = vld [vmem:[%s204 + $0x262] sm:$0xff]
    %v637 = vld [vmem:[%s204 + $0x272] sm:$0xff]
    %v638 = vld [vmem:[%s204 + $0x27a] sm:$0xff]
    %v639 = vld [vmem:[%s204 + $0x28a] sm:$0xff]
    %v640 = vld [vmem:[%s204 + $0x292] sm:$0xff]
    %v641 = vld [vmem:[%s204 + $0x2a2] sm:$0xff]
    %v642 = vld [vmem:[%s204 + $0x2aa] sm:$0xff]
    %v643 = vld [vmem:[%s204 + $0x2ba] sm:$0xff]
    %v644 = vld [vmem:[%s204 + $0x2c2] sm:$0xff]
    %v645 = vld [vmem:[%s204 + $0x2d2] sm:$0xff]
    %v646 = vld [vmem:[%s204 + $0x2da] sm:$0xff]
    %v647 = vld [vmem:[%s204 + $0x2ea] sm:$0xff]
    %v648 = vld [vmem:[%s204 + $0x2f2] sm:$0xff]
    %v649 = vld [vmem:[%s204 + $0x302] sm:$0xff]
    %v650 = vld [vmem:[%s204 + $0x30a] sm:$0xff]
    %v651 = vld [vmem:[%s204 + $0x31a] sm:$0xff]
    %v652 = vld [vmem:[%s204 + $0x322] sm:$0xff]
    %s653 = scalar_lea.vmem [#allocation2], 48
    %v654 = vld [vmem:[%s653] sm:$0xff]
    %v655 = vld [vmem:[%s653 + $0x8] sm:$0xff]
    %v656 = vld [vmem:[%s653 + $0x18] sm:$0xff]
    %v657 = vld [vmem:[%s653 + $0x20] sm:$0xff]
    %v658 = vld [vmem:[%s653 + $0x30] sm:$0xff]
    %v659 = vld [vmem:[%s653 + $0x38] sm:$0xff]
    %v660 = vld [vmem:[%s653 + $0x48] sm:$0xff]
    %v661 = vld [vmem:[%s653 + $0x50] sm:$0xff]
    %v662 = vld [vmem:[%s653 + $0x60] sm:$0xff]
    %v663 = vld [vmem:[%s653 + $0x68] sm:$0xff]
    %v664 = vld [vmem:[%s653 + $0x78] sm:$0xff]
    %v665 = vld [vmem:[%s653 + $0x80] sm:$0xff]
    %v666 = vld [vmem:[%s653 + $0x90] sm:$0xff]
    %v667 = vld [vmem:[%s653 + $0x98] sm:$0xff]
    %v668 = vld [vmem:[%s653 + $0xa8] sm:$0xff]
    %v669 = vld [vmem:[%s653 + $0xb0] sm:$0xff]
    %v670 = vld [vmem:[%s653 + $0xc0] sm:$0xff]
    %v671 = vld [vmem:[%s653 + $0xc8] sm:$0xff]
    %v672 = vld [vmem:[%s653 + $0xd8] sm:$0xff]
    %v673 = vld [vmem:[%s653 + $0xe0] sm:$0xff]
    %v674 = vld [vmem:[%s653 + $0xf0] sm:$0xff]
    %v675 = vld [vmem:[%s653 + $0xf8] sm:$0xff]
    %v676 = vld [vmem:[%s653 + $0x108] sm:$0xff]
    %v677 = vld [vmem:[%s653 + $0x110] sm:$0xff]
    %v678 = vld [vmem:[%s653 + $0x120] sm:$0xff]
    %v679 = vld [vmem:[%s653 + $0x128] sm:$0xff]
    %v680 = vld [vmem:[%s653 + $0x138] sm:$0xff]
    %v681 = vld [vmem:[%s653 + $0x140] sm:$0xff]
    %v682 = vld [vmem:[%s653 + $0x150] sm:$0xff]
    %v683 = vld [vmem:[%s653 + $0x158] sm:$0xff]
    %v684 = vld [vmem:[%s653 + $0x168] sm:$0xff]
    %v685 = vld [vmem:[%s653 + $0x170] sm:$0xff]
    %v686 = vld [vmem:[%s653 + $0x1b0] sm:$0xff]
    %v687 = vld [vmem:[%s653 + $0x1b8] sm:$0xff]
    %v688 = vld [vmem:[%s653 + $0x1c8] sm:$0xff]
    %v689 = vld [vmem:[%s653 + $0x1d0] sm:$0xff]
    %v690 = vld [vmem:[%s653 + $0x1e0] sm:$0xff]
    %v691 = vld [vmem:[%s653 + $0x1e8] sm:$0xff]
    %v692 = vld [vmem:[%s653 + $0x1f8] sm:$0xff]
    %v693 = vld [vmem:[%s653 + $0x200] sm:$0xff]
    %v694 = vld [vmem:[%s653 + $0x210] sm:$0xff]
    %v695 = vld [vmem:[%s653 + $0x218] sm:$0xff]
    %v696 = vld [vmem:[%s653 + $0x228] sm:$0xff]
    %v697 = vld [vmem:[%s653 + $0x230] sm:$0xff]
    %v698 = vld [vmem:[%s653 + $0x240] sm:$0xff]
    %v699 = vld [vmem:[%s653 + $0x248] sm:$0xff]
    %v700 = vld [vmem:[%s653 + $0x258] sm:$0xff]
    %v701 = vld [vmem:[%s653 + $0x260] sm:$0xff]
    %v702 = vld [vmem:[%s653 + $0x270] sm:$0xff]
    %v703 = vld [vmem:[%s653 + $0x278] sm:$0xff]
    %v704 = vld [vmem:[%s653 + $0x288] sm:$0xff]
    %v705 = vld [vmem:[%s653 + $0x290] sm:$0xff]
    %v706 = vld [vmem:[%s653 + $0x2a0] sm:$0xff]
    %v707 = vld [vmem:[%s653 + $0x2a8] sm:$0xff]
    %v708 = vld [vmem:[%s653 + $0x2b8] sm:$0xff]
    %v709 = vld [vmem:[%s653 + $0x2c0] sm:$0xff]
    %v710 = vld [vmem:[%s653 + $0x2d0] sm:$0xff]
    %v711 = vld [vmem:[%s653 + $0x2d8] sm:$0xff]
    %v712 = vld [vmem:[%s653 + $0x2e8] sm:$0xff]
    %v713 = vld [vmem:[%s653 + $0x2f0] sm:$0xff]
    %v714 = vld [vmem:[%s653 + $0x300] sm:$0xff]
    %v715 = vld [vmem:[%s653 + $0x308] sm:$0xff]
    %v716 = vld [vmem:[%s653 + $0x318] sm:$0xff]
    %v717 = vld [vmem:[%s653 + $0x320] sm:$0xff]
    %v718 = vld [vmem:[%s653 + $0x1] sm:$0xff]
    %v719 = vld [vmem:[%s653 + $0x9] sm:$0xff]
    %v720 = vld [vmem:[%s653 + $0x19] sm:$0xff]
    %v721 = vld [vmem:[%s653 + $0x21] sm:$0xff]
    %v722 = vld [vmem:[%s653 + $0x31] sm:$0xff]
    %v723 = vld [vmem:[%s653 + $0x39] sm:$0xff]
    %v724 = vld [vmem:[%s653 + $0x49] sm:$0xff]
    %v725 = vld [vmem:[%s653 + $0x51] sm:$0xff]
    %v726 = vld [vmem:[%s653 + $0x61] sm:$0xff]
    %v727 = vld [vmem:[%s653 + $0x69] sm:$0xff]
    %v728 = vld [vmem:[%s653 + $0x79] sm:$0xff]
    %v729 = vld [vmem:[%s653 + $0x81] sm:$0xff]
    %v730 = vld [vmem:[%s653 + $0x91] sm:$0xff]
    %v731 = vld [vmem:[%s653 + $0x99] sm:$0xff]
    %v732 = vld [vmem:[%s653 + $0xa9] sm:$0xff]
    %v733 = vld [vmem:[%s653 + $0xb1] sm:$0xff]
    %v734 = vld [vmem:[%s653 + $0xc1] sm:$0xff]
    %v735 = vld [vmem:[%s653 + $0xc9] sm:$0xff]
    %v736 = vld [vmem:[%s653 + $0xd9] sm:$0xff]
    %v737 = vld [vmem:[%s653 + $0xe1] sm:$0xff]
    %v738 = vld [vmem:[%s653 + $0xf1] sm:$0xff]
    %v739 = vld [vmem:[%s653 + $0xf9] sm:$0xff]
    %v740 = vld [vmem:[%s653 + $0x109] sm:$0xff]
    %v741 = vld [vmem:[%s653 + $0x111] sm:$0xff]
    %v742 = vld [vmem:[%s653 + $0x121] sm:$0xff]
    %v743 = vld [vmem:[%s653 + $0x129] sm:$0xff]
    %v744 = vld [vmem:[%s653 + $0x139] sm:$0xff]
    %v745 = vld [vmem:[%s653 + $0x141] sm:$0xff]
    %v746 = vld [vmem:[%s653 + $0x151] sm:$0xff]
    %v747 = vld [vmem:[%s653 + $0x159] sm:$0xff]
    %v748 = vld [vmem:[%s653 + $0x169] sm:$0xff]
    %v749 = vld [vmem:[%s653 + $0x171] sm:$0xff]
    %v750 = vld [vmem:[%s653 + $0x1b1] sm:$0xff]
    %v751 = vld [vmem:[%s653 + $0x1b9] sm:$0xff]
    %v752 = vld [vmem:[%s653 + $0x1c9] sm:$0xff]
    %v753 = vld [vmem:[%s653 + $0x1d1] sm:$0xff]
    %v754 = vld [vmem:[%s653 + $0x1e1] sm:$0xff]
    %v755 = vld [vmem:[%s653 + $0x1e9] sm:$0xff]
    %v756 = vld [vmem:[%s653 + $0x1f9] sm:$0xff]
    %v757 = vld [vmem:[%s653 + $0x201] sm:$0xff]
    %v758 = vld [vmem:[%s653 + $0x211] sm:$0xff]
    %v759 = vld [vmem:[%s653 + $0x219] sm:$0xff]
    %v760 = vld [vmem:[%s653 + $0x229] sm:$0xff]
    %v761 = vld [vmem:[%s653 + $0x231] sm:$0xff]
    %v762 = vld [vmem:[%s653 + $0x241] sm:$0xff]
    %v763 = vld [vmem:[%s653 + $0x249] sm:$0xff]
    %v764 = vld [vmem:[%s653 + $0x259] sm:$0xff]
    %v765 = vld [vmem:[%s653 + $0x261] sm:$0xff]
    %v766 = vld [vmem:[%s653 + $0x271] sm:$0xff]
    %v767 = vld [vmem:[%s653 + $0x279] sm:$0xff]
    %v768 = vld [vmem:[%s653 + $0x289] sm:$0xff]
    %v769 = vld [vmem:[%s653 + $0x291] sm:$0xff]
    %v770 = vld [vmem:[%s653 + $0x2a1] sm:$0xff]
    %v771 = vld [vmem:[%s653 + $0x2a9] sm:$0xff]
    %v772 = vld [vmem:[%s653 + $0x2b9] sm:$0xff]
    %v773 = vld [vmem:[%s653 + $0x2c1] sm:$0xff]
    %v774 = vld [vmem:[%s653 + $0x2d1] sm:$0xff]
    %v775 = vld [vmem:[%s653 + $0x2d9] sm:$0xff]
    %v776 = vld [vmem:[%s653 + $0x2e9] sm:$0xff]
    %v777 = vld [vmem:[%s653 + $0x2f1] sm:$0xff]
    %v778 = vld [vmem:[%s653 + $0x301] sm:$0xff]
    %v779 = vld [vmem:[%s653 + $0x309] sm:$0xff]
    %v780 = vld [vmem:[%s653 + $0x319] sm:$0xff]
    %v781 = vld [vmem:[%s653 + $0x321] sm:$0xff]
    %v782 = vld [vmem:[%s653 + $0x2] sm:$0xff]
    %v783 = vld [vmem:[%s653 + $0xa] sm:$0xff]
    %v784 = vld [vmem:[%s653 + $0x1a] sm:$0xff]
    %v785 = vld [vmem:[%s653 + $0x22] sm:$0xff]
    %v786 = vld [vmem:[%s653 + $0x32] sm:$0xff]
    %v787 = vld [vmem:[%s653 + $0x3a] sm:$0xff]
    %v788 = vld [vmem:[%s653 + $0x4a] sm:$0xff]
    %v789 = vld [vmem:[%s653 + $0x52] sm:$0xff]
    %v790 = vld [vmem:[%s653 + $0x62] sm:$0xff]
    %v791 = vld [vmem:[%s653 + $0x6a] sm:$0xff]
    %v792 = vld [vmem:[%s653 + $0x7a] sm:$0xff]
    %v793 = vld [vmem:[%s653 + $0x82] sm:$0xff]
    %v794 = vld [vmem:[%s653 + $0x92] sm:$0xff]
    %v795 = vld [vmem:[%s653 + $0x9a] sm:$0xff]
    %v796 = vld [vmem:[%s653 + $0xaa] sm:$0xff]
    %v797 = vld [vmem:[%s653 + $0xb2] sm:$0xff]
    %v798 = vld [vmem:[%s653 + $0xc2] sm:$0xff]
    %v799 = vld [vmem:[%s653 + $0xca] sm:$0xff]
    %v800 = vld [vmem:[%s653 + $0xda] sm:$0xff]
    %v801 = vld [vmem:[%s653 + $0xe2] sm:$0xff]
    %v802 = vld [vmem:[%s653 + $0xf2] sm:$0xff]
    %v803 = vld [vmem:[%s653 + $0xfa] sm:$0xff]
    %v804 = vld [vmem:[%s653 + $0x10a] sm:$0xff]
    %v805 = vld [vmem:[%s653 + $0x112] sm:$0xff]
    %v806 = vld [vmem:[%s653 + $0x122] sm:$0xff]
    %v807 = vld [vmem:[%s653 + $0x12a] sm:$0xff]
    %v808 = vld [vmem:[%s653 + $0x13a] sm:$0xff]
    %v809 = vld [vmem:[%s653 + $0x142] sm:$0xff]
    %v810 = vld [vmem:[%s653 + $0x152] sm:$0xff]
    %v811 = vld [vmem:[%s653 + $0x15a] sm:$0xff]
    %v812 = vld [vmem:[%s653 + $0x16a] sm:$0xff]
    %v813 = vld [vmem:[%s653 + $0x172] sm:$0xff]
    %v814 = vld [vmem:[%s653 + $0x1b2] sm:$0xff]
    %v815 = vld [vmem:[%s653 + $0x1ba] sm:$0xff]
    %v816 = vld [vmem:[%s653 + $0x1ca] sm:$0xff]
    %v817 = vld [vmem:[%s653 + $0x1d2] sm:$0xff]
    %v818 = vld [vmem:[%s653 + $0x1e2] sm:$0xff]
    %v819 = vld [vmem:[%s653 + $0x1ea] sm:$0xff]
    %v820 = vld [vmem:[%s653 + $0x1fa] sm:$0xff]
    %v821 = vld [vmem:[%s653 + $0x202] sm:$0xff]
    %v822 = vld [vmem:[%s653 + $0x212] sm:$0xff]
    %v823 = vld [vmem:[%s653 + $0x21a] sm:$0xff]
    %v824 = vld [vmem:[%s653 + $0x22a] sm:$0xff]
    %v825 = vld [vmem:[%s653 + $0x232] sm:$0xff]
    %v826 = vld [vmem:[%s653 + $0x242] sm:$0xff]
    %v827 = vld [vmem:[%s653 + $0x24a] sm:$0xff]
    %v828 = vld [vmem:[%s653 + $0x25a] sm:$0xff]
    %v829 = vld [vmem:[%s653 + $0x262] sm:$0xff]
    %v830 = vld [vmem:[%s653 + $0x272] sm:$0xff]
    %v831 = vld [vmem:[%s653 + $0x27a] sm:$0xff]
    %v832 = vld [vmem:[%s653 + $0x28a] sm:$0xff]
    %v833 = vld [vmem:[%s653 + $0x292] sm:$0xff]
    %v834 = vld [vmem:[%s653 + $0x2a2] sm:$0xff]
    %v835 = vld [vmem:[%s653 + $0x2aa] sm:$0xff]
    %v836 = vld [vmem:[%s653 + $0x2ba] sm:$0xff]
    %v837 = vld [vmem:[%s653 + $0x2c2] sm:$0xff]
    %v838 = vld [vmem:[%s653 + $0x2d2] sm:$0xff]
    %v839 = vld [vmem:[%s653 + $0x2da] sm:$0xff]
    %v840 = vld [vmem:[%s653 + $0x2ea] sm:$0xff]
    %v841 = vld [vmem:[%s653 + $0x2f2] sm:$0xff]
    %v842 = vld [vmem:[%s653 + $0x302] sm:$0xff]
    %v843 = vld [vmem:[%s653 + $0x30a] sm:$0xff]
    %v844 = vld [vmem:[%s653 + $0x31a] sm:$0xff]
    %v845 = vld [vmem:[%s653 + $0x322] sm:$0xff]
    %910 = vrot.lane.b32.xlu0 %v333, 4
    %v911 = vpop.permute.xlu0 %910
    %912 = vrot.lane.b32.xlu0 %v334, 4
    %v913 = vpop.permute.xlu0 %912
    %914 = vrot.lane.b32.xlu0 %v335, 4
    %v915 = vpop.permute.xlu0 %914
    %916 = vrot.lane.b32.xlu0 %v336, 4
    %v917 = vpop.permute.xlu0 %916
    %918 = vrot.lane.b32.xlu0 %v337, 4
    %v919 = vpop.permute.xlu0 %918
    %920 = vrot.lane.b32.xlu0 %v338, 4
    %v921 = vpop.permute.xlu0 %920
    %922 = vrot.lane.b32.xlu0 %v339, 4
    %v923 = vpop.permute.xlu0 %922
    %924 = vrot.lane.b32.xlu0 %v340, 4
    %v925 = vpop.permute.xlu0 %924
    %926 = vrot.lane.b32.xlu0 %v341, 4
    %v927 = vpop.permute.xlu0 %926
    %928 = vrot.lane.b32.xlu0 %v342, 4
    %v929 = vpop.permute.xlu0 %928
    %930 = vrot.lane.b32.xlu0 %v343, 4
    %v931 = vpop.permute.xlu0 %930
    %932 = vrot.lane.b32.xlu0 %v344, 4
    %v933 = vpop.permute.xlu0 %932
    %934 = vrot.lane.b32.xlu0 %v345, 4
    %v935 = vpop.permute.xlu0 %934
    %936 = vrot.lane.b32.xlu0 %v346, 4
    %v937 = vpop.permute.xlu0 %936
    %938 = vrot.lane.b32.xlu0 %v347, 4
    %v939 = vpop.permute.xlu0 %938
    %940 = vrot.lane.b32.xlu0 %v348, 4
    %v941 = vpop.permute.xlu0 %940
    %942 = vrot.lane.b32.xlu0 %v349, 4
    %v943 = vpop.permute.xlu0 %942
    %944 = vrot.lane.b32.xlu0 %v350, 4
    %v945 = vpop.permute.xlu0 %944
    %946 = vrot.lane.b32.xlu0 %v351, 4
    %v947 = vpop.permute.xlu0 %946
    %948 = vrot.lane.b32.xlu0 %v352, 4
    %v949 = vpop.permute.xlu0 %948
    %950 = vrot.lane.b32.xlu0 %v353, 4
    %v951 = vpop.permute.xlu0 %950
    %952 = vrot.lane.b32.xlu0 %v354, 4
    %v953 = vpop.permute.xlu0 %952
    %954 = vrot.lane.b32.xlu0 %v355, 4
    %v955 = vpop.permute.xlu0 %954
    %956 = vrot.lane.b32.xlu0 %v356, 4
    %v957 = vpop.permute.xlu0 %956
    %958 = vrot.lane.b32.xlu0 %v357, 4
    %v959 = vpop.permute.xlu0 %958
    %960 = vrot.lane.b32.xlu0 %v358, 4
    %v961 = vpop.permute.xlu0 %960
    %962 = vrot.lane.b32.xlu0 %v359, 4
    %v963 = vpop.permute.xlu0 %962
    %964 = vrot.lane.b32.xlu0 %v360, 4
    %v965 = vpop.permute.xlu0 %964
    %966 = vrot.lane.b32.xlu0 %v361, 4
    %v967 = vpop.permute.xlu0 %966
    %968 = vrot.lane.b32.xlu0 %v362, 4
    %v969 = vpop.permute.xlu0 %968
    %970 = vrot.lane.b32.xlu0 %v363, 4
    %v971 = vpop.permute.xlu0 %970
    %972 = vrot.lane.b32.xlu0 %v364, 4
    %v973 = vpop.permute.xlu0 %972
    %974 = vrot.lane.b32.xlu0 %v365, 4
    %v975 = vpop.permute.xlu0 %974
    %976 = vrot.lane.b32.xlu0 %v366, 4
    %v977 = vpop.permute.xlu0 %976
    %978 = vrot.lane.b32.xlu0 %v367, 4
    %v979 = vpop.permute.xlu0 %978
    %980 = vrot.lane.b32.xlu0 %v368, 4
    %v981 = vpop.permute.xlu0 %980
    %982 = vrot.lane.b32.xlu0 %v369, 4
    %v983 = vpop.permute.xlu0 %982
    %984 = vrot.lane.b32.xlu0 %v370, 4
    %v985 = vpop.permute.xlu0 %984
    %986 = vrot.lane.b32.xlu0 %v371, 4
    %v987 = vpop.permute.xlu0 %986
    %988 = vrot.lane.b32.xlu0 %v372, 4
    %v989 = vpop.permute.xlu0 %988
    %990 = vrot.lane.b32.xlu0 %v373, 4
    %v991 = vpop.permute.xlu0 %990
    %992 = vrot.lane.b32.xlu0 %v374, 4
    %v993 = vpop.permute.xlu0 %992
    %994 = vrot.lane.b32.xlu0 %v375, 4
    %v995 = vpop.permute.xlu0 %994
    %996 = vrot.lane.b32.xlu0 %v376, 4
    %v997 = vpop.permute.xlu0 %996
    %998 = vrot.lane.b32.xlu0 %v377, 4
    %v999 = vpop.permute.xlu0 %998
    %1000 = vrot.lane.b32.xlu0 %v378, 4
    %v1001 = vpop.permute.xlu0 %1000
    %1002 = vrot.lane.b32.xlu0 %v379, 4
    %v1003 = vpop.permute.xlu0 %1002
    %1004 = vrot.lane.b32.xlu0 %v380, 4
    %v1005 = vpop.permute.xlu0 %1004
    %1006 = vrot.lane.b32.xlu0 %v381, 4
    %v1007 = vpop.permute.xlu0 %1006
    %1008 = vrot.lane.b32.xlu0 %v382, 4
    %v1009 = vpop.permute.xlu0 %1008
    %1010 = vrot.lane.b32.xlu0 %v383, 4
    %v1011 = vpop.permute.xlu0 %1010
    %1012 = vrot.lane.b32.xlu0 %v384, 4
    %v1013 = vpop.permute.xlu0 %1012
    %1014 = vrot.lane.b32.xlu0 %v385, 4
    %v1015 = vpop.permute.xlu0 %1014
    %1016 = vrot.lane.b32.xlu0 %v386, 4
    %v1017 = vpop.permute.xlu0 %1016
    %1018 = vrot.lane.b32.xlu0 %v387, 4
    %v1019 = vpop.permute.xlu0 %1018
    %1020 = vrot.lane.b32.xlu0 %v388, 4
    %v1021 = vpop.permute.xlu0 %1020
    %1022 = vrot.lane.b32.xlu0 %v389, 4
    %v1023 = vpop.permute.xlu0 %1022
    %1024 = vrot.lane.b32.xlu0 %v390, 4
    %v1025 = vpop.permute.xlu0 %1024
    %1026 = vrot.lane.b32.xlu0 %v391, 4
    %v1027 = vpop.permute.xlu0 %1026
    %1028 = vrot.lane.b32.xlu0 %v392, 4
    %v1029 = vpop.permute.xlu0 %1028
    %1030 = vrot.lane.b32.xlu0 %v393, 4
    %v1031 = vpop.permute.xlu0 %1030
    %1032 = vrot.lane.b32.xlu0 %v394, 4
    %v1033 = vpop.permute.xlu0 %1032
    %1034 = vrot.lane.b32.xlu0 %v395, 4
    %v1035 = vpop.permute.xlu0 %1034
    %1036 = vrot.lane.b32.xlu0 %v396, 4
    %v1037 = vpop.permute.xlu0 %1036
    %1166 = vrot.lane.b32.xlu0 %v397, 8
    %v1167 = vpop.permute.xlu0 %1166
    %1168 = vrot.lane.b32.xlu0 %v398, 8
    %v1169 = vpop.permute.xlu0 %1168
    %1170 = vrot.lane.b32.xlu0 %v399, 8
    %v1171 = vpop.permute.xlu0 %1170
    %1172 = vrot.lane.b32.xlu0 %v400, 8
    %v1173 = vpop.permute.xlu0 %1172
    %1174 = vrot.lane.b32.xlu0 %v401, 8
    %v1175 = vpop.permute.xlu0 %1174
    %1176 = vrot.lane.b32.xlu0 %v402, 8
    %v1177 = vpop.permute.xlu0 %1176
    %1178 = vrot.lane.b32.xlu0 %v403, 8
    %v1179 = vpop.permute.xlu0 %1178
    %1180 = vrot.lane.b32.xlu0 %v404, 8
    %v1181 = vpop.permute.xlu0 %1180
    %1182 = vrot.lane.b32.xlu0 %v405, 8
    %v1183 = vpop.permute.xlu0 %1182
    %1184 = vrot.lane.b32.xlu0 %v406, 8
    %v1185 = vpop.permute.xlu0 %1184
    %1186 = vrot.lane.b32.xlu0 %v407, 8
    %v1187 = vpop.permute.xlu0 %1186
    %1188 = vrot.lane.b32.xlu0 %v408, 8
    %v1189 = vpop.permute.xlu0 %1188
    %1190 = vrot.lane.b32.xlu0 %v409, 8
    %v1191 = vpop.permute.xlu0 %1190
    %1192 = vrot.lane.b32.xlu0 %v410, 8
    %v1193 = vpop.permute.xlu0 %1192
    %1194 = vrot.lane.b32.xlu0 %v411, 8
    %v1195 = vpop.permute.xlu0 %1194
    %1196 = vrot.lane.b32.xlu0 %v412, 8
    %v1197 = vpop.permute.xlu0 %1196
    %1198 = vrot.lane.b32.xlu0 %v413, 8
    %v1199 = vpop.permute.xlu0 %1198
    %1200 = vrot.lane.b32.xlu0 %v414, 8
    %v1201 = vpop.permute.xlu0 %1200
    %1202 = vrot.lane.b32.xlu0 %v415, 8
    %v1203 = vpop.permute.xlu0 %1202
    %1204 = vrot.lane.b32.xlu0 %v416, 8
    %v1205 = vpop.permute.xlu0 %1204
    %1206 = vrot.lane.b32.xlu0 %v417, 8
    %v1207 = vpop.permute.xlu0 %1206
    %1208 = vrot.lane.b32.xlu0 %v418, 8
    %v1209 = vpop.permute.xlu0 %1208
    %1210 = vrot.lane.b32.xlu0 %v419, 8
    %v1211 = vpop.permute.xlu0 %1210
    %1212 = vrot.lane.b32.xlu0 %v420, 8
    %v1213 = vpop.permute.xlu0 %1212
    %1214 = vrot.lane.b32.xlu0 %v421, 8
    %v1215 = vpop.permute.xlu0 %1214
    %1216 = vrot.lane.b32.xlu0 %v422, 8
    %v1217 = vpop.permute.xlu0 %1216
    %1218 = vrot.lane.b32.xlu0 %v423, 8
    %v1219 = vpop.permute.xlu0 %1218
    %1220 = vrot.lane.b32.xlu0 %v424, 8
    %v1221 = vpop.permute.xlu0 %1220
    %1222 = vrot.lane.b32.xlu0 %v425, 8
    %v1223 = vpop.permute.xlu0 %1222
    %1224 = vrot.lane.b32.xlu0 %v426, 8
    %v1225 = vpop.permute.xlu0 %1224
    %1226 = vrot.lane.b32.xlu0 %v427, 8
    %v1227 = vpop.permute.xlu0 %1226
    %1228 = vrot.lane.b32.xlu0 %v428, 8
    %v1229 = vpop.permute.xlu0 %1228
    %1230 = vrot.lane.b32.xlu0 %v429, 8
    %v1231 = vpop.permute.xlu0 %1230
    %1232 = vrot.lane.b32.xlu0 %v430, 8
    %v1233 = vpop.permute.xlu0 %1232
    %1234 = vrot.lane.b32.xlu0 %v431, 8
    %v1235 = vpop.permute.xlu0 %1234
    %1236 = vrot.lane.b32.xlu0 %v432, 8
    %v1237 = vpop.permute.xlu0 %1236
    %1238 = vrot.lane.b32.xlu0 %v433, 8
    %v1239 = vpop.permute.xlu0 %1238
    %1240 = vrot.lane.b32.xlu0 %v434, 8
    %v1241 = vpop.permute.xlu0 %1240
    %1242 = vrot.lane.b32.xlu0 %v435, 8
    %v1243 = vpop.permute.xlu0 %1242
    %1244 = vrot.lane.b32.xlu0 %v436, 8
    %v1245 = vpop.permute.xlu0 %1244
    %1246 = vrot.lane.b32.xlu0 %v437, 8
    %v1247 = vpop.permute.xlu0 %1246
    %1248 = vrot.lane.b32.xlu0 %v438, 8
    %v1249 = vpop.permute.xlu0 %1248
    %1250 = vrot.lane.b32.xlu0 %v439, 8
    %v1251 = vpop.permute.xlu0 %1250
    %1252 = vrot.lane.b32.xlu0 %v440, 8
    %v1253 = vpop.permute.xlu0 %1252
    %1254 = vrot.lane.b32.xlu0 %v441, 8
    %v1255 = vpop.permute.xlu0 %1254
    %1256 = vrot.lane.b32.xlu0 %v442, 8
    %v1257 = vpop.permute.xlu0 %1256
    %1258 = vrot.lane.b32.xlu0 %v443, 8
    %v1259 = vpop.permute.xlu0 %1258
    %1260 = vrot.lane.b32.xlu0 %v444, 8
    %v1261 = vpop.permute.xlu0 %1260
    %1262 = vrot.lane.b32.xlu0 %v445, 8
    %v1263 = vpop.permute.xlu0 %1262
    %1264 = vrot.lane.b32.xlu0 %v446, 8
    %v1265 = vpop.permute.xlu0 %1264
    %1266 = vrot.lane.b32.xlu0 %v447, 8
    %v1267 = vpop.permute.xlu0 %1266
    %1268 = vrot.lane.b32.xlu0 %v448, 8
    %v1269 = vpop.permute.xlu0 %1268
    %1270 = vrot.lane.b32.xlu0 %v449, 8
    %v1271 = vpop.permute.xlu0 %1270
    %1272 = vrot.lane.b32.xlu0 %v450, 8
    %v1273 = vpop.permute.xlu0 %1272
    %1274 = vrot.lane.b32.xlu0 %v451, 8
    %v1275 = vpop.permute.xlu0 %1274
    %1276 = vrot.lane.b32.xlu0 %v452, 8
    %v1277 = vpop.permute.xlu0 %1276
    %1278 = vrot.lane.b32.xlu0 %v453, 8
    %v1279 = vpop.permute.xlu0 %1278
    %1280 = vrot.lane.b32.xlu0 %v454, 8
    %v1281 = vpop.permute.xlu0 %1280
    %1282 = vrot.lane.b32.xlu0 %v455, 8
    %v1283 = vpop.permute.xlu0 %1282
    %1284 = vrot.lane.b32.xlu0 %v456, 8
    %v1285 = vpop.permute.xlu0 %1284
    %1286 = vrot.lane.b32.xlu0 %v457, 8
    %v1287 = vpop.permute.xlu0 %1286
    %1288 = vrot.lane.b32.xlu0 %v458, 8
    %v1289 = vpop.permute.xlu0 %1288
    %1290 = vrot.lane.b32.xlu0 %v459, 8
    %v1291 = vpop.permute.xlu0 %1290
    %1292 = vrot.lane.b32.xlu0 %v460, 8
    %v1293 = vpop.permute.xlu0 %1292
    %1422 = vrot.lane.b32.xlu0 %v461, 12
    %v1423 = vpop.permute.xlu0 %1422
    %1424 = vrot.lane.b32.xlu0 %v462, 12
    %v1425 = vpop.permute.xlu0 %1424
    %1426 = vrot.lane.b32.xlu0 %v463, 12
    %v1427 = vpop.permute.xlu0 %1426
    %1428 = vrot.lane.b32.xlu0 %v464, 12
    %v1429 = vpop.permute.xlu0 %1428
    %1430 = vrot.lane.b32.xlu0 %v465, 12
    %v1431 = vpop.permute.xlu0 %1430
    %1432 = vrot.lane.b32.xlu0 %v466, 12
    %v1433 = vpop.permute.xlu0 %1432
    %1434 = vrot.lane.b32.xlu0 %v467, 12
    %v1435 = vpop.permute.xlu0 %1434
    %1436 = vrot.lane.b32.xlu0 %v468, 12
    %v1437 = vpop.permute.xlu0 %1436
    %1438 = vrot.lane.b32.xlu0 %v469, 12
    %v1439 = vpop.permute.xlu0 %1438
    %1440 = vrot.lane.b32.xlu0 %v470, 12
    %v1441 = vpop.permute.xlu0 %1440
    %1442 = vrot.lane.b32.xlu0 %v471, 12
    %v1443 = vpop.permute.xlu0 %1442
    %1444 = vrot.lane.b32.xlu0 %v472, 12
    %v1445 = vpop.permute.xlu0 %1444
    %1446 = vrot.lane.b32.xlu0 %v473, 12
    %v1447 = vpop.permute.xlu0 %1446
    %1448 = vrot.lane.b32.xlu0 %v474, 12
    %v1449 = vpop.permute.xlu0 %1448
    %1450 = vrot.lane.b32.xlu0 %v475, 12
    %v1451 = vpop.permute.xlu0 %1450
    %1452 = vrot.lane.b32.xlu0 %v476, 12
    %v1453 = vpop.permute.xlu0 %1452
    %1454 = vrot.lane.b32.xlu0 %v477, 12
    %v1455 = vpop.permute.xlu0 %1454
    %1456 = vrot.lane.b32.xlu0 %v478, 12
    %v1457 = vpop.permute.xlu0 %1456
    %1458 = vrot.lane.b32.xlu0 %v479, 12
    %v1459 = vpop.permute.xlu0 %1458
    %1460 = vrot.lane.b32.xlu0 %v480, 12
    %v1461 = vpop.permute.xlu0 %1460
    %1462 = vrot.lane.b32.xlu0 %v481, 12
    %v1463 = vpop.permute.xlu0 %1462
    %1464 = vrot.lane.b32.xlu0 %v482, 12
    %v1465 = vpop.permute.xlu0 %1464
    %1466 = vrot.lane.b32.xlu0 %v483, 12
    %v1467 = vpop.permute.xlu0 %1466
    %1468 = vrot.lane.b32.xlu0 %v484, 12
    %v1469 = vpop.permute.xlu0 %1468
    %1470 = vrot.lane.b32.xlu0 %v485, 12
    %v1471 = vpop.permute.xlu0 %1470
    %1472 = vrot.lane.b32.xlu0 %v486, 12
    %v1473 = vpop.permute.xlu0 %1472
    %1474 = vrot.lane.b32.xlu0 %v487, 12
    %v1475 = vpop.permute.xlu0 %1474
    %1476 = vrot.lane.b32.xlu0 %v488, 12
    %v1477 = vpop.permute.xlu0 %1476
    %1478 = vrot.lane.b32.xlu0 %v489, 12
    %v1479 = vpop.permute.xlu0 %1478
    %1480 = vrot.lane.b32.xlu0 %v490, 12
    %v1481 = vpop.permute.xlu0 %1480
    %1482 = vrot.lane.b32.xlu0 %v491, 12
    %v1483 = vpop.permute.xlu0 %1482
    %1484 = vrot.lane.b32.xlu0 %v492, 12
    %v1485 = vpop.permute.xlu0 %1484
    %1486 = vrot.lane.b32.xlu0 %v493, 12
    %v1487 = vpop.permute.xlu0 %1486
    %1488 = vrot.lane.b32.xlu0 %v494, 12
    %v1489 = vpop.permute.xlu0 %1488
    %1490 = vrot.lane.b32.xlu0 %v495, 12
    %v1491 = vpop.permute.xlu0 %1490
    %1492 = vrot.lane.b32.xlu0 %v496, 12
    %v1493 = vpop.permute.xlu0 %1492
    %1494 = vrot.lane.b32.xlu0 %v497, 12
    %v1495 = vpop.permute.xlu0 %1494
    %1496 = vrot.lane.b32.xlu0 %v498, 12
    %v1497 = vpop.permute.xlu0 %1496
    %1498 = vrot.lane.b32.xlu0 %v499, 12
    %v1499 = vpop.permute.xlu0 %1498
    %1500 = vrot.lane.b32.xlu0 %v500, 12
    %v1501 = vpop.permute.xlu0 %1500
    %1502 = vrot.lane.b32.xlu0 %v501, 12
    %v1503 = vpop.permute.xlu0 %1502
    %1504 = vrot.lane.b32.xlu0 %v502, 12
    %v1505 = vpop.permute.xlu0 %1504
    %1506 = vrot.lane.b32.xlu0 %v503, 12
    %v1507 = vpop.permute.xlu0 %1506
    %1508 = vrot.lane.b32.xlu0 %v504, 12
    %v1509 = vpop.permute.xlu0 %1508
    %1510 = vrot.lane.b32.xlu0 %v505, 12
    %v1511 = vpop.permute.xlu0 %1510
    %1512 = vrot.lane.b32.xlu0 %v506, 12
    %v1513 = vpop.permute.xlu0 %1512
    %1514 = vrot.lane.b32.xlu0 %v507, 12
    %v1515 = vpop.permute.xlu0 %1514
    %1516 = vrot.lane.b32.xlu0 %v508, 12
    %v1517 = vpop.permute.xlu0 %1516
    %1518 = vrot.lane.b32.xlu0 %v509, 12
    %v1519 = vpop.permute.xlu0 %1518
    %1520 = vrot.lane.b32.xlu0 %v510, 12
    %v1521 = vpop.permute.xlu0 %1520
    %1522 = vrot.lane.b32.xlu0 %v511, 12
    %v1523 = vpop.permute.xlu0 %1522
    %1524 = vrot.lane.b32.xlu0 %v512, 12
    %v1525 = vpop.permute.xlu0 %1524
    %1526 = vrot.lane.b32.xlu0 %v513, 12
    %v1527 = vpop.permute.xlu0 %1526
    %1528 = vrot.lane.b32.xlu0 %v514, 12
    %v1529 = vpop.permute.xlu0 %1528
    %1530 = vrot.lane.b32.xlu0 %v515, 12
    %v1531 = vpop.permute.xlu0 %1530
    %1532 = vrot.lane.b32.xlu0 %v516, 12
    %v1533 = vpop.permute.xlu0 %1532
    %1534 = vrot.lane.b32.xlu0 %v517, 12
    %v1535 = vpop.permute.xlu0 %1534
    %1536 = vrot.lane.b32.xlu0 %v518, 12
    %v1537 = vpop.permute.xlu0 %1536
    %1538 = vrot.lane.b32.xlu0 %v519, 12
    %v1539 = vpop.permute.xlu0 %1538
    %1540 = vrot.lane.b32.xlu0 %v520, 12
    %v1541 = vpop.permute.xlu0 %1540
    %1542 = vrot.lane.b32.xlu0 %v521, 12
    %v1543 = vpop.permute.xlu0 %1542
    %1544 = vrot.lane.b32.xlu0 %v522, 12
    %v1545 = vpop.permute.xlu0 %1544
    %1546 = vrot.lane.b32.xlu0 %v523, 12
    %v1547 = vpop.permute.xlu0 %1546
    %1548 = vrot.lane.b32.xlu0 %v524, 12
    %v1549 = vpop.permute.xlu0 %1548
    %1678 = vrot.lane.b32.xlu0 %v525, 16
    %v1679 = vpop.permute.xlu0 %1678
    %1680 = vrot.lane.b32.xlu0 %v526, 16
    %v1681 = vpop.permute.xlu0 %1680
    %1682 = vrot.lane.b32.xlu0 %v527, 16
    %v1683 = vpop.permute.xlu0 %1682
    %1684 = vrot.lane.b32.xlu0 %v528, 16
    %v1685 = vpop.permute.xlu0 %1684
    %1686 = vrot.lane.b32.xlu0 %v529, 16
    %v1687 = vpop.permute.xlu0 %1686
    %1688 = vrot.lane.b32.xlu0 %v530, 16
    %v1689 = vpop.permute.xlu0 %1688
    %1690 = vrot.lane.b32.xlu0 %v531, 16
    %v1691 = vpop.permute.xlu0 %1690
    %1692 = vrot.lane.b32.xlu0 %v532, 16
    %v1693 = vpop.permute.xlu0 %1692
    %1694 = vrot.lane.b32.xlu0 %v533, 16
    %v1695 = vpop.permute.xlu0 %1694
    %1696 = vrot.lane.b32.xlu0 %v534, 16
    %v1697 = vpop.permute.xlu0 %1696
    %1698 = vrot.lane.b32.xlu0 %v535, 16
    %v1699 = vpop.permute.xlu0 %1698
    %1700 = vrot.lane.b32.xlu0 %v536, 16
    %v1701 = vpop.permute.xlu0 %1700
    %1702 = vrot.lane.b32.xlu0 %v537, 16
    %v1703 = vpop.permute.xlu0 %1702
    %1704 = vrot.lane.b32.xlu0 %v538, 16
    %v1705 = vpop.permute.xlu0 %1704
    %1706 = vrot.lane.b32.xlu0 %v539, 16
    %v1707 = vpop.permute.xlu0 %1706
    %1708 = vrot.lane.b32.xlu0 %v540, 16
    %v1709 = vpop.permute.xlu0 %1708
    %1710 = vrot.lane.b32.xlu0 %v541, 16
    %v1711 = vpop.permute.xlu0 %1710
    %1712 = vrot.lane.b32.xlu0 %v542, 16
    %v1713 = vpop.permute.xlu0 %1712
    %1714 = vrot.lane.b32.xlu0 %v543, 16
    %v1715 = vpop.permute.xlu0 %1714
    %1716 = vrot.lane.b32.xlu0 %v544, 16
    %v1717 = vpop.permute.xlu0 %1716
    %1718 = vrot.lane.b32.xlu0 %v545, 16
    %v1719 = vpop.permute.xlu0 %1718
    %1720 = vrot.lane.b32.xlu0 %v546, 16
    %v1721 = vpop.permute.xlu0 %1720
    %1722 = vrot.lane.b32.xlu0 %v547, 16
    %v1723 = vpop.permute.xlu0 %1722
    %1724 = vrot.lane.b32.xlu0 %v548, 16
    %v1725 = vpop.permute.xlu0 %1724
    %1726 = vrot.lane.b32.xlu0 %v549, 16
    %v1727 = vpop.permute.xlu0 %1726
    %1728 = vrot.lane.b32.xlu0 %v550, 16
    %v1729 = vpop.permute.xlu0 %1728
    %1730 = vrot.lane.b32.xlu0 %v551, 16
    %v1731 = vpop.permute.xlu0 %1730
    %1732 = vrot.lane.b32.xlu0 %v552, 16
    %v1733 = vpop.permute.xlu0 %1732
    %1734 = vrot.lane.b32.xlu0 %v553, 16
    %v1735 = vpop.permute.xlu0 %1734
    %1736 = vrot.lane.b32.xlu0 %v554, 16
    %v1737 = vpop.permute.xlu0 %1736
    %1738 = vrot.lane.b32.xlu0 %v555, 16
    %v1739 = vpop.permute.xlu0 %1738
    %1740 = vrot.lane.b32.xlu0 %v556, 16
    %v1741 = vpop.permute.xlu0 %1740
    %1742 = vrot.lane.b32.xlu0 %v557, 16
    %v1743 = vpop.permute.xlu0 %1742
    %1744 = vrot.lane.b32.xlu0 %v558, 16
    %v1745 = vpop.permute.xlu0 %1744
    %1746 = vrot.lane.b32.xlu0 %v559, 16
    %v1747 = vpop.permute.xlu0 %1746
    %1748 = vrot.lane.b32.xlu0 %v560, 16
    %v1749 = vpop.permute.xlu0 %1748
    %1750 = vrot.lane.b32.xlu0 %v561, 16
    %v1751 = vpop.permute.xlu0 %1750
    %1752 = vrot.lane.b32.xlu0 %v562, 16
    %v1753 = vpop.permute.xlu0 %1752
    %1754 = vrot.lane.b32.xlu0 %v563, 16
    %v1755 = vpop.permute.xlu0 %1754
    %1756 = vrot.lane.b32.xlu0 %v564, 16
    %v1757 = vpop.permute.xlu0 %1756
    %1758 = vrot.lane.b32.xlu0 %v565, 16
    %v1759 = vpop.permute.xlu0 %1758
    %1760 = vrot.lane.b32.xlu0 %v566, 16
    %v1761 = vpop.permute.xlu0 %1760
    %1762 = vrot.lane.b32.xlu0 %v567, 16
    %v1763 = vpop.permute.xlu0 %1762
    %1764 = vrot.lane.b32.xlu0 %v568, 16
    %v1765 = vpop.permute.xlu0 %1764
    %1766 = vrot.lane.b32.xlu0 %v569, 16
    %v1767 = vpop.permute.xlu0 %1766
    %1768 = vrot.lane.b32.xlu0 %v570, 16
    %v1769 = vpop.permute.xlu0 %1768
    %1770 = vrot.lane.b32.xlu0 %v571, 16
    %v1771 = vpop.permute.xlu0 %1770
    %1772 = vrot.lane.b32.xlu0 %v572, 16
    %v1773 = vpop.permute.xlu0 %1772
    %1774 = vrot.lane.b32.xlu0 %v573, 16
    %v1775 = vpop.permute.xlu0 %1774
    %1776 = vrot.lane.b32.xlu0 %v574, 16
    %v1777 = vpop.permute.xlu0 %1776
    %1778 = vrot.lane.b32.xlu0 %v575, 16
    %v1779 = vpop.permute.xlu0 %1778
    %1780 = vrot.lane.b32.xlu0 %v576, 16
    %v1781 = vpop.permute.xlu0 %1780
    %1782 = vrot.lane.b32.xlu0 %v577, 16
    %v1783 = vpop.permute.xlu0 %1782
    %1784 = vrot.lane.b32.xlu0 %v578, 16
    %v1785 = vpop.permute.xlu0 %1784
    %1786 = vrot.lane.b32.xlu0 %v579, 16
    %v1787 = vpop.permute.xlu0 %1786
    %1788 = vrot.lane.b32.xlu0 %v580, 16
    %v1789 = vpop.permute.xlu0 %1788
    %1790 = vrot.lane.b32.xlu0 %v581, 16
    %v1791 = vpop.permute.xlu0 %1790
    %1792 = vrot.lane.b32.xlu0 %v582, 16
    %v1793 = vpop.permute.xlu0 %1792
    %1794 = vrot.lane.b32.xlu0 %v583, 16
    %v1795 = vpop.permute.xlu0 %1794
    %1796 = vrot.lane.b32.xlu0 %v584, 16
    %v1797 = vpop.permute.xlu0 %1796
    %1798 = vrot.lane.b32.xlu0 %v585, 16
    %v1799 = vpop.permute.xlu0 %1798
    %1800 = vrot.lane.b32.xlu0 %v586, 16
    %v1801 = vpop.permute.xlu0 %1800
    %1802 = vrot.lane.b32.xlu0 %v587, 16
    %v1803 = vpop.permute.xlu0 %1802
    %1804 = vrot.lane.b32.xlu0 %v588, 16
    %v1805 = vpop.permute.xlu0 %1804
    %1934 = vrot.lane.b32.xlu0 %v589, 20
    %v1935 = vpop.permute.xlu0 %1934
    %1936 = vrot.lane.b32.xlu0 %v590, 20
    %v1937 = vpop.permute.xlu0 %1936
    %1938 = vrot.lane.b32.xlu0 %v591, 20
    %v1939 = vpop.permute.xlu0 %1938
    %1940 = vrot.lane.b32.xlu0 %v592, 20
    %v1941 = vpop.permute.xlu0 %1940
    %1942 = vrot.lane.b32.xlu0 %v593, 20
    %v1943 = vpop.permute.xlu0 %1942
    %1944 = vrot.lane.b32.xlu0 %v594, 20
    %v1945 = vpop.permute.xlu0 %1944
    %1946 = vrot.lane.b32.xlu0 %v595, 20
    %v1947 = vpop.permute.xlu0 %1946
    %1948 = vrot.lane.b32.xlu0 %v596, 20
    %v1949 = vpop.permute.xlu0 %1948
    %1950 = vrot.lane.b32.xlu0 %v597, 20
    %v1951 = vpop.permute.xlu0 %1950
    %1952 = vrot.lane.b32.xlu0 %v598, 20
    %v1953 = vpop.permute.xlu0 %1952
    %1954 = vrot.lane.b32.xlu0 %v599, 20
    %v1955 = vpop.permute.xlu0 %1954
    %1956 = vrot.lane.b32.xlu0 %v600, 20
    %v1957 = vpop.permute.xlu0 %1956
    %1958 = vrot.lane.b32.xlu0 %v601, 20
    %v1959 = vpop.permute.xlu0 %1958
    %1960 = vrot.lane.b32.xlu0 %v602, 20
    %v1961 = vpop.permute.xlu0 %1960
    %1962 = vrot.lane.b32.xlu0 %v603, 20
    %v1963 = vpop.permute.xlu0 %1962
    %1964 = vrot.lane.b32.xlu0 %v604, 20
    %v1965 = vpop.permute.xlu0 %1964
    %1966 = vrot.lane.b32.xlu0 %v605, 20
    %v1967 = vpop.permute.xlu0 %1966
    %1968 = vrot.lane.b32.xlu0 %v606, 20
    %v1969 = vpop.permute.xlu0 %1968
    %1970 = vrot.lane.b32.xlu0 %v607, 20
    %v1971 = vpop.permute.xlu0 %1970
    %1972 = vrot.lane.b32.xlu0 %v608, 20
    %v1973 = vpop.permute.xlu0 %1972
    %1974 = vrot.lane.b32.xlu0 %v609, 20
    %v1975 = vpop.permute.xlu0 %1974
    %1976 = vrot.lane.b32.xlu0 %v610, 20
    %v1977 = vpop.permute.xlu0 %1976
    %1978 = vrot.lane.b32.xlu0 %v611, 20
    %v1979 = vpop.permute.xlu0 %1978
    %1980 = vrot.lane.b32.xlu0 %v612, 20
    %v1981 = vpop.permute.xlu0 %1980
    %1982 = vrot.lane.b32.xlu0 %v613, 20
    %v1983 = vpop.permute.xlu0 %1982
    %1984 = vrot.lane.b32.xlu0 %v614, 20
    %v1985 = vpop.permute.xlu0 %1984
    %1986 = vrot.lane.b32.xlu0 %v615, 20
    %v1987 = vpop.permute.xlu0 %1986
    %1988 = vrot.lane.b32.xlu0 %v616, 20
    %v1989 = vpop.permute.xlu0 %1988
    %1990 = vrot.lane.b32.xlu0 %v617, 20
    %v1991 = vpop.permute.xlu0 %1990
    %1992 = vrot.lane.b32.xlu0 %v618, 20
    %v1993 = vpop.permute.xlu0 %1992
    %1994 = vrot.lane.b32.xlu0 %v619, 20
    %v1995 = vpop.permute.xlu0 %1994
    %1996 = vrot.lane.b32.xlu0 %v620, 20
    %v1997 = vpop.permute.xlu0 %1996
    %1998 = vrot.lane.b32.xlu0 %v621, 20
    %v1999 = vpop.permute.xlu0 %1998
    %2000 = vrot.lane.b32.xlu0 %v622, 20
    %v2001 = vpop.permute.xlu0 %2000
    %2002 = vrot.lane.b32.xlu0 %v623, 20
    %v2003 = vpop.permute.xlu0 %2002
    %2004 = vrot.lane.b32.xlu0 %v624, 20
    %v2005 = vpop.permute.xlu0 %2004
    %2006 = vrot.lane.b32.xlu0 %v625, 20
    %v2007 = vpop.permute.xlu0 %2006
    %2008 = vrot.lane.b32.xlu0 %v626, 20
    %v2009 = vpop.permute.xlu0 %2008
    %2010 = vrot.lane.b32.xlu0 %v627, 20
    %v2011 = vpop.permute.xlu0 %2010
    %2012 = vrot.lane.b32.xlu0 %v628, 20
    %v2013 = vpop.permute.xlu0 %2012
    %2014 = vrot.lane.b32.xlu0 %v629, 20
    %v2015 = vpop.permute.xlu0 %2014
    %2016 = vrot.lane.b32.xlu0 %v630, 20
    %v2017 = vpop.permute.xlu0 %2016
    %2018 = vrot.lane.b32.xlu0 %v631, 20
    %v2019 = vpop.permute.xlu0 %2018
    %2020 = vrot.lane.b32.xlu0 %v632, 20
    %v2021 = vpop.permute.xlu0 %2020
    %2022 = vrot.lane.b32.xlu0 %v633, 20
    %v2023 = vpop.permute.xlu0 %2022
    %2024 = vrot.lane.b32.xlu0 %v634, 20
    %v2025 = vpop.permute.xlu0 %2024
    %2026 = vrot.lane.b32.xlu0 %v635, 20
    %v2027 = vpop.permute.xlu0 %2026
    %2028 = vrot.lane.b32.xlu0 %v636, 20
    %v2029 = vpop.permute.xlu0 %2028
    %2030 = vrot.lane.b32.xlu0 %v637, 20
    %v2031 = vpop.permute.xlu0 %2030
    %2032 = vrot.lane.b32.xlu0 %v638, 20
    %v2033 = vpop.permute.xlu0 %2032
    %2034 = vrot.lane.b32.xlu0 %v639, 20
    %v2035 = vpop.permute.xlu0 %2034
    %2036 = vrot.lane.b32.xlu0 %v640, 20
    %v2037 = vpop.permute.xlu0 %2036
    %2038 = vrot.lane.b32.xlu0 %v641, 20
    %v2039 = vpop.permute.xlu0 %2038
    %2040 = vrot.lane.b32.xlu0 %v642, 20
    %v2041 = vpop.permute.xlu0 %2040
    %2042 = vrot.lane.b32.xlu0 %v643, 20
    %v2043 = vpop.permute.xlu0 %2042
    %2044 = vrot.lane.b32.xlu0 %v644, 20
    %v2045 = vpop.permute.xlu0 %2044
    %2046 = vrot.lane.b32.xlu0 %v645, 20
    %v2047 = vpop.permute.xlu0 %2046
    %2048 = vrot.lane.b32.xlu0 %v646, 20
    %v2049 = vpop.permute.xlu0 %2048
    %2050 = vrot.lane.b32.xlu0 %v647, 20
    %v2051 = vpop.permute.xlu0 %2050
    %2052 = vrot.lane.b32.xlu0 %v648, 20
    %v2053 = vpop.permute.xlu0 %2052
    %2054 = vrot.lane.b32.xlu0 %v649, 20
    %v2055 = vpop.permute.xlu0 %2054
    %2056 = vrot.lane.b32.xlu0 %v650, 20
    %v2057 = vpop.permute.xlu0 %2056
    %2058 = vrot.lane.b32.xlu0 %v651, 20
    %v2059 = vpop.permute.xlu0 %2058
    %2060 = vrot.lane.b32.xlu0 %v652, 20
    %v2061 = vpop.permute.xlu0 %2060
    %2190 = vrot.lane.b32.xlu0 %v654, 24
    %v2191 = vpop.permute.xlu0 %2190
    %2192 = vrot.lane.b32.xlu0 %v655, 24
    %v2193 = vpop.permute.xlu0 %2192
    %2194 = vrot.lane.b32.xlu0 %v656, 24
    %v2195 = vpop.permute.xlu0 %2194
    %2196 = vrot.lane.b32.xlu0 %v657, 24
    %v2197 = vpop.permute.xlu0 %2196
    %2198 = vrot.lane.b32.xlu0 %v658, 24
    %v2199 = vpop.permute.xlu0 %2198
    %2200 = vrot.lane.b32.xlu0 %v659, 24
    %v2201 = vpop.permute.xlu0 %2200
    %2202 = vrot.lane.b32.xlu0 %v660, 24
    %v2203 = vpop.permute.xlu0 %2202
    %2204 = vrot.lane.b32.xlu0 %v661, 24
    %v2205 = vpop.permute.xlu0 %2204
    %2206 = vrot.lane.b32.xlu0 %v662, 24
    %v2207 = vpop.permute.xlu0 %2206
    %2208 = vrot.lane.b32.xlu0 %v663, 24
    %v2209 = vpop.permute.xlu0 %2208
    %2210 = vrot.lane.b32.xlu0 %v664, 24
    %v2211 = vpop.permute.xlu0 %2210
    %2212 = vrot.lane.b32.xlu0 %v665, 24
    %v2213 = vpop.permute.xlu0 %2212
    %2214 = vrot.lane.b32.xlu0 %v666, 24
    %v2215 = vpop.permute.xlu0 %2214
    %2216 = vrot.lane.b32.xlu0 %v667, 24
    %v2217 = vpop.permute.xlu0 %2216
    %2218 = vrot.lane.b32.xlu0 %v668, 24
    %v2219 = vpop.permute.xlu0 %2218
    %2220 = vrot.lane.b32.xlu0 %v669, 24
    %v2221 = vpop.permute.xlu0 %2220
    %2222 = vrot.lane.b32.xlu0 %v670, 24
    %v2223 = vpop.permute.xlu0 %2222
    %2224 = vrot.lane.b32.xlu0 %v671, 24
    %v2225 = vpop.permute.xlu0 %2224
    %2226 = vrot.lane.b32.xlu0 %v672, 24
    %v2227 = vpop.permute.xlu0 %2226
    %2228 = vrot.lane.b32.xlu0 %v673, 24
    %v2229 = vpop.permute.xlu0 %2228
    %2230 = vrot.lane.b32.xlu0 %v674, 24
    %v2231 = vpop.permute.xlu0 %2230
    %2232 = vrot.lane.b32.xlu0 %v675, 24
    %v2233 = vpop.permute.xlu0 %2232
    %2234 = vrot.lane.b32.xlu0 %v676, 24
    %v2235 = vpop.permute.xlu0 %2234
    %2236 = vrot.lane.b32.xlu0 %v677, 24
    %v2237 = vpop.permute.xlu0 %2236
    %2238 = vrot.lane.b32.xlu0 %v678, 24
    %v2239 = vpop.permute.xlu0 %2238
    %2240 = vrot.lane.b32.xlu0 %v679, 24
    %v2241 = vpop.permute.xlu0 %2240
    %2242 = vrot.lane.b32.xlu0 %v680, 24
    %v2243 = vpop.permute.xlu0 %2242
    %2244 = vrot.lane.b32.xlu0 %v681, 24
    %v2245 = vpop.permute.xlu0 %2244
    %2246 = vrot.lane.b32.xlu0 %v682, 24
    %v2247 = vpop.permute.xlu0 %2246
    %2248 = vrot.lane.b32.xlu0 %v683, 24
    %v2249 = vpop.permute.xlu0 %2248
    %2250 = vrot.lane.b32.xlu0 %v684, 24
    %v2251 = vpop.permute.xlu0 %2250
    %2252 = vrot.lane.b32.xlu0 %v685, 24
    %v2253 = vpop.permute.xlu0 %2252
    %2254 = vrot.lane.b32.xlu0 %v686, 24
    %v2255 = vpop.permute.xlu0 %2254
    %2256 = vrot.lane.b32.xlu0 %v687, 24
    %v2257 = vpop.permute.xlu0 %2256
    %2258 = vrot.lane.b32.xlu0 %v688, 24
    %v2259 = vpop.permute.xlu0 %2258
    %2260 = vrot.lane.b32.xlu0 %v689, 24
    %v2261 = vpop.permute.xlu0 %2260
    %2262 = vrot.lane.b32.xlu0 %v690, 24
    %v2263 = vpop.permute.xlu0 %2262
    %2264 = vrot.lane.b32.xlu0 %v691, 24
    %v2265 = vpop.permute.xlu0 %2264
    %2266 = vrot.lane.b32.xlu0 %v692, 24
    %v2267 = vpop.permute.xlu0 %2266
    %2268 = vrot.lane.b32.xlu0 %v693, 24
    %v2269 = vpop.permute.xlu0 %2268
    %2270 = vrot.lane.b32.xlu0 %v694, 24
    %v2271 = vpop.permute.xlu0 %2270
    %2272 = vrot.lane.b32.xlu0 %v695, 24
    %v2273 = vpop.permute.xlu0 %2272
    %2274 = vrot.lane.b32.xlu0 %v696, 24
    %v2275 = vpop.permute.xlu0 %2274
    %2276 = vrot.lane.b32.xlu0 %v697, 24
    %v2277 = vpop.permute.xlu0 %2276
    %2278 = vrot.lane.b32.xlu0 %v698, 24
    %v2279 = vpop.permute.xlu0 %2278
    %2280 = vrot.lane.b32.xlu0 %v699, 24
    %v2281 = vpop.permute.xlu0 %2280
    %2282 = vrot.lane.b32.xlu0 %v700, 24
    %v2283 = vpop.permute.xlu0 %2282
    %2284 = vrot.lane.b32.xlu0 %v701, 24
    %v2285 = vpop.permute.xlu0 %2284
    %2286 = vrot.lane.b32.xlu0 %v702, 24
    %v2287 = vpop.permute.xlu0 %2286
    %2288 = vrot.lane.b32.xlu0 %v703, 24
    %v2289 = vpop.permute.xlu0 %2288
    %2290 = vrot.lane.b32.xlu0 %v704, 24
    %v2291 = vpop.permute.xlu0 %2290
    %2292 = vrot.lane.b32.xlu0 %v705, 24
    %v2293 = vpop.permute.xlu0 %2292
    %2294 = vrot.lane.b32.xlu0 %v706, 24
    %v2295 = vpop.permute.xlu0 %2294
    %2296 = vrot.lane.b32.xlu0 %v707, 24
    %v2297 = vpop.permute.xlu0 %2296
    %2298 = vrot.lane.b32.xlu0 %v708, 24
    %v2299 = vpop.permute.xlu0 %2298
    %2300 = vrot.lane.b32.xlu0 %v709, 24
    %v2301 = vpop.permute.xlu0 %2300
    %2302 = vrot.lane.b32.xlu0 %v710, 24
    %v2303 = vpop.permute.xlu0 %2302
    %2304 = vrot.lane.b32.xlu0 %v711, 24
    %v2305 = vpop.permute.xlu0 %2304
    %2306 = vrot.lane.b32.xlu0 %v712, 24
    %v2307 = vpop.permute.xlu0 %2306
    %2308 = vrot.lane.b32.xlu0 %v713, 24
    %v2309 = vpop.permute.xlu0 %2308
    %2310 = vrot.lane.b32.xlu0 %v714, 24
    %v2311 = vpop.permute.xlu0 %2310
    %2312 = vrot.lane.b32.xlu0 %v715, 24
    %v2313 = vpop.permute.xlu0 %2312
    %2314 = vrot.lane.b32.xlu0 %v716, 24
    %v2315 = vpop.permute.xlu0 %2314
    %2316 = vrot.lane.b32.xlu0 %v717, 24
    %v2317 = vpop.permute.xlu0 %2316
    %2446 = vrot.lane.b32.xlu0 %v718, 28
    %v2447 = vpop.permute.xlu0 %2446
    %2448 = vrot.lane.b32.xlu0 %v719, 28
    %v2449 = vpop.permute.xlu0 %2448
    %2450 = vrot.lane.b32.xlu0 %v720, 28
    %v2451 = vpop.permute.xlu0 %2450
    %2452 = vrot.lane.b32.xlu0 %v721, 28
    %v2453 = vpop.permute.xlu0 %2452
    %2454 = vrot.lane.b32.xlu0 %v722, 28
    %v2455 = vpop.permute.xlu0 %2454
    %2456 = vrot.lane.b32.xlu0 %v723, 28
    %v2457 = vpop.permute.xlu0 %2456
    %2458 = vrot.lane.b32.xlu0 %v724, 28
    %v2459 = vpop.permute.xlu0 %2458
    %2460 = vrot.lane.b32.xlu0 %v725, 28
    %v2461 = vpop.permute.xlu0 %2460
    %2462 = vrot.lane.b32.xlu0 %v726, 28
    %v2463 = vpop.permute.xlu0 %2462
    %2464 = vrot.lane.b32.xlu0 %v727, 28
    %v2465 = vpop.permute.xlu0 %2464
    %2466 = vrot.lane.b32.xlu0 %v728, 28
    %v2467 = vpop.permute.xlu0 %2466
    %2468 = vrot.lane.b32.xlu0 %v729, 28
    %v2469 = vpop.permute.xlu0 %2468
    %2470 = vrot.lane.b32.xlu0 %v730, 28
    %v2471 = vpop.permute.xlu0 %2470
    %2472 = vrot.lane.b32.xlu0 %v731, 28
    %v2473 = vpop.permute.xlu0 %2472
    %2474 = vrot.lane.b32.xlu0 %v732, 28
    %v2475 = vpop.permute.xlu0 %2474
    %2476 = vrot.lane.b32.xlu0 %v733, 28
    %v2477 = vpop.permute.xlu0 %2476
    %2478 = vrot.lane.b32.xlu0 %v734, 28
    %v2479 = vpop.permute.xlu0 %2478
    %2480 = vrot.lane.b32.xlu0 %v735, 28
    %v2481 = vpop.permute.xlu0 %2480
    %2482 = vrot.lane.b32.xlu0 %v736, 28
    %v2483 = vpop.permute.xlu0 %2482
    %2484 = vrot.lane.b32.xlu0 %v737, 28
    %v2485 = vpop.permute.xlu0 %2484
    %2486 = vrot.lane.b32.xlu0 %v738, 28
    %v2487 = vpop.permute.xlu0 %2486
    %2488 = vrot.lane.b32.xlu0 %v739, 28
    %v2489 = vpop.permute.xlu0 %2488
    %2490 = vrot.lane.b32.xlu0 %v740, 28
    %v2491 = vpop.permute.xlu0 %2490
    %2492 = vrot.lane.b32.xlu0 %v741, 28
    %v2493 = vpop.permute.xlu0 %2492
    %2494 = vrot.lane.b32.xlu0 %v742, 28
    %v2495 = vpop.permute.xlu0 %2494
    %2496 = vrot.lane.b32.xlu0 %v743, 28
    %v2497 = vpop.permute.xlu0 %2496
    %2498 = vrot.lane.b32.xlu0 %v744, 28
    %v2499 = vpop.permute.xlu0 %2498
    %2500 = vrot.lane.b32.xlu0 %v745, 28
    %v2501 = vpop.permute.xlu0 %2500
    %2502 = vrot.lane.b32.xlu0 %v746, 28
    %v2503 = vpop.permute.xlu0 %2502
    %2504 = vrot.lane.b32.xlu0 %v747, 28
    %v2505 = vpop.permute.xlu0 %2504
    %2506 = vrot.lane.b32.xlu0 %v748, 28
    %v2507 = vpop.permute.xlu0 %2506
    %2508 = vrot.lane.b32.xlu0 %v749, 28
    %v2509 = vpop.permute.xlu0 %2508
    %2510 = vrot.lane.b32.xlu0 %v750, 28
    %v2511 = vpop.permute.xlu0 %2510
    %2512 = vrot.lane.b32.xlu0 %v751, 28
    %v2513 = vpop.permute.xlu0 %2512
    %2514 = vrot.lane.b32.xlu0 %v752, 28
    %v2515 = vpop.permute.xlu0 %2514
    %2516 = vrot.lane.b32.xlu0 %v753, 28
    %v2517 = vpop.permute.xlu0 %2516
    %2518 = vrot.lane.b32.xlu0 %v754, 28
    %v2519 = vpop.permute.xlu0 %2518
    %2520 = vrot.lane.b32.xlu0 %v755, 28
    %v2521 = vpop.permute.xlu0 %2520
    %2522 = vrot.lane.b32.xlu0 %v756, 28
    %v2523 = vpop.permute.xlu0 %2522
    %2524 = vrot.lane.b32.xlu0 %v757, 28
    %v2525 = vpop.permute.xlu0 %2524
    %2526 = vrot.lane.b32.xlu0 %v758, 28
    %v2527 = vpop.permute.xlu0 %2526
    %2528 = vrot.lane.b32.xlu0 %v759, 28
    %v2529 = vpop.permute.xlu0 %2528
    %2530 = vrot.lane.b32.xlu0 %v760, 28
    %v2531 = vpop.permute.xlu0 %2530
    %2532 = vrot.lane.b32.xlu0 %v761, 28
    %v2533 = vpop.permute.xlu0 %2532
    %2534 = vrot.lane.b32.xlu0 %v762, 28
    %v2535 = vpop.permute.xlu0 %2534
    %2536 = vrot.lane.b32.xlu0 %v763, 28
    %v2537 = vpop.permute.xlu0 %2536
    %2538 = vrot.lane.b32.xlu0 %v764, 28
    %v2539 = vpop.permute.xlu0 %2538
    %2540 = vrot.lane.b32.xlu0 %v765, 28
    %v2541 = vpop.permute.xlu0 %2540
    %2542 = vrot.lane.b32.xlu0 %v766, 28
    %v2543 = vpop.permute.xlu0 %2542
    %2544 = vrot.lane.b32.xlu0 %v767, 28
    %v2545 = vpop.permute.xlu0 %2544
    %2546 = vrot.lane.b32.xlu0 %v768, 28
    %v2547 = vpop.permute.xlu0 %2546
    %2548 = vrot.lane.b32.xlu0 %v769, 28
    %v2549 = vpop.permute.xlu0 %2548
    %2550 = vrot.lane.b32.xlu0 %v770, 28
    %v2551 = vpop.permute.xlu0 %2550
    %2552 = vrot.lane.b32.xlu0 %v771, 28
    %v2553 = vpop.permute.xlu0 %2552
    %2554 = vrot.lane.b32.xlu0 %v772, 28
    %v2555 = vpop.permute.xlu0 %2554
    %2556 = vrot.lane.b32.xlu0 %v773, 28
    %v2557 = vpop.permute.xlu0 %2556
    %2558 = vrot.lane.b32.xlu0 %v774, 28
    %v2559 = vpop.permute.xlu0 %2558
    %2560 = vrot.lane.b32.xlu0 %v775, 28
    %v2561 = vpop.permute.xlu0 %2560
    %2562 = vrot.lane.b32.xlu0 %v776, 28
    %v2563 = vpop.permute.xlu0 %2562
    %2564 = vrot.lane.b32.xlu0 %v777, 28
    %v2565 = vpop.permute.xlu0 %2564
    %2566 = vrot.lane.b32.xlu0 %v778, 28
    %v2567 = vpop.permute.xlu0 %2566
    %2568 = vrot.lane.b32.xlu0 %v779, 28
    %v2569 = vpop.permute.xlu0 %2568
    %2570 = vrot.lane.b32.xlu0 %v780, 28
    %v2571 = vpop.permute.xlu0 %2570
    %2572 = vrot.lane.b32.xlu0 %v781, 28
    %v2573 = vpop.permute.xlu0 %2572
    %2702 = vrot.lane.b32.xlu0 %v782, 32
    %v2703 = vpop.permute.xlu0 %2702
    %2704 = vrot.lane.b32.xlu0 %v783, 32
    %v2705 = vpop.permute.xlu0 %2704
    %2706 = vrot.lane.b32.xlu0 %v784, 32
    %v2707 = vpop.permute.xlu0 %2706
    %2708 = vrot.lane.b32.xlu0 %v785, 32
    %v2709 = vpop.permute.xlu0 %2708
    %2710 = vrot.lane.b32.xlu0 %v786, 32
    %v2711 = vpop.permute.xlu0 %2710
    %2712 = vrot.lane.b32.xlu0 %v787, 32
    %v2713 = vpop.permute.xlu0 %2712
    %2714 = vrot.lane.b32.xlu0 %v788, 32
    %v2715 = vpop.permute.xlu0 %2714
    %2716 = vrot.lane.b32.xlu0 %v789, 32
    %v2717 = vpop.permute.xlu0 %2716
    %2718 = vrot.lane.b32.xlu0 %v790, 32
    %v2719 = vpop.permute.xlu0 %2718
    %2720 = vrot.lane.b32.xlu0 %v791, 32
    %v2721 = vpop.permute.xlu0 %2720
    %2722 = vrot.lane.b32.xlu0 %v792, 32
    %v2723 = vpop.permute.xlu0 %2722
    %2724 = vrot.lane.b32.xlu0 %v793, 32
    %v2725 = vpop.permute.xlu0 %2724
    %2726 = vrot.lane.b32.xlu0 %v794, 32
    %v2727 = vpop.permute.xlu0 %2726
    %2728 = vrot.lane.b32.xlu0 %v795, 32
    %v2729 = vpop.permute.xlu0 %2728
    %2730 = vrot.lane.b32.xlu0 %v796, 32
    %v2731 = vpop.permute.xlu0 %2730
    %2732 = vrot.lane.b32.xlu0 %v797, 32
    %v2733 = vpop.permute.xlu0 %2732
    %2734 = vrot.lane.b32.xlu0 %v798, 32
    %v2735 = vpop.permute.xlu0 %2734
    %2736 = vrot.lane.b32.xlu0 %v799, 32
    %v2737 = vpop.permute.xlu0 %2736
    %2738 = vrot.lane.b32.xlu0 %v800, 32
    %v2739 = vpop.permute.xlu0 %2738
    %2740 = vrot.lane.b32.xlu0 %v801, 32
    %v2741 = vpop.permute.xlu0 %2740
    %2742 = vrot.lane.b32.xlu0 %v802, 32
    %v2743 = vpop.permute.xlu0 %2742
    %2744 = vrot.lane.b32.xlu0 %v803, 32
    %v2745 = vpop.permute.xlu0 %2744
    %2746 = vrot.lane.b32.xlu0 %v804, 32
    %v2747 = vpop.permute.xlu0 %2746
    %2748 = vrot.lane.b32.xlu0 %v805, 32
    %v2749 = vpop.permute.xlu0 %2748
    %2750 = vrot.lane.b32.xlu0 %v806, 32
    %v2751 = vpop.permute.xlu0 %2750
    %2752 = vrot.lane.b32.xlu0 %v807, 32
    %v2753 = vpop.permute.xlu0 %2752
    %2754 = vrot.lane.b32.xlu0 %v808, 32
    %v2755 = vpop.permute.xlu0 %2754
    %2756 = vrot.lane.b32.xlu0 %v809, 32
    %v2757 = vpop.permute.xlu0 %2756
    %2758 = vrot.lane.b32.xlu0 %v810, 32
    %v2759 = vpop.permute.xlu0 %2758
    %2760 = vrot.lane.b32.xlu0 %v811, 32
    %v2761 = vpop.permute.xlu0 %2760
    %2762 = vrot.lane.b32.xlu0 %v812, 32
    %v2763 = vpop.permute.xlu0 %2762
    %2764 = vrot.lane.b32.xlu0 %v813, 32
    %v2765 = vpop.permute.xlu0 %2764
    %2766 = vrot.lane.b32.xlu0 %v814, 32
    %v2767 = vpop.permute.xlu0 %2766
    %2768 = vrot.lane.b32.xlu0 %v815, 32
    %v2769 = vpop.permute.xlu0 %2768
    %2770 = vrot.lane.b32.xlu0 %v816, 32
    %v2771 = vpop.permute.xlu0 %2770
    %2772 = vrot.lane.b32.xlu0 %v817, 32
    %v2773 = vpop.permute.xlu0 %2772
    %2774 = vrot.lane.b32.xlu0 %v818, 32
    %v2775 = vpop.permute.xlu0 %2774
    %2776 = vrot.lane.b32.xlu0 %v819, 32
    %v2777 = vpop.permute.xlu0 %2776
    %2778 = vrot.lane.b32.xlu0 %v820, 32
    %v2779 = vpop.permute.xlu0 %2778
    %2780 = vrot.lane.b32.xlu0 %v821, 32
    %v2781 = vpop.permute.xlu0 %2780
    %2782 = vrot.lane.b32.xlu0 %v822, 32
    %v2783 = vpop.permute.xlu0 %2782
    %2784 = vrot.lane.b32.xlu0 %v823, 32
    %v2785 = vpop.permute.xlu0 %2784
    %2786 = vrot.lane.b32.xlu0 %v824, 32
    %v2787 = vpop.permute.xlu0 %2786
    %2788 = vrot.lane.b32.xlu0 %v825, 32
    %v2789 = vpop.permute.xlu0 %2788
    %2790 = vrot.lane.b32.xlu0 %v826, 32
    %v2791 = vpop.permute.xlu0 %2790
    %2792 = vrot.lane.b32.xlu0 %v827, 32
    %v2793 = vpop.permute.xlu0 %2792
    %2794 = vrot.lane.b32.xlu0 %v828, 32
    %v2795 = vpop.permute.xlu0 %2794
    %2796 = vrot.lane.b32.xlu0 %v829, 32
    %v2797 = vpop.permute.xlu0 %2796
    %2798 = vrot.lane.b32.xlu0 %v830, 32
    %v2799 = vpop.permute.xlu0 %2798
    %2800 = vrot.lane.b32.xlu0 %v831, 32
    %v2801 = vpop.permute.xlu0 %2800
    %2802 = vrot.lane.b32.xlu0 %v832, 32
    %v2803 = vpop.permute.xlu0 %2802
    %2804 = vrot.lane.b32.xlu0 %v833, 32
    %v2805 = vpop.permute.xlu0 %2804
    %2806 = vrot.lane.b32.xlu0 %v834, 32
    %v2807 = vpop.permute.xlu0 %2806
    %2808 = vrot.lane.b32.xlu0 %v835, 32
    %v2809 = vpop.permute.xlu0 %2808
    %2810 = vrot.lane.b32.xlu0 %v836, 32
    %v2811 = vpop.permute.xlu0 %2810
    %2812 = vrot.lane.b32.xlu0 %v837, 32
    %v2813 = vpop.permute.xlu0 %2812
    %2814 = vrot.lane.b32.xlu0 %v838, 32
    %v2815 = vpop.permute.xlu0 %2814
    %2816 = vrot.lane.b32.xlu0 %v839, 32
    %v2817 = vpop.permute.xlu0 %2816
    %2818 = vrot.lane.b32.xlu0 %v840, 32
    %v2819 = vpop.permute.xlu0 %2818
    %2820 = vrot.lane.b32.xlu0 %v841, 32
    %v2821 = vpop.permute.xlu0 %2820
    %2822 = vrot.lane.b32.xlu0 %v842, 32
    %v2823 = vpop.permute.xlu0 %2822
    %2824 = vrot.lane.b32.xlu0 %v843, 32
    %v2825 = vpop.permute.xlu0 %2824
    %2826 = vrot.lane.b32.xlu0 %v844, 32
    %v2827 = vpop.permute.xlu0 %2826
    %2828 = vrot.lane.b32.xlu0 %v845, 32
    %v2829 = vpop.permute.xlu0 %2828
    %v2894 = vsel %vm30, %v269, %v911
    %v2895 = vsel %vm30, %v270, %v913
    %v2896 = vsel %vm30, %v271, %v915
    %v2897 = vsel %vm30, %v272, %v917
    %v2898 = vsel %vm30, %v273, %v919
    %v2899 = vsel %vm30, %v274, %v921
    %v2900 = vsel %vm30, %v275, %v923
    %v2901 = vsel %vm30, %v276, %v925
    %v2902 = vsel %vm30, %v277, %v927
    %v2903 = vsel %vm30, %v278, %v929
    %v2904 = vsel %vm30, %v279, %v931
    %v2905 = vsel %vm30, %v280, %v933
    %v2906 = vsel %vm30, %v281, %v935
    %v2907 = vsel %vm30, %v282, %v937
    %v2908 = vsel %vm30, %v283, %v939
    %v2909 = vsel %vm30, %v284, %v941
    %v2910 = vsel %vm30, %v285, %v943
    %v2911 = vsel %vm30, %v286, %v945
    %v2912 = vsel %vm30, %v287, %v947
    %v2913 = vsel %vm30, %v288, %v949
    %v2914 = vsel %vm30, %v289, %v951
    %v2915 = vsel %vm30, %v290, %v953
    %v2916 = vsel %vm30, %v291, %v955
    %v2917 = vsel %vm30, %v292, %v957
    %v2918 = vsel %vm30, %v293, %v959
    %v2919 = vsel %vm30, %v294, %v961
    %v2920 = vsel %vm30, %v295, %v963
    %v2921 = vsel %vm30, %v296, %v965
    %v2922 = vsel %vm30, %v297, %v967
    %v2923 = vsel %vm30, %v298, %v969
    %v2924 = vsel %vm30, %v299, %v971
    %v2925 = vsel %vm30, %v300, %v973
    %v2926 = vsel %vm30, %v301, %v975
    %v2927 = vsel %vm30, %v302, %v977
    %v2928 = vsel %vm30, %v303, %v979
    %v2929 = vsel %vm30, %v304, %v981
    %v2930 = vsel %vm30, %v305, %v983
    %v2931 = vsel %vm30, %v306, %v985
    %v2932 = vsel %vm30, %v307, %v987
    %v2933 = vsel %vm30, %v308, %v989
    %v2934 = vsel %vm30, %v309, %v991
    %v2935 = vsel %vm30, %v310, %v993
    %v2936 = vsel %vm30, %v311, %v995
    %v2937 = vsel %vm30, %v312, %v997
    %v2938 = vsel %vm30, %v313, %v999
    %v2939 = vsel %vm30, %v314, %v1001
    %v2940 = vsel %vm30, %v315, %v1003
    %v2941 = vsel %vm30, %v316, %v1005
    %v2942 = vsel %vm30, %v317, %v1007
    %v2943 = vsel %vm30, %v318, %v1009
    %v2944 = vsel %vm30, %v319, %v1011
    %v2945 = vsel %vm30, %v320, %v1013
    %v2946 = vsel %vm30, %v321, %v1015
    %v2947 = vsel %vm30, %v322, %v1017
    %v2948 = vsel %vm30, %v323, %v1019
    %v2949 = vsel %vm30, %v324, %v1021
    %v2950 = vsel %vm30, %v325, %v1023
    %v2951 = vsel %vm30, %v326, %v1025
    %v2952 = vsel %vm30, %v327, %v1027
    %v2953 = vsel %vm30, %v328, %v1029
    %v2954 = vsel %vm30, %v329, %v1031
    %v2955 = vsel %vm30, %v330, %v1033
    %v2956 = vsel %vm30, %v331, %v1035
    %v2957 = vsel %vm30, %v332, %v1037
    %vm2958 = vcmask 64512
    %v2959 = vsel %vm2958, %v2894, %v1167
    %v2960 = vsel %vm2958, %v2895, %v1169
    %v2961 = vsel %vm2958, %v2896, %v1171
    %v2962 = vsel %vm2958, %v2897, %v1173
    %v2963 = vsel %vm2958, %v2898, %v1175
    %v2964 = vsel %vm2958, %v2899, %v1177
    %v2965 = vsel %vm2958, %v2900, %v1179
    %v2966 = vsel %vm2958, %v2901, %v1181
    %v2967 = vsel %vm2958, %v2902, %v1183
    %v2968 = vsel %vm2958, %v2903, %v1185
    %v2969 = vsel %vm2958, %v2904, %v1187
    %v2970 = vsel %vm2958, %v2905, %v1189
    %v2971 = vsel %vm2958, %v2906, %v1191
    %v2972 = vsel %vm2958, %v2907, %v1193
    %v2973 = vsel %vm2958, %v2908, %v1195
    %v2974 = vsel %vm2958, %v2909, %v1197
    %v2975 = vsel %vm2958, %v2910, %v1199
    %v2976 = vsel %vm2958, %v2911, %v1201
    %v2977 = vsel %vm2958, %v2912, %v1203
    %v2978 = vsel %vm2958, %v2913, %v1205
    %v2979 = vsel %vm2958, %v2914, %v1207
    %v2980 = vsel %vm2958, %v2915, %v1209
    %v2981 = vsel %vm2958, %v2916, %v1211
    %v2982 = vsel %vm2958, %v2917, %v1213
    %v2983 = vsel %vm2958, %v2918, %v1215
    %v2984 = vsel %vm2958, %v2919, %v1217
    %v2985 = vsel %vm2958, %v2920, %v1219
    %v2986 = vsel %vm2958, %v2921, %v1221
    %v2987 = vsel %vm2958, %v2922, %v1223
    %v2988 = vsel %vm2958, %v2923, %v1225
    %v2989 = vsel %vm2958, %v2924, %v1227
    %v2990 = vsel %vm2958, %v2925, %v1229
    %v2991 = vsel %vm2958, %v2926, %v1231
    %v2992 = vsel %vm2958, %v2927, %v1233
    %v2993 = vsel %vm2958, %v2928, %v1235
    %v2994 = vsel %vm2958, %v2929, %v1237
    %v2995 = vsel %vm2958, %v2930, %v1239
    %v2996 = vsel %vm2958, %v2931, %v1241
    %v2997 = vsel %vm2958, %v2932, %v1243
    %v2998 = vsel %vm2958, %v2933, %v1245
    %v2999 = vsel %vm2958, %v2934, %v1247
    %v3000 = vsel %vm2958, %v2935, %v1249
    %v3001 = vsel %vm2958, %v2936, %v1251
    %v3002 = vsel %vm2958, %v2937, %v1253
    %v3003 = vsel %vm2958, %v2938, %v1255
    %v3004 = vsel %vm2958, %v2939, %v1257
    %v3005 = vsel %vm2958, %v2940, %v1259
    %v3006 = vsel %vm2958, %v2941, %v1261
    %v3007 = vsel %vm2958, %v2942, %v1263
    %v3008 = vsel %vm2958, %v2943, %v1265
    %v3009 = vsel %vm2958, %v2944, %v1267
    %v3010 = vsel %vm2958, %v2945, %v1269
    %v3011 = vsel %vm2958, %v2946, %v1271
    %v3012 = vsel %vm2958, %v2947, %v1273
    %v3013 = vsel %vm2958, %v2948, %v1275
    %v3014 = vsel %vm2958, %v2949, %v1277
    %v3015 = vsel %vm2958, %v2950, %v1279
    %v3016 = vsel %vm2958, %v2951, %v1281
    %v3017 = vsel %vm2958, %v2952, %v1283
    %v3018 = vsel %vm2958, %v2953, %v1285
    %v3019 = vsel %vm2958, %v2954, %v1287
    %v3020 = vsel %vm2958, %v2955, %v1289
    %v3021 = vsel %vm2958, %v2956, %v1291
    %v3022 = vsel %vm2958, %v2957, %v1293
    %vm3023 = vcmask 97280
    %v3024 = vsel %vm3023, %v2959, %v1423
    %v3025 = vsel %vm3023, %v2960, %v1425
    %v3026 = vsel %vm3023, %v2961, %v1427
    %v3027 = vsel %vm3023, %v2962, %v1429
    %v3028 = vsel %vm3023, %v2963, %v1431
    %v3029 = vsel %vm3023, %v2964, %v1433
    %v3030 = vsel %vm3023, %v2965, %v1435
    %v3031 = vsel %vm3023, %v2966, %v1437
    %v3032 = vsel %vm3023, %v2967, %v1439
    %v3033 = vsel %vm3023, %v2968, %v1441
    %v3034 = vsel %vm3023, %v2969, %v1443
    %v3035 = vsel %vm3023, %v2970, %v1445
    %v3036 = vsel %vm3023, %v2971, %v1447
    %v3037 = vsel %vm3023, %v2972, %v1449
    %v3038 = vsel %vm3023, %v2973, %v1451
    %v3039 = vsel %vm3023, %v2974, %v1453
    %v3040 = vsel %vm3023, %v2975, %v1455
    %v3041 = vsel %vm3023, %v2976, %v1457
    %v3042 = vsel %vm3023, %v2977, %v1459
    %v3043 = vsel %vm3023, %v2978, %v1461
    %v3044 = vsel %vm3023, %v2979, %v1463
    %v3045 = vsel %vm3023, %v2980, %v1465
    %v3046 = vsel %vm3023, %v2981, %v1467
    %v3047 = vsel %vm3023, %v2982, %v1469
    %v3048 = vsel %vm3023, %v2983, %v1471
    %v3049 = vsel %vm3023, %v2984, %v1473
    %v3050 = vsel %vm3023, %v2985, %v1475
    %v3051 = vsel %vm3023, %v2986, %v1477
    %v3052 = vsel %vm3023, %v2987, %v1479
    %v3053 = vsel %vm3023, %v2988, %v1481
    %v3054 = vsel %vm3023, %v2989, %v1483
    %v3055 = vsel %vm3023, %v2990, %v1485
    %v3056 = vsel %vm3023, %v2991, %v1487
    %v3057 = vsel %vm3023, %v2992, %v1489
    %v3058 = vsel %vm3023, %v2993, %v1491
    %v3059 = vsel %vm3023, %v2994, %v1493
    %v3060 = vsel %vm3023, %v2995, %v1495
    %v3061 = vsel %vm3023, %v2996, %v1497
    %v3062 = vsel %vm3023, %v2997, %v1499
    %v3063 = vsel %vm3023, %v2998, %v1501
    %v3064 = vsel %vm3023, %v2999, %v1503
    %v3065 = vsel %vm3023, %v3000, %v1505
    %v3066 = vsel %vm3023, %v3001, %v1507
    %v3067 = vsel %vm3023, %v3002, %v1509
    %v3068 = vsel %vm3023, %v3003, %v1511
    %v3069 = vsel %vm3023, %v3004, %v1513
    %v3070 = vsel %vm3023, %v3005, %v1515
    %v3071 = vsel %vm3023, %v3006, %v1517
    %v3072 = vsel %vm3023, %v3007, %v1519
    %v3073 = vsel %vm3023, %v3008, %v1521
    %v3074 = vsel %vm3023, %v3009, %v1523
    %v3075 = vsel %vm3023, %v3010, %v1525
    %v3076 = vsel %vm3023, %v3011, %v1527
    %v3077 = vsel %vm3023, %v3012, %v1529
    %v3078 = vsel %vm3023, %v3013, %v1531
    %v3079 = vsel %vm3023, %v3014, %v1533
    %v3080 = vsel %vm3023, %v3015, %v1535
    %v3081 = vsel %vm3023, %v3016, %v1537
    %v3082 = vsel %vm3023, %v3017, %v1539
    %v3083 = vsel %vm3023, %v3018, %v1541
    %v3084 = vsel %vm3023, %v3019, %v1543
    %v3085 = vsel %vm3023, %v3020, %v1545
    %v3086 = vsel %vm3023, %v3021, %v1547
    %v3087 = vsel %vm3023, %v3022, %v1549
    %vm3088 = vcmask 130048
    %v3089 = vsel %vm3088, %v3024, %v1679
    %v3090 = vsel %vm3088, %v3025, %v1681
    %v3091 = vsel %vm3088, %v3026, %v1683
    %v3092 = vsel %vm3088, %v3027, %v1685
    %v3093 = vsel %vm3088, %v3028, %v1687
    %v3094 = vsel %vm3088, %v3029, %v1689
    %v3095 = vsel %vm3088, %v3030, %v1691
    %v3096 = vsel %vm3088, %v3031, %v1693
    %v3097 = vsel %vm3088, %v3032, %v1695
    %v3098 = vsel %vm3088, %v3033, %v1697
    %v3099 = vsel %vm3088, %v3034, %v1699
    %v3100 = vsel %vm3088, %v3035, %v1701
    %v3101 = vsel %vm3088, %v3036, %v1703
    %v3102 = vsel %vm3088, %v3037, %v1705
    %v3103 = vsel %vm3088, %v3038, %v1707
    %v3104 = vsel %vm3088, %v3039, %v1709
    %v3105 = vsel %vm3088, %v3040, %v1711
    %v3106 = vsel %vm3088, %v3041, %v1713
    %v3107 = vsel %vm3088, %v3042, %v1715
    %v3108 = vsel %vm3088, %v3043, %v1717
    %v3109 = vsel %vm3088, %v3044, %v1719
    %v3110 = vsel %vm3088, %v3045, %v1721
    %v3111 = vsel %vm3088, %v3046, %v1723
    %v3112 = vsel %vm3088, %v3047, %v1725
    %v3113 = vsel %vm3088, %v3048, %v1727
    %v3114 = vsel %vm3088, %v3049, %v1729
    %v3115 = vsel %vm3088, %v3050, %v1731
    %v3116 = vsel %vm3088, %v3051, %v1733
    %v3117 = vsel %vm3088, %v3052, %v1735
    %v3118 = vsel %vm3088, %v3053, %v1737
    %v3119 = vsel %vm3088, %v3054, %v1739
    %v3120 = vsel %vm3088, %v3055, %v1741
    %v3121 = vsel %vm3088, %v3056, %v1743
    %v3122 = vsel %vm3088, %v3057, %v1745
    %v3123 = vsel %vm3088, %v3058, %v1747
    %v3124 = vsel %vm3088, %v3059, %v1749
    %v3125 = vsel %vm3088, %v3060, %v1751
    %v3126 = vsel %vm3088, %v3061, %v1753
    %v3127 = vsel %vm3088, %v3062, %v1755
    %v3128 = vsel %vm3088, %v3063, %v1757
    %v3129 = vsel %vm3088, %v3064, %v1759
    %v3130 = vsel %vm3088, %v3065, %v1761
    %v3131 = vsel %vm3088, %v3066, %v1763
    %v3132 = vsel %vm3088, %v3067, %v1765
    %v3133 = vsel %vm3088, %v3068, %v1767
    %v3134 = vsel %vm3088, %v3069, %v1769
    %v3135 = vsel %vm3088, %v3070, %v1771
    %v3136 = vsel %vm3088, %v3071, %v1773
    %v3137 = vsel %vm3088, %v3072, %v1775
    %v3138 = vsel %vm3088, %v3073, %v1777
    %v3139 = vsel %vm3088, %v3074, %v1779
    %v3140 = vsel %vm3088, %v3075, %v1781
    %v3141 = vsel %vm3088, %v3076, %v1783
    %v3142 = vsel %vm3088, %v3077, %v1785
    %v3143 = vsel %vm3088, %v3078, %v1787
    %v3144 = vsel %vm3088, %v3079, %v1789
    %v3145 = vsel %vm3088, %v3080, %v1791
    %v3146 = vsel %vm3088, %v3081, %v1793
    %v3147 = vsel %vm3088, %v3082, %v1795
    %v3148 = vsel %vm3088, %v3083, %v1797
    %v3149 = vsel %vm3088, %v3084, %v1799
    %v3150 = vsel %vm3088, %v3085, %v1801
    %v3151 = vsel %vm3088, %v3086, %v1803
    %v3152 = vsel %vm3088, %v3087, %v1805
    %vm3153 = vcmask 162816
    %v3154 = vsel %vm3153, %v3089, %v1935
    %v3155 = vsel %vm3153, %v3090, %v1937
    %v3156 = vsel %vm3153, %v3091, %v1939
    %v3157 = vsel %vm3153, %v3092, %v1941
    %v3158 = vsel %vm3153, %v3093, %v1943
    %v3159 = vsel %vm3153, %v3094, %v1945
    %v3160 = vsel %vm3153, %v3095, %v1947
    %v3161 = vsel %vm3153, %v3096, %v1949
    %v3162 = vsel %vm3153, %v3097, %v1951
    %v3163 = vsel %vm3153, %v3098, %v1953
    %v3164 = vsel %vm3153, %v3099, %v1955
    %v3165 = vsel %vm3153, %v3100, %v1957
    %v3166 = vsel %vm3153, %v3101, %v1959
    %v3167 = vsel %vm3153, %v3102, %v1961
    %v3168 = vsel %vm3153, %v3103, %v1963
    %v3169 = vsel %vm3153, %v3104, %v1965
    %v3170 = vsel %vm3153, %v3105, %v1967
    %v3171 = vsel %vm3153, %v3106, %v1969
    %v3172 = vsel %vm3153, %v3107, %v1971
    %v3173 = vsel %vm3153, %v3108, %v1973
    %v3174 = vsel %vm3153, %v3109, %v1975
    %v3175 = vsel %vm3153, %v3110, %v1977
    %v3176 = vsel %vm3153, %v3111, %v1979
    %v3177 = vsel %vm3153, %v3112, %v1981
    %v3178 = vsel %vm3153, %v3113, %v1983
    %v3179 = vsel %vm3153, %v3114, %v1985
    %v3180 = vsel %vm3153, %v3115, %v1987
    %v3181 = vsel %vm3153, %v3116, %v1989
    %v3182 = vsel %vm3153, %v3117, %v1991
    %v3183 = vsel %vm3153, %v3118, %v1993
    %v3184 = vsel %vm3153, %v3119, %v1995
    %v3185 = vsel %vm3153, %v3120, %v1997
    %v3186 = vsel %vm3153, %v3121, %v1999
    %v3187 = vsel %vm3153, %v3122, %v2001
    %v3188 = vsel %vm3153, %v3123, %v2003
    %v3189 = vsel %vm3153, %v3124, %v2005
    %v3190 = vsel %vm3153, %v3125, %v2007
    %v3191 = vsel %vm3153, %v3126, %v2009
    %v3192 = vsel %vm3153, %v3127, %v2011
    %v3193 = vsel %vm3153, %v3128, %v2013
    %v3194 = vsel %vm3153, %v3129, %v2015
    %v3195 = vsel %vm3153, %v3130, %v2017
    %v3196 = vsel %vm3153, %v3131, %v2019
    %v3197 = vsel %vm3153, %v3132, %v2021
    %v3198 = vsel %vm3153, %v3133, %v2023
    %v3199 = vsel %vm3153, %v3134, %v2025
    %v3200 = vsel %vm3153, %v3135, %v2027
    %v3201 = vsel %vm3153, %v3136, %v2029
    %v3202 = vsel %vm3153, %v3137, %v2031
    %v3203 = vsel %vm3153, %v3138, %v2033
    %v3204 = vsel %vm3153, %v3139, %v2035
    %v3205 = vsel %vm3153, %v3140, %v2037
    %v3206 = vsel %vm3153, %v3141, %v2039
    %v3207 = vsel %vm3153, %v3142, %v2041
    %v3208 = vsel %vm3153, %v3143, %v2043
    %v3209 = vsel %vm3153, %v3144, %v2045
    %v3210 = vsel %vm3153, %v3145, %v2047
    %v3211 = vsel %vm3153, %v3146, %v2049
    %v3212 = vsel %vm3153, %v3147, %v2051
    %v3213 = vsel %vm3153, %v3148, %v2053
    %v3214 = vsel %vm3153, %v3149, %v2055
    %v3215 = vsel %vm3153, %v3150, %v2057
    %v3216 = vsel %vm3153, %v3151, %v2059
    %v3217 = vsel %vm3153, %v3152, %v2061
    %vm3218 = vcmask 195584
    %v3219 = vsel %vm3218, %v3154, %v2191
    %v3220 = vsel %vm3218, %v3155, %v2193
    %v3221 = vsel %vm3218, %v3156, %v2195
    %v3222 = vsel %vm3218, %v3157, %v2197
    %v3223 = vsel %vm3218, %v3158, %v2199
    %v3224 = vsel %vm3218, %v3159, %v2201
    %v3225 = vsel %vm3218, %v3160, %v2203
    %v3226 = vsel %vm3218, %v3161, %v2205
    %v3227 = vsel %vm3218, %v3162, %v2207
    %v3228 = vsel %vm3218, %v3163, %v2209
    %v3229 = vsel %vm3218, %v3164, %v2211
    %v3230 = vsel %vm3218, %v3165, %v2213
    %v3231 = vsel %vm3218, %v3166, %v2215
    %v3232 = vsel %vm3218, %v3167, %v2217
    %v3233 = vsel %vm3218, %v3168, %v2219
    %v3234 = vsel %vm3218, %v3169, %v2221
    %v3235 = vsel %vm3218, %v3170, %v2223
    %v3236 = vsel %vm3218, %v3171, %v2225
    %v3237 = vsel %vm3218, %v3172, %v2227
    %v3238 = vsel %vm3218, %v3173, %v2229
    %v3239 = vsel %vm3218, %v3174, %v2231
    %v3240 = vsel %vm3218, %v3175, %v2233
    %v3241 = vsel %vm3218, %v3176, %v2235
    %v3242 = vsel %vm3218, %v3177, %v2237
    %v3243 = vsel %vm3218, %v3178, %v2239
    %v3244 = vsel %vm3218, %v3179, %v2241
    %v3245 = vsel %vm3218, %v3180, %v2243
    %v3246 = vsel %vm3218, %v3181, %v2245
    %v3247 = vsel %vm3218, %v3182, %v2247
    %v3248 = vsel %vm3218, %v3183, %v2249
    %v3249 = vsel %vm3218, %v3184, %v2251
    %v3250 = vsel %vm3218, %v3185, %v2253
    %v3251 = vsel %vm3218, %v3186, %v2255
    %v3252 = vsel %vm3218, %v3187, %v2257
    %v3253 = vsel %vm3218, %v3188, %v2259
    %v3254 = vsel %vm3218, %v3189, %v2261
    %v3255 = vsel %vm3218, %v3190, %v2263
    %v3256 = vsel %vm3218, %v3191, %v2265
    %v3257 = vsel %vm3218, %v3192, %v2267
    %v3258 = vsel %vm3218, %v3193, %v2269
    %v3259 = vsel %vm3218, %v3194, %v2271
    %v3260 = vsel %vm3218, %v3195, %v2273
    %v3261 = vsel %vm3218, %v3196, %v2275
    %v3262 = vsel %vm3218, %v3197, %v2277
    %v3263 = vsel %vm3218, %v3198, %v2279
    %v3264 = vsel %vm3218, %v3199, %v2281
    %v3265 = vsel %vm3218, %v3200, %v2283
    %v3266 = vsel %vm3218, %v3201, %v2285
    %v3267 = vsel %vm3218, %v3202, %v2287
    %v3268 = vsel %vm3218, %v3203, %v2289
    %v3269 = vsel %vm3218, %v3204, %v2291
    %v3270 = vsel %vm3218, %v3205, %v2293
    %v3271 = vsel %vm3218, %v3206, %v2295
    %v3272 = vsel %vm3218, %v3207, %v2297
    %v3273 = vsel %vm3218, %v3208, %v2299
    %v3274 = vsel %vm3218, %v3209, %v2301
    %v3275 = vsel %vm3218, %v3210, %v2303
    %v3276 = vsel %vm3218, %v3211, %v2305
    %v3277 = vsel %vm3218, %v3212, %v2307
    %v3278 = vsel %vm3218, %v3213, %v2309
    %v3279 = vsel %vm3218, %v3214, %v2311
    %v3280 = vsel %vm3218, %v3215, %v2313
    %v3281 = vsel %vm3218, %v3216, %v2315
    %v3282 = vsel %vm3218, %v3217, %v2317
    %vm3283 = vcmask 228352
    %v3284 = vsel %vm3283, %v3219, %v2447
    %v3285 = vsel %vm3283, %v3220, %v2449
    %v3286 = vsel %vm3283, %v3221, %v2451
    %v3287 = vsel %vm3283, %v3222, %v2453
    %v3288 = vsel %vm3283, %v3223, %v2455
    %v3289 = vsel %vm3283, %v3224, %v2457
    %v3290 = vsel %vm3283, %v3225, %v2459
    %v3291 = vsel %vm3283, %v3226, %v2461
    %v3292 = vsel %vm3283, %v3227, %v2463
    %v3293 = vsel %vm3283, %v3228, %v2465
    %v3294 = vsel %vm3283, %v3229, %v2467
    %v3295 = vsel %vm3283, %v3230, %v2469
    %v3296 = vsel %vm3283, %v3231, %v2471
    %v3297 = vsel %vm3283, %v3232, %v2473
    %v3298 = vsel %vm3283, %v3233, %v2475
    %v3299 = vsel %vm3283, %v3234, %v2477
    %v3300 = vsel %vm3283, %v3235, %v2479
    %v3301 = vsel %vm3283, %v3236, %v2481
    %v3302 = vsel %vm3283, %v3237, %v2483
    %v3303 = vsel %vm3283, %v3238, %v2485
    %v3304 = vsel %vm3283, %v3239, %v2487
    %v3305 = vsel %vm3283, %v3240, %v2489
    %v3306 = vsel %vm3283, %v3241, %v2491
    %v3307 = vsel %vm3283, %v3242, %v2493
    %v3308 = vsel %vm3283, %v3243, %v2495
    %v3309 = vsel %vm3283, %v3244, %v2497
    %v3310 = vsel %vm3283, %v3245, %v2499
    %v3311 = vsel %vm3283, %v3246, %v2501
    %v3312 = vsel %vm3283, %v3247, %v2503
    %v3313 = vsel %vm3283, %v3248, %v2505
    %v3314 = vsel %vm3283, %v3249, %v2507
    %v3315 = vsel %vm3283, %v3250, %v2509
    %v3316 = vsel %vm3283, %v3251, %v2511
    %v3317 = vsel %vm3283, %v3252, %v2513
    %v3318 = vsel %vm3283, %v3253, %v2515
    %v3319 = vsel %vm3283, %v3254, %v2517
    %v3320 = vsel %vm3283, %v3255, %v2519
    %v3321 = vsel %vm3283, %v3256, %v2521
    %v3322 = vsel %vm3283, %v3257, %v2523
    %v3323 = vsel %vm3283, %v3258, %v2525
    %v3324 = vsel %vm3283, %v3259, %v2527
    %v3325 = vsel %vm3283, %v3260, %v2529
    %v3326 = vsel %vm3283, %v3261, %v2531
    %v3327 = vsel %vm3283, %v3262, %v2533
    %v3328 = vsel %vm3283, %v3263, %v2535
    %v3329 = vsel %vm3283, %v3264, %v2537
    %v3330 = vsel %vm3283, %v3265, %v2539
    %v3331 = vsel %vm3283, %v3266, %v2541
    %v3332 = vsel %vm3283, %v3267, %v2543
    %v3333 = vsel %vm3283, %v3268, %v2545
    %v3334 = vsel %vm3283, %v3269, %v2547
    %v3335 = vsel %vm3283, %v3270, %v2549
    %v3336 = vsel %vm3283, %v3271, %v2551
    %v3337 = vsel %vm3283, %v3272, %v2553
    %v3338 = vsel %vm3283, %v3273, %v2555
    %v3339 = vsel %vm3283, %v3274, %v2557
    %v3340 = vsel %vm3283, %v3275, %v2559
    %v3341 = vsel %vm3283, %v3276, %v2561
    %v3342 = vsel %vm3283, %v3277, %v2563
    %v3343 = vsel %vm3283, %v3278, %v2565
    %v3344 = vsel %vm3283, %v3279, %v2567
    %v3345 = vsel %vm3283, %v3280, %v2569
    %v3346 = vsel %vm3283, %v3281, %v2571
    %v3347 = vsel %vm3283, %v3282, %v2573
    %vm3348 = vcmask 261120
    %v3349 = vsel %vm3348, %v3284, %v2703
    %v3350 = vsel %vm3348, %v3285, %v2705
    %v3351 = vsel %vm3348, %v3286, %v2707
    %v3352 = vsel %vm3348, %v3287, %v2709
    %v3353 = vsel %vm3348, %v3288, %v2711
    %v3354 = vsel %vm3348, %v3289, %v2713
    %v3355 = vsel %vm3348, %v3290, %v2715
    %v3356 = vsel %vm3348, %v3291, %v2717
    %v3357 = vsel %vm3348, %v3292, %v2719
    %v3358 = vsel %vm3348, %v3293, %v2721
    %v3359 = vsel %vm3348, %v3294, %v2723
    %v3360 = vsel %vm3348, %v3295, %v2725
    %v3361 = vsel %vm3348, %v3296, %v2727
    %v3362 = vsel %vm3348, %v3297, %v2729
    %v3363 = vsel %vm3348, %v3298, %v2731
    %v3364 = vsel %vm3348, %v3299, %v2733
    %v3365 = vsel %vm3348, %v3300, %v2735
    %v3366 = vsel %vm3348, %v3301, %v2737
    %v3367 = vsel %vm3348, %v3302, %v2739
    %v3368 = vsel %vm3348, %v3303, %v2741
    %v3369 = vsel %vm3348, %v3304, %v2743
    %v3370 = vsel %vm3348, %v3305, %v2745
    %v3371 = vsel %vm3348, %v3306, %v2747
    %v3372 = vsel %vm3348, %v3307, %v2749
    %v3373 = vsel %vm3348, %v3308, %v2751
    %v3374 = vsel %vm3348, %v3309, %v2753
    %v3375 = vsel %vm3348, %v3310, %v2755
    %v3376 = vsel %vm3348, %v3311, %v2757
    %v3377 = vsel %vm3348, %v3312, %v2759
    %v3378 = vsel %vm3348, %v3313, %v2761
    %v3379 = vsel %vm3348, %v3314, %v2763
    %v3380 = vsel %vm3348, %v3315, %v2765
    %v3381 = vsel %vm3348, %v3316, %v2767
    %v3382 = vsel %vm3348, %v3317, %v2769
    %v3383 = vsel %vm3348, %v3318, %v2771
    %v3384 = vsel %vm3348, %v3319, %v2773
    %v3385 = vsel %vm3348, %v3320, %v2775
    %v3386 = vsel %vm3348, %v3321, %v2777
    %v3387 = vsel %vm3348, %v3322, %v2779
    %v3388 = vsel %vm3348, %v3323, %v2781
    %v3389 = vsel %vm3348, %v3324, %v2783
    %v3390 = vsel %vm3348, %v3325, %v2785
    %v3391 = vsel %vm3348, %v3326, %v2787
    %v3392 = vsel %vm3348, %v3327, %v2789
    %v3393 = vsel %vm3348, %v3328, %v2791
    %v3394 = vsel %vm3348, %v3329, %v2793
    %v3395 = vsel %vm3348, %v3330, %v2795
    %v3396 = vsel %vm3348, %v3331, %v2797
    %v3397 = vsel %vm3348, %v3332, %v2799
    %v3398 = vsel %vm3348, %v3333, %v2801
    %v3399 = vsel %vm3348, %v3334, %v2803
    %v3400 = vsel %vm3348, %v3335, %v2805
    %v3401 = vsel %vm3348, %v3336, %v2807
    %v3402 = vsel %vm3348, %v3337, %v2809
    %v3403 = vsel %vm3348, %v3338, %v2811
    %v3404 = vsel %vm3348, %v3339, %v2813
    %v3405 = vsel %vm3348, %v3340, %v2815
    %v3406 = vsel %vm3348, %v3341, %v2817
    %v3407 = vsel %vm3348, %v3342, %v2819
    %v3408 = vsel %vm3348, %v3343, %v2821
    %v3409 = vsel %vm3348, %v3344, %v2823
    %v3410 = vsel %vm3348, %v3345, %v2825
    %v3411 = vsel %vm3348, %v3346, %v2827
    %v3412 = vsel %vm3348, %v3347, %v2829
    %v3413 = vld [vmem:[%s1] sm:$0xff]
    %v3414 = vld [vmem:[%s1 + $0x8] sm:$0xff]
    %v3415 = vld [vmem:[%s1 + $0x10] sm:$0xff]
    %v3416 = vld [vmem:[%s1 + $0x18] sm:$0xff]
    %v3417 = vld [vmem:[%s1 + $0x20] sm:$0xf]
    %v3418 = vld [vmem:[%s2] sm:$0x1]
    %v3420 = vlaneseq
    %v3421 = vshrl.u32 %v3420, 7
    %v3422 = vsub.s32 0, %v3421
    %v3423 = vrot.slane %v3418, %v3422
    %vm3425 = vcmask 293888
    %v3427 = vsel %vm3425, %v3349, 0
    %v3430 = vsel %vm3425, %v3350, 0
    %v3433 = vsel %vm3425, %v3351, 0
    %v3436 = vsel %vm3425, %v3352, 0
    %v3439 = vsel %vm3425, %v3353, 0
    %v3442 = vsel %vm3425, %v3354, 0
    %v3445 = vsel %vm3425, %v3355, 0
    %v3448 = vsel %vm3425, %v3356, 0
    %v3451 = vsel %vm3425, %v3357, 0
    %v3454 = vsel %vm3425, %v3358, 0
    %v3457 = vsel %vm3425, %v3359, 0
    %v3460 = vsel %vm3425, %v3360, 0
    %v3463 = vsel %vm3425, %v3361, 0
    %v3466 = vsel %vm3425, %v3362, 0
    %v3469 = vsel %vm3425, %v3363, 0
    %v3472 = vsel %vm3425, %v3364, 0
    %v3475 = vsel %vm3425, %v3365, 0
    %v3478 = vsel %vm3425, %v3366, 0
    %v3481 = vsel %vm3425, %v3367, 0
    %v3484 = vsel %vm3425, %v3368, 0
    %v3487 = vsel %vm3425, %v3369, 0
    %v3490 = vsel %vm3425, %v3370, 0
    %v3493 = vsel %vm3425, %v3371, 0
    %v3496 = vsel %vm3425, %v3372, 0
    %v3499 = vsel %vm3425, %v3373, 0
    %v3502 = vsel %vm3425, %v3374, 0
    %v3505 = vsel %vm3425, %v3375, 0
    %v3508 = vsel %vm3425, %v3376, 0
    %v3511 = vsel %vm3425, %v3377, 0
    %v3514 = vsel %vm3425, %v3378, 0
    %v3517 = vsel %vm3425, %v3379, 0
    %v3520 = vsel %vm3425, %v3380, 0
    %v3523 = vsel %vm3425, %v3381, 0
    %v3526 = vsel %vm3425, %v3382, 0
    %v3529 = vsel %vm3425, %v3383, 0
    %v3532 = vsel %vm3425, %v3384, 0
    %v3535 = vsel %vm3425, %v3385, 0
    %v3538 = vsel %vm3425, %v3386, 0
    %v3541 = vsel %vm3425, %v3387, 0
    %v3544 = vsel %vm3425, %v3388, 0
    %v3547 = vsel %vm3425, %v3389, 0
    %v3550 = vsel %vm3425, %v3390, 0
    %v3553 = vsel %vm3425, %v3391, 0
    %v3556 = vsel %vm3425, %v3392, 0
    %v3559 = vsel %vm3425, %v3393, 0
    %v3562 = vsel %vm3425, %v3394, 0
    %v3565 = vsel %vm3425, %v3395, 0
    %v3568 = vsel %vm3425, %v3396, 0
    %v3571 = vsel %vm3425, %v3397, 0
    %v3574 = vsel %vm3425, %v3398, 0
    %v3577 = vsel %vm3425, %v3399, 0
    %v3580 = vsel %vm3425, %v3400, 0
    %v3583 = vsel %vm3425, %v3401, 0
    %v3586 = vsel %vm3425, %v3402, 0
    %v3589 = vsel %vm3425, %v3403, 0
    %v3592 = vsel %vm3425, %v3404, 0
    %v3595 = vsel %vm3425, %v3405, 0
    %v3598 = vsel %vm3425, %v3406, 0
    %v3601 = vsel %vm3425, %v3407, 0
    %v3604 = vsel %vm3425, %v3408, 0
    %v3607 = vsel %vm3425, %v3409, 0
    %v3610 = vsel %vm3425, %v3410, 0
    %v3613 = vsel %vm3425, %v3411, 0
    %v3616 = vsel %vm3425, %v3412, 0
    %vm3618 = vcmask 1043456
    %v3620 = vsel %vm3618, %v3417, 0
    %3622 = vmatprep.subr.mxu0 0.0
    %3623 = vmatpush1.msra.mxu0 %v3413
    %3624 = vmatprep.subr.mxu0 0.0
    %3625 = vmatpush1.msra.mxu0 %v3414
    %3626 = vmatprep.subr.mxu0 0.0
    %3627 = vmatpush1.msra.mxu0 %v3415
    %3628 = vmatprep.subr.mxu0 0.0
    %3629 = vmatpush1.msra.mxu0 %v3416
    %3630 = vmatprep.subr.mxu0 0.0
    %3631 = vmatpush1.msra.mxu0 %v3620
    %3632 = vmatprep.subr.mxu0 0.0
    %3633 = vmatpush1.msra.mxu0 0.0
    %3634 = vmatprep.subr.mxu0 0.0
    %3635 = vmatpush1.msra.mxu0 0.0
    %3636 = vmatprep.subr.mxu0 0.0
    %3637 = vmatpush1.msra.mxu0 0.0
    %3638 = vmatprep.subr.mxu0 0.0
    %3639 = vmatpush1.msra.mxu0 0.0
    %3640 = vmatprep.subr.mxu0 0.0
    %3641 = vmatpush1.msra.mxu0 0.0
    %3642 = vmatprep.subr.mxu0 0.0
    %3643 = vmatpush1.msra.mxu0 0.0
    %3644 = vmatprep.subr.mxu0 0.0
    %3645 = vmatpush1.msra.mxu0 0.0
    %3646 = vmatprep.subr.mxu0 0.0
    %3647 = vmatpush1.msra.mxu0 0.0
    %3648 = vmatprep.subr.mxu0 0.0
    %3649 = vmatpush1.msra.mxu0 0.0
    %3650 = vmatprep.subr.mxu0 0.0
    %3651 = vmatpush1.msra.mxu0 0.0
    %3652 = vmatprep.subr.mxu0 0.0
    %3653 = vmatpush1.msra.mxu0 0.0
    %3654 = vmatprep.subr.mxu0 0.0
    %3655 = vmatpush1.msra.mxu0 0.0
    %3656 = vmatprep.subr.mxu0 0.0
    %3657 = vmatpush1.msra.mxu0 0.0
    %3658 = vmatprep.subr.mxu0 0.0
    %3659 = vmatpush1.msra.mxu0 0.0
    %3660 = vmatprep.subr.mxu0 0.0
    %3661 = vmatpush1.msra.mxu0 0.0
    %3662 = vmatprep.subr.mxu0 0.0
    %3663 = vmatpush1.msra.mxu0 0.0
    %3664 = vmatprep.subr.mxu0 0.0
    %3665 = vmatpush1.msra.mxu0 0.0
    %3666 = vmatprep.subr.mxu0 0.0
    %3667 = vmatpush1.msra.mxu0 0.0
    %3668 = vmatprep.subr.mxu0 0.0
    %3669 = vmatpush1.msra.mxu0 0.0
    %3670 = vmatprep.subr.mxu0 0.0
    %3671 = vmatpush1.msra.mxu0 0.0
    %3672 = vmatprep.subr.mxu0 0.0
    %3673 = vmatpush1.msra.mxu0 0.0
    %3674 = vmatprep.subr.mxu0 0.0
    %3675 = vmatpush1.msra.mxu0 0.0
    %3676 = vmatprep.subr.mxu0 0.0
    %3677 = vmatpush1.msra.mxu0 0.0
    %3678 = vmatprep.subr.mxu0 0.0
    %3679 = vmatpush1.msra.mxu0 0.0
    %3680 = vmatprep.subr.mxu0 0.0
    %3681 = vmatpush1.msra.mxu0 0.0
    %3682 = vmatprep.subr.mxu0 0.0
    %3683 = vmatpush1.msra.mxu0 0.0
    %3684 = vmatprep.subr.mxu0 0.0
    %3685 = vmatpush1.msra.mxu0 0.0
    %3686 = vmatprep.mubr.f32.mxu0 0.0
    %3687 = vmatmul.mubr.f32.gmra.mrb[0].mxu0 %v3427
    %v3688 = vpop.f32.mrb[0].mxu0
    %v3689 = vadd.f32 %v3423, %v3688
    %v3690 = vpop.f32.mrb[0].mxu0
    %3691 = vmatprep.mubr.f32.mxu0 0.0
    %3692 = vmatmul.mubr.f32.gmra.mrb[0].mxu0 %v3430
    %v3693 = vpop.f32.mrb[0].mxu0
    %v3694 = vadd.f32 %v3423, %v3693
    %v3695 = vpop.f32.mrb[0].mxu0
    %3696 = vmatprep.mubr.f32.mxu0 0.0
    %3697 = vmatmul.mubr.f32.gmra.mrb[0].mxu0 %v3433
    %v3698 = vpop.f32.mrb[0].mxu0
    %v3699 = vadd.f32 %v3423, %v3698
    %v3700 = vpop.f32.mrb[0].mxu0
    %3701 = vmatprep.mubr.f32.mxu0 0.0
    %3702 = vmatmul.mubr.f32.gmra.mrb[0].mxu0 %v3436
    %v3703 = vpop.f32.mrb[0].mxu0
    %v3704 = vadd.f32 %v3423, %v3703
    %v3705 = vpop.f32.mrb[0].mxu0
    %3706 = vmatprep.mubr.f32.mxu0 0.0
    %3707 = vmatmul.mubr.f32.gmra.mrb[0].mxu0 %v3439
    %v3708 = vpop.f32.mrb[0].mxu0
    %v3709 = vadd.f32 %v3423, %v3708
    %v3710 = vpop.f32.mrb[0].mxu0
    %3711 = vmatprep.mubr.f32.mxu0 0.0
    %3712 = vmatmul.mubr.f32.gmra.mrb[0].mxu0 %v3442
    %v3713 = vpop.f32.mrb[0].mxu0
    %v3714 = vadd.f32 %v3423, %v3713
    %v3715 = vpop.f32.mrb[0].mxu0
    %3716 = vmatprep.mubr.f32.mxu0 0.0
    %3717 = vmatmul.mubr.f32.gmra.mrb[0].mxu0 %v3445
    %v3718 = vpop.f32.mrb[0].mxu0
    %v3719 = vadd.f32 %v3423, %v3718
    %v3720 = vpop.f32.mrb[0].mxu0
    %3721 = vmatprep.mubr.f32.mxu0 0.0
    %3722 = vmatmul.mubr.f32.gmra.mrb[0].mxu0 %v3448
    %v3723 = vpop.f32.mrb[0].mxu0
    %v3724 = vadd.f32 %v3423, %v3723
    %v3725 = vpop.f32.mrb[0].mxu0
    %3726 = vmatprep.mubr.f32.mxu0 0.0
    %3727 = vmatmul.mubr.f32.gmra.mrb[0].mxu0 %v3451
    %v3728 = vpop.f32.mrb[0].mxu0
    %v3729 = vadd.f32 %v3423, %v3728
    %v3730 = vpop.f32.mrb[0].mxu0
    %3731 = vmatprep.mubr.f32.mxu0 0.0
    %3732 = vmatmul.mubr.f32.gmra.mrb[0].mxu0 %v3454
    %v3733 = vpop.f32.mrb[0].mxu0
    %v3734 = vadd.f32 %v3423, %v3733
    %v3735 = vpop.f32.mrb[0].mxu0
    %3736 = vmatprep.mubr.f32.mxu0 0.0
    %3737 = vmatmul.mubr.f32.gmra.mrb[0].mxu0 %v3457
    %v3738 = vpop.f32.mrb[0].mxu0
    %v3739 = vadd.f32 %v3423, %v3738
    %v3740 = vpop.f32.mrb[0].mxu0
    %3741 = vmatprep.mubr.f32.mxu0 0.0
    %3742 = vmatmul.mubr.f32.gmra.mrb[0].mxu0 %v3460
    %v3743 = vpop.f32.mrb[0].mxu0
    %v3744 = vadd.f32 %v3423, %v3743
    %v3745 = vpop.f32.mrb[0].mxu0
    %3746 = vmatprep.mubr.f32.mxu0 0.0
    %3747 = vmatmul.mubr.f32.gmra.mrb[0].mxu0 %v3463
    %v3748 = vpop.f32.mrb[0].mxu0
    %v3749 = vadd.f32 %v3423, %v3748
    %v3750 = vpop.f32.mrb[0].mxu0
    %3751 = vmatprep.mubr.f32.mxu0 0.0
    %3752 = vmatmul.mubr.f32.gmra.mrb[0].mxu0 %v3466
    %v3753 = vpop.f32.mrb[0].mxu0
    %v3754 = vadd.f32 %v3423, %v3753
    %v3755 = vpop.f32.mrb[0].mxu0
    %3756 = vmatprep.mubr.f32.mxu0 0.0
    %3757 = vmatmul.mubr.f32.gmra.mrb[0].mxu0 %v3469
    %v3758 = vpop.f32.mrb[0].mxu0
    %v3759 = vadd.f32 %v3423, %v3758
    %v3760 = vpop.f32.mrb[0].mxu0
    %3761 = vmatprep.mubr.f32.mxu0 0.0
    %3762 = vmatmul.mubr.f32.gmra.mrb[0].mxu0 %v3472
    %v3763 = vpop.f32.mrb[0].mxu0
    %v3764 = vadd.f32 %v3423, %v3763
    %v3765 = vpop.f32.mrb[0].mxu0
    %3766 = vmatprep.mubr.f32.mxu0 0.0
    %3767 = vmatmul.mubr.f32.gmra.mrb[0].mxu0 %v3475
    %v3768 = vpop.f32.mrb[0].mxu0
    %v3769 = vadd.f32 %v3423, %v3768
    %v3770 = vpop.f32.mrb[0].mxu0
    %3771 = vmatprep.mubr.f32.mxu0 0.0
    %3772 = vmatmul.mubr.f32.gmra.mrb[0].mxu0 %v3478
    %v3773 = vpop.f32.mrb[0].mxu0
    %v3774 = vadd.f32 %v3423, %v3773
    %v3775 = vpop.f32.mrb[0].mxu0
    %3776 = vmatprep.mubr.f32.mxu0 0.0
    %3777 = vmatmul.mubr.f32.gmra.mrb[0].mxu0 %v3481
    %v3778 = vpop.f32.mrb[0].mxu0
    %v3779 = vadd.f32 %v3423, %v3778
    %v3780 = vpop.f32.mrb[0].mxu0
    %3781 = vmatprep.mubr.f32.mxu0 0.0
    %3782 = vmatmul.mubr.f32.gmra.mrb[0].mxu0 %v3484
    %v3783 = vpop.f32.mrb[0].mxu0
    %v3784 = vadd.f32 %v3423, %v3783
    %v3785 = vpop.f32.mrb[0].mxu0
    %3786 = vmatprep.mubr.f32.mxu0 0.0
    %3787 = vmatmul.mubr.f32.gmra.mrb[0].mxu0 %v3487
    %v3788 = vpop.f32.mrb[0].mxu0
    %v3789 = vadd.f32 %v3423, %v3788
    %v3790 = vpop.f32.mrb[0].mxu0
    %3791 = vmatprep.mubr.f32.mxu0 0.0
    %3792 = vmatmul.mubr.f32.gmra.mrb[0].mxu0 %v3490
    %v3793 = vpop.f32.mrb[0].mxu0
    %v3794 = vadd.f32 %v3423, %v3793
    %v3795 = vpop.f32.mrb[0].mxu0
    %3796 = vmatprep.mubr.f32.mxu0 0.0
    %3797 = vmatmul.mubr.f32.gmra.mrb[0].mxu0 %v3493
    %v3798 = vpop.f32.mrb[0].mxu0
    %v3799 = vadd.f32 %v3423, %v3798
    %v3800 = vpop.f32.mrb[0].mxu0
    %3801 = vmatprep.mubr.f32.mxu0 0.0
    %3802 = vmatmul.mubr.f32.gmra.mrb[0].mxu0 %v3496
    %v3803 = vpop.f32.mrb[0].mxu0
    %v3804 = vadd.f32 %v3423, %v3803
    %v3805 = vpop.f32.mrb[0].mxu0
    %3806 = vmatprep.mubr.f32.mxu0 0.0
    %3807 = vmatmul.mubr.f32.gmra.mrb[0].mxu0 %v3499
    %v3808 = vpop.f32.mrb[0].mxu0
    %v3809 = vadd.f32 %v3423, %v3808
    %v3810 = vpop.f32.mrb[0].mxu0
    %3811 = vmatprep.mubr.f32.mxu0 0.0
    %3812 = vmatmul.mubr.f32.gmra.mrb[0].mxu0 %v3502
    %v3813 = vpop.f32.mrb[0].mxu0
    %v3814 = vadd.f32 %v3423, %v3813
    %v3815 = vpop.f32.mrb[0].mxu0
    %3816 = vmatprep.mubr.f32.mxu0 0.0
    %3817 = vmatmul.mubr.f32.gmra.mrb[0].mxu0 %v3505
    %v3818 = vpop.f32.mrb[0].mxu0
    %v3819 = vadd.f32 %v3423, %v3818
    %v3820 = vpop.f32.mrb[0].mxu0
    %3821 = vmatprep.mubr.f32.mxu0 0.0
    %3822 = vmatmul.mubr.f32.gmra.mrb[0].mxu0 %v3508
    %v3823 = vpop.f32.mrb[0].mxu0
    %v3824 = vadd.f32 %v3423, %v3823
    %v3825 = vpop.f32.mrb[0].mxu0
    %3826 = vmatprep.mubr.f32.mxu0 0.0
    %3827 = vmatmul.mubr.f32.gmra.mrb[0].mxu0 %v3511
    %v3828 = vpop.f32.mrb[0].mxu0
    %v3829 = vadd.f32 %v3423, %v3828
    %v3830 = vpop.f32.mrb[0].mxu0
    %3831 = vmatprep.mubr.f32.mxu0 0.0
    %3832 = vmatmul.mubr.f32.gmra.mrb[0].mxu0 %v3514
    %v3833 = vpop.f32.mrb[0].mxu0
    %v3834 = vadd.f32 %v3423, %v3833
    %v3835 = vpop.f32.mrb[0].mxu0
    %3836 = vmatprep.mubr.f32.mxu0 0.0
    %3837 = vmatmul.mubr.f32.gmra.mrb[0].mxu0 %v3517
    %v3838 = vpop.f32.mrb[0].mxu0
    %v3839 = vadd.f32 %v3423, %v3838
    %v3840 = vpop.f32.mrb[0].mxu0
    %3841 = vmatprep.mubr.f32.mxu0 0.0
    %3842 = vmatmul.mubr.f32.gmra.mrb[0].mxu0 %v3520
    %v3843 = vpop.f32.mrb[0].mxu0
    %v3844 = vadd.f32 %v3423, %v3843
    %v3845 = vpop.f32.mrb[0].mxu0
    %3846 = vmatprep.mubr.f32.mxu0 0.0
    %3847 = vmatmul.mubr.f32.gmra.mrb[0].mxu0 %v3523
    %v3848 = vpop.f32.mrb[0].mxu0
    %v3849 = vadd.f32 %v3423, %v3848
    %v3850 = vpop.f32.mrb[0].mxu0
    %3851 = vmatprep.mubr.f32.mxu0 0.0
    %3852 = vmatmul.mubr.f32.gmra.mrb[0].mxu0 %v3526
    %v3853 = vpop.f32.mrb[0].mxu0
    %v3854 = vadd.f32 %v3423, %v3853
    %v3855 = vpop.f32.mrb[0].mxu0
    %3856 = vmatprep.mubr.f32.mxu0 0.0
    %3857 = vmatmul.mubr.f32.gmra.mrb[0].mxu0 %v3529
    %v3858 = vpop.f32.mrb[0].mxu0
    %v3859 = vadd.f32 %v3423, %v3858
    %v3860 = vpop.f32.mrb[0].mxu0
    %3861 = vmatprep.mubr.f32.mxu0 0.0
    %3862 = vmatmul.mubr.f32.gmra.mrb[0].mxu0 %v3532
    %v3863 = vpop.f32.mrb[0].mxu0
    %v3864 = vadd.f32 %v3423, %v3863
    %v3865 = vpop.f32.mrb[0].mxu0
    %3866 = vmatprep.mubr.f32.mxu0 0.0
    %3867 = vmatmul.mubr.f32.gmra.mrb[0].mxu0 %v3535
    %v3868 = vpop.f32.mrb[0].mxu0
    %v3869 = vadd.f32 %v3423, %v3868
    %v3870 = vpop.f32.mrb[0].mxu0
    %3871 = vmatprep.mubr.f32.mxu0 0.0
    %3872 = vmatmul.mubr.f32.gmra.mrb[0].mxu0 %v3538
    %v3873 = vpop.f32.mrb[0].mxu0
    %v3874 = vadd.f32 %v3423, %v3873
    %v3875 = vpop.f32.mrb[0].mxu0
    %3876 = vmatprep.mubr.f32.mxu0 0.0
    %3877 = vmatmul.mubr.f32.gmra.mrb[0].mxu0 %v3541
    %v3878 = vpop.f32.mrb[0].mxu0
    %v3879 = vadd.f32 %v3423, %v3878
    %v3880 = vpop.f32.mrb[0].mxu0
    %3881 = vmatprep.mubr.f32.mxu0 0.0
    %3882 = vmatmul.mubr.f32.gmra.mrb[0].mxu0 %v3544
    %v3883 = vpop.f32.mrb[0].mxu0
    %v3884 = vadd.f32 %v3423, %v3883
    %v3885 = vpop.f32.mrb[0].mxu0
    %3886 = vmatprep.mubr.f32.mxu0 0.0
    %3887 = vmatmul.mubr.f32.gmra.mrb[0].mxu0 %v3547
    %v3888 = vpop.f32.mrb[0].mxu0
    %v3889 = vadd.f32 %v3423, %v3888
    %v3890 = vpop.f32.mrb[0].mxu0
    %3891 = vmatprep.mubr.f32.mxu0 0.0
    %3892 = vmatmul.mubr.f32.gmra.mrb[0].mxu0 %v3550
    %v3893 = vpop.f32.mrb[0].mxu0
    %v3894 = vadd.f32 %v3423, %v3893
    %v3895 = vpop.f32.mrb[0].mxu0
    %3896 = vmatprep.mubr.f32.mxu0 0.0
    %3897 = vmatmul.mubr.f32.gmra.mrb[0].mxu0 %v3553
    %v3898 = vpop.f32.mrb[0].mxu0
    %v3899 = vadd.f32 %v3423, %v3898
    %v3900 = vpop.f32.mrb[0].mxu0
    %3901 = vmatprep.mubr.f32.mxu0 0.0
    %3902 = vmatmul.mubr.f32.gmra.mrb[0].mxu0 %v3556
    %v3903 = vpop.f32.mrb[0].mxu0
    %v3904 = vadd.f32 %v3423, %v3903
    %v3905 = vpop.f32.mrb[0].mxu0
    %3906 = vmatprep.mubr.f32.mxu0 0.0
    %3907 = vmatmul.mubr.f32.gmra.mrb[0].mxu0 %v3559
    %v3908 = vpop.f32.mrb[0].mxu0
    %v3909 = vadd.f32 %v3423, %v3908
    %v3910 = vpop.f32.mrb[0].mxu0
    %3911 = vmatprep.mubr.f32.mxu0 0.0
    %3912 = vmatmul.mubr.f32.gmra.mrb[0].mxu0 %v3562
    %v3913 = vpop.f32.mrb[0].mxu0
    %v3914 = vadd.f32 %v3423, %v3913
    %v3915 = vpop.f32.mrb[0].mxu0
    %3916 = vmatprep.mubr.f32.mxu0 0.0
    %3917 = vmatmul.mubr.f32.gmra.mrb[0].mxu0 %v3565
    %v3918 = vpop.f32.mrb[0].mxu0
    %v3919 = vadd.f32 %v3423, %v3918
    %v3920 = vpop.f32.mrb[0].mxu0
    %3921 = vmatprep.mubr.f32.mxu0 0.0
    %3922 = vmatmul.mubr.f32.gmra.mrb[0].mxu0 %v3568
    %v3923 = vpop.f32.mrb[0].mxu0
    %v3924 = vadd.f32 %v3423, %v3923
    %v3925 = vpop.f32.mrb[0].mxu0
    %3926 = vmatprep.mubr.f32.mxu0 0.0
    %3927 = vmatmul.mubr.f32.gmra.mrb[0].mxu0 %v3571
    %v3928 = vpop.f32.mrb[0].mxu0
    %v3929 = vadd.f32 %v3423, %v3928
    %v3930 = vpop.f32.mrb[0].mxu0
    %3931 = vmatprep.mubr.f32.mxu0 0.0
    %3932 = vmatmul.mubr.f32.gmra.mrb[0].mxu0 %v3574
    %v3933 = vpop.f32.mrb[0].mxu0
    %v3934 = vadd.f32 %v3423, %v3933
    %v3935 = vpop.f32.mrb[0].mxu0
    %3936 = vmatprep.mubr.f32.mxu0 0.0
    %3937 = vmatmul.mubr.f32.gmra.mrb[0].mxu0 %v3577
    %v3938 = vpop.f32.mrb[0].mxu0
    %v3939 = vadd.f32 %v3423, %v3938
    %v3940 = vpop.f32.mrb[0].mxu0
    %3941 = vmatprep.mubr.f32.mxu0 0.0
    %3942 = vmatmul.mubr.f32.gmra.mrb[0].mxu0 %v3580
    %v3943 = vpop.f32.mrb[0].mxu0
    %v3944 = vadd.f32 %v3423, %v3943
    %v3945 = vpop.f32.mrb[0].mxu0
    %3946 = vmatprep.mubr.f32.mxu0 0.0
    %3947 = vmatmul.mubr.f32.gmra.mrb[0].mxu0 %v3583
    %v3948 = vpop.f32.mrb[0].mxu0
    %v3949 = vadd.f32 %v3423, %v3948
    %v3950 = vpop.f32.mrb[0].mxu0
    %3951 = vmatprep.mubr.f32.mxu0 0.0
    %3952 = vmatmul.mubr.f32.gmra.mrb[0].mxu0 %v3586
    %v3953 = vpop.f32.mrb[0].mxu0
    %v3954 = vadd.f32 %v3423, %v3953
    %v3955 = vpop.f32.mrb[0].mxu0
    %3956 = vmatprep.mubr.f32.mxu0 0.0
    %3957 = vmatmul.mubr.f32.gmra.mrb[0].mxu0 %v3589
    %v3958 = vpop.f32.mrb[0].mxu0
    %v3959 = vadd.f32 %v3423, %v3958
    %v3960 = vpop.f32.mrb[0].mxu0
    %3961 = vmatprep.mubr.f32.mxu0 0.0
    %3962 = vmatmul.mubr.f32.gmra.mrb[0].mxu0 %v3592
    %v3963 = vpop.f32.mrb[0].mxu0
    %v3964 = vadd.f32 %v3423, %v3963
    %v3965 = vpop.f32.mrb[0].mxu0
    %3966 = vmatprep.mubr.f32.mxu0 0.0
    %3967 = vmatmul.mubr.f32.gmra.mrb[0].mxu0 %v3595
    %v3968 = vpop.f32.mrb[0].mxu0
    %v3969 = vadd.f32 %v3423, %v3968
    %v3970 = vpop.f32.mrb[0].mxu0
    %3971 = vmatprep.mubr.f32.mxu0 0.0
    %3972 = vmatmul.mubr.f32.gmra.mrb[0].mxu0 %v3598
    %v3973 = vpop.f32.mrb[0].mxu0
    %v3974 = vadd.f32 %v3423, %v3973
    %v3975 = vpop.f32.mrb[0].mxu0
    %3976 = vmatprep.mubr.f32.mxu0 0.0
    %3977 = vmatmul.mubr.f32.gmra.mrb[0].mxu0 %v3601
    %v3978 = vpop.f32.mrb[0].mxu0
    %v3979 = vadd.f32 %v3423, %v3978
    %v3980 = vpop.f32.mrb[0].mxu0
    %3981 = vmatprep.mubr.f32.mxu0 0.0
    %3982 = vmatmul.mubr.f32.gmra.mrb[0].mxu0 %v3604
    %v3983 = vpop.f32.mrb[0].mxu0
    %v3984 = vadd.f32 %v3423, %v3983
    %v3985 = vpop.f32.mrb[0].mxu0
    %3986 = vmatprep.mubr.f32.mxu0 0.0
    %3987 = vmatmul.mubr.f32.gmra.mrb[0].mxu0 %v3607
    %v3988 = vpop.f32.mrb[0].mxu0
    %v3989 = vadd.f32 %v3423, %v3988
    %v3990 = vpop.f32.mrb[0].mxu0
    %3991 = vmatprep.mubr.f32.mxu0 0.0
    %3992 = vmatmul.mubr.f32.gmra.mrb[0].mxu0 %v3610
    %v3993 = vpop.f32.mrb[0].mxu0
    %v3994 = vadd.f32 %v3423, %v3993
    %v3995 = vpop.f32.mrb[0].mxu0
    %3996 = vmatprep.mubr.f32.mxu0 0.0
    %3997 = vmatmul.mubr.f32.gmra.mrb[0].mxu0 %v3613
    %v3998 = vpop.f32.mrb[0].mxu0
    %v3999 = vadd.f32 %v3423, %v3998
    %v4000 = vpop.f32.mrb[0].mxu0
    %4001 = vmatprep.mubr.f32.mxu0 0.0
    %4002 = vmatmul.mubr.f32.gmra.mrb[0].mxu0 %v3616
    %v4003 = vpop.f32.mrb[0].mxu0
    %v4004 = vadd.f32 %v3423, %v4003
    %v4005 = vpop.f32.mrb[0].mxu0
    %4006 = vdwg.mxu0
    %v4007 = vmax.f32 %v3689, 0.0
    %v4008 = vmax.f32 %v3694, 0.0
    %v4009 = vmax.f32 %v3699, 0.0
    %v4010 = vmax.f32 %v3704, 0.0
    %v4011 = vmax.f32 %v3709, 0.0
    %v4012 = vmax.f32 %v3714, 0.0
    %v4013 = vmax.f32 %v3719, 0.0
    %v4014 = vmax.f32 %v3724, 0.0
    %v4015 = vmax.f32 %v3729, 0.0
    %v4016 = vmax.f32 %v3734, 0.0
    %v4017 = vmax.f32 %v3739, 0.0
    %v4018 = vmax.f32 %v3744, 0.0
    %v4019 = vmax.f32 %v3749, 0.0
    %v4020 = vmax.f32 %v3754, 0.0
    %v4021 = vmax.f32 %v3759, 0.0
    %v4022 = vmax.f32 %v3764, 0.0
    %v4023 = vmax.f32 %v3769, 0.0
    %v4024 = vmax.f32 %v3774, 0.0
    %v4025 = vmax.f32 %v3779, 0.0
    %v4026 = vmax.f32 %v3784, 0.0
    %v4027 = vmax.f32 %v3789, 0.0
    %v4028 = vmax.f32 %v3794, 0.0
    %v4029 = vmax.f32 %v3799, 0.0
    %v4030 = vmax.f32 %v3804, 0.0
    %v4031 = vmax.f32 %v3809, 0.0
    %v4032 = vmax.f32 %v3814, 0.0
    %v4033 = vmax.f32 %v3819, 0.0
    %v4034 = vmax.f32 %v3824, 0.0
    %v4035 = vmax.f32 %v3829, 0.0
    %v4036 = vmax.f32 %v3834, 0.0
    %v4037 = vmax.f32 %v3839, 0.0
    %v4038 = vmax.f32 %v3844, 0.0
    %v4039 = vmax.f32 %v3849, 0.0
    %v4040 = vmax.f32 %v3854, 0.0
    %v4041 = vmax.f32 %v3859, 0.0
    %v4042 = vmax.f32 %v3864, 0.0
    %v4043 = vmax.f32 %v3869, 0.0
    %v4044 = vmax.f32 %v3874, 0.0
    %v4045 = vmax.f32 %v3879, 0.0
    %v4046 = vmax.f32 %v3884, 0.0
    %v4047 = vmax.f32 %v3889, 0.0
    %v4048 = vmax.f32 %v3894, 0.0
    %v4049 = vmax.f32 %v3899, 0.0
    %v4050 = vmax.f32 %v3904, 0.0
    %v4051 = vmax.f32 %v3909, 0.0
    %v4052 = vmax.f32 %v3914, 0.0
    %v4053 = vmax.f32 %v3919, 0.0
    %v4054 = vmax.f32 %v3924, 0.0
    %v4055 = vmax.f32 %v3929, 0.0
    %v4056 = vmax.f32 %v3934, 0.0
    %v4057 = vmax.f32 %v3939, 0.0
    %v4058 = vmax.f32 %v3944, 0.0
    %v4059 = vmax.f32 %v3949, 0.0
    %v4060 = vmax.f32 %v3954, 0.0
    %v4061 = vmax.f32 %v3959, 0.0
    %v4062 = vmax.f32 %v3964, 0.0
    %v4063 = vmax.f32 %v3969, 0.0
    %v4064 = vmax.f32 %v3974, 0.0
    %v4065 = vmax.f32 %v3979, 0.0
    %v4066 = vmax.f32 %v3984, 0.0
    %v4067 = vmax.f32 %v3989, 0.0
    %v4068 = vmax.f32 %v3994, 0.0
    %v4069 = vmax.f32 %v3999, 0.0
    %v4070 = vmax.f32 %v4004, 0.0
    %4071 = vst.msk [vmem:[#allocation3] sm:$0xff] %vm3348, 0.0
    %4072 = vst.msk [vmem:[#allocation3 + $0x8] sm:$0xff] %vm3348, 0.0
    %vm4073 = vcmask 254976
    %4074 = vst.msk [vmem:[#allocation3 + $0x10] sm:$0x3] %vm4073, 0.0
    %4075 = vst.msk [vmem:[#allocation3 + $0x18] sm:$0xff] %vm3348, 0.0
    %4076 = vst.msk [vmem:[#allocation3 + $0x20] sm:$0xff] %vm3348, 0.0
    %4077 = vst.msk [vmem:[#allocation3 + $0x28] sm:$0x3] %vm4073, 0.0
    %4078 = vst.msk [vmem:[#allocation3 + $0x30] sm:$0xff] %vm3348, 0.0
    %4079 = vst.msk [vmem:[#allocation3 + $0x38] sm:$0xff] %vm3348, 0.0
    %4080 = vst.msk [vmem:[#allocation3 + $0x40] sm:$0x3] %vm4073, 0.0
    %4081 = vst.msk [vmem:[#allocation3 + $0x48] sm:$0xff] %vm3348, 0.0
    %4082 = vst.msk [vmem:[#allocation3 + $0x50] sm:$0xff] %vm3348, 0.0
    %4083 = vst.msk [vmem:[#allocation3 + $0x58] sm:$0x3] %vm4073, 0.0
    %4084 = vst.msk [vmem:[#allocation3 + $0x60] sm:$0xff] %vm3348, 0.0
    %4085 = vst.msk [vmem:[#allocation3 + $0x68] sm:$0xff] %vm3348, 0.0
    %4086 = vst.msk [vmem:[#allocation3 + $0x70] sm:$0x3] %vm4073, 0.0
    %4087 = vst.msk [vmem:[#allocation3 + $0x78] sm:$0xff] %vm3348, 0.0
    %4088 = vst.msk [vmem:[#allocation3 + $0x80] sm:$0xff] %vm3348, 0.0
    %4089 = vst.msk [vmem:[#allocation3 + $0x88] sm:$0x3] %vm4073, 0.0
    %4090 = vst.msk [vmem:[#allocation3 + $0x90] sm:$0xff] %vm3348, 0.0
    %4091 = vst.msk [vmem:[#allocation3 + $0x98] sm:$0xff] %vm3348, 0.0
    %4092 = vst.msk [vmem:[#allocation3 + $0xa0] sm:$0x3] %vm4073, 0.0
    %4093 = vst.msk [vmem:[#allocation3 + $0xa8] sm:$0xff] %vm3348, 0.0
    %4094 = vst.msk [vmem:[#allocation3 + $0xb0] sm:$0xff] %vm3348, 0.0
    %4095 = vst.msk [vmem:[#allocation3 + $0xb8] sm:$0x3] %vm4073, 0.0
    %4096 = vst.msk [vmem:[#allocation3 + $0xc0] sm:$0xff] %vm3348, 0.0
    %4097 = vst.msk [vmem:[#allocation3 + $0xc8] sm:$0xff] %vm3348, 0.0
    %4098 = vst.msk [vmem:[#allocation3 + $0xd0] sm:$0x3] %vm4073, 0.0
    %4099 = vst.msk [vmem:[#allocation3 + $0xd8] sm:$0xff] %vm3348, 0.0
    %4100 = vst.msk [vmem:[#allocation3 + $0xe0] sm:$0xff] %vm3348, 0.0
    %4101 = vst.msk [vmem:[#allocation3 + $0xe8] sm:$0x3] %vm4073, 0.0
    %4102 = vst.msk [vmem:[#allocation3 + $0xf0] sm:$0xff] %vm3348, 0.0
    %4103 = vst.msk [vmem:[#allocation3 + $0xf8] sm:$0xff] %vm3348, 0.0
    %4104 = vst.msk [vmem:[#allocation3 + $0x100] sm:$0x3] %vm4073, 0.0
    %4105 = vst.msk [vmem:[#allocation3 + $0x108] sm:$0xff] %vm3348, 0.0
    %4106 = vst.msk [vmem:[#allocation3 + $0x110] sm:$0xff] %vm3348, 0.0
    %4107 = vst.msk [vmem:[#allocation3 + $0x118] sm:$0x3] %vm4073, 0.0
    %4108 = vst.msk [vmem:[#allocation3 + $0x120] sm:$0xff] %vm3348, 0.0
    %4109 = vst.msk [vmem:[#allocation3 + $0x128] sm:$0xff] %vm3348, 0.0
    %4110 = vst.msk [vmem:[#allocation3 + $0x130] sm:$0x3] %vm4073, 0.0
    %4111 = vst.msk [vmem:[#allocation3 + $0x138] sm:$0xff] %vm3348, 0.0
    %4112 = vst.msk [vmem:[#allocation3 + $0x140] sm:$0xff] %vm3348, 0.0
    %4113 = vst.msk [vmem:[#allocation3 + $0x148] sm:$0x3] %vm4073, 0.0
    %4114 = vst.msk [vmem:[#allocation3 + $0x150] sm:$0xff] %vm3348, 0.0
    %4115 = vst.msk [vmem:[#allocation3 + $0x158] sm:$0xff] %vm3348, 0.0
    %4116 = vst.msk [vmem:[#allocation3 + $0x160] sm:$0x3] %vm4073, 0.0
    %4117 = vst.msk [vmem:[#allocation3 + $0x168] sm:$0xff] %vm3348, 0.0
    %4118 = vst.msk [vmem:[#allocation3 + $0x170] sm:$0xff] %vm3348, 0.0
    %4119 = vst.msk [vmem:[#allocation3 + $0x178] sm:$0x3] %vm4073, 0.0
    %4120 = vst.msk [vmem:[#allocation3 + $0x180] sm:$0xff] %vm3348, 0.0
    %4121 = vst.msk [vmem:[#allocation3 + $0x188] sm:$0xff] %vm3348, 0.0
    %4122 = vst.msk [vmem:[#allocation3 + $0x190] sm:$0x3] %vm4073, 0.0
    %4123 = vst.msk [vmem:[#allocation3 + $0x198] sm:$0xff] %vm3348, 0.0
    %4124 = vst.msk [vmem:[#allocation3 + $0x1a0] sm:$0xff] %vm3348, 0.0
    %4125 = vst.msk [vmem:[#allocation3 + $0x1a8] sm:$0x3] %vm4073, 0.0
    %4126 = vst.msk [vmem:[#allocation3 + $0x1b0] sm:$0xff] %vm3348, 0.0
    %4127 = vst.msk [vmem:[#allocation3 + $0x1b8] sm:$0xff] %vm3348, 0.0
    %4128 = vst.msk [vmem:[#allocation3 + $0x1c0] sm:$0x3] %vm4073, 0.0
    %4129 = vst.msk [vmem:[#allocation3 + $0x1c8] sm:$0xff] %vm3348, 0.0
    %4130 = vst.msk [vmem:[#allocation3 + $0x1d0] sm:$0xff] %vm3348, 0.0
    %4131 = vst.msk [vmem:[#allocation3 + $0x1d8] sm:$0x3] %vm4073, 0.0
    %4132 = vst.msk [vmem:[#allocation3 + $0x1e0] sm:$0xff] %vm3348, 0.0
    %4133 = vst.msk [vmem:[#allocation3 + $0x1e8] sm:$0xff] %vm3348, 0.0
    %4134 = vst.msk [vmem:[#allocation3 + $0x1f0] sm:$0x3] %vm4073, 0.0
    %4135 = vst.msk [vmem:[#allocation3 + $0x1f8] sm:$0xff] %vm3348, 0.0
    %4136 = vst.msk [vmem:[#allocation3 + $0x200] sm:$0xff] %vm3348, 0.0
    %4137 = vst.msk [vmem:[#allocation3 + $0x208] sm:$0x3] %vm4073, 0.0
    %4138 = vst.msk [vmem:[#allocation3 + $0x210] sm:$0xff] %vm3348, 0.0
    %4139 = vst.msk [vmem:[#allocation3 + $0x218] sm:$0xff] %vm3348, 0.0
    %4140 = vst.msk [vmem:[#allocation3 + $0x220] sm:$0x3] %vm4073, 0.0
    %4141 = vst.msk [vmem:[#allocation3 + $0x228] sm:$0xff] %vm3348, 0.0
    %4142 = vst.msk [vmem:[#allocation3 + $0x230] sm:$0xff] %vm3348, 0.0
    %4143 = vst.msk [vmem:[#allocation3 + $0x238] sm:$0x3] %vm4073, 0.0
    %4144 = vst.msk [vmem:[#allocation3 + $0x240] sm:$0xff] %vm3348, 0.0
    %4145 = vst.msk [vmem:[#allocation3 + $0x248] sm:$0xff] %vm3348, 0.0
    %4146 = vst.msk [vmem:[#allocation3 + $0x250] sm:$0x3] %vm4073, 0.0
    %4147 = vst.msk [vmem:[#allocation3 + $0x258] sm:$0xff] %vm3348, 0.0
    %4148 = vst.msk [vmem:[#allocation3 + $0x260] sm:$0xff] %vm3348, 0.0
    %4149 = vst.msk [vmem:[#allocation3 + $0x268] sm:$0x3] %vm4073, 0.0
    %4150 = vst.msk [vmem:[#allocation3 + $0x270] sm:$0xff] %vm3348, 0.0
    %4151 = vst.msk [vmem:[#allocation3 + $0x278] sm:$0xff] %vm3348, 0.0
    %4152 = vst.msk [vmem:[#allocation3 + $0x280] sm:$0x3] %vm4073, 0.0
    %4153 = vst.msk [vmem:[#allocation3 + $0x288] sm:$0xff] %vm3348, 0.0
    %4154 = vst.msk [vmem:[#allocation3 + $0x290] sm:$0xff] %vm3348, 0.0
    %4155 = vst.msk [vmem:[#allocation3 + $0x298] sm:$0x3] %vm4073, 0.0
    %4156 = vst.msk [vmem:[#allocation3 + $0x2a0] sm:$0xff] %vm3348, 0.0
    %4157 = vst.msk [vmem:[#allocation3 + $0x2a8] sm:$0xff] %vm3348, 0.0
    %4158 = vst.msk [vmem:[#allocation3 + $0x2b0] sm:$0x3] %vm4073, 0.0
    %4159 = vst.msk [vmem:[#allocation3 + $0x2b8] sm:$0xff] %vm3348, 0.0
    %4160 = vst.msk [vmem:[#allocation3 + $0x2c0] sm:$0xff] %vm3348, 0.0
    %4161 = vst.msk [vmem:[#allocation3 + $0x2c8] sm:$0x3] %vm4073, 0.0
    %4162 = vst.msk [vmem:[#allocation3 + $0x2d0] sm:$0xff] %vm3348, 0.0
    %4163 = vst.msk [vmem:[#allocation3 + $0x2d8] sm:$0xff] %vm3348, 0.0
    %4164 = vst.msk [vmem:[#allocation3 + $0x2e0] sm:$0x3] %vm4073, 0.0
    %4165 = vst.msk [vmem:[#allocation3 + $0x2e8] sm:$0xff] %vm3348, 0.0
    %4166 = vst.msk [vmem:[#allocation3 + $0x2f0] sm:$0xff] %vm3348, 0.0
    %4167 = vst.msk [vmem:[#allocation3 + $0x2f8] sm:$0x3] %vm4073, 0.0
    %4168 = vst.msk [vmem:[#allocation3 + $0x300] sm:$0xff] %vm3348, 0.0
    %4169 = vst.msk [vmem:[#allocation3 + $0x308] sm:$0xff] %vm3348, 0.0
    %4170 = vst.msk [vmem:[#allocation3 + $0x310] sm:$0x3] %vm4073, 0.0
    %4171 = vst.msk [vmem:[#allocation3 + $0x318] sm:$0xff] %vm3348, 0.0
    %4172 = vst.msk [vmem:[#allocation3 + $0x320] sm:$0xff] %vm3348, 0.0
    %4173 = vst.msk [vmem:[#allocation3 + $0x328] sm:$0x3] %vm4073, 0.0
    %4174 = vst.msk [vmem:[#allocation3 + $0x330] sm:$0xff] %vm3348, 0.0
    %4175 = vst.msk [vmem:[#allocation3 + $0x338] sm:$0xff] %vm3348, 0.0
    %4176 = vst.msk [vmem:[#allocation3 + $0x340] sm:$0x3] %vm4073, 0.0
    %4177 = vst.msk [vmem:[#allocation3 + $0x348] sm:$0xff] %vm3348, 0.0
    %4178 = vst.msk [vmem:[#allocation3 + $0x350] sm:$0xff] %vm3348, 0.0
    %4179 = vst.msk [vmem:[#allocation3 + $0x358] sm:$0x3] %vm4073, 0.0
    %s4180 = scalar_lea.vmem [#allocation3], 24
    %4181 = vst.msk [vmem:[%s4180 + $0x1] sm:$0xff] %vm3348, %v4007
    %4182 = vst.msk [vmem:[%s4180 + $0x9] sm:$0xff] %vm3348, %v4008
    %4183 = vst.msk [vmem:[%s4180 + $0x19] sm:$0xff] %vm3348, %v4009
    %4184 = vst.msk [vmem:[%s4180 + $0x21] sm:$0xff] %vm3348, %v4010
    %4185 = vst.msk [vmem:[%s4180 + $0x31] sm:$0xff] %vm3348, %v4011
    %4186 = vst.msk [vmem:[%s4180 + $0x39] sm:$0xff] %vm3348, %v4012
    %4187 = vst.msk [vmem:[%s4180 + $0x49] sm:$0xff] %vm3348, %v4013
    %4188 = vst.msk [vmem:[%s4180 + $0x51] sm:$0xff] %vm3348, %v4014
    %4189 = vst.msk [vmem:[%s4180 + $0x61] sm:$0xff] %vm3348, %v4015
    %4190 = vst.msk [vmem:[%s4180 + $0x69] sm:$0xff] %vm3348, %v4016
    %4191 = vst.msk [vmem:[%s4180 + $0x79] sm:$0xff] %vm3348, %v4017
    %4192 = vst.msk [vmem:[%s4180 + $0x81] sm:$0xff] %vm3348, %v4018
    %4193 = vst.msk [vmem:[%s4180 + $0x91] sm:$0xff] %vm3348, %v4019
    %4194 = vst.msk [vmem:[%s4180 + $0x99] sm:$0xff] %vm3348, %v4020
    %4195 = vst.msk [vmem:[%s4180 + $0xa9] sm:$0xff] %vm3348, %v4021
    %4196 = vst.msk [vmem:[%s4180 + $0xb1] sm:$0xff] %vm3348, %v4022
    %4197 = vst.msk [vmem:[%s4180 + $0xc1] sm:$0xff] %vm3348, %v4023
    %4198 = vst.msk [vmem:[%s4180 + $0xc9] sm:$0xff] %vm3348, %v4024
    %4199 = vst.msk [vmem:[%s4180 + $0xd9] sm:$0xff] %vm3348, %v4025
    %4200 = vst.msk [vmem:[%s4180 + $0xe1] sm:$0xff] %vm3348, %v4026
    %4201 = vst.msk [vmem:[%s4180 + $0xf1] sm:$0xff] %vm3348, %v4027
    %4202 = vst.msk [vmem:[%s4180 + $0xf9] sm:$0xff] %vm3348, %v4028
    %4203 = vst.msk [vmem:[%s4180 + $0x109] sm:$0xff] %vm3348, %v4029
    %4204 = vst.msk [vmem:[%s4180 + $0x111] sm:$0xff] %vm3348, %v4030
    %4205 = vst.msk [vmem:[%s4180 + $0x121] sm:$0xff] %vm3348, %v4031
    %4206 = vst.msk [vmem:[%s4180 + $0x129] sm:$0xff] %vm3348, %v4032
    %4207 = vst.msk [vmem:[%s4180 + $0x139] sm:$0xff] %vm3348, %v4033
    %4208 = vst.msk [vmem:[%s4180 + $0x141] sm:$0xff] %vm3348, %v4034
    %4209 = vst.msk [vmem:[%s4180 + $0x151] sm:$0xff] %vm3348, %v4035
    %4210 = vst.msk [vmem:[%s4180 + $0x159] sm:$0xff] %vm3348, %v4036
    %4211 = vst.msk [vmem:[%s4180 + $0x169] sm:$0xff] %vm3348, %v4037
    %4212 = vst.msk [vmem:[%s4180 + $0x171] sm:$0xff] %vm3348, %v4038
    %4213 = vst.msk [vmem:[%s4180 + $0x1b1] sm:$0xff] %vm3348, %v4039
    %4214 = vst.msk [vmem:[%s4180 + $0x1b9] sm:$0xff] %vm3348, %v4040
    %4215 = vst.msk [vmem:[%s4180 + $0x1c9] sm:$0xff] %vm3348, %v4041
    %4216 = vst.msk [vmem:[%s4180 + $0x1d1] sm:$0xff] %vm3348, %v4042
    %4217 = vst.msk [vmem:[%s4180 + $0x1e1] sm:$0xff] %vm3348, %v4043
    %4218 = vst.msk [vmem:[%s4180 + $0x1e9] sm:$0xff] %vm3348, %v4044
    %4219 = vst.msk [vmem:[%s4180 + $0x1f9] sm:$0xff] %vm3348, %v4045
    %4220 = vst.msk [vmem:[%s4180 + $0x201] sm:$0xff] %vm3348, %v4046
    %4221 = vst.msk [vmem:[%s4180 + $0x211] sm:$0xff] %vm3348, %v4047
    %4222 = vst.msk [vmem:[%s4180 + $0x219] sm:$0xff] %vm3348, %v4048
    %4223 = vst.msk [vmem:[%s4180 + $0x229] sm:$0xff] %vm3348, %v4049
    %4224 = vst.msk [vmem:[%s4180 + $0x231] sm:$0xff] %vm3348, %v4050
    %4225 = vst.msk [vmem:[%s4180 + $0x241] sm:$0xff] %vm3348, %v4051
    %4226 = vst.msk [vmem:[%s4180 + $0x249] sm:$0xff] %vm3348, %v4052
    %4227 = vst.msk [vmem:[%s4180 + $0x259] sm:$0xff] %vm3348, %v4053
    %4228 = vst.msk [vmem:[%s4180 + $0x261] sm:$0xff] %vm3348, %v4054
    %4229 = vst.msk [vmem:[%s4180 + $0x271] sm:$0xff] %vm3348, %v4055
    %4230 = vst.msk [vmem:[%s4180 + $0x279] sm:$0xff] %vm3348, %v4056
    %4231 = vst.msk [vmem:[%s4180 + $0x289] sm:$0xff] %vm3348, %v4057
    %4232 = vst.msk [vmem:[%s4180 + $0x291] sm:$0xff] %vm3348, %v4058
    %4233 = vst.msk [vmem:[%s4180 + $0x2a1] sm:$0xff] %vm3348, %v4059
    %4234 = vst.msk [vmem:[%s4180 + $0x2a9] sm:$0xff] %vm3348, %v4060
    %4235 = vst.msk [vmem:[%s4180 + $0x2b9] sm:$0xff] %vm3348, %v4061
    %4236 = vst.msk [vmem:[%s4180 + $0x2c1] sm:$0xff] %vm3348, %v4062
    %4237 = vst.msk [vmem:[%s4180 + $0x2d1] sm:$0xff] %vm3348, %v4063
    %4238 = vst.msk [vmem:[%s4180 + $0x2d9] sm:$0xff] %vm3348, %v4064
    %4239 = vst.msk [vmem:[%s4180 + $0x2e9] sm:$0xff] %vm3348, %v4065
    %4240 = vst.msk [vmem:[%s4180 + $0x2f1] sm:$0xff] %vm3348, %v4066
    %4241 = vst.msk [vmem:[%s4180 + $0x301] sm:$0xff] %vm3348, %v4067
    %4242 = vst.msk [vmem:[%s4180 + $0x309] sm:$0xff] %vm3348, %v4068
    %4243 = vst.msk [vmem:[%s4180 + $0x319] sm:$0xff] %vm3348, %v4069
    %4244 = vst.msk [vmem:[%s4180 + $0x321] sm:$0xff] %vm3348, %v4070
    %v4245 = vld [vmem:[#allocation3] sm:$0xff]
    %v4246 = vld [vmem:[#allocation3 + $0x8] sm:$0xff]
    %v4247 = vld [vmem:[#allocation3 + $0x18] sm:$0xff]
    %v4248 = vld [vmem:[#allocation3 + $0x20] sm:$0xff]
    %v4249 = vld [vmem:[#allocation3 + $0x30] sm:$0xff]
    %v4250 = vld [vmem:[#allocation3 + $0x38] sm:$0xff]
    %v4251 = vld [vmem:[#allocation3 + $0x48] sm:$0xff]
    %v4252 = vld [vmem:[#allocation3 + $0x50] sm:$0xff]
    %v4253 = vld [vmem:[#allocation3 + $0x60] sm:$0xff]
    %v4254 = vld [vmem:[#allocation3 + $0x68] sm:$0xff]
    %v4255 = vld [vmem:[#allocation3 + $0x78] sm:$0xff]
    %v4256 = vld [vmem:[#allocation3 + $0x80] sm:$0xff]
    %v4257 = vld [vmem:[#allocation3 + $0x90] sm:$0xff]
    %v4258 = vld [vmem:[#allocation3 + $0x98] sm:$0xff]
    %v4259 = vld [vmem:[#allocation3 + $0xa8] sm:$0xff]
    %v4260 = vld [vmem:[#allocation3 + $0xb0] sm:$0xff]
    %v4261 = vld [vmem:[#allocation3 + $0xc0] sm:$0xff]
    %v4262 = vld [vmem:[#allocation3 + $0xc8] sm:$0xff]
    %v4263 = vld [vmem:[#allocation3 + $0xd8] sm:$0xff]
    %v4264 = vld [vmem:[#allocation3 + $0xe0] sm:$0xff]
    %v4265 = vld [vmem:[#allocation3 + $0xf0] sm:$0xff]
    %v4266 = vld [vmem:[#allocation3 + $0xf8] sm:$0xff]
    %v4267 = vld [vmem:[#allocation3 + $0x108] sm:$0xff]
    %v4268 = vld [vmem:[#allocation3 + $0x110] sm:$0xff]
    %v4269 = vld [vmem:[#allocation3 + $0x120] sm:$0xff]
    %v4270 = vld [vmem:[#allocation3 + $0x128] sm:$0xff]
    %v4271 = vld [vmem:[#allocation3 + $0x138] sm:$0xff]
    %v4272 = vld [vmem:[#allocation3 + $0x140] sm:$0xff]
    %v4273 = vld [vmem:[#allocation3 + $0x150] sm:$0xff]
    %v4274 = vld [vmem:[#allocation3 + $0x158] sm:$0xff]
    %v4275 = vld [vmem:[#allocation3 + $0x168] sm:$0xff]
    %v4276 = vld [vmem:[#allocation3 + $0x170] sm:$0xff]
    %v4277 = vld [vmem:[#allocation3 + $0x1b0] sm:$0xff]
    %v4278 = vld [vmem:[#allocation3 + $0x1b8] sm:$0xff]
    %v4279 = vld [vmem:[#allocation3 + $0x1c8] sm:$0xff]
    %v4280 = vld [vmem:[#allocation3 + $0x1d0] sm:$0xff]
    %v4281 = vld [vmem:[#allocation3 + $0x1e0] sm:$0xff]
    %v4282 = vld [vmem:[#allocation3 + $0x1e8] sm:$0xff]
    %v4283 = vld [vmem:[#allocation3 + $0x1f8] sm:$0xff]
    %v4284 = vld [vmem:[#allocation3 + $0x200] sm:$0xff]
    %v4285 = vld [vmem:[#allocation3 + $0x210] sm:$0xff]
    %v4286 = vld [vmem:[#allocation3 + $0x218] sm:$0xff]
    %v4287 = vld [vmem:[#allocation3 + $0x228] sm:$0xff]
    %v4288 = vld [vmem:[#allocation3 + $0x230] sm:$0xff]
    %v4289 = vld [vmem:[#allocation3 + $0x240] sm:$0xff]
    %v4290 = vld [vmem:[#allocation3 + $0x248] sm:$0xff]
    %v4291 = vld [vmem:[#allocation3 + $0x258] sm:$0xff]
    %v4292 = vld [vmem:[#allocation3 + $0x260] sm:$0xff]
    %v4293 = vld [vmem:[#allocation3 + $0x270] sm:$0xff]
    %v4294 = vld [vmem:[#allocation3 + $0x278] sm:$0xff]
    %v4295 = vld [vmem:[#allocation3 + $0x288] sm:$0xff]
    %v4296 = vld [vmem:[#allocation3 + $0x290] sm:$0xff]
    %v4297 = vld [vmem:[#allocation3 + $0x2a0] sm:$0xff]
    %v4298 = vld [vmem:[#allocation3 + $0x2a8] sm:$0xff]
    %v4299 = vld [vmem:[#allocation3 + $0x2b8] sm:$0xff]
    %v4300 = vld [vmem:[#allocation3 + $0x2c0] sm:$0xff]
    %v4301 = vld [vmem:[#allocation3 + $0x2d0] sm:$0xff]
    %v4302 = vld [vmem:[#allocation3 + $0x2d8] sm:$0xff]
    %v4303 = vld [vmem:[#allocation3 + $0x2e8] sm:$0xff]
    %v4304 = vld [vmem:[#allocation3 + $0x2f0] sm:$0xff]
    %v4305 = vld [vmem:[#allocation3 + $0x300] sm:$0xff]
    %v4306 = vld [vmem:[#allocation3 + $0x308] sm:$0xff]
    %v4307 = vld [vmem:[#allocation3 + $0x318] sm:$0xff]
    %v4308 = vld [vmem:[#allocation3 + $0x320] sm:$0xff]
    %v4309 = vld [vmem:[#allocation3 + $0x1] sm:$0xff]
    %v4310 = vld [vmem:[#allocation3 + $0x9] sm:$0xff]
    %v4311 = vld [vmem:[#allocation3 + $0x19] sm:$0xff]
    %v4312 = vld [vmem:[#allocation3 + $0x21] sm:$0xff]
    %v4313 = vld [vmem:[#allocation3 + $0x31] sm:$0xff]
    %v4314 = vld [vmem:[#allocation3 + $0x39] sm:$0xff]
    %v4315 = vld [vmem:[#allocation3 + $0x49] sm:$0xff]
    %v4316 = vld [vmem:[#allocation3 + $0x51] sm:$0xff]
    %v4317 = vld [vmem:[#allocation3 + $0x61] sm:$0xff]
    %v4318 = vld [vmem:[#allocation3 + $0x69] sm:$0xff]
    %v4319 = vld [vmem:[#allocation3 + $0x79] sm:$0xff]
    %v4320 = vld [vmem:[#allocation3 + $0x81] sm:$0xff]
    %v4321 = vld [vmem:[#allocation3 + $0x91] sm:$0xff]
    %v4322 = vld [vmem:[#allocation3 + $0x99] sm:$0xff]
    %v4323 = vld [vmem:[#allocation3 + $0xa9] sm:$0xff]
    %v4324 = vld [vmem:[#allocation3 + $0xb1] sm:$0xff]
    %v4325 = vld [vmem:[#allocation3 + $0xc1] sm:$0xff]
    %v4326 = vld [vmem:[#allocation3 + $0xc9] sm:$0xff]
    %v4327 = vld [vmem:[#allocation3 + $0xd9] sm:$0xff]
    %v4328 = vld [vmem:[#allocation3 + $0xe1] sm:$0xff]
    %v4329 = vld [vmem:[#allocation3 + $0xf1] sm:$0xff]
    %v4330 = vld [vmem:[#allocation3 + $0xf9] sm:$0xff]
    %v4331 = vld [vmem:[#allocation3 + $0x109] sm:$0xff]
    %v4332 = vld [vmem:[#allocation3 + $0x111] sm:$0xff]
    %v4333 = vld [vmem:[#allocation3 + $0x121] sm:$0xff]
    %v4334 = vld [vmem:[#allocation3 + $0x129] sm:$0xff]
    %v4335 = vld [vmem:[#allocation3 + $0x139] sm:$0xff]
    %v4336 = vld [vmem:[#allocation3 + $0x141] sm:$0xff]
    %v4337 = vld [vmem:[#allocation3 + $0x151] sm:$0xff]
    %v4338 = vld [vmem:[#allocation3 + $0x159] sm:$0xff]
    %v4339 = vld [vmem:[#allocation3 + $0x169] sm:$0xff]
    %v4340 = vld [vmem:[#allocation3 + $0x171] sm:$0xff]
    %v4341 = vld [vmem:[#allocation3 + $0x1b1] sm:$0xff]
    %v4342 = vld [vmem:[#allocation3 + $0x1b9] sm:$0xff]
    %v4343 = vld [vmem:[#allocation3 + $0x1c9] sm:$0xff]
    %v4344 = vld [vmem:[#allocation3 + $0x1d1] sm:$0xff]
    %v4345 = vld [vmem:[#allocation3 + $0x1e1] sm:$0xff]
    %v4346 = vld [vmem:[#allocation3 + $0x1e9] sm:$0xff]
    %v4347 = vld [vmem:[#allocation3 + $0x1f9] sm:$0xff]
    %v4348 = vld [vmem:[#allocation3 + $0x201] sm:$0xff]
    %v4349 = vld [vmem:[#allocation3 + $0x211] sm:$0xff]
    %v4350 = vld [vmem:[#allocation3 + $0x219] sm:$0xff]
    %v4351 = vld [vmem:[#allocation3 + $0x229] sm:$0xff]
    %v4352 = vld [vmem:[#allocation3 + $0x231] sm:$0xff]
    %v4353 = vld [vmem:[#allocation3 + $0x241] sm:$0xff]
    %v4354 = vld [vmem:[#allocation3 + $0x249] sm:$0xff]
    %v4355 = vld [vmem:[#allocation3 + $0x259] sm:$0xff]
    %v4356 = vld [vmem:[#allocation3 + $0x261] sm:$0xff]
    %v4357 = vld [vmem:[#allocation3 + $0x271] sm:$0xff]
    %v4358 = vld [vmem:[#allocation3 + $0x279] sm:$0xff]
    %v4359 = vld [vmem:[#allocation3 + $0x289] sm:$0xff]
    %v4360 = vld [vmem:[#allocation3 + $0x291] sm:$0xff]
    %v4361 = vld [vmem:[#allocation3 + $0x2a1] sm:$0xff]
    %v4362 = vld [vmem:[#allocation3 + $0x2a9] sm:$0xff]
    %v4363 = vld [vmem:[#allocation3 + $0x2b9] sm:$0xff]
    %v4364 = vld [vmem:[#allocation3 + $0x2c1] sm:$0xff]
    %v4365 = vld [vmem:[#allocation3 + $0x2d1] sm:$0xff]
    %v4366 = vld [vmem:[#allocation3 + $0x2d9] sm:$0xff]
    %v4367 = vld [vmem:[#allocation3 + $0x2e9] sm:$0xff]
    %v4368 = vld [vmem:[#allocation3 + $0x2f1] sm:$0xff]
    %v4369 = vld [vmem:[#allocation3 + $0x301] sm:$0xff]
    %v4370 = vld [vmem:[#allocation3 + $0x309] sm:$0xff]
    %v4371 = vld [vmem:[#allocation3 + $0x319] sm:$0xff]
    %v4372 = vld [vmem:[#allocation3 + $0x321] sm:$0xff]
    %v4373 = vld [vmem:[#allocation3 + $0x2] sm:$0xff]
    %v4374 = vld [vmem:[#allocation3 + $0xa] sm:$0xff]
    %v4375 = vld [vmem:[#allocation3 + $0x1a] sm:$0xff]
    %v4376 = vld [vmem:[#allocation3 + $0x22] sm:$0xff]
    %v4377 = vld [vmem:[#allocation3 + $0x32] sm:$0xff]
    %v4378 = vld [vmem:[#allocation3 + $0x3a] sm:$0xff]
    %v4379 = vld [vmem:[#allocation3 + $0x4a] sm:$0xff]
    %v4380 = vld [vmem:[#allocation3 + $0x52] sm:$0xff]
    %v4381 = vld [vmem:[#allocation3 + $0x62] sm:$0xff]
    %v4382 = vld [vmem:[#allocation3 + $0x6a] sm:$0xff]
    %v4383 = vld [vmem:[#allocation3 + $0x7a] sm:$0xff]
    %v4384 = vld [vmem:[#allocation3 + $0x82] sm:$0xff]
    %v4385 = vld [vmem:[#allocation3 + $0x92] sm:$0xff]
    %v4386 = vld [vmem:[#allocation3 + $0x9a] sm:$0xff]
    %v4387 = vld [vmem:[#allocation3 + $0xaa] sm:$0xff]
    %v4388 = vld [vmem:[#allocation3 + $0xb2] sm:$0xff]
    %v4389 = vld [vmem:[#allocation3 + $0xc2] sm:$0xff]
    %v4390 = vld [vmem:[#allocation3 + $0xca] sm:$0xff]
    %v4391 = vld [vmem:[#allocation3 + $0xda] sm:$0xff]
    %v4392 = vld [vmem:[#allocation3 + $0xe2] sm:$0xff]
    %v4393 = vld [vmem:[#allocation3 + $0xf2] sm:$0xff]
    %v4394 = vld [vmem:[#allocation3 + $0xfa] sm:$0xff]
    %v4395 = vld [vmem:[#allocation3 + $0x10a] sm:$0xff]
    %v4396 = vld [vmem:[#allocation3 + $0x112] sm:$0xff]
    %v4397 = vld [vmem:[#allocation3 + $0x122] sm:$0xff]
    %v4398 = vld [vmem:[#allocation3 + $0x12a] sm:$0xff]
    %v4399 = vld [vmem:[#allocation3 + $0x13a] sm:$0xff]
    %v4400 = vld [vmem:[#allocation3 + $0x142] sm:$0xff]
    %v4401 = vld [vmem:[#allocation3 + $0x152] sm:$0xff]
    %v4402 = vld [vmem:[#allocation3 + $0x15a] sm:$0xff]
    %v4403 = vld [vmem:[#allocation3 + $0x16a] sm:$0xff]
    %v4404 = vld [vmem:[#allocation3 + $0x172] sm:$0xff]
    %v4405 = vld [vmem:[#allocation3 + $0x1b2] sm:$0xff]
    %v4406 = vld [vmem:[#allocation3 + $0x1ba] sm:$0xff]
    %v4407 = vld [vmem:[#allocation3 + $0x1ca] sm:$0xff]
    %v4408 = vld [vmem:[#allocation3 + $0x1d2] sm:$0xff]
    %v4409 = vld [vmem:[#allocation3 + $0x1e2] sm:$0xff]
    %v4410 = vld [vmem:[#allocation3 + $0x1ea] sm:$0xff]
    %v4411 = vld [vmem:[#allocation3 + $0x1fa] sm:$0xff]
    %v4412 = vld [vmem:[#allocation3 + $0x202] sm:$0xff]
    %v4413 = vld [vmem:[#allocation3 + $0x212] sm:$0xff]
    %v4414 = vld [vmem:[#allocation3 + $0x21a] sm:$0xff]
    %v4415 = vld [vmem:[#allocation3 + $0x22a] sm:$0xff]
    %v4416 = vld [vmem:[#allocation3 + $0x232] sm:$0xff]
    %v4417 = vld [vmem:[#allocation3 + $0x242] sm:$0xff]
    %v4418 = vld [vmem:[#allocation3 + $0x24a] sm:$0xff]
    %v4419 = vld [vmem:[#allocation3 + $0x25a] sm:$0xff]
    %v4420 = vld [vmem:[#allocation3 + $0x262] sm:$0xff]
    %v4421 = vld [vmem:[#allocation3 + $0x272] sm:$0xff]
    %v4422 = vld [vmem:[#allocation3 + $0x27a] sm:$0xff]
    %v4423 = vld [vmem:[#allocation3 + $0x28a] sm:$0xff]
    %v4424 = vld [vmem:[#allocation3 + $0x292] sm:$0xff]
    %v4425 = vld [vmem:[#allocation3 + $0x2a2] sm:$0xff]
    %v4426 = vld [vmem:[#allocation3 + $0x2aa] sm:$0xff]
    %v4427 = vld [vmem:[#allocation3 + $0x2ba] sm:$0xff]
    %v4428 = vld [vmem:[#allocation3 + $0x2c2] sm:$0xff]
    %v4429 = vld [vmem:[#allocation3 + $0x2d2] sm:$0xff]
    %v4430 = vld [vmem:[#allocation3 + $0x2da] sm:$0xff]
    %v4431 = vld [vmem:[#allocation3 + $0x2ea] sm:$0xff]
    %v4432 = vld [vmem:[#allocation3 + $0x2f2] sm:$0xff]
    %v4433 = vld [vmem:[#allocation3 + $0x302] sm:$0xff]
    %v4434 = vld [vmem:[#allocation3 + $0x30a] sm:$0xff]
    %v4435 = vld [vmem:[#allocation3 + $0x31a] sm:$0xff]
    %v4436 = vld [vmem:[#allocation3 + $0x322] sm:$0xff]
    %v4437 = vld [vmem:[%s4180] sm:$0xff]
    %v4438 = vld [vmem:[%s4180 + $0x8] sm:$0xff]
    %v4439 = vld [vmem:[%s4180 + $0x18] sm:$0xff]
    %v4440 = vld [vmem:[%s4180 + $0x20] sm:$0xff]
    %v4441 = vld [vmem:[%s4180 + $0x30] sm:$0xff]
    %v4442 = vld [vmem:[%s4180 + $0x38] sm:$0xff]
    %v4443 = vld [vmem:[%s4180 + $0x48] sm:$0xff]
    %v4444 = vld [vmem:[%s4180 + $0x50] sm:$0xff]
    %v4445 = vld [vmem:[%s4180 + $0x60] sm:$0xff]
    %v4446 = vld [vmem:[%s4180 + $0x68] sm:$0xff]
    %v4447 = vld [vmem:[%s4180 + $0x78] sm:$0xff]
    %v4448 = vld [vmem:[%s4180 + $0x80] sm:$0xff]
    %v4449 = vld [vmem:[%s4180 + $0x90] sm:$0xff]
    %v4450 = vld [vmem:[%s4180 + $0x98] sm:$0xff]
    %v4451 = vld [vmem:[%s4180 + $0xa8] sm:$0xff]
    %v4452 = vld [vmem:[%s4180 + $0xb0] sm:$0xff]
    %v4453 = vld [vmem:[%s4180 + $0xc0] sm:$0xff]
    %v4454 = vld [vmem:[%s4180 + $0xc8] sm:$0xff]
    %v4455 = vld [vmem:[%s4180 + $0xd8] sm:$0xff]
    %v4456 = vld [vmem:[%s4180 + $0xe0] sm:$0xff]
    %v4457 = vld [vmem:[%s4180 + $0xf0] sm:$0xff]
    %v4458 = vld [vmem:[%s4180 + $0xf8] sm:$0xff]
    %v4459 = vld [vmem:[%s4180 + $0x108] sm:$0xff]
    %v4460 = vld [vmem:[%s4180 + $0x110] sm:$0xff]
    %v4461 = vld [vmem:[%s4180 + $0x120] sm:$0xff]
    %v4462 = vld [vmem:[%s4180 + $0x128] sm:$0xff]
    %v4463 = vld [vmem:[%s4180 + $0x138] sm:$0xff]
    %v4464 = vld [vmem:[%s4180 + $0x140] sm:$0xff]
    %v4465 = vld [vmem:[%s4180 + $0x150] sm:$0xff]
    %v4466 = vld [vmem:[%s4180 + $0x158] sm:$0xff]
    %v4467 = vld [vmem:[%s4180 + $0x168] sm:$0xff]
    %v4468 = vld [vmem:[%s4180 + $0x170] sm:$0xff]
    %v4469 = vld [vmem:[%s4180 + $0x1b0] sm:$0xff]
    %v4470 = vld [vmem:[%s4180 + $0x1b8] sm:$0xff]
    %v4471 = vld [vmem:[%s4180 + $0x1c8] sm:$0xff]
    %v4472 = vld [vmem:[%s4180 + $0x1d0] sm:$0xff]
    %v4473 = vld [vmem:[%s4180 + $0x1e0] sm:$0xff]
    %v4474 = vld [vmem:[%s4180 + $0x1e8] sm:$0xff]
    %v4475 = vld [vmem:[%s4180 + $0x1f8] sm:$0xff]
    %v4476 = vld [vmem:[%s4180 + $0x200] sm:$0xff]
    %v4477 = vld [vmem:[%s4180 + $0x210] sm:$0xff]
    %v4478 = vld [vmem:[%s4180 + $0x218] sm:$0xff]
    %v4479 = vld [vmem:[%s4180 + $0x228] sm:$0xff]
    %v4480 = vld [vmem:[%s4180 + $0x230] sm:$0xff]
    %v4481 = vld [vmem:[%s4180 + $0x240] sm:$0xff]
    %v4482 = vld [vmem:[%s4180 + $0x248] sm:$0xff]
    %v4483 = vld [vmem:[%s4180 + $0x258] sm:$0xff]
    %v4484 = vld [vmem:[%s4180 + $0x260] sm:$0xff]
    %v4485 = vld [vmem:[%s4180 + $0x270] sm:$0xff]
    %v4486 = vld [vmem:[%s4180 + $0x278] sm:$0xff]
    %v4487 = vld [vmem:[%s4180 + $0x288] sm:$0xff]
    %v4488 = vld [vmem:[%s4180 + $0x290] sm:$0xff]
    %v4489 = vld [vmem:[%s4180 + $0x2a0] sm:$0xff]
    %v4490 = vld [vmem:[%s4180 + $0x2a8] sm:$0xff]
    %v4491 = vld [vmem:[%s4180 + $0x2b8] sm:$0xff]
    %v4492 = vld [vmem:[%s4180 + $0x2c0] sm:$0xff]
    %v4493 = vld [vmem:[%s4180 + $0x2d0] sm:$0xff]
    %v4494 = vld [vmem:[%s4180 + $0x2d8] sm:$0xff]
    %v4495 = vld [vmem:[%s4180 + $0x2e8] sm:$0xff]
    %v4496 = vld [vmem:[%s4180 + $0x2f0] sm:$0xff]
    %v4497 = vld [vmem:[%s4180 + $0x300] sm:$0xff]
    %v4498 = vld [vmem:[%s4180 + $0x308] sm:$0xff]
    %v4499 = vld [vmem:[%s4180 + $0x318] sm:$0xff]
    %v4500 = vld [vmem:[%s4180 + $0x320] sm:$0xff]
    %v4501 = vld [vmem:[%s4180 + $0x1] sm:$0xff]
    %v4502 = vld [vmem:[%s4180 + $0x9] sm:$0xff]
    %v4503 = vld [vmem:[%s4180 + $0x19] sm:$0xff]
    %v4504 = vld [vmem:[%s4180 + $0x21] sm:$0xff]
    %v4505 = vld [vmem:[%s4180 + $0x31] sm:$0xff]
    %v4506 = vld [vmem:[%s4180 + $0x39] sm:$0xff]
    %v4507 = vld [vmem:[%s4180 + $0x49] sm:$0xff]
    %v4508 = vld [vmem:[%s4180 + $0x51] sm:$0xff]
    %v4509 = vld [vmem:[%s4180 + $0x61] sm:$0xff]
    %v4510 = vld [vmem:[%s4180 + $0x69] sm:$0xff]
    %v4511 = vld [vmem:[%s4180 + $0x79] sm:$0xff]
    %v4512 = vld [vmem:[%s4180 + $0x81] sm:$0xff]
    %v4513 = vld [vmem:[%s4180 + $0x91] sm:$0xff]
    %v4514 = vld [vmem:[%s4180 + $0x99] sm:$0xff]
    %v4515 = vld [vmem:[%s4180 + $0xa9] sm:$0xff]
    %v4516 = vld [vmem:[%s4180 + $0xb1] sm:$0xff]
    %v4517 = vld [vmem:[%s4180 + $0xc1] sm:$0xff]
    %v4518 = vld [vmem:[%s4180 + $0xc9] sm:$0xff]
    %v4519 = vld [vmem:[%s4180 + $0xd9] sm:$0xff]
    %v4520 = vld [vmem:[%s4180 + $0xe1] sm:$0xff]
    %v4521 = vld [vmem:[%s4180 + $0xf1] sm:$0xff]
    %v4522 = vld [vmem:[%s4180 + $0xf9] sm:$0xff]
    %v4523 = vld [vmem:[%s4180 + $0x109] sm:$0xff]
    %v4524 = vld [vmem:[%s4180 + $0x111] sm:$0xff]
    %v4525 = vld [vmem:[%s4180 + $0x121] sm:$0xff]
    %v4526 = vld [vmem:[%s4180 + $0x129] sm:$0xff]
    %v4527 = vld [vmem:[%s4180 + $0x139] sm:$0xff]
    %v4528 = vld [vmem:[%s4180 + $0x141] sm:$0xff]
    %v4529 = vld [vmem:[%s4180 + $0x151] sm:$0xff]
    %v4530 = vld [vmem:[%s4180 + $0x159] sm:$0xff]
    %v4531 = vld [vmem:[%s4180 + $0x169] sm:$0xff]
    %v4532 = vld [vmem:[%s4180 + $0x171] sm:$0xff]
    %v4533 = vld [vmem:[%s4180 + $0x1b1] sm:$0xff]
    %v4534 = vld [vmem:[%s4180 + $0x1b9] sm:$0xff]
    %v4535 = vld [vmem:[%s4180 + $0x1c9] sm:$0xff]
    %v4536 = vld [vmem:[%s4180 + $0x1d1] sm:$0xff]
    %v4537 = vld [vmem:[%s4180 + $0x1e1] sm:$0xff]
    %v4538 = vld [vmem:[%s4180 + $0x1e9] sm:$0xff]
    %v4539 = vld [vmem:[%s4180 + $0x1f9] sm:$0xff]
    %v4540 = vld [vmem:[%s4180 + $0x201] sm:$0xff]
    %v4541 = vld [vmem:[%s4180 + $0x211] sm:$0xff]
    %v4542 = vld [vmem:[%s4180 + $0x219] sm:$0xff]
    %v4543 = vld [vmem:[%s4180 + $0x229] sm:$0xff]
    %v4544 = vld [vmem:[%s4180 + $0x231] sm:$0xff]
    %v4545 = vld [vmem:[%s4180 + $0x241] sm:$0xff]
    %v4546 = vld [vmem:[%s4180 + $0x249] sm:$0xff]
    %v4547 = vld [vmem:[%s4180 + $0x259] sm:$0xff]
    %v4548 = vld [vmem:[%s4180 + $0x261] sm:$0xff]
    %v4549 = vld [vmem:[%s4180 + $0x271] sm:$0xff]
    %v4550 = vld [vmem:[%s4180 + $0x279] sm:$0xff]
    %v4551 = vld [vmem:[%s4180 + $0x289] sm:$0xff]
    %v4552 = vld [vmem:[%s4180 + $0x291] sm:$0xff]
    %v4553 = vld [vmem:[%s4180 + $0x2a1] sm:$0xff]
    %v4554 = vld [vmem:[%s4180 + $0x2a9] sm:$0xff]
    %v4555 = vld [vmem:[%s4180 + $0x2b9] sm:$0xff]
    %v4556 = vld [vmem:[%s4180 + $0x2c1] sm:$0xff]
    %v4557 = vld [vmem:[%s4180 + $0x2d1] sm:$0xff]
    %v4558 = vld [vmem:[%s4180 + $0x2d9] sm:$0xff]
    %v4559 = vld [vmem:[%s4180 + $0x2e9] sm:$0xff]
    %v4560 = vld [vmem:[%s4180 + $0x2f1] sm:$0xff]
    %v4561 = vld [vmem:[%s4180 + $0x301] sm:$0xff]
    %v4562 = vld [vmem:[%s4180 + $0x309] sm:$0xff]
    %v4563 = vld [vmem:[%s4180 + $0x319] sm:$0xff]
    %v4564 = vld [vmem:[%s4180 + $0x321] sm:$0xff]
    %v4565 = vld [vmem:[%s4180 + $0x2] sm:$0xff]
    %v4566 = vld [vmem:[%s4180 + $0xa] sm:$0xff]
    %v4567 = vld [vmem:[%s4180 + $0x1a] sm:$0xff]
    %v4568 = vld [vmem:[%s4180 + $0x22] sm:$0xff]
    %v4569 = vld [vmem:[%s4180 + $0x32] sm:$0xff]
    %v4570 = vld [vmem:[%s4180 + $0x3a] sm:$0xff]
    %v4571 = vld [vmem:[%s4180 + $0x4a] sm:$0xff]
    %v4572 = vld [vmem:[%s4180 + $0x52] sm:$0xff]
    %v4573 = vld [vmem:[%s4180 + $0x62] sm:$0xff]
    %v4574 = vld [vmem:[%s4180 + $0x6a] sm:$0xff]
    %v4575 = vld [vmem:[%s4180 + $0x7a] sm:$0xff]
    %v4576 = vld [vmem:[%s4180 + $0x82] sm:$0xff]
    %v4577 = vld [vmem:[%s4180 + $0x92] sm:$0xff]
    %v4578 = vld [vmem:[%s4180 + $0x9a] sm:$0xff]
    %v4579 = vld [vmem:[%s4180 + $0xaa] sm:$0xff]
    %v4580 = vld [vmem:[%s4180 + $0xb2] sm:$0xff]
    %v4581 = vld [vmem:[%s4180 + $0xc2] sm:$0xff]
    %v4582 = vld [vmem:[%s4180 + $0xca] sm:$0xff]
    %v4583 = vld [vmem:[%s4180 + $0xda] sm:$0xff]
    %v4584 = vld [vmem:[%s4180 + $0xe2] sm:$0xff]
    %v4585 = vld [vmem:[%s4180 + $0xf2] sm:$0xff]
    %v4586 = vld [vmem:[%s4180 + $0xfa] sm:$0xff]
    %v4587 = vld [vmem:[%s4180 + $0x10a] sm:$0xff]
    %v4588 = vld [vmem:[%s4180 + $0x112] sm:$0xff]
    %v4589 = vld [vmem:[%s4180 + $0x122] sm:$0xff]
    %v4590 = vld [vmem:[%s4180 + $0x12a] sm:$0xff]
    %v4591 = vld [vmem:[%s4180 + $0x13a] sm:$0xff]
    %v4592 = vld [vmem:[%s4180 + $0x142] sm:$0xff]
    %v4593 = vld [vmem:[%s4180 + $0x152] sm:$0xff]
    %v4594 = vld [vmem:[%s4180 + $0x15a] sm:$0xff]
    %v4595 = vld [vmem:[%s4180 + $0x16a] sm:$0xff]
    %v4596 = vld [vmem:[%s4180 + $0x172] sm:$0xff]
    %v4597 = vld [vmem:[%s4180 + $0x1b2] sm:$0xff]
    %v4598 = vld [vmem:[%s4180 + $0x1ba] sm:$0xff]
    %v4599 = vld [vmem:[%s4180 + $0x1ca] sm:$0xff]
    %v4600 = vld [vmem:[%s4180 + $0x1d2] sm:$0xff]
    %v4601 = vld [vmem:[%s4180 + $0x1e2] sm:$0xff]
    %v4602 = vld [vmem:[%s4180 + $0x1ea] sm:$0xff]
    %v4603 = vld [vmem:[%s4180 + $0x1fa] sm:$0xff]
    %v4604 = vld [vmem:[%s4180 + $0x202] sm:$0xff]
    %v4605 = vld [vmem:[%s4180 + $0x212] sm:$0xff]
    %v4606 = vld [vmem:[%s4180 + $0x21a] sm:$0xff]
    %v4607 = vld [vmem:[%s4180 + $0x22a] sm:$0xff]
    %v4608 = vld [vmem:[%s4180 + $0x232] sm:$0xff]
    %v4609 = vld [vmem:[%s4180 + $0x242] sm:$0xff]
    %v4610 = vld [vmem:[%s4180 + $0x24a] sm:$0xff]
    %v4611 = vld [vmem:[%s4180 + $0x25a] sm:$0xff]
    %v4612 = vld [vmem:[%s4180 + $0x262] sm:$0xff]
    %v4613 = vld [vmem:[%s4180 + $0x272] sm:$0xff]
    %v4614 = vld [vmem:[%s4180 + $0x27a] sm:$0xff]
    %v4615 = vld [vmem:[%s4180 + $0x28a] sm:$0xff]
    %v4616 = vld [vmem:[%s4180 + $0x292] sm:$0xff]
    %v4617 = vld [vmem:[%s4180 + $0x2a2] sm:$0xff]
    %v4618 = vld [vmem:[%s4180 + $0x2aa] sm:$0xff]
    %v4619 = vld [vmem:[%s4180 + $0x2ba] sm:$0xff]
    %v4620 = vld [vmem:[%s4180 + $0x2c2] sm:$0xff]
    %v4621 = vld [vmem:[%s4180 + $0x2d2] sm:$0xff]
    %v4622 = vld [vmem:[%s4180 + $0x2da] sm:$0xff]
    %v4623 = vld [vmem:[%s4180 + $0x2ea] sm:$0xff]
    %v4624 = vld [vmem:[%s4180 + $0x2f2] sm:$0xff]
    %v4625 = vld [vmem:[%s4180 + $0x302] sm:$0xff]
    %v4626 = vld [vmem:[%s4180 + $0x30a] sm:$0xff]
    %v4627 = vld [vmem:[%s4180 + $0x31a] sm:$0xff]
    %v4628 = vld [vmem:[%s4180 + $0x322] sm:$0xff]
    %s4629 = scalar_lea.vmem [#allocation3], 48
    %v4630 = vld [vmem:[%s4629] sm:$0xff]
    %v4631 = vld [vmem:[%s4629 + $0x8] sm:$0xff]
    %v4632 = vld [vmem:[%s4629 + $0x18] sm:$0xff]
    %v4633 = vld [vmem:[%s4629 + $0x20] sm:$0xff]
    %v4634 = vld [vmem:[%s4629 + $0x30] sm:$0xff]
    %v4635 = vld [vmem:[%s4629 + $0x38] sm:$0xff]
    %v4636 = vld [vmem:[%s4629 + $0x48] sm:$0xff]
    %v4637 = vld [vmem:[%s4629 + $0x50] sm:$0xff]
    %v4638 = vld [vmem:[%s4629 + $0x60] sm:$0xff]
    %v4639 = vld [vmem:[%s4629 + $0x68] sm:$0xff]
    %v4640 = vld [vmem:[%s4629 + $0x78] sm:$0xff]
    %v4641 = vld [vmem:[%s4629 + $0x80] sm:$0xff]
    %v4642 = vld [vmem:[%s4629 + $0x90] sm:$0xff]
    %v4643 = vld [vmem:[%s4629 + $0x98] sm:$0xff]
    %v4644 = vld [vmem:[%s4629 + $0xa8] sm:$0xff]
    %v4645 = vld [vmem:[%s4629 + $0xb0] sm:$0xff]
    %v4646 = vld [vmem:[%s4629 + $0xc0] sm:$0xff]
    %v4647 = vld [vmem:[%s4629 + $0xc8] sm:$0xff]
    %v4648 = vld [vmem:[%s4629 + $0xd8] sm:$0xff]
    %v4649 = vld [vmem:[%s4629 + $0xe0] sm:$0xff]
    %v4650 = vld [vmem:[%s4629 + $0xf0] sm:$0xff]
    %v4651 = vld [vmem:[%s4629 + $0xf8] sm:$0xff]
    %v4652 = vld [vmem:[%s4629 + $0x108] sm:$0xff]
    %v4653 = vld [vmem:[%s4629 + $0x110] sm:$0xff]
    %v4654 = vld [vmem:[%s4629 + $0x120] sm:$0xff]
    %v4655 = vld [vmem:[%s4629 + $0x128] sm:$0xff]
    %v4656 = vld [vmem:[%s4629 + $0x138] sm:$0xff]
    %v4657 = vld [vmem:[%s4629 + $0x140] sm:$0xff]
    %v4658 = vld [vmem:[%s4629 + $0x150] sm:$0xff]
    %v4659 = vld [vmem:[%s4629 + $0x158] sm:$0xff]
    %v4660 = vld [vmem:[%s4629 + $0x168] sm:$0xff]
    %v4661 = vld [vmem:[%s4629 + $0x170] sm:$0xff]
    %v4662 = vld [vmem:[%s4629 + $0x1b0] sm:$0xff]
    %v4663 = vld [vmem:[%s4629 + $0x1b8] sm:$0xff]
    %v4664 = vld [vmem:[%s4629 + $0x1c8] sm:$0xff]
    %v4665 = vld [vmem:[%s4629 + $0x1d0] sm:$0xff]
    %v4666 = vld [vmem:[%s4629 + $0x1e0] sm:$0xff]
    %v4667 = vld [vmem:[%s4629 + $0x1e8] sm:$0xff]
    %v4668 = vld [vmem:[%s4629 + $0x1f8] sm:$0xff]
    %v4669 = vld [vmem:[%s4629 + $0x200] sm:$0xff]
    %v4670 = vld [vmem:[%s4629 + $0x210] sm:$0xff]
    %v4671 = vld [vmem:[%s4629 + $0x218] sm:$0xff]
    %v4672 = vld [vmem:[%s4629 + $0x228] sm:$0xff]
    %v4673 = vld [vmem:[%s4629 + $0x230] sm:$0xff]
    %v4674 = vld [vmem:[%s4629 + $0x240] sm:$0xff]
    %v4675 = vld [vmem:[%s4629 + $0x248] sm:$0xff]
    %v4676 = vld [vmem:[%s4629 + $0x258] sm:$0xff]
    %v4677 = vld [vmem:[%s4629 + $0x260] sm:$0xff]
    %v4678 = vld [vmem:[%s4629 + $0x270] sm:$0xff]
    %v4679 = vld [vmem:[%s4629 + $0x278] sm:$0xff]
    %v4680 = vld [vmem:[%s4629 + $0x288] sm:$0xff]
    %v4681 = vld [vmem:[%s4629 + $0x290] sm:$0xff]
    %v4682 = vld [vmem:[%s4629 + $0x2a0] sm:$0xff]
    %v4683 = vld [vmem:[%s4629 + $0x2a8] sm:$0xff]
    %v4684 = vld [vmem:[%s4629 + $0x2b8] sm:$0xff]
    %v4685 = vld [vmem:[%s4629 + $0x2c0] sm:$0xff]
    %v4686 = vld [vmem:[%s4629 + $0x2d0] sm:$0xff]
    %v4687 = vld [vmem:[%s4629 + $0x2d8] sm:$0xff]
    %v4688 = vld [vmem:[%s4629 + $0x2e8] sm:$0xff]
    %v4689 = vld [vmem:[%s4629 + $0x2f0] sm:$0xff]
    %v4690 = vld [vmem:[%s4629 + $0x300] sm:$0xff]
    %v4691 = vld [vmem:[%s4629 + $0x308] sm:$0xff]
    %v4692 = vld [vmem:[%s4629 + $0x318] sm:$0xff]
    %v4693 = vld [vmem:[%s4629 + $0x320] sm:$0xff]
    %v4694 = vld [vmem:[%s4629 + $0x1] sm:$0xff]
    %v4695 = vld [vmem:[%s4629 + $0x9] sm:$0xff]
    %v4696 = vld [vmem:[%s4629 + $0x19] sm:$0xff]
    %v4697 = vld [vmem:[%s4629 + $0x21] sm:$0xff]
    %v4698 = vld [vmem:[%s4629 + $0x31] sm:$0xff]
    %v4699 = vld [vmem:[%s4629 + $0x39] sm:$0xff]
    %v4700 = vld [vmem:[%s4629 + $0x49] sm:$0xff]
    %v4701 = vld [vmem:[%s4629 + $0x51] sm:$0xff]
    %v4702 = vld [vmem:[%s4629 + $0x61] sm:$0xff]
    %v4703 = vld [vmem:[%s4629 + $0x69] sm:$0xff]
    %v4704 = vld [vmem:[%s4629 + $0x79] sm:$0xff]
    %v4705 = vld [vmem:[%s4629 + $0x81] sm:$0xff]
    %v4706 = vld [vmem:[%s4629 + $0x91] sm:$0xff]
    %v4707 = vld [vmem:[%s4629 + $0x99] sm:$0xff]
    %v4708 = vld [vmem:[%s4629 + $0xa9] sm:$0xff]
    %v4709 = vld [vmem:[%s4629 + $0xb1] sm:$0xff]
    %v4710 = vld [vmem:[%s4629 + $0xc1] sm:$0xff]
    %v4711 = vld [vmem:[%s4629 + $0xc9] sm:$0xff]
    %v4712 = vld [vmem:[%s4629 + $0xd9] sm:$0xff]
    %v4713 = vld [vmem:[%s4629 + $0xe1] sm:$0xff]
    %v4714 = vld [vmem:[%s4629 + $0xf1] sm:$0xff]
    %v4715 = vld [vmem:[%s4629 + $0xf9] sm:$0xff]
    %v4716 = vld [vmem:[%s4629 + $0x109] sm:$0xff]
    %v4717 = vld [vmem:[%s4629 + $0x111] sm:$0xff]
    %v4718 = vld [vmem:[%s4629 + $0x121] sm:$0xff]
    %v4719 = vld [vmem:[%s4629 + $0x129] sm:$0xff]
    %v4720 = vld [vmem:[%s4629 + $0x139] sm:$0xff]
    %v4721 = vld [vmem:[%s4629 + $0x141] sm:$0xff]
    %v4722 = vld [vmem:[%s4629 + $0x151] sm:$0xff]
    %v4723 = vld [vmem:[%s4629 + $0x159] sm:$0xff]
    %v4724 = vld [vmem:[%s4629 + $0x169] sm:$0xff]
    %v4725 = vld [vmem:[%s4629 + $0x171] sm:$0xff]
    %v4726 = vld [vmem:[%s4629 + $0x1b1] sm:$0xff]
    %v4727 = vld [vmem:[%s4629 + $0x1b9] sm:$0xff]
    %v4728 = vld [vmem:[%s4629 + $0x1c9] sm:$0xff]
    %v4729 = vld [vmem:[%s4629 + $0x1d1] sm:$0xff]
    %v4730 = vld [vmem:[%s4629 + $0x1e1] sm:$0xff]
    %v4731 = vld [vmem:[%s4629 + $0x1e9] sm:$0xff]
    %v4732 = vld [vmem:[%s4629 + $0x1f9] sm:$0xff]
    %v4733 = vld [vmem:[%s4629 + $0x201] sm:$0xff]
    %v4734 = vld [vmem:[%s4629 + $0x211] sm:$0xff]
    %v4735 = vld [vmem:[%s4629 + $0x219] sm:$0xff]
    %v4736 = vld [vmem:[%s4629 + $0x229] sm:$0xff]
    %v4737 = vld [vmem:[%s4629 + $0x231] sm:$0xff]
    %v4738 = vld [vmem:[%s4629 + $0x241] sm:$0xff]
    %v4739 = vld [vmem:[%s4629 + $0x249] sm:$0xff]
    %v4740 = vld [vmem:[%s4629 + $0x259] sm:$0xff]
    %v4741 = vld [vmem:[%s4629 + $0x261] sm:$0xff]
    %v4742 = vld [vmem:[%s4629 + $0x271] sm:$0xff]
    %v4743 = vld [vmem:[%s4629 + $0x279] sm:$0xff]
    %v4744 = vld [vmem:[%s4629 + $0x289] sm:$0xff]
    %v4745 = vld [vmem:[%s4629 + $0x291] sm:$0xff]
    %v4746 = vld [vmem:[%s4629 + $0x2a1] sm:$0xff]
    %v4747 = vld [vmem:[%s4629 + $0x2a9] sm:$0xff]
    %v4748 = vld [vmem:[%s4629 + $0x2b9] sm:$0xff]
    %v4749 = vld [vmem:[%s4629 + $0x2c1] sm:$0xff]
    %v4750 = vld [vmem:[%s4629 + $0x2d1] sm:$0xff]
    %v4751 = vld [vmem:[%s4629 + $0x2d9] sm:$0xff]
    %v4752 = vld [vmem:[%s4629 + $0x2e9] sm:$0xff]
    %v4753 = vld [vmem:[%s4629 + $0x2f1] sm:$0xff]
    %v4754 = vld [vmem:[%s4629 + $0x301] sm:$0xff]
    %v4755 = vld [vmem:[%s4629 + $0x309] sm:$0xff]
    %v4756 = vld [vmem:[%s4629 + $0x319] sm:$0xff]
    %v4757 = vld [vmem:[%s4629 + $0x321] sm:$0xff]
    %v4758 = vld [vmem:[%s4629 + $0x2] sm:$0xff]
    %v4759 = vld [vmem:[%s4629 + $0xa] sm:$0xff]
    %v4760 = vld [vmem:[%s4629 + $0x1a] sm:$0xff]
    %v4761 = vld [vmem:[%s4629 + $0x22] sm:$0xff]
    %v4762 = vld [vmem:[%s4629 + $0x32] sm:$0xff]
    %v4763 = vld [vmem:[%s4629 + $0x3a] sm:$0xff]
    %v4764 = vld [vmem:[%s4629 + $0x4a] sm:$0xff]
    %v4765 = vld [vmem:[%s4629 + $0x52] sm:$0xff]
    %v4766 = vld [vmem:[%s4629 + $0x62] sm:$0xff]
    %v4767 = vld [vmem:[%s4629 + $0x6a] sm:$0xff]
    %v4768 = vld [vmem:[%s4629 + $0x7a] sm:$0xff]
    %v4769 = vld [vmem:[%s4629 + $0x82] sm:$0xff]
    %v4770 = vld [vmem:[%s4629 + $0x92] sm:$0xff]
    %v4771 = vld [vmem:[%s4629 + $0x9a] sm:$0xff]
    %v4772 = vld [vmem:[%s4629 + $0xaa] sm:$0xff]
    %v4773 = vld [vmem:[%s4629 + $0xb2] sm:$0xff]
    %v4774 = vld [vmem:[%s4629 + $0xc2] sm:$0xff]
    %v4775 = vld [vmem:[%s4629 + $0xca] sm:$0xff]
    %v4776 = vld [vmem:[%s4629 + $0xda] sm:$0xff]
    %v4777 = vld [vmem:[%s4629 + $0xe2] sm:$0xff]
    %v4778 = vld [vmem:[%s4629 + $0xf2] sm:$0xff]
    %v4779 = vld [vmem:[%s4629 + $0xfa] sm:$0xff]
    %v4780 = vld [vmem:[%s4629 + $0x10a] sm:$0xff]
    %v4781 = vld [vmem:[%s4629 + $0x112] sm:$0xff]
    %v4782 = vld [vmem:[%s4629 + $0x122] sm:$0xff]
    %v4783 = vld [vmem:[%s4629 + $0x12a] sm:$0xff]
    %v4784 = vld [vmem:[%s4629 + $0x13a] sm:$0xff]
    %v4785 = vld [vmem:[%s4629 + $0x142] sm:$0xff]
    %v4786 = vld [vmem:[%s4629 + $0x152] sm:$0xff]
    %v4787 = vld [vmem:[%s4629 + $0x15a] sm:$0xff]
    %v4788 = vld [vmem:[%s4629 + $0x16a] sm:$0xff]
    %v4789 = vld [vmem:[%s4629 + $0x172] sm:$0xff]
    %v4790 = vld [vmem:[%s4629 + $0x1b2] sm:$0xff]
    %v4791 = vld [vmem:[%s4629 + $0x1ba] sm:$0xff]
    %v4792 = vld [vmem:[%s4629 + $0x1ca] sm:$0xff]
    %v4793 = vld [vmem:[%s4629 + $0x1d2] sm:$0xff]
    %v4794 = vld [vmem:[%s4629 + $0x1e2] sm:$0xff]
    %v4795 = vld [vmem:[%s4629 + $0x1ea] sm:$0xff]
    %v4796 = vld [vmem:[%s4629 + $0x1fa] sm:$0xff]
    %v4797 = vld [vmem:[%s4629 + $0x202] sm:$0xff]
    %v4798 = vld [vmem:[%s4629 + $0x212] sm:$0xff]
    %v4799 = vld [vmem:[%s4629 + $0x21a] sm:$0xff]
    %v4800 = vld [vmem:[%s4629 + $0x22a] sm:$0xff]
    %v4801 = vld [vmem:[%s4629 + $0x232] sm:$0xff]
    %v4802 = vld [vmem:[%s4629 + $0x242] sm:$0xff]
    %v4803 = vld [vmem:[%s4629 + $0x24a] sm:$0xff]
    %v4804 = vld [vmem:[%s4629 + $0x25a] sm:$0xff]
    %v4805 = vld [vmem:[%s4629 + $0x262] sm:$0xff]
    %v4806 = vld [vmem:[%s4629 + $0x272] sm:$0xff]
    %v4807 = vld [vmem:[%s4629 + $0x27a] sm:$0xff]
    %v4808 = vld [vmem:[%s4629 + $0x28a] sm:$0xff]
    %v4809 = vld [vmem:[%s4629 + $0x292] sm:$0xff]
    %v4810 = vld [vmem:[%s4629 + $0x2a2] sm:$0xff]
    %v4811 = vld [vmem:[%s4629 + $0x2aa] sm:$0xff]
    %v4812 = vld [vmem:[%s4629 + $0x2ba] sm:$0xff]
    %v4813 = vld [vmem:[%s4629 + $0x2c2] sm:$0xff]
    %v4814 = vld [vmem:[%s4629 + $0x2d2] sm:$0xff]
    %v4815 = vld [vmem:[%s4629 + $0x2da] sm:$0xff]
    %v4816 = vld [vmem:[%s4629 + $0x2ea] sm:$0xff]
    %v4817 = vld [vmem:[%s4629 + $0x2f2] sm:$0xff]
    %v4818 = vld [vmem:[%s4629 + $0x302] sm:$0xff]
    %v4819 = vld [vmem:[%s4629 + $0x30a] sm:$0xff]
    %v4820 = vld [vmem:[%s4629 + $0x31a] sm:$0xff]
    %v4821 = vld [vmem:[%s4629 + $0x322] sm:$0xff]
    %4886 = vrot.lane.b32.xlu0 %v4309, 32
    %v4887 = vpop.permute.xlu0 %4886
    %4888 = vrot.lane.b32.xlu0 %v4310, 32
    %v4889 = vpop.permute.xlu0 %4888
    %4890 = vrot.lane.b32.xlu0 %v4311, 32
    %v4891 = vpop.permute.xlu0 %4890
    %4892 = vrot.lane.b32.xlu0 %v4312, 32
    %v4893 = vpop.permute.xlu0 %4892
    %4894 = vrot.lane.b32.xlu0 %v4313, 32
    %v4895 = vpop.permute.xlu0 %4894
    %4896 = vrot.lane.b32.xlu0 %v4314, 32
    %v4897 = vpop.permute.xlu0 %4896
    %4898 = vrot.lane.b32.xlu0 %v4315, 32
    %v4899 = vpop.permute.xlu0 %4898
    %4900 = vrot.lane.b32.xlu0 %v4316, 32
    %v4901 = vpop.permute.xlu0 %4900
    %4902 = vrot.lane.b32.xlu0 %v4317, 32
    %v4903 = vpop.permute.xlu0 %4902
    %4904 = vrot.lane.b32.xlu0 %v4318, 32
    %v4905 = vpop.permute.xlu0 %4904
    %4906 = vrot.lane.b32.xlu0 %v4319, 32
    %v4907 = vpop.permute.xlu0 %4906
    %4908 = vrot.lane.b32.xlu0 %v4320, 32
    %v4909 = vpop.permute.xlu0 %4908
    %4910 = vrot.lane.b32.xlu0 %v4321, 32
    %v4911 = vpop.permute.xlu0 %4910
    %4912 = vrot.lane.b32.xlu0 %v4322, 32
    %v4913 = vpop.permute.xlu0 %4912
    %4914 = vrot.lane.b32.xlu0 %v4323, 32
    %v4915 = vpop.permute.xlu0 %4914
    %4916 = vrot.lane.b32.xlu0 %v4324, 32
    %v4917 = vpop.permute.xlu0 %4916
    %4918 = vrot.lane.b32.xlu0 %v4325, 32
    %v4919 = vpop.permute.xlu0 %4918
    %4920 = vrot.lane.b32.xlu0 %v4326, 32
    %v4921 = vpop.permute.xlu0 %4920
    %4922 = vrot.lane.b32.xlu0 %v4327, 32
    %v4923 = vpop.permute.xlu0 %4922
    %4924 = vrot.lane.b32.xlu0 %v4328, 32
    %v4925 = vpop.permute.xlu0 %4924
    %4926 = vrot.lane.b32.xlu0 %v4329, 32
    %v4927 = vpop.permute.xlu0 %4926
    %4928 = vrot.lane.b32.xlu0 %v4330, 32
    %v4929 = vpop.permute.xlu0 %4928
    %4930 = vrot.lane.b32.xlu0 %v4331, 32
    %v4931 = vpop.permute.xlu0 %4930
    %4932 = vrot.lane.b32.xlu0 %v4332, 32
    %v4933 = vpop.permute.xlu0 %4932
    %4934 = vrot.lane.b32.xlu0 %v4333, 32
    %v4935 = vpop.permute.xlu0 %4934
    %4936 = vrot.lane.b32.xlu0 %v4334, 32
    %v4937 = vpop.permute.xlu0 %4936
    %4938 = vrot.lane.b32.xlu0 %v4335, 32
    %v4939 = vpop.permute.xlu0 %4938
    %4940 = vrot.lane.b32.xlu0 %v4336, 32
    %v4941 = vpop.permute.xlu0 %4940
    %4942 = vrot.lane.b32.xlu0 %v4337, 32
    %v4943 = vpop.permute.xlu0 %4942
    %4944 = vrot.lane.b32.xlu0 %v4338, 32
    %v4945 = vpop.permute.xlu0 %4944
    %4946 = vrot.lane.b32.xlu0 %v4339, 32
    %v4947 = vpop.permute.xlu0 %4946
    %4948 = vrot.lane.b32.xlu0 %v4340, 32
    %v4949 = vpop.permute.xlu0 %4948
    %4950 = vrot.lane.b32.xlu0 %v4341, 32
    %v4951 = vpop.permute.xlu0 %4950
    %4952 = vrot.lane.b32.xlu0 %v4342, 32
    %v4953 = vpop.permute.xlu0 %4952
    %4954 = vrot.lane.b32.xlu0 %v4343, 32
    %v4955 = vpop.permute.xlu0 %4954
    %4956 = vrot.lane.b32.xlu0 %v4344, 32
    %v4957 = vpop.permute.xlu0 %4956
    %4958 = vrot.lane.b32.xlu0 %v4345, 32
    %v4959 = vpop.permute.xlu0 %4958
    %4960 = vrot.lane.b32.xlu0 %v4346, 32
    %v4961 = vpop.permute.xlu0 %4960
    %4962 = vrot.lane.b32.xlu0 %v4347, 32
    %v4963 = vpop.permute.xlu0 %4962
    %4964 = vrot.lane.b32.xlu0 %v4348, 32
    %v4965 = vpop.permute.xlu0 %4964
    %4966 = vrot.lane.b32.xlu0 %v4349, 32
    %v4967 = vpop.permute.xlu0 %4966
    %4968 = vrot.lane.b32.xlu0 %v4350, 32
    %v4969 = vpop.permute.xlu0 %4968
    %4970 = vrot.lane.b32.xlu0 %v4351, 32
    %v4971 = vpop.permute.xlu0 %4970
    %4972 = vrot.lane.b32.xlu0 %v4352, 32
    %v4973 = vpop.permute.xlu0 %4972
    %4974 = vrot.lane.b32.xlu0 %v4353, 32
    %v4975 = vpop.permute.xlu0 %4974
    %4976 = vrot.lane.b32.xlu0 %v4354, 32
    %v4977 = vpop.permute.xlu0 %4976
    %4978 = vrot.lane.b32.xlu0 %v4355, 32
    %v4979 = vpop.permute.xlu0 %4978
    %4980 = vrot.lane.b32.xlu0 %v4356, 32
    %v4981 = vpop.permute.xlu0 %4980
    %4982 = vrot.lane.b32.xlu0 %v4357, 32
    %v4983 = vpop.permute.xlu0 %4982
    %4984 = vrot.lane.b32.xlu0 %v4358, 32
    %v4985 = vpop.permute.xlu0 %4984
    %4986 = vrot.lane.b32.xlu0 %v4359, 32
    %v4987 = vpop.permute.xlu0 %4986
    %4988 = vrot.lane.b32.xlu0 %v4360, 32
    %v4989 = vpop.permute.xlu0 %4988
    %4990 = vrot.lane.b32.xlu0 %v4361, 32
    %v4991 = vpop.permute.xlu0 %4990
    %4992 = vrot.lane.b32.xlu0 %v4362, 32
    %v4993 = vpop.permute.xlu0 %4992
    %4994 = vrot.lane.b32.xlu0 %v4363, 32
    %v4995 = vpop.permute.xlu0 %4994
    %4996 = vrot.lane.b32.xlu0 %v4364, 32
    %v4997 = vpop.permute.xlu0 %4996
    %4998 = vrot.lane.b32.xlu0 %v4365, 32
    %v4999 = vpop.permute.xlu0 %4998
    %5000 = vrot.lane.b32.xlu0 %v4366, 32
    %v5001 = vpop.permute.xlu0 %5000
    %5002 = vrot.lane.b32.xlu0 %v4367, 32
    %v5003 = vpop.permute.xlu0 %5002
    %5004 = vrot.lane.b32.xlu0 %v4368, 32
    %v5005 = vpop.permute.xlu0 %5004
    %5006 = vrot.lane.b32.xlu0 %v4369, 32
    %v5007 = vpop.permute.xlu0 %5006
    %5008 = vrot.lane.b32.xlu0 %v4370, 32
    %v5009 = vpop.permute.xlu0 %5008
    %5010 = vrot.lane.b32.xlu0 %v4371, 32
    %v5011 = vpop.permute.xlu0 %5010
    %5012 = vrot.lane.b32.xlu0 %v4372, 32
    %v5013 = vpop.permute.xlu0 %5012
    %5142 = vrot.lane.b32.xlu0 %v4373, 64
    %v5143 = vpop.permute.xlu0 %5142
    %5144 = vrot.lane.b32.xlu0 %v4374, 64
    %v5145 = vpop.permute.xlu0 %5144
    %5146 = vrot.lane.b32.xlu0 %v4375, 64
    %v5147 = vpop.permute.xlu0 %5146
    %5148 = vrot.lane.b32.xlu0 %v4376, 64
    %v5149 = vpop.permute.xlu0 %5148
    %5150 = vrot.lane.b32.xlu0 %v4377, 64
    %v5151 = vpop.permute.xlu0 %5150
    %5152 = vrot.lane.b32.xlu0 %v4378, 64
    %v5153 = vpop.permute.xlu0 %5152
    %5154 = vrot.lane.b32.xlu0 %v4379, 64
    %v5155 = vpop.permute.xlu0 %5154
    %5156 = vrot.lane.b32.xlu0 %v4380, 64
    %v5157 = vpop.permute.xlu0 %5156
    %5158 = vrot.lane.b32.xlu0 %v4381, 64
    %v5159 = vpop.permute.xlu0 %5158
    %5160 = vrot.lane.b32.xlu0 %v4382, 64
    %v5161 = vpop.permute.xlu0 %5160
    %5162 = vrot.lane.b32.xlu0 %v4383, 64
    %v5163 = vpop.permute.xlu0 %5162
    %5164 = vrot.lane.b32.xlu0 %v4384, 64
    %v5165 = vpop.permute.xlu0 %5164
    %5166 = vrot.lane.b32.xlu0 %v4385, 64
    %v5167 = vpop.permute.xlu0 %5166
    %5168 = vrot.lane.b32.xlu0 %v4386, 64
    %v5169 = vpop.permute.xlu0 %5168
    %5170 = vrot.lane.b32.xlu0 %v4387, 64
    %v5171 = vpop.permute.xlu0 %5170
    %5172 = vrot.lane.b32.xlu0 %v4388, 64
    %v5173 = vpop.permute.xlu0 %5172
    %5174 = vrot.lane.b32.xlu0 %v4389, 64
    %v5175 = vpop.permute.xlu0 %5174
    %5176 = vrot.lane.b32.xlu0 %v4390, 64
    %v5177 = vpop.permute.xlu0 %5176
    %5178 = vrot.lane.b32.xlu0 %v4391, 64
    %v5179 = vpop.permute.xlu0 %5178
    %5180 = vrot.lane.b32.xlu0 %v4392, 64
    %v5181 = vpop.permute.xlu0 %5180
    %5182 = vrot.lane.b32.xlu0 %v4393, 64
    %v5183 = vpop.permute.xlu0 %5182
    %5184 = vrot.lane.b32.xlu0 %v4394, 64
    %v5185 = vpop.permute.xlu0 %5184
    %5186 = vrot.lane.b32.xlu0 %v4395, 64
    %v5187 = vpop.permute.xlu0 %5186
    %5188 = vrot.lane.b32.xlu0 %v4396, 64
    %v5189 = vpop.permute.xlu0 %5188
    %5190 = vrot.lane.b32.xlu0 %v4397, 64
    %v5191 = vpop.permute.xlu0 %5190
    %5192 = vrot.lane.b32.xlu0 %v4398, 64
    %v5193 = vpop.permute.xlu0 %5192
    %5194 = vrot.lane.b32.xlu0 %v4399, 64
    %v5195 = vpop.permute.xlu0 %5194
    %5196 = vrot.lane.b32.xlu0 %v4400, 64
    %v5197 = vpop.permute.xlu0 %5196
    %5198 = vrot.lane.b32.xlu0 %v4401, 64
    %v5199 = vpop.permute.xlu0 %5198
    %5200 = vrot.lane.b32.xlu0 %v4402, 64
    %v5201 = vpop.permute.xlu0 %5200
    %5202 = vrot.lane.b32.xlu0 %v4403, 64
    %v5203 = vpop.permute.xlu0 %5202
    %5204 = vrot.lane.b32.xlu0 %v4404, 64
    %v5205 = vpop.permute.xlu0 %5204
    %5206 = vrot.lane.b32.xlu0 %v4405, 64
    %v5207 = vpop.permute.xlu0 %5206
    %5208 = vrot.lane.b32.xlu0 %v4406, 64
    %v5209 = vpop.permute.xlu0 %5208
    %5210 = vrot.lane.b32.xlu0 %v4407, 64
    %v5211 = vpop.permute.xlu0 %5210
    %5212 = vrot.lane.b32.xlu0 %v4408, 64
    %v5213 = vpop.permute.xlu0 %5212
    %5214 = vrot.lane.b32.xlu0 %v4409, 64
    %v5215 = vpop.permute.xlu0 %5214
    %5216 = vrot.lane.b32.xlu0 %v4410, 64
    %v5217 = vpop.permute.xlu0 %5216
    %5218 = vrot.lane.b32.xlu0 %v4411, 64
    %v5219 = vpop.permute.xlu0 %5218
    %5220 = vrot.lane.b32.xlu0 %v4412, 64
    %v5221 = vpop.permute.xlu0 %5220
    %5222 = vrot.lane.b32.xlu0 %v4413, 64
    %v5223 = vpop.permute.xlu0 %5222
    %5224 = vrot.lane.b32.xlu0 %v4414, 64
    %v5225 = vpop.permute.xlu0 %5224
    %5226 = vrot.lane.b32.xlu0 %v4415, 64
    %v5227 = vpop.permute.xlu0 %5226
    %5228 = vrot.lane.b32.xlu0 %v4416, 64
    %v5229 = vpop.permute.xlu0 %5228
    %5230 = vrot.lane.b32.xlu0 %v4417, 64
    %v5231 = vpop.permute.xlu0 %5230
    %5232 = vrot.lane.b32.xlu0 %v4418, 64
    %v5233 = vpop.permute.xlu0 %5232
    %5234 = vrot.lane.b32.xlu0 %v4419, 64
    %v5235 = vpop.permute.xlu0 %5234
    %5236 = vrot.lane.b32.xlu0 %v4420, 64
    %v5237 = vpop.permute.xlu0 %5236
    %5238 = vrot.lane.b32.xlu0 %v4421, 64
    %v5239 = vpop.permute.xlu0 %5238
    %5240 = vrot.lane.b32.xlu0 %v4422, 64
    %v5241 = vpop.permute.xlu0 %5240
    %5242 = vrot.lane.b32.xlu0 %v4423, 64
    %v5243 = vpop.permute.xlu0 %5242
    %5244 = vrot.lane.b32.xlu0 %v4424, 64
    %v5245 = vpop.permute.xlu0 %5244
    %5246 = vrot.lane.b32.xlu0 %v4425, 64
    %v5247 = vpop.permute.xlu0 %5246
    %5248 = vrot.lane.b32.xlu0 %v4426, 64
    %v5249 = vpop.permute.xlu0 %5248
    %5250 = vrot.lane.b32.xlu0 %v4427, 64
    %v5251 = vpop.permute.xlu0 %5250
    %5252 = vrot.lane.b32.xlu0 %v4428, 64
    %v5253 = vpop.permute.xlu0 %5252
    %5254 = vrot.lane.b32.xlu0 %v4429, 64
    %v5255 = vpop.permute.xlu0 %5254
    %5256 = vrot.lane.b32.xlu0 %v4430, 64
    %v5257 = vpop.permute.xlu0 %5256
    %5258 = vrot.lane.b32.xlu0 %v4431, 64
    %v5259 = vpop.permute.xlu0 %5258
    %5260 = vrot.lane.b32.xlu0 %v4432, 64
    %v5261 = vpop.permute.xlu0 %5260
    %5262 = vrot.lane.b32.xlu0 %v4433, 64
    %v5263 = vpop.permute.xlu0 %5262
    %5264 = vrot.lane.b32.xlu0 %v4434, 64
    %v5265 = vpop.permute.xlu0 %5264
    %5266 = vrot.lane.b32.xlu0 %v4435, 64
    %v5267 = vpop.permute.xlu0 %5266
    %5268 = vrot.lane.b32.xlu0 %v4436, 64
    %v5269 = vpop.permute.xlu0 %5268
    %5398 = vrot.lane.b32.xlu0 %v4437, 96
    %v5399 = vpop.permute.xlu0 %5398
    %5400 = vrot.lane.b32.xlu0 %v4438, 96
    %v5401 = vpop.permute.xlu0 %5400
    %5402 = vrot.lane.b32.xlu0 %v4439, 96
    %v5403 = vpop.permute.xlu0 %5402
    %5404 = vrot.lane.b32.xlu0 %v4440, 96
    %v5405 = vpop.permute.xlu0 %5404
    %5406 = vrot.lane.b32.xlu0 %v4441, 96
    %v5407 = vpop.permute.xlu0 %5406
    %5408 = vrot.lane.b32.xlu0 %v4442, 96
    %v5409 = vpop.permute.xlu0 %5408
    %5410 = vrot.lane.b32.xlu0 %v4443, 96
    %v5411 = vpop.permute.xlu0 %5410
    %5412 = vrot.lane.b32.xlu0 %v4444, 96
    %v5413 = vpop.permute.xlu0 %5412
    %5414 = vrot.lane.b32.xlu0 %v4445, 96
    %v5415 = vpop.permute.xlu0 %5414
    %5416 = vrot.lane.b32.xlu0 %v4446, 96
    %v5417 = vpop.permute.xlu0 %5416
    %5418 = vrot.lane.b32.xlu0 %v4447, 96
    %v5419 = vpop.permute.xlu0 %5418
    %5420 = vrot.lane.b32.xlu0 %v4448, 96
    %v5421 = vpop.permute.xlu0 %5420
    %5422 = vrot.lane.b32.xlu0 %v4449, 96
    %v5423 = vpop.permute.xlu0 %5422
    %5424 = vrot.lane.b32.xlu0 %v4450, 96
    %v5425 = vpop.permute.xlu0 %5424
    %5426 = vrot.lane.b32.xlu0 %v4451, 96
    %v5427 = vpop.permute.xlu0 %5426
    %5428 = vrot.lane.b32.xlu0 %v4452, 96
    %v5429 = vpop.permute.xlu0 %5428
    %5430 = vrot.lane.b32.xlu0 %v4453, 96
    %v5431 = vpop.permute.xlu0 %5430
    %5432 = vrot.lane.b32.xlu0 %v4454, 96
    %v5433 = vpop.permute.xlu0 %5432
    %5434 = vrot.lane.b32.xlu0 %v4455, 96
    %v5435 = vpop.permute.xlu0 %5434
    %5436 = vrot.lane.b32.xlu0 %v4456, 96
    %v5437 = vpop.permute.xlu0 %5436
    %5438 = vrot.lane.b32.xlu0 %v4457, 96
    %v5439 = vpop.permute.xlu0 %5438
    %5440 = vrot.lane.b32.xlu0 %v4458, 96
    %v5441 = vpop.permute.xlu0 %5440
    %5442 = vrot.lane.b32.xlu0 %v4459, 96
    %v5443 = vpop.permute.xlu0 %5442
    %5444 = vrot.lane.b32.xlu0 %v4460, 96
    %v5445 = vpop.permute.xlu0 %5444
    %5446 = vrot.lane.b32.xlu0 %v4461, 96
    %v5447 = vpop.permute.xlu0 %5446
    %5448 = vrot.lane.b32.xlu0 %v4462, 96
    %v5449 = vpop.permute.xlu0 %5448
    %5450 = vrot.lane.b32.xlu0 %v4463, 96
    %v5451 = vpop.permute.xlu0 %5450
    %5452 = vrot.lane.b32.xlu0 %v4464, 96
    %v5453 = vpop.permute.xlu0 %5452
    %5454 = vrot.lane.b32.xlu0 %v4465, 96
    %v5455 = vpop.permute.xlu0 %5454
    %5456 = vrot.lane.b32.xlu0 %v4466, 96
    %v5457 = vpop.permute.xlu0 %5456
    %5458 = vrot.lane.b32.xlu0 %v4467, 96
    %v5459 = vpop.permute.xlu0 %5458
    %5460 = vrot.lane.b32.xlu0 %v4468, 96
    %v5461 = vpop.permute.xlu0 %5460
    %5462 = vrot.lane.b32.xlu0 %v4469, 96
    %v5463 = vpop.permute.xlu0 %5462
    %5464 = vrot.lane.b32.xlu0 %v4470, 96
    %v5465 = vpop.permute.xlu0 %5464
    %5466 = vrot.lane.b32.xlu0 %v4471, 96
    %v5467 = vpop.permute.xlu0 %5466
    %5468 = vrot.lane.b32.xlu0 %v4472, 96
    %v5469 = vpop.permute.xlu0 %5468
    %5470 = vrot.lane.b32.xlu0 %v4473, 96
    %v5471 = vpop.permute.xlu0 %5470
    %5472 = vrot.lane.b32.xlu0 %v4474, 96
    %v5473 = vpop.permute.xlu0 %5472
    %5474 = vrot.lane.b32.xlu0 %v4475, 96
    %v5475 = vpop.permute.xlu0 %5474
    %5476 = vrot.lane.b32.xlu0 %v4476, 96
    %v5477 = vpop.permute.xlu0 %5476
    %5478 = vrot.lane.b32.xlu0 %v4477, 96
    %v5479 = vpop.permute.xlu0 %5478
    %5480 = vrot.lane.b32.xlu0 %v4478, 96
    %v5481 = vpop.permute.xlu0 %5480
    %5482 = vrot.lane.b32.xlu0 %v4479, 96
    %v5483 = vpop.permute.xlu0 %5482
    %5484 = vrot.lane.b32.xlu0 %v4480, 96
    %v5485 = vpop.permute.xlu0 %5484
    %5486 = vrot.lane.b32.xlu0 %v4481, 96
    %v5487 = vpop.permute.xlu0 %5486
    %5488 = vrot.lane.b32.xlu0 %v4482, 96
    %v5489 = vpop.permute.xlu0 %5488
    %5490 = vrot.lane.b32.xlu0 %v4483, 96
    %v5491 = vpop.permute.xlu0 %5490
    %5492 = vrot.lane.b32.xlu0 %v4484, 96
    %v5493 = vpop.permute.xlu0 %5492
    %5494 = vrot.lane.b32.xlu0 %v4485, 96
    %v5495 = vpop.permute.xlu0 %5494
    %5496 = vrot.lane.b32.xlu0 %v4486, 96
    %v5497 = vpop.permute.xlu0 %5496
    %5498 = vrot.lane.b32.xlu0 %v4487, 96
    %v5499 = vpop.permute.xlu0 %5498
    %5500 = vrot.lane.b32.xlu0 %v4488, 96
    %v5501 = vpop.permute.xlu0 %5500
    %5502 = vrot.lane.b32.xlu0 %v4489, 96
    %v5503 = vpop.permute.xlu0 %5502
    %5504 = vrot.lane.b32.xlu0 %v4490, 96
    %v5505 = vpop.permute.xlu0 %5504
    %5506 = vrot.lane.b32.xlu0 %v4491, 96
    %v5507 = vpop.permute.xlu0 %5506
    %5508 = vrot.lane.b32.xlu0 %v4492, 96
    %v5509 = vpop.permute.xlu0 %5508
    %5510 = vrot.lane.b32.xlu0 %v4493, 96
    %v5511 = vpop.permute.xlu0 %5510
    %5512 = vrot.lane.b32.xlu0 %v4494, 96
    %v5513 = vpop.permute.xlu0 %5512
    %5514 = vrot.lane.b32.xlu0 %v4495, 96
    %v5515 = vpop.permute.xlu0 %5514
    %5516 = vrot.lane.b32.xlu0 %v4496, 96
    %v5517 = vpop.permute.xlu0 %5516
    %5518 = vrot.lane.b32.xlu0 %v4497, 96
    %v5519 = vpop.permute.xlu0 %5518
    %5520 = vrot.lane.b32.xlu0 %v4498, 96
    %v5521 = vpop.permute.xlu0 %5520
    %5522 = vrot.lane.b32.xlu0 %v4499, 96
    %v5523 = vpop.permute.xlu0 %5522
    %5524 = vrot.lane.b32.xlu0 %v4500, 96
    %v5525 = vpop.permute.xlu0 %5524
    %5654 = vrot.lane.b32.xlu0 %v4565, 32
    %v5655 = vpop.permute.xlu0 %5654
    %5656 = vrot.lane.b32.xlu0 %v4566, 32
    %v5657 = vpop.permute.xlu0 %5656
    %5658 = vrot.lane.b32.xlu0 %v4567, 32
    %v5659 = vpop.permute.xlu0 %5658
    %5660 = vrot.lane.b32.xlu0 %v4568, 32
    %v5661 = vpop.permute.xlu0 %5660
    %5662 = vrot.lane.b32.xlu0 %v4569, 32
    %v5663 = vpop.permute.xlu0 %5662
    %5664 = vrot.lane.b32.xlu0 %v4570, 32
    %v5665 = vpop.permute.xlu0 %5664
    %5666 = vrot.lane.b32.xlu0 %v4571, 32
    %v5667 = vpop.permute.xlu0 %5666
    %5668 = vrot.lane.b32.xlu0 %v4572, 32
    %v5669 = vpop.permute.xlu0 %5668
    %5670 = vrot.lane.b32.xlu0 %v4573, 32
    %v5671 = vpop.permute.xlu0 %5670
    %5672 = vrot.lane.b32.xlu0 %v4574, 32
    %v5673 = vpop.permute.xlu0 %5672
    %5674 = vrot.lane.b32.xlu0 %v4575, 32
    %v5675 = vpop.permute.xlu0 %5674
    %5676 = vrot.lane.b32.xlu0 %v4576, 32
    %v5677 = vpop.permute.xlu0 %5676
    %5678 = vrot.lane.b32.xlu0 %v4577, 32
    %v5679 = vpop.permute.xlu0 %5678
    %5680 = vrot.lane.b32.xlu0 %v4578, 32
    %v5681 = vpop.permute.xlu0 %5680
    %5682 = vrot.lane.b32.xlu0 %v4579, 32
    %v5683 = vpop.permute.xlu0 %5682
    %5684 = vrot.lane.b32.xlu0 %v4580, 32
    %v5685 = vpop.permute.xlu0 %5684
    %5686 = vrot.lane.b32.xlu0 %v4581, 32
    %v5687 = vpop.permute.xlu0 %5686
    %5688 = vrot.lane.b32.xlu0 %v4582, 32
    %v5689 = vpop.permute.xlu0 %5688
    %5690 = vrot.lane.b32.xlu0 %v4583, 32
    %v5691 = vpop.permute.xlu0 %5690
    %5692 = vrot.lane.b32.xlu0 %v4584, 32
    %v5693 = vpop.permute.xlu0 %5692
    %5694 = vrot.lane.b32.xlu0 %v4585, 32
    %v5695 = vpop.permute.xlu0 %5694
    %5696 = vrot.lane.b32.xlu0 %v4586, 32
    %v5697 = vpop.permute.xlu0 %5696
    %5698 = vrot.lane.b32.xlu0 %v4587, 32
    %v5699 = vpop.permute.xlu0 %5698
    %5700 = vrot.lane.b32.xlu0 %v4588, 32
    %v5701 = vpop.permute.xlu0 %5700
    %5702 = vrot.lane.b32.xlu0 %v4589, 32
    %v5703 = vpop.permute.xlu0 %5702
    %5704 = vrot.lane.b32.xlu0 %v4590, 32
    %v5705 = vpop.permute.xlu0 %5704
    %5706 = vrot.lane.b32.xlu0 %v4591, 32
    %v5707 = vpop.permute.xlu0 %5706
    %5708 = vrot.lane.b32.xlu0 %v4592, 32
    %v5709 = vpop.permute.xlu0 %5708
    %5710 = vrot.lane.b32.xlu0 %v4593, 32
    %v5711 = vpop.permute.xlu0 %5710
    %5712 = vrot.lane.b32.xlu0 %v4594, 32
    %v5713 = vpop.permute.xlu0 %5712
    %5714 = vrot.lane.b32.xlu0 %v4595, 32
    %v5715 = vpop.permute.xlu0 %5714
    %5716 = vrot.lane.b32.xlu0 %v4596, 32
    %v5717 = vpop.permute.xlu0 %5716
    %5718 = vrot.lane.b32.xlu0 %v4597, 32
    %v5719 = vpop.permute.xlu0 %5718
    %5720 = vrot.lane.b32.xlu0 %v4598, 32
    %v5721 = vpop.permute.xlu0 %5720
    %5722 = vrot.lane.b32.xlu0 %v4599, 32
    %v5723 = vpop.permute.xlu0 %5722
    %5724 = vrot.lane.b32.xlu0 %v4600, 32
    %v5725 = vpop.permute.xlu0 %5724
    %5726 = vrot.lane.b32.xlu0 %v4601, 32
    %v5727 = vpop.permute.xlu0 %5726
    %5728 = vrot.lane.b32.xlu0 %v4602, 32
    %v5729 = vpop.permute.xlu0 %5728
    %5730 = vrot.lane.b32.xlu0 %v4603, 32
    %v5731 = vpop.permute.xlu0 %5730
    %5732 = vrot.lane.b32.xlu0 %v4604, 32
    %v5733 = vpop.permute.xlu0 %5732
    %5734 = vrot.lane.b32.xlu0 %v4605, 32
    %v5735 = vpop.permute.xlu0 %5734
    %5736 = vrot.lane.b32.xlu0 %v4606, 32
    %v5737 = vpop.permute.xlu0 %5736
    %5738 = vrot.lane.b32.xlu0 %v4607, 32
    %v5739 = vpop.permute.xlu0 %5738
    %5740 = vrot.lane.b32.xlu0 %v4608, 32
    %v5741 = vpop.permute.xlu0 %5740
    %5742 = vrot.lane.b32.xlu0 %v4609, 32
    %v5743 = vpop.permute.xlu0 %5742
    %5744 = vrot.lane.b32.xlu0 %v4610, 32
    %v5745 = vpop.permute.xlu0 %5744
    %5746 = vrot.lane.b32.xlu0 %v4611, 32
    %v5747 = vpop.permute.xlu0 %5746
    %5748 = vrot.lane.b32.xlu0 %v4612, 32
    %v5749 = vpop.permute.xlu0 %5748
    %5750 = vrot.lane.b32.xlu0 %v4613, 32
    %v5751 = vpop.permute.xlu0 %5750
    %5752 = vrot.lane.b32.xlu0 %v4614, 32
    %v5753 = vpop.permute.xlu0 %5752
    %5754 = vrot.lane.b32.xlu0 %v4615, 32
    %v5755 = vpop.permute.xlu0 %5754
    %5756 = vrot.lane.b32.xlu0 %v4616, 32
    %v5757 = vpop.permute.xlu0 %5756
    %5758 = vrot.lane.b32.xlu0 %v4617, 32
    %v5759 = vpop.permute.xlu0 %5758
    %5760 = vrot.lane.b32.xlu0 %v4618, 32
    %v5761 = vpop.permute.xlu0 %5760
    %5762 = vrot.lane.b32.xlu0 %v4619, 32
    %v5763 = vpop.permute.xlu0 %5762
    %5764 = vrot.lane.b32.xlu0 %v4620, 32
    %v5765 = vpop.permute.xlu0 %5764
    %5766 = vrot.lane.b32.xlu0 %v4621, 32
    %v5767 = vpop.permute.xlu0 %5766
    %5768 = vrot.lane.b32.xlu0 %v4622, 32
    %v5769 = vpop.permute.xlu0 %5768
    %5770 = vrot.lane.b32.xlu0 %v4623, 32
    %v5771 = vpop.permute.xlu0 %5770
    %5772 = vrot.lane.b32.xlu0 %v4624, 32
    %v5773 = vpop.permute.xlu0 %5772
    %5774 = vrot.lane.b32.xlu0 %v4625, 32
    %v5775 = vpop.permute.xlu0 %5774
    %5776 = vrot.lane.b32.xlu0 %v4626, 32
    %v5777 = vpop.permute.xlu0 %5776
    %5778 = vrot.lane.b32.xlu0 %v4627, 32
    %v5779 = vpop.permute.xlu0 %5778
    %5780 = vrot.lane.b32.xlu0 %v4628, 32
    %v5781 = vpop.permute.xlu0 %5780
    %5910 = vrot.lane.b32.xlu0 %v4630, 64
    %v5911 = vpop.permute.xlu0 %5910
    %5912 = vrot.lane.b32.xlu0 %v4631, 64
    %v5913 = vpop.permute.xlu0 %5912
    %5914 = vrot.lane.b32.xlu0 %v4632, 64
    %v5915 = vpop.permute.xlu0 %5914
    %5916 = vrot.lane.b32.xlu0 %v4633, 64
    %v5917 = vpop.permute.xlu0 %5916
    %5918 = vrot.lane.b32.xlu0 %v4634, 64
    %v5919 = vpop.permute.xlu0 %5918
    %5920 = vrot.lane.b32.xlu0 %v4635, 64
    %v5921 = vpop.permute.xlu0 %5920
    %5922 = vrot.lane.b32.xlu0 %v4636, 64
    %v5923 = vpop.permute.xlu0 %5922
    %5924 = vrot.lane.b32.xlu0 %v4637, 64
    %v5925 = vpop.permute.xlu0 %5924
    %5926 = vrot.lane.b32.xlu0 %v4638, 64
    %v5927 = vpop.permute.xlu0 %5926
    %5928 = vrot.lane.b32.xlu0 %v4639, 64
    %v5929 = vpop.permute.xlu0 %5928
    %5930 = vrot.lane.b32.xlu0 %v4640, 64
    %v5931 = vpop.permute.xlu0 %5930
    %5932 = vrot.lane.b32.xlu0 %v4641, 64
    %v5933 = vpop.permute.xlu0 %5932
    %5934 = vrot.lane.b32.xlu0 %v4642, 64
    %v5935 = vpop.permute.xlu0 %5934
    %5936 = vrot.lane.b32.xlu0 %v4643, 64
    %v5937 = vpop.permute.xlu0 %5936
    %5938 = vrot.lane.b32.xlu0 %v4644, 64
    %v5939 = vpop.permute.xlu0 %5938
    %5940 = vrot.lane.b32.xlu0 %v4645, 64
    %v5941 = vpop.permute.xlu0 %5940
    %5942 = vrot.lane.b32.xlu0 %v4646, 64
    %v5943 = vpop.permute.xlu0 %5942
    %5944 = vrot.lane.b32.xlu0 %v4647, 64
    %v5945 = vpop.permute.xlu0 %5944
    %5946 = vrot.lane.b32.xlu0 %v4648, 64
    %v5947 = vpop.permute.xlu0 %5946
    %5948 = vrot.lane.b32.xlu0 %v4649, 64
    %v5949 = vpop.permute.xlu0 %5948
    %5950 = vrot.lane.b32.xlu0 %v4650, 64
    %v5951 = vpop.permute.xlu0 %5950
    %5952 = vrot.lane.b32.xlu0 %v4651, 64
    %v5953 = vpop.permute.xlu0 %5952
    %5954 = vrot.lane.b32.xlu0 %v4652, 64
    %v5955 = vpop.permute.xlu0 %5954
    %5956 = vrot.lane.b32.xlu0 %v4653, 64
    %v5957 = vpop.permute.xlu0 %5956
    %5958 = vrot.lane.b32.xlu0 %v4654, 64
    %v5959 = vpop.permute.xlu0 %5958
    %5960 = vrot.lane.b32.xlu0 %v4655, 64
    %v5961 = vpop.permute.xlu0 %5960
    %5962 = vrot.lane.b32.xlu0 %v4656, 64
    %v5963 = vpop.permute.xlu0 %5962
    %5964 = vrot.lane.b32.xlu0 %v4657, 64
    %v5965 = vpop.permute.xlu0 %5964
    %5966 = vrot.lane.b32.xlu0 %v4658, 64
    %v5967 = vpop.permute.xlu0 %5966
    %5968 = vrot.lane.b32.xlu0 %v4659, 64
    %v5969 = vpop.permute.xlu0 %5968
    %5970 = vrot.lane.b32.xlu0 %v4660, 64
    %v5971 = vpop.permute.xlu0 %5970
    %5972 = vrot.lane.b32.xlu0 %v4661, 64
    %v5973 = vpop.permute.xlu0 %5972
    %5974 = vrot.lane.b32.xlu0 %v4662, 64
    %v5975 = vpop.permute.xlu0 %5974
    %5976 = vrot.lane.b32.xlu0 %v4663, 64
    %v5977 = vpop.permute.xlu0 %5976
    %5978 = vrot.lane.b32.xlu0 %v4664, 64
    %v5979 = vpop.permute.xlu0 %5978
    %5980 = vrot.lane.b32.xlu0 %v4665, 64
    %v5981 = vpop.permute.xlu0 %5980
    %5982 = vrot.lane.b32.xlu0 %v4666, 64
    %v5983 = vpop.permute.xlu0 %5982
    %5984 = vrot.lane.b32.xlu0 %v4667, 64
    %v5985 = vpop.permute.xlu0 %5984
    %5986 = vrot.lane.b32.xlu0 %v4668, 64
    %v5987 = vpop.permute.xlu0 %5986
    %5988 = vrot.lane.b32.xlu0 %v4669, 64
    %v5989 = vpop.permute.xlu0 %5988
    %5990 = vrot.lane.b32.xlu0 %v4670, 64
    %v5991 = vpop.permute.xlu0 %5990
    %5992 = vrot.lane.b32.xlu0 %v4671, 64
    %v5993 = vpop.permute.xlu0 %5992
    %5994 = vrot.lane.b32.xlu0 %v4672, 64
    %v5995 = vpop.permute.xlu0 %5994
    %5996 = vrot.lane.b32.xlu0 %v4673, 64
    %v5997 = vpop.permute.xlu0 %5996
    %5998 = vrot.lane.b32.xlu0 %v4674, 64
    %v5999 = vpop.permute.xlu0 %5998
    %6000 = vrot.lane.b32.xlu0 %v4675, 64
    %v6001 = vpop.permute.xlu0 %6000
    %6002 = vrot.lane.b32.xlu0 %v4676, 64
    %v6003 = vpop.permute.xlu0 %6002
    %6004 = vrot.lane.b32.xlu0 %v4677, 64
    %v6005 = vpop.permute.xlu0 %6004
    %6006 = vrot.lane.b32.xlu0 %v4678, 64
    %v6007 = vpop.permute.xlu0 %6006
    %6008 = vrot.lane.b32.xlu0 %v4679, 64
    %v6009 = vpop.permute.xlu0 %6008
    %6010 = vrot.lane.b32.xlu0 %v4680, 64
    %v6011 = vpop.permute.xlu0 %6010
    %6012 = vrot.lane.b32.xlu0 %v4681, 64
    %v6013 = vpop.permute.xlu0 %6012
    %6014 = vrot.lane.b32.xlu0 %v4682, 64
    %v6015 = vpop.permute.xlu0 %6014
    %6016 = vrot.lane.b32.xlu0 %v4683, 64
    %v6017 = vpop.permute.xlu0 %6016
    %6018 = vrot.lane.b32.xlu0 %v4684, 64
    %v6019 = vpop.permute.xlu0 %6018
    %6020 = vrot.lane.b32.xlu0 %v4685, 64
    %v6021 = vpop.permute.xlu0 %6020
    %6022 = vrot.lane.b32.xlu0 %v4686, 64
    %v6023 = vpop.permute.xlu0 %6022
    %6024 = vrot.lane.b32.xlu0 %v4687, 64
    %v6025 = vpop.permute.xlu0 %6024
    %6026 = vrot.lane.b32.xlu0 %v4688, 64
    %v6027 = vpop.permute.xlu0 %6026
    %6028 = vrot.lane.b32.xlu0 %v4689, 64
    %v6029 = vpop.permute.xlu0 %6028
    %6030 = vrot.lane.b32.xlu0 %v4690, 64
    %v6031 = vpop.permute.xlu0 %6030
    %6032 = vrot.lane.b32.xlu0 %v4691, 64
    %v6033 = vpop.permute.xlu0 %6032
    %6034 = vrot.lane.b32.xlu0 %v4692, 64
    %v6035 = vpop.permute.xlu0 %6034
    %6036 = vrot.lane.b32.xlu0 %v4693, 64
    %v6037 = vpop.permute.xlu0 %6036
    %6166 = vrot.lane.b32.xlu0 %v4694, 96
    %v6167 = vpop.permute.xlu0 %6166
    %6168 = vrot.lane.b32.xlu0 %v4695, 96
    %v6169 = vpop.permute.xlu0 %6168
    %6170 = vrot.lane.b32.xlu0 %v4696, 96
    %v6171 = vpop.permute.xlu0 %6170
    %6172 = vrot.lane.b32.xlu0 %v4697, 96
    %v6173 = vpop.permute.xlu0 %6172
    %6174 = vrot.lane.b32.xlu0 %v4698, 96
    %v6175 = vpop.permute.xlu0 %6174
    %6176 = vrot.lane.b32.xlu0 %v4699, 96
    %v6177 = vpop.permute.xlu0 %6176
    %6178 = vrot.lane.b32.xlu0 %v4700, 96
    %v6179 = vpop.permute.xlu0 %6178
    %6180 = vrot.lane.b32.xlu0 %v4701, 96
    %v6181 = vpop.permute.xlu0 %6180
    %6182 = vrot.lane.b32.xlu0 %v4702, 96
    %v6183 = vpop.permute.xlu0 %6182
    %6184 = vrot.lane.b32.xlu0 %v4703, 96
    %v6185 = vpop.permute.xlu0 %6184
    %6186 = vrot.lane.b32.xlu0 %v4704, 96
    %v6187 = vpop.permute.xlu0 %6186
    %6188 = vrot.lane.b32.xlu0 %v4705, 96
    %v6189 = vpop.permute.xlu0 %6188
    %6190 = vrot.lane.b32.xlu0 %v4706, 96
    %v6191 = vpop.permute.xlu0 %6190
    %6192 = vrot.lane.b32.xlu0 %v4707, 96
    %v6193 = vpop.permute.xlu0 %6192
    %6194 = vrot.lane.b32.xlu0 %v4708, 96
    %v6195 = vpop.permute.xlu0 %6194
    %6196 = vrot.lane.b32.xlu0 %v4709, 96
    %v6197 = vpop.permute.xlu0 %6196
    %6198 = vrot.lane.b32.xlu0 %v4710, 96
    %v6199 = vpop.permute.xlu0 %6198
    %6200 = vrot.lane.b32.xlu0 %v4711, 96
    %v6201 = vpop.permute.xlu0 %6200
    %6202 = vrot.lane.b32.xlu0 %v4712, 96
    %v6203 = vpop.permute.xlu0 %6202
    %6204 = vrot.lane.b32.xlu0 %v4713, 96
    %v6205 = vpop.permute.xlu0 %6204
    %6206 = vrot.lane.b32.xlu0 %v4714, 96
    %v6207 = vpop.permute.xlu0 %6206
    %6208 = vrot.lane.b32.xlu0 %v4715, 96
    %v6209 = vpop.permute.xlu0 %6208
    %6210 = vrot.lane.b32.xlu0 %v4716, 96
    %v6211 = vpop.permute.xlu0 %6210
    %6212 = vrot.lane.b32.xlu0 %v4717, 96
    %v6213 = vpop.permute.xlu0 %6212
    %6214 = vrot.lane.b32.xlu0 %v4718, 96
    %v6215 = vpop.permute.xlu0 %6214
    %6216 = vrot.lane.b32.xlu0 %v4719, 96
    %v6217 = vpop.permute.xlu0 %6216
    %6218 = vrot.lane.b32.xlu0 %v4720, 96
    %v6219 = vpop.permute.xlu0 %6218
    %6220 = vrot.lane.b32.xlu0 %v4721, 96
    %v6221 = vpop.permute.xlu0 %6220
    %6222 = vrot.lane.b32.xlu0 %v4722, 96
    %v6223 = vpop.permute.xlu0 %6222
    %6224 = vrot.lane.b32.xlu0 %v4723, 96
    %v6225 = vpop.permute.xlu0 %6224
    %6226 = vrot.lane.b32.xlu0 %v4724, 96
    %v6227 = vpop.permute.xlu0 %6226
    %6228 = vrot.lane.b32.xlu0 %v4725, 96
    %v6229 = vpop.permute.xlu0 %6228
    %6230 = vrot.lane.b32.xlu0 %v4726, 96
    %v6231 = vpop.permute.xlu0 %6230
    %6232 = vrot.lane.b32.xlu0 %v4727, 96
    %v6233 = vpop.permute.xlu0 %6232
    %6234 = vrot.lane.b32.xlu0 %v4728, 96
    %v6235 = vpop.permute.xlu0 %6234
    %6236 = vrot.lane.b32.xlu0 %v4729, 96
    %v6237 = vpop.permute.xlu0 %6236
    %6238 = vrot.lane.b32.xlu0 %v4730, 96
    %v6239 = vpop.permute.xlu0 %6238
    %6240 = vrot.lane.b32.xlu0 %v4731, 96
    %v6241 = vpop.permute.xlu0 %6240
    %6242 = vrot.lane.b32.xlu0 %v4732, 96
    %v6243 = vpop.permute.xlu0 %6242
    %6244 = vrot.lane.b32.xlu0 %v4733, 96
    %v6245 = vpop.permute.xlu0 %6244
    %6246 = vrot.lane.b32.xlu0 %v4734, 96
    %v6247 = vpop.permute.xlu0 %6246
    %6248 = vrot.lane.b32.xlu0 %v4735, 96
    %v6249 = vpop.permute.xlu0 %6248
    %6250 = vrot.lane.b32.xlu0 %v4736, 96
    %v6251 = vpop.permute.xlu0 %6250
    %6252 = vrot.lane.b32.xlu0 %v4737, 96
    %v6253 = vpop.permute.xlu0 %6252
    %6254 = vrot.lane.b32.xlu0 %v4738, 96
    %v6255 = vpop.permute.xlu0 %6254
    %6256 = vrot.lane.b32.xlu0 %v4739, 96
    %v6257 = vpop.permute.xlu0 %6256
    %6258 = vrot.lane.b32.xlu0 %v4740, 96
    %v6259 = vpop.permute.xlu0 %6258
    %6260 = vrot.lane.b32.xlu0 %v4741, 96
    %v6261 = vpop.permute.xlu0 %6260
    %6262 = vrot.lane.b32.xlu0 %v4742, 96
    %v6263 = vpop.permute.xlu0 %6262
    %6264 = vrot.lane.b32.xlu0 %v4743, 96
    %v6265 = vpop.permute.xlu0 %6264
    %6266 = vrot.lane.b32.xlu0 %v4744, 96
    %v6267 = vpop.permute.xlu0 %6266
    %6268 = vrot.lane.b32.xlu0 %v4745, 96
    %v6269 = vpop.permute.xlu0 %6268
    %6270 = vrot.lane.b32.xlu0 %v4746, 96
    %v6271 = vpop.permute.xlu0 %6270
    %6272 = vrot.lane.b32.xlu0 %v4747, 96
    %v6273 = vpop.permute.xlu0 %6272
    %6274 = vrot.lane.b32.xlu0 %v4748, 96
    %v6275 = vpop.permute.xlu0 %6274
    %6276 = vrot.lane.b32.xlu0 %v4749, 96
    %v6277 = vpop.permute.xlu0 %6276
    %6278 = vrot.lane.b32.xlu0 %v4750, 96
    %v6279 = vpop.permute.xlu0 %6278
    %6280 = vrot.lane.b32.xlu0 %v4751, 96
    %v6281 = vpop.permute.xlu0 %6280
    %6282 = vrot.lane.b32.xlu0 %v4752, 96
    %v6283 = vpop.permute.xlu0 %6282
    %6284 = vrot.lane.b32.xlu0 %v4753, 96
    %v6285 = vpop.permute.xlu0 %6284
    %6286 = vrot.lane.b32.xlu0 %v4754, 96
    %v6287 = vpop.permute.xlu0 %6286
    %6288 = vrot.lane.b32.xlu0 %v4755, 96
    %v6289 = vpop.permute.xlu0 %6288
    %6290 = vrot.lane.b32.xlu0 %v4756, 96
    %v6291 = vpop.permute.xlu0 %6290
    %6292 = vrot.lane.b32.xlu0 %v4757, 96
    %v6293 = vpop.permute.xlu0 %6292
    %v6358 = vsel %vm3348, %v4245, %v4887
    %v6359 = vsel %vm3348, %v4246, %v4889
    %v6360 = vsel %vm3348, %v4247, %v4891
    %v6361 = vsel %vm3348, %v4248, %v4893
    %v6362 = vsel %vm3348, %v4249, %v4895
    %v6363 = vsel %vm3348, %v4250, %v4897
    %v6364 = vsel %vm3348, %v4251, %v4899
    %v6365 = vsel %vm3348, %v4252, %v4901
    %v6366 = vsel %vm3348, %v4253, %v4903
    %v6367 = vsel %vm3348, %v4254, %v4905
    %v6368 = vsel %vm3348, %v4255, %v4907
    %v6369 = vsel %vm3348, %v4256, %v4909
    %v6370 = vsel %vm3348, %v4257, %v4911
    %v6371 = vsel %vm3348, %v4258, %v4913
    %v6372 = vsel %vm3348, %v4259, %v4915
    %v6373 = vsel %vm3348, %v4260, %v4917
    %v6374 = vsel %vm3348, %v4261, %v4919
    %v6375 = vsel %vm3348, %v4262, %v4921
    %v6376 = vsel %vm3348, %v4263, %v4923
    %v6377 = vsel %vm3348, %v4264, %v4925
    %v6378 = vsel %vm3348, %v4265, %v4927
    %v6379 = vsel %vm3348, %v4266, %v4929
    %v6380 = vsel %vm3348, %v4267, %v4931
    %v6381 = vsel %vm3348, %v4268, %v4933
    %v6382 = vsel %vm3348, %v4269, %v4935
    %v6383 = vsel %vm3348, %v4270, %v4937
    %v6384 = vsel %vm3348, %v4271, %v4939
    %v6385 = vsel %vm3348, %v4272, %v4941
    %v6386 = vsel %vm3348, %v4273, %v4943
    %v6387 = vsel %vm3348, %v4274, %v4945
    %v6388 = vsel %vm3348, %v4275, %v4947
    %v6389 = vsel %vm3348, %v4276, %v4949
    %v6390 = vsel %vm3348, %v4277, %v4951
    %v6391 = vsel %vm3348, %v4278, %v4953
    %v6392 = vsel %vm3348, %v4279, %v4955
    %v6393 = vsel %vm3348, %v4280, %v4957
    %v6394 = vsel %vm3348, %v4281, %v4959
    %v6395 = vsel %vm3348, %v4282, %v4961
    %v6396 = vsel %vm3348, %v4283, %v4963
    %v6397 = vsel %vm3348, %v4284, %v4965
    %v6398 = vsel %vm3348, %v4285, %v4967
    %v6399 = vsel %vm3348, %v4286, %v4969
    %v6400 = vsel %vm3348, %v4287, %v4971
    %v6401 = vsel %vm3348, %v4288, %v4973
    %v6402 = vsel %vm3348, %v4289, %v4975
    %v6403 = vsel %vm3348, %v4290, %v4977
    %v6404 = vsel %vm3348, %v4291, %v4979
    %v6405 = vsel %vm3348, %v4292, %v4981
    %v6406 = vsel %vm3348, %v4293, %v4983
    %v6407 = vsel %vm3348, %v4294, %v4985
    %v6408 = vsel %vm3348, %v4295, %v4987
    %v6409 = vsel %vm3348, %v4296, %v4989
    %v6410 = vsel %vm3348, %v4297, %v4991
    %v6411 = vsel %vm3348, %v4298, %v4993
    %v6412 = vsel %vm3348, %v4299, %v4995
    %v6413 = vsel %vm3348, %v4300, %v4997
    %v6414 = vsel %vm3348, %v4301, %v4999
    %v6415 = vsel %vm3348, %v4302, %v5001
    %v6416 = vsel %vm3348, %v4303, %v5003
    %v6417 = vsel %vm3348, %v4304, %v5005
    %v6418 = vsel %vm3348, %v4305, %v5007
    %v6419 = vsel %vm3348, %v4306, %v5009
    %v6420 = vsel %vm3348, %v4307, %v5011
    %v6421 = vsel %vm3348, %v4308, %v5013
    %vm6422 = vcmask 523264
    %v6423 = vsel %vm6422, %v6358, %v5143
    %v6424 = vsel %vm6422, %v6359, %v5145
    %v6425 = vsel %vm6422, %v6360, %v5147
    %v6426 = vsel %vm6422, %v6361, %v5149
    %v6427 = vsel %vm6422, %v6362, %v5151
    %v6428 = vsel %vm6422, %v6363, %v5153
    %v6429 = vsel %vm6422, %v6364, %v5155
    %v6430 = vsel %vm6422, %v6365, %v5157
    %v6431 = vsel %vm6422, %v6366, %v5159
    %v6432 = vsel %vm6422, %v6367, %v5161
    %v6433 = vsel %vm6422, %v6368, %v5163
    %v6434 = vsel %vm6422, %v6369, %v5165
    %v6435 = vsel %vm6422, %v6370, %v5167
    %v6436 = vsel %vm6422, %v6371, %v5169
    %v6437 = vsel %vm6422, %v6372, %v5171
    %v6438 = vsel %vm6422, %v6373, %v5173
    %v6439 = vsel %vm6422, %v6374, %v5175
    %v6440 = vsel %vm6422, %v6375, %v5177
    %v6441 = vsel %vm6422, %v6376, %v5179
    %v6442 = vsel %vm6422, %v6377, %v5181
    %v6443 = vsel %vm6422, %v6378, %v5183
    %v6444 = vsel %vm6422, %v6379, %v5185
    %v6445 = vsel %vm6422, %v6380, %v5187
    %v6446 = vsel %vm6422, %v6381, %v5189
    %v6447 = vsel %vm6422, %v6382, %v5191
    %v6448 = vsel %vm6422, %v6383, %v5193
    %v6449 = vsel %vm6422, %v6384, %v5195
    %v6450 = vsel %vm6422, %v6385, %v5197
    %v6451 = vsel %vm6422, %v6386, %v5199
    %v6452 = vsel %vm6422, %v6387, %v5201
    %v6453 = vsel %vm6422, %v6388, %v5203
    %v6454 = vsel %vm6422, %v6389, %v5205
    %v6455 = vsel %vm6422, %v6390, %v5207
    %v6456 = vsel %vm6422, %v6391, %v5209
    %v6457 = vsel %vm6422, %v6392, %v5211
    %v6458 = vsel %vm6422, %v6393, %v5213
    %v6459 = vsel %vm6422, %v6394, %v5215
    %v6460 = vsel %vm6422, %v6395, %v5217
    %v6461 = vsel %vm6422, %v6396, %v5219
    %v6462 = vsel %vm6422, %v6397, %v5221
    %v6463 = vsel %vm6422, %v6398, %v5223
    %v6464 = vsel %vm6422, %v6399, %v5225
    %v6465 = vsel %vm6422, %v6400, %v5227
    %v6466 = vsel %vm6422, %v6401, %v5229
    %v6467 = vsel %vm6422, %v6402, %v5231
    %v6468 = vsel %vm6422, %v6403, %v5233
    %v6469 = vsel %vm6422, %v6404, %v5235
    %v6470 = vsel %vm6422, %v6405, %v5237
    %v6471 = vsel %vm6422, %v6406, %v5239
    %v6472 = vsel %vm6422, %v6407, %v5241
    %v6473 = vsel %vm6422, %v6408, %v5243
    %v6474 = vsel %vm6422, %v6409, %v5245
    %v6475 = vsel %vm6422, %v6410, %v5247
    %v6476 = vsel %vm6422, %v6411, %v5249
    %v6477 = vsel %vm6422, %v6412, %v5251
    %v6478 = vsel %vm6422, %v6413, %v5253
    %v6479 = vsel %vm6422, %v6414, %v5255
    %v6480 = vsel %vm6422, %v6415, %v5257
    %v6481 = vsel %vm6422, %v6416, %v5259
    %v6482 = vsel %vm6422, %v6417, %v5261
    %v6483 = vsel %vm6422, %v6418, %v5263
    %v6484 = vsel %vm6422, %v6419, %v5265
    %v6485 = vsel %vm6422, %v6420, %v5267
    %v6486 = vsel %vm6422, %v6421, %v5269
    %vm6487 = vcmask 785408
    %v6488 = vsel %vm6487, %v6423, %v5399
    %v6489 = vsel %vm6487, %v6424, %v5401
    %v6490 = vsel %vm6487, %v6425, %v5403
    %v6491 = vsel %vm6487, %v6426, %v5405
    %v6492 = vsel %vm6487, %v6427, %v5407
    %v6493 = vsel %vm6487, %v6428, %v5409
    %v6494 = vsel %vm6487, %v6429, %v5411
    %v6495 = vsel %vm6487, %v6430, %v5413
    %v6496 = vsel %vm6487, %v6431, %v5415
    %v6497 = vsel %vm6487, %v6432, %v5417
    %v6498 = vsel %vm6487, %v6433, %v5419
    %v6499 = vsel %vm6487, %v6434, %v5421
    %v6500 = vsel %vm6487, %v6435, %v5423
    %v6501 = vsel %vm6487, %v6436, %v5425
    %v6502 = vsel %vm6487, %v6437, %v5427
    %v6503 = vsel %vm6487, %v6438, %v5429
    %v6504 = vsel %vm6487, %v6439, %v5431
    %v6505 = vsel %vm6487, %v6440, %v5433
    %v6506 = vsel %vm6487, %v6441, %v5435
    %v6507 = vsel %vm6487, %v6442, %v5437
    %v6508 = vsel %vm6487, %v6443, %v5439
    %v6509 = vsel %vm6487, %v6444, %v5441
    %v6510 = vsel %vm6487, %v6445, %v5443
    %v6511 = vsel %vm6487, %v6446, %v5445
    %v6512 = vsel %vm6487, %v6447, %v5447
    %v6513 = vsel %vm6487, %v6448, %v5449
    %v6514 = vsel %vm6487, %v6449, %v5451
    %v6515 = vsel %vm6487, %v6450, %v5453
    %v6516 = vsel %vm6487, %v6451, %v5455
    %v6517 = vsel %vm6487, %v6452, %v5457
    %v6518 = vsel %vm6487, %v6453, %v5459
    %v6519 = vsel %vm6487, %v6454, %v5461
    %v6520 = vsel %vm6487, %v6455, %v5463
    %v6521 = vsel %vm6487, %v6456, %v5465
    %v6522 = vsel %vm6487, %v6457, %v5467
    %v6523 = vsel %vm6487, %v6458, %v5469
    %v6524 = vsel %vm6487, %v6459, %v5471
    %v6525 = vsel %vm6487, %v6460, %v5473
    %v6526 = vsel %vm6487, %v6461, %v5475
    %v6527 = vsel %vm6487, %v6462, %v5477
    %v6528 = vsel %vm6487, %v6463, %v5479
    %v6529 = vsel %vm6487, %v6464, %v5481
    %v6530 = vsel %vm6487, %v6465, %v5483
    %v6531 = vsel %vm6487, %v6466, %v5485
    %v6532 = vsel %vm6487, %v6467, %v5487
    %v6533 = vsel %vm6487, %v6468, %v5489
    %v6534 = vsel %vm6487, %v6469, %v5491
    %v6535 = vsel %vm6487, %v6470, %v5493
    %v6536 = vsel %vm6487, %v6471, %v5495
    %v6537 = vsel %vm6487, %v6472, %v5497
    %v6538 = vsel %vm6487, %v6473, %v5499
    %v6539 = vsel %vm6487, %v6474, %v5501
    %v6540 = vsel %vm6487, %v6475, %v5503
    %v6541 = vsel %vm6487, %v6476, %v5505
    %v6542 = vsel %vm6487, %v6477, %v5507
    %v6543 = vsel %vm6487, %v6478, %v5509
    %v6544 = vsel %vm6487, %v6479, %v5511
    %v6545 = vsel %vm6487, %v6480, %v5513
    %v6546 = vsel %vm6487, %v6481, %v5515
    %v6547 = vsel %vm6487, %v6482, %v5517
    %v6548 = vsel %vm6487, %v6483, %v5519
    %v6549 = vsel %vm6487, %v6484, %v5521
    %v6550 = vsel %vm6487, %v6485, %v5523
    %v6551 = vsel %vm6487, %v6486, %v5525
    %v6552 = vsel %vm3348, %v4501, %v5655
    %v6553 = vsel %vm3348, %v4502, %v5657
    %v6554 = vsel %vm3348, %v4503, %v5659
    %v6555 = vsel %vm3348, %v4504, %v5661
    %v6556 = vsel %vm3348, %v4505, %v5663
    %v6557 = vsel %vm3348, %v4506, %v5665
    %v6558 = vsel %vm3348, %v4507, %v5667
    %v6559 = vsel %vm3348, %v4508, %v5669
    %v6560 = vsel %vm3348, %v4509, %v5671
    %v6561 = vsel %vm3348, %v4510, %v5673
    %v6562 = vsel %vm3348, %v4511, %v5675
    %v6563 = vsel %vm3348, %v4512, %v5677
    %v6564 = vsel %vm3348, %v4513, %v5679
    %v6565 = vsel %vm3348, %v4514, %v5681
    %v6566 = vsel %vm3348, %v4515, %v5683
    %v6567 = vsel %vm3348, %v4516, %v5685
    %v6568 = vsel %vm3348, %v4517, %v5687
    %v6569 = vsel %vm3348, %v4518, %v5689
    %v6570 = vsel %vm3348, %v4519, %v5691
    %v6571 = vsel %vm3348, %v4520, %v5693
    %v6572 = vsel %vm3348, %v4521, %v5695
    %v6573 = vsel %vm3348, %v4522, %v5697
    %v6574 = vsel %vm3348, %v4523, %v5699
    %v6575 = vsel %vm3348, %v4524, %v5701
    %v6576 = vsel %vm3348, %v4525, %v5703
    %v6577 = vsel %vm3348, %v4526, %v5705
    %v6578 = vsel %vm3348, %v4527, %v5707
    %v6579 = vsel %vm3348, %v4528, %v5709
    %v6580 = vsel %vm3348, %v4529, %v5711
    %v6581 = vsel %vm3348, %v4530, %v5713
    %v6582 = vsel %vm3348, %v4531, %v5715
    %v6583 = vsel %vm3348, %v4532, %v5717
    %v6584 = vsel %vm3348, %v4533, %v5719
    %v6585 = vsel %vm3348, %v4534, %v5721
    %v6586 = vsel %vm3348, %v4535, %v5723
    %v6587 = vsel %vm3348, %v4536, %v5725
    %v6588 = vsel %vm3348, %v4537, %v5727
    %v6589 = vsel %vm3348, %v4538, %v5729
    %v6590 = vsel %vm3348, %v4539, %v5731
    %v6591 = vsel %vm3348, %v4540, %v5733
    %v6592 = vsel %vm3348, %v4541, %v5735
    %v6593 = vsel %vm3348, %v4542, %v5737
    %v6594 = vsel %vm3348, %v4543, %v5739
    %v6595 = vsel %vm3348, %v4544, %v5741
    %v6596 = vsel %vm3348, %v4545, %v5743
    %v6597 = vsel %vm3348, %v4546, %v5745
    %v6598 = vsel %vm3348, %v4547, %v5747
    %v6599 = vsel %vm3348, %v4548, %v5749
    %v6600 = vsel %vm3348, %v4549, %v5751
    %v6601 = vsel %vm3348, %v4550, %v5753
    %v6602 = vsel %vm3348, %v4551, %v5755
    %v6603 = vsel %vm3348, %v4552, %v5757
    %v6604 = vsel %vm3348, %v4553, %v5759
    %v6605 = vsel %vm3348, %v4554, %v5761
    %v6606 = vsel %vm3348, %v4555, %v5763
    %v6607 = vsel %vm3348, %v4556, %v5765
    %v6608 = vsel %vm3348, %v4557, %v5767
    %v6609 = vsel %vm3348, %v4558, %v5769
    %v6610 = vsel %vm3348, %v4559, %v5771
    %v6611 = vsel %vm3348, %v4560, %v5773
    %v6612 = vsel %vm3348, %v4561, %v5775
    %v6613 = vsel %vm3348, %v4562, %v5777
    %v6614 = vsel %vm3348, %v4563, %v5779
    %v6615 = vsel %vm3348, %v4564, %v5781
    %v6616 = vsel %vm6422, %v6552, %v5911
    %v6617 = vsel %vm6422, %v6553, %v5913
    %v6618 = vsel %vm6422, %v6554, %v5915
    %v6619 = vsel %vm6422, %v6555, %v5917
    %v6620 = vsel %vm6422, %v6556, %v5919
    %v6621 = vsel %vm6422, %v6557, %v5921
    %v6622 = vsel %vm6422, %v6558, %v5923
    %v6623 = vsel %vm6422, %v6559, %v5925
    %v6624 = vsel %vm6422, %v6560, %v5927
    %v6625 = vsel %vm6422, %v6561, %v5929
    %v6626 = vsel %vm6422, %v6562, %v5931
    %v6627 = vsel %vm6422, %v6563, %v5933
    %v6628 = vsel %vm6422, %v6564, %v5935
    %v6629 = vsel %vm6422, %v6565, %v5937
    %v6630 = vsel %vm6422, %v6566, %v5939
    %v6631 = vsel %vm6422, %v6567, %v5941
    %v6632 = vsel %vm6422, %v6568, %v5943
    %v6633 = vsel %vm6422, %v6569, %v5945
    %v6634 = vsel %vm6422, %v6570, %v5947
    %v6635 = vsel %vm6422, %v6571, %v5949
    %v6636 = vsel %vm6422, %v6572, %v5951
    %v6637 = vsel %vm6422, %v6573, %v5953
    %v6638 = vsel %vm6422, %v6574, %v5955
    %v6639 = vsel %vm6422, %v6575, %v5957
    %v6640 = vsel %vm6422, %v6576, %v5959
    %v6641 = vsel %vm6422, %v6577, %v5961
    %v6642 = vsel %vm6422, %v6578, %v5963
    %v6643 = vsel %vm6422, %v6579, %v5965
    %v6644 = vsel %vm6422, %v6580, %v5967
    %v6645 = vsel %vm6422, %v6581, %v5969
    %v6646 = vsel %vm6422, %v6582, %v5971
    %v6647 = vsel %vm6422, %v6583, %v5973
    %v6648 = vsel %vm6422, %v6584, %v5975
    %v6649 = vsel %vm6422, %v6585, %v5977
    %v6650 = vsel %vm6422, %v6586, %v5979
    %v6651 = vsel %vm6422, %v6587, %v5981
    %v6652 = vsel %vm6422, %v6588, %v5983
    %v6653 = vsel %vm6422, %v6589, %v5985
    %v6654 = vsel %vm6422, %v6590, %v5987
    %v6655 = vsel %vm6422, %v6591, %v5989
    %v6656 = vsel %vm6422, %v6592, %v5991
    %v6657 = vsel %vm6422, %v6593, %v5993
    %v6658 = vsel %vm6422, %v6594, %v5995
    %v6659 = vsel %vm6422, %v6595, %v5997
    %v6660 = vsel %vm6422, %v6596, %v5999
    %v6661 = vsel %vm6422, %v6597, %v6001
    %v6662 = vsel %vm6422, %v6598, %v6003
    %v6663 = vsel %vm6422, %v6599, %v6005
    %v6664 = vsel %vm6422, %v6600, %v6007
    %v6665 = vsel %vm6422, %v6601, %v6009
    %v6666 = vsel %vm6422, %v6602, %v6011
    %v6667 = vsel %vm6422, %v6603, %v6013
    %v6668 = vsel %vm6422, %v6604, %v6015
    %v6669 = vsel %vm6422, %v6605, %v6017
    %v6670 = vsel %vm6422, %v6606, %v6019
    %v6671 = vsel %vm6422, %v6607, %v6021
    %v6672 = vsel %vm6422, %v6608, %v6023
    %v6673 = vsel %vm6422, %v6609, %v6025
    %v6674 = vsel %vm6422, %v6610, %v6027
    %v6675 = vsel %vm6422, %v6611, %v6029
    %v6676 = vsel %vm6422, %v6612, %v6031
    %v6677 = vsel %vm6422, %v6613, %v6033
    %v6678 = vsel %vm6422, %v6614, %v6035
    %v6679 = vsel %vm6422, %v6615, %v6037
    %v6680 = vsel %vm6487, %v6616, %v6167
    %v6681 = vsel %vm6487, %v6617, %v6169
    %v6682 = vsel %vm6487, %v6618, %v6171
    %v6683 = vsel %vm6487, %v6619, %v6173
    %v6684 = vsel %vm6487, %v6620, %v6175
    %v6685 = vsel %vm6487, %v6621, %v6177
    %v6686 = vsel %vm6487, %v6622, %v6179
    %v6687 = vsel %vm6487, %v6623, %v6181
    %v6688 = vsel %vm6487, %v6624, %v6183
    %v6689 = vsel %vm6487, %v6625, %v6185
    %v6690 = vsel %vm6487, %v6626, %v6187
    %v6691 = vsel %vm6487, %v6627, %v6189
    %v6692 = vsel %vm6487, %v6628, %v6191
    %v6693 = vsel %vm6487, %v6629, %v6193
    %v6694 = vsel %vm6487, %v6630, %v6195
    %v6695 = vsel %vm6487, %v6631, %v6197
    %v6696 = vsel %vm6487, %v6632, %v6199
    %v6697 = vsel %vm6487, %v6633, %v6201
    %v6698 = vsel %vm6487, %v6634, %v6203
    %v6699 = vsel %vm6487, %v6635, %v6205
    %v6700 = vsel %vm6487, %v6636, %v6207
    %v6701 = vsel %vm6487, %v6637, %v6209
    %v6702 = vsel %vm6487, %v6638, %v6211
    %v6703 = vsel %vm6487, %v6639, %v6213
    %v6704 = vsel %vm6487, %v6640, %v6215
    %v6705 = vsel %vm6487, %v6641, %v6217
    %v6706 = vsel %vm6487, %v6642, %v6219
    %v6707 = vsel %vm6487, %v6643, %v6221
    %v6708 = vsel %vm6487, %v6644, %v6223
    %v6709 = vsel %vm6487, %v6645, %v6225
    %v6710 = vsel %vm6487, %v6646, %v6227
    %v6711 = vsel %vm6487, %v6647, %v6229
    %v6712 = vsel %vm6487, %v6648, %v6231
    %v6713 = vsel %vm6487, %v6649, %v6233
    %v6714 = vsel %vm6487, %v6650, %v6235
    %v6715 = vsel %vm6487, %v6651, %v6237
    %v6716 = vsel %vm6487, %v6652, %v6239
    %v6717 = vsel %vm6487, %v6653, %v6241
    %v6718 = vsel %vm6487, %v6654, %v6243
    %v6719 = vsel %vm6487, %v6655, %v6245
    %v6720 = vsel %vm6487, %v6656, %v6247
    %v6721 = vsel %vm6487, %v6657, %v6249
    %v6722 = vsel %vm6487, %v6658, %v6251
    %v6723 = vsel %vm6487, %v6659, %v6253
    %v6724 = vsel %vm6487, %v6660, %v6255
    %v6725 = vsel %vm6487, %v6661, %v6257
    %v6726 = vsel %vm6487, %v6662, %v6259
    %v6727 = vsel %vm6487, %v6663, %v6261
    %v6728 = vsel %vm6487, %v6664, %v6263
    %v6729 = vsel %vm6487, %v6665, %v6265
    %v6730 = vsel %vm6487, %v6666, %v6267
    %v6731 = vsel %vm6487, %v6667, %v6269
    %v6732 = vsel %vm6487, %v6668, %v6271
    %v6733 = vsel %vm6487, %v6669, %v6273
    %v6734 = vsel %vm6487, %v6670, %v6275
    %v6735 = vsel %vm6487, %v6671, %v6277
    %v6736 = vsel %vm6487, %v6672, %v6279
    %v6737 = vsel %vm6487, %v6673, %v6281
    %v6738 = vsel %vm6487, %v6674, %v6283
    %v6739 = vsel %vm6487, %v6675, %v6285
    %v6740 = vsel %vm6487, %v6676, %v6287
    %v6741 = vsel %vm6487, %v6677, %v6289
    %v6742 = vsel %vm6487, %v6678, %v6291
    %v6743 = vsel %vm6487, %v6679, %v6293
    %v6744 = vld [vmem:[%s3] sm:$0xff]
    %v6745 = vld [vmem:[%s3 + $0x8] sm:$0xff]
    %v6746 = vld [vmem:[%s3 + $0x10] sm:$0xff]
    %v6747 = vld [vmem:[%s3 + $0x18] sm:$0xff]
    %v6748 = vld [vmem:[%s3 + $0x20] sm:$0xff]
    %v6749 = vld [vmem:[%s3 + $0x28] sm:$0xff]
    %v6750 = vld [vmem:[%s3 + $0x30] sm:$0xff]
    %v6751 = vld [vmem:[%s3 + $0x38] sm:$0xff]
    %v6752 = vld [vmem:[%s3 + $0x40] sm:$0xff]
    %v6753 = vld [vmem:[%s3 + $0x48] sm:$0xff]
    %v6754 = vld [vmem:[%s3 + $0x50] sm:$0xff]
    %v6755 = vld [vmem:[%s3 + $0x58] sm:$0xff]
    %v6756 = vld [vmem:[%s3 + $0x60] sm:$0xff]
    %v6757 = vld [vmem:[%s3 + $0x68] sm:$0xff]
    %v6758 = vld [vmem:[%s3 + $0x70] sm:$0xff]
    %v6759 = vld [vmem:[%s3 + $0x78] sm:$0xff]
    %v6760 = vld [vmem:[%s3 + $0x80] sm:$0xff]
    %v6761 = vld [vmem:[%s3 + $0x88] sm:$0xff]
    %v6762 = vld [vmem:[%s3 + $0x90] sm:$0xff]
    %v6763 = vld [vmem:[%s3 + $0x98] sm:$0xff]
    %v6764 = vld [vmem:[%s3 + $0xa0] sm:$0xff]
    %v6765 = vld [vmem:[%s3 + $0xa8] sm:$0xff]
    %v6766 = vld [vmem:[%s3 + $0xb0] sm:$0xff]
    %v6767 = vld [vmem:[%s3 + $0xb8] sm:$0xff]
    %v6768 = vld [vmem:[%s3 + $0xc0] sm:$0xff]
    %v6769 = vld [vmem:[%s3 + $0xc8] sm:$0xff]
    %v6770 = vld [vmem:[%s3 + $0xd0] sm:$0xff]
    %v6771 = vld [vmem:[%s3 + $0xd8] sm:$0xff]
    %v6772 = vld [vmem:[%s3 + $0xe0] sm:$0xff]
    %v6773 = vld [vmem:[%s3 + $0xe8] sm:$0xff]
    %v6774 = vld [vmem:[%s3 + $0xf0] sm:$0xff]
    %v6775 = vld [vmem:[%s3 + $0xf8] sm:$0xff]
    %v6776 = vld [vmem:[%s3 + $0x100] sm:$0xff]
    %v6777 = vld [vmem:[%s3 + $0x108] sm:$0xff]
    %v6778 = vld [vmem:[%s3 + $0x110] sm:$0xff]
    %v6779 = vld [vmem:[%s3 + $0x118] sm:$0xff]
    %v6780 = vld [vmem:[%s4] sm:$0x1]
    %v6782 = vlaneseq
    %v6783 = vshrl.u32 %v6782, 7
    %v6784 = vsub.s32 0, %v6783
    %v6785 = vrot.slane %v6780, %v6784
    %v6788 = vsel %vm3348, %v4758, 0
    %v6791 = vsel %vm3348, %v4759, 0
    %v6794 = vsel %vm3348, %v4760, 0
    %v6797 = vsel %vm3348, %v4761, 0
    %v6800 = vsel %vm3348, %v4762, 0
    %v6803 = vsel %vm3348, %v4763, 0
    %v6806 = vsel %vm3348, %v4764, 0
    %v6809 = vsel %vm3348, %v4765, 0
    %v6812 = vsel %vm3348, %v4766, 0
    %v6815 = vsel %vm3348, %v4767, 0
    %v6818 = vsel %vm3348, %v4768, 0
    %v6821 = vsel %vm3348, %v4769, 0
    %v6824 = vsel %vm3348, %v4770, 0
    %v6827 = vsel %vm3348, %v4771, 0
    %v6830 = vsel %vm3348, %v4772, 0
    %v6833 = vsel %vm3348, %v4773, 0
    %v6836 = vsel %vm3348, %v4774, 0
    %v6839 = vsel %vm3348, %v4775, 0
    %v6842 = vsel %vm3348, %v4776, 0
    %v6845 = vsel %vm3348, %v4777, 0
    %v6848 = vsel %vm3348, %v4778, 0
    %v6851 = vsel %vm3348, %v4779, 0
    %v6854 = vsel %vm3348, %v4780, 0
    %v6857 = vsel %vm3348, %v4781, 0
    %v6860 = vsel %vm3348, %v4782, 0
    %v6863 = vsel %vm3348, %v4783, 0
    %v6866 = vsel %vm3348, %v4784, 0
    %v6869 = vsel %vm3348, %v4785, 0
    %v6872 = vsel %vm3348, %v4786, 0
    %v6875 = vsel %vm3348, %v4787, 0
    %v6878 = vsel %vm3348, %v4788, 0
    %v6881 = vsel %vm3348, %v4789, 0
    %v6884 = vsel %vm3348, %v4790, 0
    %v6887 = vsel %vm3348, %v4791, 0
    %v6890 = vsel %vm3348, %v4792, 0
    %v6893 = vsel %vm3348, %v4793, 0
    %v6896 = vsel %vm3348, %v4794, 0
    %v6899 = vsel %vm3348, %v4795, 0
    %v6902 = vsel %vm3348, %v4796, 0
    %v6905 = vsel %vm3348, %v4797, 0
    %v6908 = vsel %vm3348, %v4798, 0
    %v6911 = vsel %vm3348, %v4799, 0
    %v6914 = vsel %vm3348, %v4800, 0
    %v6917 = vsel %vm3348, %v4801, 0
    %v6920 = vsel %vm3348, %v4802, 0
    %v6923 = vsel %vm3348, %v4803, 0
    %v6926 = vsel %vm3348, %v4804, 0
    %v6929 = vsel %vm3348, %v4805, 0
    %v6932 = vsel %vm3348, %v4806, 0
    %v6935 = vsel %vm3348, %v4807, 0
    %v6938 = vsel %vm3348, %v4808, 0
    %v6941 = vsel %vm3348, %v4809, 0
    %v6944 = vsel %vm3348, %v4810, 0
    %v6947 = vsel %vm3348, %v4811, 0
    %v6950 = vsel %vm3348, %v4812, 0
    %v6953 = vsel %vm3348, %v4813, 0
    %v6956 = vsel %vm3348, %v4814, 0
    %v6959 = vsel %vm3348, %v4815, 0
    %v6962 = vsel %vm3348, %v4816, 0
    %v6965 = vsel %vm3348, %v4817, 0
    %v6968 = vsel %vm3348, %v4818, 0
    %v6971 = vsel %vm3348, %v4819, 0
    %v6974 = vsel %vm3348, %v4820, 0
    %v6977 = vsel %vm3348, %v4821, 0
    %6979 = vmatprep.subr.mxu0 0.0
    %6980 = vmatpush1.msra.mxu0 %v6744
    %6981 = vmatprep.subr.mxu0 0.0
    %6982 = vmatpush1.msra.mxu0 %v6745
    %6983 = vmatprep.subr.mxu0 0.0
    %6984 = vmatpush1.msra.mxu0 %v6746
    %6985 = vmatprep.subr.mxu0 0.0
    %6986 = vmatpush1.msra.mxu0 %v6747
    %6987 = vmatprep.subr.mxu0 0.0
    %6988 = vmatpush1.msra.mxu0 %v6748
    %6989 = vmatprep.subr.mxu0 0.0
    %6990 = vmatpush1.msra.mxu0 %v6749
    %6991 = vmatprep.subr.mxu0 0.0
    %6992 = vmatpush1.msra.mxu0 %v6750
    %6993 = vmatprep.subr.mxu0 0.0
    %6994 = vmatpush1.msra.mxu0 %v6751
    %6995 = vmatprep.subr.mxu0 0.0
    %6996 = vmatpush1.msra.mxu0 %v6752
    %6997 = vmatprep.subr.mxu0 0.0
    %6998 = vmatpush1.msra.mxu0 %v6753
    %6999 = vmatprep.subr.mxu0 0.0
    %7000 = vmatpush1.msra.mxu0 %v6754
    %7001 = vmatprep.subr.mxu0 0.0
    %7002 = vmatpush1.msra.mxu0 %v6755
    %7003 = vmatprep.subr.mxu0 0.0
    %7004 = vmatpush1.msra.mxu0 %v6756
    %7005 = vmatprep.subr.mxu0 0.0
    %7006 = vmatpush1.msra.mxu0 %v6757
    %7007 = vmatprep.subr.mxu0 0.0
    %7008 = vmatpush1.msra.mxu0 %v6758
    %7009 = vmatprep.subr.mxu0 0.0
    %7010 = vmatpush1.msra.mxu0 %v6759
    %7011 = vmatprep.subr.mxu0 0.0
    %7012 = vmatpush1.msra.mxu0 %v6760
    %7013 = vmatprep.subr.mxu0 0.0
    %7014 = vmatpush1.msra.mxu0 %v6761
    %7015 = vmatprep.subr.mxu0 0.0
    %7016 = vmatpush1.msra.mxu0 %v6762
    %7017 = vmatprep.subr.mxu0 0.0
    %7018 = vmatpush1.msra.mxu0 %v6763
    %7019 = vmatprep.subr.mxu0 0.0
    %7020 = vmatpush1.msra.mxu0 %v6764
    %7021 = vmatprep.subr.mxu0 0.0
    %7022 = vmatpush1.msra.mxu0 %v6765
    %7023 = vmatprep.subr.mxu0 0.0
    %7024 = vmatpush1.msra.mxu0 %v6766
    %7025 = vmatprep.subr.mxu0 0.0
    %7026 = vmatpush1.msra.mxu0 %v6767
    %7027 = vmatprep.subr.mxu0 0.0
    %7028 = vmatpush1.msra.mxu0 %v6768
    %7029 = vmatprep.subr.mxu0 0.0
    %7030 = vmatpush1.msra.mxu0 %v6769
    %7031 = vmatprep.subr.mxu0 0.0
    %7032 = vmatpush1.msra.mxu0 %v6770
    %7033 = vmatprep.subr.mxu0 0.0
    %7034 = vmatpush1.msra.mxu0 %v6771
    %7035 = vmatprep.subr.mxu0 0.0
    %7036 = vmatpush1.msra.mxu0 %v6772
    %7037 = vmatprep.subr.mxu0 0.0
    %7038 = vmatpush1.msra.mxu0 %v6773
    %7039 = vmatprep.subr.mxu0 0.0
    %7040 = vmatpush1.msra.mxu0 %v6774
    %7041 = vmatprep.subr.mxu0 0.0
    %7042 = vmatpush1.msra.mxu0 %v6775
    %7043 = vmatprep.mubr.f32.mxu0 %v6680
    %7044 = vmatmul.mubr.f32.gmra.mrb[0].mxu0 %v6488
    %v7045 = vpop.f32.mrb[0].mxu0
    %v7046 = vadd.f32 %v6785, %v7045
    %v7047 = vpop.f32.mrb[0].mxu0
    %7048 = vmatprep.mubr.f32.mxu0 %v6681
    %7049 = vmatmul.mubr.f32.gmra.mrb[0].mxu0 %v6489
    %v7050 = vpop.f32.mrb[0].mxu0
    %v7051 = vadd.f32 %v6785, %v7050
    %v7052 = vpop.f32.mrb[0].mxu0
    %7053 = vmatprep.mubr.f32.mxu0 %v6682
    %7054 = vmatmul.mubr.f32.gmra.mrb[0].mxu0 %v6490
    %v7055 = vpop.f32.mrb[0].mxu0
    %v7056 = vadd.f32 %v6785, %v7055
    %v7057 = vpop.f32.mrb[0].mxu0
    %7058 = vmatprep.mubr.f32.mxu0 %v6683
    %7059 = vmatmul.mubr.f32.gmra.mrb[0].mxu0 %v6491
    %v7060 = vpop.f32.mrb[0].mxu0
    %v7061 = vadd.f32 %v6785, %v7060
    %v7062 = vpop.f32.mrb[0].mxu0
    %7063 = vmatprep.mubr.f32.mxu0 %v6684
    %7064 = vmatmul.mubr.f32.gmra.mrb[0].mxu0 %v6492
    %v7065 = vpop.f32.mrb[0].mxu0
    %v7066 = vadd.f32 %v6785, %v7065
    %v7067 = vpop.f32.mrb[0].mxu0
    %7068 = vmatprep.mubr.f32.mxu0 %v6685
    %7069 = vmatmul.mubr.f32.gmra.mrb[0].mxu0 %v6493
    %v7070 = vpop.f32.mrb[0].mxu0
    %v7071 = vadd.f32 %v6785, %v7070
    %v7072 = vpop.f32.mrb[0].mxu0
    %7073 = vmatprep.mubr.f32.mxu0 %v6686
    %7074 = vmatmul.mubr.f32.gmra.mrb[0].mxu0 %v6494
    %v7075 = vpop.f32.mrb[0].mxu0
    %v7076 = vadd.f32 %v6785, %v7075
    %v7077 = vpop.f32.mrb[0].mxu0
    %7078 = vmatprep.mubr.f32.mxu0 %v6687
    %7079 = vmatmul.mubr.f32.gmra.mrb[0].mxu0 %v6495
    %v7080 = vpop.f32.mrb[0].mxu0
    %v7081 = vadd.f32 %v6785, %v7080
    %v7082 = vpop.f32.mrb[0].mxu0
    %7083 = vmatprep.mubr.f32.mxu0 %v6688
    %7084 = vmatmul.mubr.f32.gmra.mrb[0].mxu0 %v6496
    %v7085 = vpop.f32.mrb[0].mxu0
    %v7086 = vadd.f32 %v6785, %v7085
    %v7087 = vpop.f32.mrb[0].mxu0
    %7088 = vmatprep.mubr.f32.mxu0 %v6689
    %7089 = vmatmul.mubr.f32.gmra.mrb[0].mxu0 %v6497
    %v7090 = vpop.f32.mrb[0].mxu0
    %v7091 = vadd.f32 %v6785, %v7090
    %v7092 = vpop.f32.mrb[0].mxu0
    %7093 = vmatprep.mubr.f32.mxu0 %v6690
    %7094 = vmatmul.mubr.f32.gmra.mrb[0].mxu0 %v6498
    %v7095 = vpop.f32.mrb[0].mxu0
    %v7096 = vadd.f32 %v6785, %v7095
    %v7097 = vpop.f32.mrb[0].mxu0
    %7098 = vmatprep.mubr.f32.mxu0 %v6691
    %7099 = vmatmul.mubr.f32.gmra.mrb[0].mxu0 %v6499
    %v7100 = vpop.f32.mrb[0].mxu0
    %v7101 = vadd.f32 %v6785, %v7100
    %v7102 = vpop.f32.mrb[0].mxu0
    %7103 = vmatprep.mubr.f32.mxu0 %v6692
    %7104 = vmatmul.mubr.f32.gmra.mrb[0].mxu0 %v6500
    %v7105 = vpop.f32.mrb[0].mxu0
    %v7106 = vadd.f32 %v6785, %v7105
    %v7107 = vpop.f32.mrb[0].mxu0
    %7108 = vmatprep.mubr.f32.mxu0 %v6693
    %7109 = vmatmul.mubr.f32.gmra.mrb[0].mxu0 %v6501
    %v7110 = vpop.f32.mrb[0].mxu0
    %v7111 = vadd.f32 %v6785, %v7110
    %v7112 = vpop.f32.mrb[0].mxu0
    %7113 = vmatprep.mubr.f32.mxu0 %v6694
    %7114 = vmatmul.mubr.f32.gmra.mrb[0].mxu0 %v6502
    %v7115 = vpop.f32.mrb[0].mxu0
    %v7116 = vadd.f32 %v6785, %v7115
    %v7117 = vpop.f32.mrb[0].mxu0
    %7118 = vmatprep.mubr.f32.mxu0 %v6695
    %7119 = vmatmul.mubr.f32.gmra.mrb[0].mxu0 %v6503
    %v7120 = vpop.f32.mrb[0].mxu0
    %v7121 = vadd.f32 %v6785, %v7120
    %v7122 = vpop.f32.mrb[0].mxu0
    %7123 = vmatprep.mubr.f32.mxu0 %v6696
    %7124 = vmatmul.mubr.f32.gmra.mrb[0].mxu0 %v6504
    %v7125 = vpop.f32.mrb[0].mxu0
    %v7126 = vadd.f32 %v6785, %v7125
    %v7127 = vpop.f32.mrb[0].mxu0
    %7128 = vmatprep.mubr.f32.mxu0 %v6697
    %7129 = vmatmul.mubr.f32.gmra.mrb[0].mxu0 %v6505
    %v7130 = vpop.f32.mrb[0].mxu0
    %v7131 = vadd.f32 %v6785, %v7130
    %v7132 = vpop.f32.mrb[0].mxu0
    %7133 = vmatprep.mubr.f32.mxu0 %v6698
    %7134 = vmatmul.mubr.f32.gmra.mrb[0].mxu0 %v6506
    %v7135 = vpop.f32.mrb[0].mxu0
    %v7136 = vadd.f32 %v6785, %v7135
    %v7137 = vpop.f32.mrb[0].mxu0
    %7138 = vmatprep.mubr.f32.mxu0 %v6699
    %7139 = vmatmul.mubr.f32.gmra.mrb[0].mxu0 %v6507
    %v7140 = vpop.f32.mrb[0].mxu0
    %v7141 = vadd.f32 %v6785, %v7140
    %v7142 = vpop.f32.mrb[0].mxu0
    %7143 = vmatprep.mubr.f32.mxu0 %v6700
    %7144 = vmatmul.mubr.f32.gmra.mrb[0].mxu0 %v6508
    %v7145 = vpop.f32.mrb[0].mxu0
    %v7146 = vadd.f32 %v6785, %v7145
    %v7147 = vpop.f32.mrb[0].mxu0
    %7148 = vmatprep.mubr.f32.mxu0 %v6701
    %7149 = vmatmul.mubr.f32.gmra.mrb[0].mxu0 %v6509
    %v7150 = vpop.f32.mrb[0].mxu0
    %v7151 = vadd.f32 %v6785, %v7150
    %v7152 = vpop.f32.mrb[0].mxu0
    %7153 = vmatprep.mubr.f32.mxu0 %v6702
    %7154 = vmatmul.mubr.f32.gmra.mrb[0].mxu0 %v6510
    %v7155 = vpop.f32.mrb[0].mxu0
    %v7156 = vadd.f32 %v6785, %v7155
    %v7157 = vpop.f32.mrb[0].mxu0
    %7158 = vmatprep.mubr.f32.mxu0 %v6703
    %7159 = vmatmul.mubr.f32.gmra.mrb[0].mxu0 %v6511
    %v7160 = vpop.f32.mrb[0].mxu0
    %v7161 = vadd.f32 %v6785, %v7160
    %v7162 = vpop.f32.mrb[0].mxu0
    %7163 = vmatprep.mubr.f32.mxu0 %v6704
    %7164 = vmatmul.mubr.f32.gmra.mrb[0].mxu0 %v6512
    %v7165 = vpop.f32.mrb[0].mxu0
    %v7166 = vadd.f32 %v6785, %v7165
    %v7167 = vpop.f32.mrb[0].mxu0
    %7168 = vmatprep.mubr.f32.mxu0 %v6705
    %7169 = vmatmul.mubr.f32.gmra.mrb[0].mxu0 %v6513
    %v7170 = vpop.f32.mrb[0].mxu0
    %v7171 = vadd.f32 %v6785, %v7170
    %v7172 = vpop.f32.mrb[0].mxu0
    %7173 = vmatprep.mubr.f32.mxu0 %v6706
    %7174 = vmatmul.mubr.f32.gmra.mrb[0].mxu0 %v6514
    %v7175 = vpop.f32.mrb[0].mxu0
    %v7176 = vadd.f32 %v6785, %v7175
    %v7177 = vpop.f32.mrb[0].mxu0
    %7178 = vmatprep.mubr.f32.mxu0 %v6707
    %7179 = vmatmul.mubr.f32.gmra.mrb[0].mxu0 %v6515
    %v7180 = vpop.f32.mrb[0].mxu0
    %v7181 = vadd.f32 %v6785, %v7180
    %v7182 = vpop.f32.mrb[0].mxu0
    %7183 = vmatprep.mubr.f32.mxu0 %v6708
    %7184 = vmatmul.mubr.f32.gmra.mrb[0].mxu0 %v6516
    %v7185 = vpop.f32.mrb[0].mxu0
    %v7186 = vadd.f32 %v6785, %v7185
    %v7187 = vpop.f32.mrb[0].mxu0
    %7188 = vmatprep.mubr.f32.mxu0 %v6709
    %7189 = vmatmul.mubr.f32.gmra.mrb[0].mxu0 %v6517
    %v7190 = vpop.f32.mrb[0].mxu0
    %v7191 = vadd.f32 %v6785, %v7190
    %v7192 = vpop.f32.mrb[0].mxu0
    %7193 = vmatprep.mubr.f32.mxu0 %v6710
    %7194 = vmatmul.mubr.f32.gmra.mrb[0].mxu0 %v6518
    %v7195 = vpop.f32.mrb[0].mxu0
    %v7196 = vadd.f32 %v6785, %v7195
    %v7197 = vpop.f32.mrb[0].mxu0
    %7198 = vmatprep.mubr.f32.mxu0 %v6711
    %7199 = vmatmul.mubr.f32.gmra.mrb[0].mxu0 %v6519
    %v7200 = vpop.f32.mrb[0].mxu0
    %v7201 = vadd.f32 %v6785, %v7200
    %v7202 = vpop.f32.mrb[0].mxu0
    %7203 = vmatprep.mubr.f32.mxu0 %v6712
    %7204 = vmatmul.mubr.f32.gmra.mrb[0].mxu0 %v6520
    %v7205 = vpop.f32.mrb[0].mxu0
    %v7206 = vadd.f32 %v6785, %v7205
    %v7207 = vpop.f32.mrb[0].mxu0
    %7208 = vmatprep.mubr.f32.mxu0 %v6713
    %7209 = vmatmul.mubr.f32.gmra.mrb[0].mxu0 %v6521
    %v7210 = vpop.f32.mrb[0].mxu0
    %v7211 = vadd.f32 %v6785, %v7210
    %v7212 = vpop.f32.mrb[0].mxu0
    %7213 = vmatprep.mubr.f32.mxu0 %v6714
    %7214 = vmatmul.mubr.f32.gmra.mrb[0].mxu0 %v6522
    %v7215 = vpop.f32.mrb[0].mxu0
    %v7216 = vadd.f32 %v6785, %v7215
    %v7217 = vpop.f32.mrb[0].mxu0
    %7218 = vmatprep.mubr.f32.mxu0 %v6715
    %7219 = vmatmul.mubr.f32.gmra.mrb[0].mxu0 %v6523
    %v7220 = vpop.f32.mrb[0].mxu0
    %v7221 = vadd.f32 %v6785, %v7220
    %v7222 = vpop.f32.mrb[0].mxu0
    %7223 = vmatprep.mubr.f32.mxu0 %v6716
    %7224 = vmatmul.mubr.f32.gmra.mrb[0].mxu0 %v6524
    %v7225 = vpop.f32.mrb[0].mxu0
    %v7226 = vadd.f32 %v6785, %v7225
    %v7227 = vpop.f32.mrb[0].mxu0
    %7228 = vmatprep.mubr.f32.mxu0 %v6717
    %7229 = vmatmul.mubr.f32.gmra.mrb[0].mxu0 %v6525
    %v7230 = vpop.f32.mrb[0].mxu0
    %v7231 = vadd.f32 %v6785, %v7230
    %v7232 = vpop.f32.mrb[0].mxu0
    %7233 = vmatprep.mubr.f32.mxu0 %v6718
    %7234 = vmatmul.mubr.f32.gmra.mrb[0].mxu0 %v6526
    %v7235 = vpop.f32.mrb[0].mxu0
    %v7236 = vadd.f32 %v6785, %v7235
    %v7237 = vpop.f32.mrb[0].mxu0
    %7238 = vmatprep.mubr.f32.mxu0 %v6719
    %7239 = vmatmul.mubr.f32.gmra.mrb[0].mxu0 %v6527
    %v7240 = vpop.f32.mrb[0].mxu0
    %v7241 = vadd.f32 %v6785, %v7240
    %v7242 = vpop.f32.mrb[0].mxu0
    %7243 = vmatprep.mubr.f32.mxu0 %v6720
    %7244 = vmatmul.mubr.f32.gmra.mrb[0].mxu0 %v6528
    %v7245 = vpop.f32.mrb[0].mxu0
    %v7246 = vadd.f32 %v6785, %v7245
    %v7247 = vpop.f32.mrb[0].mxu0
    %7248 = vmatprep.mubr.f32.mxu0 %v6721
    %7249 = vmatmul.mubr.f32.gmra.mrb[0].mxu0 %v6529
    %v7250 = vpop.f32.mrb[0].mxu0
    %v7251 = vadd.f32 %v6785, %v7250
    %v7252 = vpop.f32.mrb[0].mxu0
    %7253 = vmatprep.mubr.f32.mxu0 %v6722
    %7254 = vmatmul.mubr.f32.gmra.mrb[0].mxu0 %v6530
    %v7255 = vpop.f32.mrb[0].mxu0
    %v7256 = vadd.f32 %v6785, %v7255
    %v7257 = vpop.f32.mrb[0].mxu0
    %7258 = vmatprep.mubr.f32.mxu0 %v6723
    %7259 = vmatmul.mubr.f32.gmra.mrb[0].mxu0 %v6531
    %v7260 = vpop.f32.mrb[0].mxu0
    %v7261 = vadd.f32 %v6785, %v7260
    %v7262 = vpop.f32.mrb[0].mxu0
    %7263 = vmatprep.mubr.f32.mxu0 %v6724
    %7264 = vmatmul.mubr.f32.gmra.mrb[0].mxu0 %v6532
    %v7265 = vpop.f32.mrb[0].mxu0
    %v7266 = vadd.f32 %v6785, %v7265
    %v7267 = vpop.f32.mrb[0].mxu0
    %7268 = vmatprep.mubr.f32.mxu0 %v6725
    %7269 = vmatmul.mubr.f32.gmra.mrb[0].mxu0 %v6533
    %v7270 = vpop.f32.mrb[0].mxu0
    %v7271 = vadd.f32 %v6785, %v7270
    %v7272 = vpop.f32.mrb[0].mxu0
    %7273 = vmatprep.mubr.f32.mxu0 %v6726
    %7274 = vmatmul.mubr.f32.gmra.mrb[0].mxu0 %v6534
    %v7275 = vpop.f32.mrb[0].mxu0
    %v7276 = vadd.f32 %v6785, %v7275
    %v7277 = vpop.f32.mrb[0].mxu0
    %7278 = vmatprep.mubr.f32.mxu0 %v6727
    %7279 = vmatmul.mubr.f32.gmra.mrb[0].mxu0 %v6535
    %v7280 = vpop.f32.mrb[0].mxu0
    %v7281 = vadd.f32 %v6785, %v7280
    %v7282 = vpop.f32.mrb[0].mxu0
    %7283 = vmatprep.mubr.f32.mxu0 %v6728
    %7284 = vmatmul.mubr.f32.gmra.mrb[0].mxu0 %v6536
    %v7285 = vpop.f32.mrb[0].mxu0
    %v7286 = vadd.f32 %v6785, %v7285
    %v7287 = vpop.f32.mrb[0].mxu0
    %7288 = vmatprep.mubr.f32.mxu0 %v6729
    %7289 = vmatmul.mubr.f32.gmra.mrb[0].mxu0 %v6537
    %v7290 = vpop.f32.mrb[0].mxu0
    %v7291 = vadd.f32 %v6785, %v7290
    %v7292 = vpop.f32.mrb[0].mxu0
    %7293 = vmatprep.mubr.f32.mxu0 %v6730
    %7294 = vmatmul.mubr.f32.gmra.mrb[0].mxu0 %v6538
    %v7295 = vpop.f32.mrb[0].mxu0
    %v7296 = vadd.f32 %v6785, %v7295
    %v7297 = vpop.f32.mrb[0].mxu0
    %7298 = vmatprep.mubr.f32.mxu0 %v6731
    %7299 = vmatmul.mubr.f32.gmra.mrb[0].mxu0 %v6539
    %v7300 = vpop.f32.mrb[0].mxu0
    %v7301 = vadd.f32 %v6785, %v7300
    %v7302 = vpop.f32.mrb[0].mxu0
    %7303 = vmatprep.mubr.f32.mxu0 %v6732
    %7304 = vmatmul.mubr.f32.gmra.mrb[0].mxu0 %v6540
    %v7305 = vpop.f32.mrb[0].mxu0
    %v7306 = vadd.f32 %v6785, %v7305
    %v7307 = vpop.f32.mrb[0].mxu0
    %7308 = vmatprep.mubr.f32.mxu0 %v6733
    %7309 = vmatmul.mubr.f32.gmra.mrb[0].mxu0 %v6541
    %v7310 = vpop.f32.mrb[0].mxu0
    %v7311 = vadd.f32 %v6785, %v7310
    %v7312 = vpop.f32.mrb[0].mxu0
    %7313 = vmatprep.mubr.f32.mxu0 %v6734
    %7314 = vmatmul.mubr.f32.gmra.mrb[0].mxu0 %v6542
    %v7315 = vpop.f32.mrb[0].mxu0
    %v7316 = vadd.f32 %v6785, %v7315
    %v7317 = vpop.f32.mrb[0].mxu0
    %7318 = vmatprep.mubr.f32.mxu0 %v6735
    %7319 = vmatmul.mubr.f32.gmra.mrb[0].mxu0 %v6543
    %v7320 = vpop.f32.mrb[0].mxu0
    %v7321 = vadd.f32 %v6785, %v7320
    %v7322 = vpop.f32.mrb[0].mxu0
    %7323 = vmatprep.mubr.f32.mxu0 %v6736
    %7324 = vmatmul.mubr.f32.gmra.mrb[0].mxu0 %v6544
    %v7325 = vpop.f32.mrb[0].mxu0
    %v7326 = vadd.f32 %v6785, %v7325
    %v7327 = vpop.f32.mrb[0].mxu0
    %7328 = vmatprep.mubr.f32.mxu0 %v6737
    %7329 = vmatmul.mubr.f32.gmra.mrb[0].mxu0 %v6545
    %v7330 = vpop.f32.mrb[0].mxu0
    %v7331 = vadd.f32 %v6785, %v7330
    %v7332 = vpop.f32.mrb[0].mxu0
    %7333 = vmatprep.mubr.f32.mxu0 %v6738
    %7334 = vmatmul.mubr.f32.gmra.mrb[0].mxu0 %v6546
    %v7335 = vpop.f32.mrb[0].mxu0
    %v7336 = vadd.f32 %v6785, %v7335
    %v7337 = vpop.f32.mrb[0].mxu0
    %7338 = vmatprep.mubr.f32.mxu0 %v6739
    %7339 = vmatmul.mubr.f32.gmra.mrb[0].mxu0 %v6547
    %v7340 = vpop.f32.mrb[0].mxu0
    %v7341 = vadd.f32 %v6785, %v7340
    %v7342 = vpop.f32.mrb[0].mxu0
    %7343 = vmatprep.mubr.f32.mxu0 %v6740
    %7344 = vmatmul.mubr.f32.gmra.mrb[0].mxu0 %v6548
    %v7345 = vpop.f32.mrb[0].mxu0
    %v7346 = vadd.f32 %v6785, %v7345
    %v7347 = vpop.f32.mrb[0].mxu0
    %7348 = vmatprep.mubr.f32.mxu0 %v6741
    %7349 = vmatmul.mubr.f32.gmra.mrb[0].mxu0 %v6549
    %v7350 = vpop.f32.mrb[0].mxu0
    %v7351 = vadd.f32 %v6785, %v7350
    %v7352 = vpop.f32.mrb[0].mxu0
    %7353 = vmatprep.mubr.f32.mxu0 %v6742
    %7354 = vmatmul.mubr.f32.gmra.mrb[0].mxu0 %v6550
    %v7355 = vpop.f32.mrb[0].mxu0
    %v7356 = vadd.f32 %v6785, %v7355
    %v7357 = vpop.f32.mrb[0].mxu0
    %7358 = vmatprep.mubr.f32.mxu0 %v6743
    %7359 = vmatmul.mubr.f32.gmra.mrb[0].mxu0 %v6551
    %v7360 = vpop.f32.mrb[0].mxu0
    %v7361 = vadd.f32 %v6785, %v7360
    %v7362 = vpop.f32.mrb[0].mxu0
    %7363 = vdwg.mxu0
    %7364 = vmatprep.subr.mxu0 0.0
    %7365 = vmatpush1.msra.mxu0 %v6776
    %7366 = vmatprep.subr.mxu0 0.0
    %7367 = vmatpush1.msra.mxu0 %v6777
    %7368 = vmatprep.subr.mxu0 0.0
    %7369 = vmatpush1.msra.mxu0 %v6778
    %7370 = vmatprep.subr.mxu0 0.0
    %7371 = vmatpush1.msra.mxu0 %v6779
    %7372 = vmatprep.subr.mxu0 0.0
    %7373 = vmatpush1.msra.mxu0 0.0
    %7374 = vmatprep.subr.mxu0 0.0
    %7375 = vmatpush1.msra.mxu0 0.0
    %7376 = vmatprep.subr.mxu0 0.0
    %7377 = vmatpush1.msra.mxu0 0.0
    %7378 = vmatprep.subr.mxu0 0.0
    %7379 = vmatpush1.msra.mxu0 0.0
    %7380 = vmatprep.subr.mxu0 0.0
    %7381 = vmatpush1.msra.mxu0 0.0
    %7382 = vmatprep.subr.mxu0 0.0
    %7383 = vmatpush1.msra.mxu0 0.0
    %7384 = vmatprep.subr.mxu0 0.0
    %7385 = vmatpush1.msra.mxu0 0.0
    %7386 = vmatprep.subr.mxu0 0.0
    %7387 = vmatpush1.msra.mxu0 0.0
    %7388 = vmatprep.subr.mxu0 0.0
    %7389 = vmatpush1.msra.mxu0 0.0
    %7390 = vmatprep.subr.mxu0 0.0
    %7391 = vmatpush1.msra.mxu0 0.0
    %7392 = vmatprep.subr.mxu0 0.0
    %7393 = vmatpush1.msra.mxu0 0.0
    %7394 = vmatprep.subr.mxu0 0.0
    %7395 = vmatpush1.msra.mxu0 0.0
    %7396 = vmatprep.subr.mxu0 0.0
    %7397 = vmatpush1.msra.mxu0 0.0
    %7398 = vmatprep.subr.mxu0 0.0
    %7399 = vmatpush1.msra.mxu0 0.0
    %7400 = vmatprep.subr.mxu0 0.0
    %7401 = vmatpush1.msra.mxu0 0.0
    %7402 = vmatprep.subr.mxu0 0.0
    %7403 = vmatpush1.msra.mxu0 0.0
    %7404 = vmatprep.subr.mxu0 0.0
    %7405 = vmatpush1.msra.mxu0 0.0
    %7406 = vmatprep.subr.mxu0 0.0
    %7407 = vmatpush1.msra.mxu0 0.0
    %7408 = vmatprep.subr.mxu0 0.0
    %7409 = vmatpush1.msra.mxu0 0.0
    %7410 = vmatprep.subr.mxu0 0.0
    %7411 = vmatpush1.msra.mxu0 0.0
    %7412 = vmatprep.subr.mxu0 0.0
    %7413 = vmatpush1.msra.mxu0 0.0
    %7414 = vmatprep.subr.mxu0 0.0
    %7415 = vmatpush1.msra.mxu0 0.0
    %7416 = vmatprep.subr.mxu0 0.0
    %7417 = vmatpush1.msra.mxu0 0.0
    %7418 = vmatprep.subr.mxu0 0.0
    %7419 = vmatpush1.msra.mxu0 0.0
    %7420 = vmatprep.subr.mxu0 0.0
    %7421 = vmatpush1.msra.mxu0 0.0
    %7422 = vmatprep.subr.mxu0 0.0
    %7423 = vmatpush1.msra.mxu0 0.0
    %7424 = vmatprep.subr.mxu0 0.0
    %7425 = vmatpush1.msra.mxu0 0.0
    %7426 = vmatprep.subr.mxu0 0.0
    %7427 = vmatpush1.msra.mxu0 0.0
    %7428 = vmatprep.mubr.f32.mxu0 0.0
    %7429 = vmatmul.mubr.f32.gmra.mrb[0].mxu0 %v6788
    %v7430 = vpop.f32.mrb[0].mxu0
    %v7431 = vadd.f32 %v7046, %v7430
    %v7432 = vpop.f32.mrb[0].mxu0
    %7433 = vmatprep.mubr.f32.mxu0 0.0
    %7434 = vmatmul.mubr.f32.gmra.mrb[0].mxu0 %v6791
    %v7435 = vpop.f32.mrb[0].mxu0
    %v7436 = vadd.f32 %v7051, %v7435
    %v7437 = vpop.f32.mrb[0].mxu0
    %7438 = vmatprep.mubr.f32.mxu0 0.0
    %7439 = vmatmul.mubr.f32.gmra.mrb[0].mxu0 %v6794
    %v7440 = vpop.f32.mrb[0].mxu0
    %v7441 = vadd.f32 %v7056, %v7440
    %v7442 = vpop.f32.mrb[0].mxu0
    %7443 = vmatprep.mubr.f32.mxu0 0.0
    %7444 = vmatmul.mubr.f32.gmra.mrb[0].mxu0 %v6797
    %v7445 = vpop.f32.mrb[0].mxu0
    %v7446 = vadd.f32 %v7061, %v7445
    %v7447 = vpop.f32.mrb[0].mxu0
    %7448 = vmatprep.mubr.f32.mxu0 0.0
    %7449 = vmatmul.mubr.f32.gmra.mrb[0].mxu0 %v6800
    %v7450 = vpop.f32.mrb[0].mxu0
    %v7451 = vadd.f32 %v7066, %v7450
    %v7452 = vpop.f32.mrb[0].mxu0
    %7453 = vmatprep.mubr.f32.mxu0 0.0
    %7454 = vmatmul.mubr.f32.gmra.mrb[0].mxu0 %v6803
    %v7455 = vpop.f32.mrb[0].mxu0
    %v7456 = vadd.f32 %v7071, %v7455
    %v7457 = vpop.f32.mrb[0].mxu0
    %7458 = vmatprep.mubr.f32.mxu0 0.0
    %7459 = vmatmul.mubr.f32.gmra.mrb[0].mxu0 %v6806
    %v7460 = vpop.f32.mrb[0].mxu0
    %v7461 = vadd.f32 %v7076, %v7460
    %v7462 = vpop.f32.mrb[0].mxu0
    %7463 = vmatprep.mubr.f32.mxu0 0.0
    %7464 = vmatmul.mubr.f32.gmra.mrb[0].mxu0 %v6809
    %v7465 = vpop.f32.mrb[0].mxu0
    %v7466 = vadd.f32 %v7081, %v7465
    %v7467 = vpop.f32.mrb[0].mxu0
    %7468 = vmatprep.mubr.f32.mxu0 0.0
    %7469 = vmatmul.mubr.f32.gmra.mrb[0].mxu0 %v6812
    %v7470 = vpop.f32.mrb[0].mxu0
    %v7471 = vadd.f32 %v7086, %v7470
    %v7472 = vpop.f32.mrb[0].mxu0
    %7473 = vmatprep.mubr.f32.mxu0 0.0
    %7474 = vmatmul.mubr.f32.gmra.mrb[0].mxu0 %v6815
    %v7475 = vpop.f32.mrb[0].mxu0
    %v7476 = vadd.f32 %v7091, %v7475
    %v7477 = vpop.f32.mrb[0].mxu0
    %7478 = vmatprep.mubr.f32.mxu0 0.0
    %7479 = vmatmul.mubr.f32.gmra.mrb[0].mxu0 %v6818
    %v7480 = vpop.f32.mrb[0].mxu0
    %v7481 = vadd.f32 %v7096, %v7480
    %v7482 = vpop.f32.mrb[0].mxu0
    %7483 = vmatprep.mubr.f32.mxu0 0.0
    %7484 = vmatmul.mubr.f32.gmra.mrb[0].mxu0 %v6821
    %v7485 = vpop.f32.mrb[0].mxu0
    %v7486 = vadd.f32 %v7101, %v7485
    %v7487 = vpop.f32.mrb[0].mxu0
    %7488 = vmatprep.mubr.f32.mxu0 0.0
    %7489 = vmatmul.mubr.f32.gmra.mrb[0].mxu0 %v6824
    %v7490 = vpop.f32.mrb[0].mxu0
    %v7491 = vadd.f32 %v7106, %v7490
    %v7492 = vpop.f32.mrb[0].mxu0
    %7493 = vmatprep.mubr.f32.mxu0 0.0
    %7494 = vmatmul.mubr.f32.gmra.mrb[0].mxu0 %v6827
    %v7495 = vpop.f32.mrb[0].mxu0
    %v7496 = vadd.f32 %v7111, %v7495
    %v7497 = vpop.f32.mrb[0].mxu0
    %7498 = vmatprep.mubr.f32.mxu0 0.0
    %7499 = vmatmul.mubr.f32.gmra.mrb[0].mxu0 %v6830
    %v7500 = vpop.f32.mrb[0].mxu0
    %v7501 = vadd.f32 %v7116, %v7500
    %v7502 = vpop.f32.mrb[0].mxu0
    %7503 = vmatprep.mubr.f32.mxu0 0.0
    %7504 = vmatmul.mubr.f32.gmra.mrb[0].mxu0 %v6833
    %v7505 = vpop.f32.mrb[0].mxu0
    %v7506 = vadd.f32 %v7121, %v7505
    %v7507 = vpop.f32.mrb[0].mxu0
    %7508 = vmatprep.mubr.f32.mxu0 0.0
    %7509 = vmatmul.mubr.f32.gmra.mrb[0].mxu0 %v6836
    %v7510 = vpop.f32.mrb[0].mxu0
    %v7511 = vadd.f32 %v7126, %v7510
    %v7512 = vpop.f32.mrb[0].mxu0
    %7513 = vmatprep.mubr.f32.mxu0 0.0
    %7514 = vmatmul.mubr.f32.gmra.mrb[0].mxu0 %v6839
    %v7515 = vpop.f32.mrb[0].mxu0
    %v7516 = vadd.f32 %v7131, %v7515
    %v7517 = vpop.f32.mrb[0].mxu0
    %7518 = vmatprep.mubr.f32.mxu0 0.0
    %7519 = vmatmul.mubr.f32.gmra.mrb[0].mxu0 %v6842
    %v7520 = vpop.f32.mrb[0].mxu0
    %v7521 = vadd.f32 %v7136, %v7520
    %v7522 = vpop.f32.mrb[0].mxu0
    %7523 = vmatprep.mubr.f32.mxu0 0.0
    %7524 = vmatmul.mubr.f32.gmra.mrb[0].mxu0 %v6845
    %v7525 = vpop.f32.mrb[0].mxu0
    %v7526 = vadd.f32 %v7141, %v7525
    %v7527 = vpop.f32.mrb[0].mxu0
    %7528 = vmatprep.mubr.f32.mxu0 0.0
    %7529 = vmatmul.mubr.f32.gmra.mrb[0].mxu0 %v6848
    %v7530 = vpop.f32.mrb[0].mxu0
    %v7531 = vadd.f32 %v7146, %v7530
    %v7532 = vpop.f32.mrb[0].mxu0
    %7533 = vmatprep.mubr.f32.mxu0 0.0
    %7534 = vmatmul.mubr.f32.gmra.mrb[0].mxu0 %v6851
    %v7535 = vpop.f32.mrb[0].mxu0
    %v7536 = vadd.f32 %v7151, %v7535
    %v7537 = vpop.f32.mrb[0].mxu0
    %7538 = vmatprep.mubr.f32.mxu0 0.0
    %7539 = vmatmul.mubr.f32.gmra.mrb[0].mxu0 %v6854
    %v7540 = vpop.f32.mrb[0].mxu0
    %v7541 = vadd.f32 %v7156, %v7540
    %v7542 = vpop.f32.mrb[0].mxu0
    %7543 = vmatprep.mubr.f32.mxu0 0.0
    %7544 = vmatmul.mubr.f32.gmra.mrb[0].mxu0 %v6857
    %v7545 = vpop.f32.mrb[0].mxu0
    %v7546 = vadd.f32 %v7161, %v7545
    %v7547 = vpop.f32.mrb[0].mxu0
    %7548 = vmatprep.mubr.f32.mxu0 0.0
    %7549 = vmatmul.mubr.f32.gmra.mrb[0].mxu0 %v6860
    %v7550 = vpop.f32.mrb[0].mxu0
    %v7551 = vadd.f32 %v7166, %v7550
    %v7552 = vpop.f32.mrb[0].mxu0
    %7553 = vmatprep.mubr.f32.mxu0 0.0
    %7554 = vmatmul.mubr.f32.gmra.mrb[0].mxu0 %v6863
    %v7555 = vpop.f32.mrb[0].mxu0
    %v7556 = vadd.f32 %v7171, %v7555
    %v7557 = vpop.f32.mrb[0].mxu0
    %7558 = vmatprep.mubr.f32.mxu0 0.0
    %7559 = vmatmul.mubr.f32.gmra.mrb[0].mxu0 %v6866
    %v7560 = vpop.f32.mrb[0].mxu0
    %v7561 = vadd.f32 %v7176, %v7560
    %v7562 = vpop.f32.mrb[0].mxu0
    %7563 = vmatprep.mubr.f32.mxu0 0.0
    %7564 = vmatmul.mubr.f32.gmra.mrb[0].mxu0 %v6869
    %v7565 = vpop.f32.mrb[0].mxu0
    %v7566 = vadd.f32 %v7181, %v7565
    %v7567 = vpop.f32.mrb[0].mxu0
    %7568 = vmatprep.mubr.f32.mxu0 0.0
    %7569 = vmatmul.mubr.f32.gmra.mrb[0].mxu0 %v6872
    %v7570 = vpop.f32.mrb[0].mxu0
    %v7571 = vadd.f32 %v7186, %v7570
    %v7572 = vpop.f32.mrb[0].mxu0
    %7573 = vmatprep.mubr.f32.mxu0 0.0
    %7574 = vmatmul.mubr.f32.gmra.mrb[0].mxu0 %v6875
    %v7575 = vpop.f32.mrb[0].mxu0
    %v7576 = vadd.f32 %v7191, %v7575
    %v7577 = vpop.f32.mrb[0].mxu0
    %7578 = vmatprep.mubr.f32.mxu0 0.0
    %7579 = vmatmul.mubr.f32.gmra.mrb[0].mxu0 %v6878
    %v7580 = vpop.f32.mrb[0].mxu0
    %v7581 = vadd.f32 %v7196, %v7580
    %v7582 = vpop.f32.mrb[0].mxu0
    %7583 = vmatprep.mubr.f32.mxu0 0.0
    %7584 = vmatmul.mubr.f32.gmra.mrb[0].mxu0 %v6881
    %v7585 = vpop.f32.mrb[0].mxu0
    %v7586 = vadd.f32 %v7201, %v7585
    %v7587 = vpop.f32.mrb[0].mxu0
    %7588 = vmatprep.mubr.f32.mxu0 0.0
    %7589 = vmatmul.mubr.f32.gmra.mrb[0].mxu0 %v6884
    %v7590 = vpop.f32.mrb[0].mxu0
    %v7591 = vadd.f32 %v7206, %v7590
    %v7592 = vpop.f32.mrb[0].mxu0
    %7593 = vmatprep.mubr.f32.mxu0 0.0
    %7594 = vmatmul.mubr.f32.gmra.mrb[0].mxu0 %v6887
    %v7595 = vpop.f32.mrb[0].mxu0
    %v7596 = vadd.f32 %v7211, %v7595
    %v7597 = vpop.f32.mrb[0].mxu0
    %7598 = vmatprep.mubr.f32.mxu0 0.0
    %7599 = vmatmul.mubr.f32.gmra.mrb[0].mxu0 %v6890
    %v7600 = vpop.f32.mrb[0].mxu0
    %v7601 = vadd.f32 %v7216, %v7600
    %v7602 = vpop.f32.mrb[0].mxu0
    %7603 = vmatprep.mubr.f32.mxu0 0.0
    %7604 = vmatmul.mubr.f32.gmra.mrb[0].mxu0 %v6893
    %v7605 = vpop.f32.mrb[0].mxu0
    %v7606 = vadd.f32 %v7221, %v7605
    %v7607 = vpop.f32.mrb[0].mxu0
    %7608 = vmatprep.mubr.f32.mxu0 0.0
    %7609 = vmatmul.mubr.f32.gmra.mrb[0].mxu0 %v6896
    %v7610 = vpop.f32.mrb[0].mxu0
    %v7611 = vadd.f32 %v7226, %v7610
    %v7612 = vpop.f32.mrb[0].mxu0
    %7613 = vmatprep.mubr.f32.mxu0 0.0
    %7614 = vmatmul.mubr.f32.gmra.mrb[0].mxu0 %v6899
    %v7615 = vpop.f32.mrb[0].mxu0
    %v7616 = vadd.f32 %v7231, %v7615
    %v7617 = vpop.f32.mrb[0].mxu0
    %7618 = vmatprep.mubr.f32.mxu0 0.0
    %7619 = vmatmul.mubr.f32.gmra.mrb[0].mxu0 %v6902
    %v7620 = vpop.f32.mrb[0].mxu0
    %v7621 = vadd.f32 %v7236, %v7620
    %v7622 = vpop.f32.mrb[0].mxu0
    %7623 = vmatprep.mubr.f32.mxu0 0.0
    %7624 = vmatmul.mubr.f32.gmra.mrb[0].mxu0 %v6905
    %v7625 = vpop.f32.mrb[0].mxu0
    %v7626 = vadd.f32 %v7241, %v7625
    %v7627 = vpop.f32.mrb[0].mxu0
    %7628 = vmatprep.mubr.f32.mxu0 0.0
    %7629 = vmatmul.mubr.f32.gmra.mrb[0].mxu0 %v6908
    %v7630 = vpop.f32.mrb[0].mxu0
    %v7631 = vadd.f32 %v7246, %v7630
    %v7632 = vpop.f32.mrb[0].mxu0
    %7633 = vmatprep.mubr.f32.mxu0 0.0
    %7634 = vmatmul.mubr.f32.gmra.mrb[0].mxu0 %v6911
    %v7635 = vpop.f32.mrb[0].mxu0
    %v7636 = vadd.f32 %v7251, %v7635
    %v7637 = vpop.f32.mrb[0].mxu0
    %7638 = vmatprep.mubr.f32.mxu0 0.0
    %7639 = vmatmul.mubr.f32.gmra.mrb[0].mxu0 %v6914
    %v7640 = vpop.f32.mrb[0].mxu0
    %v7641 = vadd.f32 %v7256, %v7640
    %v7642 = vpop.f32.mrb[0].mxu0
    %7643 = vmatprep.mubr.f32.mxu0 0.0
    %7644 = vmatmul.mubr.f32.gmra.mrb[0].mxu0 %v6917
    %v7645 = vpop.f32.mrb[0].mxu0
    %v7646 = vadd.f32 %v7261, %v7645
    %v7647 = vpop.f32.mrb[0].mxu0
    %7648 = vmatprep.mubr.f32.mxu0 0.0
    %7649 = vmatmul.mubr.f32.gmra.mrb[0].mxu0 %v6920
    %v7650 = vpop.f32.mrb[0].mxu0
    %v7651 = vadd.f32 %v7266, %v7650
    %v7652 = vpop.f32.mrb[0].mxu0
    %7653 = vmatprep.mubr.f32.mxu0 0.0
    %7654 = vmatmul.mubr.f32.gmra.mrb[0].mxu0 %v6923
    %v7655 = vpop.f32.mrb[0].mxu0
    %v7656 = vadd.f32 %v7271, %v7655
    %v7657 = vpop.f32.mrb[0].mxu0
    %7658 = vmatprep.mubr.f32.mxu0 0.0
    %7659 = vmatmul.mubr.f32.gmra.mrb[0].mxu0 %v6926
    %v7660 = vpop.f32.mrb[0].mxu0
    %v7661 = vadd.f32 %v7276, %v7660
    %v7662 = vpop.f32.mrb[0].mxu0
    %7663 = vmatprep.mubr.f32.mxu0 0.0
    %7664 = vmatmul.mubr.f32.gmra.mrb[0].mxu0 %v6929
    %v7665 = vpop.f32.mrb[0].mxu0
    %v7666 = vadd.f32 %v7281, %v7665
    %v7667 = vpop.f32.mrb[0].mxu0
    %7668 = vmatprep.mubr.f32.mxu0 0.0
    %7669 = vmatmul.mubr.f32.gmra.mrb[0].mxu0 %v6932
    %v7670 = vpop.f32.mrb[0].mxu0
    %v7671 = vadd.f32 %v7286, %v7670
    %v7672 = vpop.f32.mrb[0].mxu0
    %7673 = vmatprep.mubr.f32.mxu0 0.0
    %7674 = vmatmul.mubr.f32.gmra.mrb[0].mxu0 %v6935
    %v7675 = vpop.f32.mrb[0].mxu0
    %v7676 = vadd.f32 %v7291, %v7675
    %v7677 = vpop.f32.mrb[0].mxu0
    %7678 = vmatprep.mubr.f32.mxu0 0.0
    %7679 = vmatmul.mubr.f32.gmra.mrb[0].mxu0 %v6938
    %v7680 = vpop.f32.mrb[0].mxu0
    %v7681 = vadd.f32 %v7296, %v7680
    %v7682 = vpop.f32.mrb[0].mxu0
    %7683 = vmatprep.mubr.f32.mxu0 0.0
    %7684 = vmatmul.mubr.f32.gmra.mrb[0].mxu0 %v6941
    %v7685 = vpop.f32.mrb[0].mxu0
    %v7686 = vadd.f32 %v7301, %v7685
    %v7687 = vpop.f32.mrb[0].mxu0
    %7688 = vmatprep.mubr.f32.mxu0 0.0
    %7689 = vmatmul.mubr.f32.gmra.mrb[0].mxu0 %v6944
    %v7690 = vpop.f32.mrb[0].mxu0
    %v7691 = vadd.f32 %v7306, %v7690
    %v7692 = vpop.f32.mrb[0].mxu0
    %7693 = vmatprep.mubr.f32.mxu0 0.0
    %7694 = vmatmul.mubr.f32.gmra.mrb[0].mxu0 %v6947
    %v7695 = vpop.f32.mrb[0].mxu0
    %v7696 = vadd.f32 %v7311, %v7695
    %v7697 = vpop.f32.mrb[0].mxu0
    %7698 = vmatprep.mubr.f32.mxu0 0.0
    %7699 = vmatmul.mubr.f32.gmra.mrb[0].mxu0 %v6950
    %v7700 = vpop.f32.mrb[0].mxu0
    %v7701 = vadd.f32 %v7316, %v7700
    %v7702 = vpop.f32.mrb[0].mxu0
    %7703 = vmatprep.mubr.f32.mxu0 0.0
    %7704 = vmatmul.mubr.f32.gmra.mrb[0].mxu0 %v6953
    %v7705 = vpop.f32.mrb[0].mxu0
    %v7706 = vadd.f32 %v7321, %v7705
    %v7707 = vpop.f32.mrb[0].mxu0
    %7708 = vmatprep.mubr.f32.mxu0 0.0
    %7709 = vmatmul.mubr.f32.gmra.mrb[0].mxu0 %v6956
    %v7710 = vpop.f32.mrb[0].mxu0
    %v7711 = vadd.f32 %v7326, %v7710
    %v7712 = vpop.f32.mrb[0].mxu0
    %7713 = vmatprep.mubr.f32.mxu0 0.0
    %7714 = vmatmul.mubr.f32.gmra.mrb[0].mxu0 %v6959
    %v7715 = vpop.f32.mrb[0].mxu0
    %v7716 = vadd.f32 %v7331, %v7715
    %v7717 = vpop.f32.mrb[0].mxu0
    %7718 = vmatprep.mubr.f32.mxu0 0.0
    %7719 = vmatmul.mubr.f32.gmra.mrb[0].mxu0 %v6962
    %v7720 = vpop.f32.mrb[0].mxu0
    %v7721 = vadd.f32 %v7336, %v7720
    %v7722 = vpop.f32.mrb[0].mxu0
    %7723 = vmatprep.mubr.f32.mxu0 0.0
    %7724 = vmatmul.mubr.f32.gmra.mrb[0].mxu0 %v6965
    %v7725 = vpop.f32.mrb[0].mxu0
    %v7726 = vadd.f32 %v7341, %v7725
    %v7727 = vpop.f32.mrb[0].mxu0
    %7728 = vmatprep.mubr.f32.mxu0 0.0
    %7729 = vmatmul.mubr.f32.gmra.mrb[0].mxu0 %v6968
    %v7730 = vpop.f32.mrb[0].mxu0
    %v7731 = vadd.f32 %v7346, %v7730
    %v7732 = vpop.f32.mrb[0].mxu0
    %7733 = vmatprep.mubr.f32.mxu0 0.0
    %7734 = vmatmul.mubr.f32.gmra.mrb[0].mxu0 %v6971
    %v7735 = vpop.f32.mrb[0].mxu0
    %v7736 = vadd.f32 %v7351, %v7735
    %v7737 = vpop.f32.mrb[0].mxu0
    %7738 = vmatprep.mubr.f32.mxu0 0.0
    %7739 = vmatmul.mubr.f32.gmra.mrb[0].mxu0 %v6974
    %v7740 = vpop.f32.mrb[0].mxu0
    %v7741 = vadd.f32 %v7356, %v7740
    %v7742 = vpop.f32.mrb[0].mxu0
    %7743 = vmatprep.mubr.f32.mxu0 0.0
    %7744 = vmatmul.mubr.f32.gmra.mrb[0].mxu0 %v6977
    %v7745 = vpop.f32.mrb[0].mxu0
    %v7746 = vadd.f32 %v7361, %v7745
    %v7747 = vpop.f32.mrb[0].mxu0
    %7748 = vdwg.mxu0
    %v7749 = vmax.f32 %v7431, 0.0
    %v7750 = vmax.f32 %v7436, 0.0
    %v7751 = vmax.f32 %v7441, 0.0
    %v7752 = vmax.f32 %v7446, 0.0
    %v7753 = vmax.f32 %v7451, 0.0
    %v7754 = vmax.f32 %v7456, 0.0
    %v7755 = vmax.f32 %v7461, 0.0
    %v7756 = vmax.f32 %v7466, 0.0
    %v7757 = vmax.f32 %v7471, 0.0
    %v7758 = vmax.f32 %v7476, 0.0
    %v7759 = vmax.f32 %v7481, 0.0
    %v7760 = vmax.f32 %v7486, 0.0
    %v7761 = vmax.f32 %v7491, 0.0
    %v7762 = vmax.f32 %v7496, 0.0
    %v7763 = vmax.f32 %v7501, 0.0
    %v7764 = vmax.f32 %v7506, 0.0
    %v7765 = vmax.f32 %v7511, 0.0
    %v7766 = vmax.f32 %v7516, 0.0
    %v7767 = vmax.f32 %v7521, 0.0
    %v7768 = vmax.f32 %v7526, 0.0
    %v7769 = vmax.f32 %v7531, 0.0
    %v7770 = vmax.f32 %v7536, 0.0
    %v7771 = vmax.f32 %v7541, 0.0
    %v7772 = vmax.f32 %v7546, 0.0
    %v7773 = vmax.f32 %v7551, 0.0
    %v7774 = vmax.f32 %v7556, 0.0
    %v7775 = vmax.f32 %v7561, 0.0
    %v7776 = vmax.f32 %v7566, 0.0
    %v7777 = vmax.f32 %v7571, 0.0
    %v7778 = vmax.f32 %v7576, 0.0
    %v7779 = vmax.f32 %v7581, 0.0
    %v7780 = vmax.f32 %v7586, 0.0
    %v7781 = vmax.f32 %v7591, 0.0
    %v7782 = vmax.f32 %v7596, 0.0
    %v7783 = vmax.f32 %v7601, 0.0
    %v7784 = vmax.f32 %v7606, 0.0
    %v7785 = vmax.f32 %v7611, 0.0
    %v7786 = vmax.f32 %v7616, 0.0
    %v7787 = vmax.f32 %v7621, 0.0
    %v7788 = vmax.f32 %v7626, 0.0
    %v7789 = vmax.f32 %v7631, 0.0
    %v7790 = vmax.f32 %v7636, 0.0
    %v7791 = vmax.f32 %v7641, 0.0
    %v7792 = vmax.f32 %v7646, 0.0
    %v7793 = vmax.f32 %v7651, 0.0
    %v7794 = vmax.f32 %v7656, 0.0
    %v7795 = vmax.f32 %v7661, 0.0
    %v7796 = vmax.f32 %v7666, 0.0
    %v7797 = vmax.f32 %v7671, 0.0
    %v7798 = vmax.f32 %v7676, 0.0
    %v7799 = vmax.f32 %v7681, 0.0
    %v7800 = vmax.f32 %v7686, 0.0
    %v7801 = vmax.f32 %v7691, 0.0
    %v7802 = vmax.f32 %v7696, 0.0
    %v7803 = vmax.f32 %v7701, 0.0
    %v7804 = vmax.f32 %v7706, 0.0
    %v7805 = vmax.f32 %v7711, 0.0
    %v7806 = vmax.f32 %v7716, 0.0
    %v7807 = vmax.f32 %v7721, 0.0
    %v7808 = vmax.f32 %v7726, 0.0
    %v7809 = vmax.f32 %v7731, 0.0
    %v7810 = vmax.f32 %v7736, 0.0
    %v7811 = vmax.f32 %v7741, 0.0
    %v7812 = vmax.f32 %v7746, 0.0
    %v7813 = vld [vmem:[%s5] sm:$0xff]
    %v7814 = vld [vmem:[%s5 + $0x8] sm:$0xff]
    %v7815 = vld [vmem:[%s5 + $0x10] sm:$0xff]
    %v7816 = vld [vmem:[%s5 + $0x18] sm:$0xff]
    %v7817 = vld [vmem:[%s5 + $0x20] sm:$0xff]
    %v7818 = vld [vmem:[%s5 + $0x28] sm:$0xff]
    %v7819 = vld [vmem:[%s5 + $0x30] sm:$0xff]
    %v7820 = vld [vmem:[%s5 + $0x38] sm:$0xff]
    %v7821 = vld [vmem:[%s5 + $0x40] sm:$0xff]
    %v7822 = vld [vmem:[%s5 + $0x48] sm:$0xff]
    %v7823 = vld [vmem:[%s5 + $0x50] sm:$0xff]
    %v7824 = vld [vmem:[%s5 + $0x58] sm:$0xff]
    %v7825 = vld [vmem:[%s5 + $0x60] sm:$0xff]
    %v7826 = vld [vmem:[%s5 + $0x68] sm:$0xff]
    %v7827 = vld [vmem:[%s5 + $0x70] sm:$0xff]
    %v7828 = vld [vmem:[%s5 + $0x78] sm:$0xff]
    %v7829 = vld [vmem:[%s5 + $0x80] sm:$0xff]
    %v7830 = vld [vmem:[%s5 + $0x88] sm:$0xff]
    %v7831 = vld [vmem:[%s5 + $0x90] sm:$0xff]
    %v7832 = vld [vmem:[%s5 + $0x98] sm:$0xff]
    %v7833 = vld [vmem:[%s5 + $0xa0] sm:$0xff]
    %v7834 = vld [vmem:[%s5 + $0xa8] sm:$0xff]
    %v7835 = vld [vmem:[%s5 + $0xb0] sm:$0xff]
    %v7836 = vld [vmem:[%s5 + $0xb8] sm:$0xff]
    %v7837 = vld [vmem:[%s5 + $0xc0] sm:$0xff]
    %v7838 = vld [vmem:[%s5 + $0xc8] sm:$0xff]
    %v7839 = vld [vmem:[%s5 + $0xd0] sm:$0xff]
    %v7840 = vld [vmem:[%s5 + $0xd8] sm:$0xff]
    %v7841 = vld [vmem:[%s5 + $0xe0] sm:$0xff]
    %v7842 = vld [vmem:[%s5 + $0xe8] sm:$0xff]
    %v7843 = vld [vmem:[%s5 + $0xf0] sm:$0xff]
    %v7844 = vld [vmem:[%s5 + $0xf8] sm:$0xff]
    %7845 = vmatprep.subr.mxu0 0.0
    %7846 = vmatpush1.msra.mxu0 %v7749
    %7847 = vmatprep.subr.mxu0 0.0
    %7848 = vmatpush1.msra.mxu0 %v7750
    %7849 = vmatprep.subr.mxu0 0.0
    %7850 = vmatpush1.msra.mxu0 %v7751
    %7851 = vmatprep.subr.mxu0 0.0
    %7852 = vmatpush1.msra.mxu0 %v7752
    %7853 = vmatprep.subr.mxu0 0.0
    %7854 = vmatpush1.msra.mxu0 %v7753
    %7855 = vmatprep.subr.mxu0 0.0
    %7856 = vmatpush1.msra.mxu0 %v7754
    %7857 = vmatprep.subr.mxu0 0.0
    %7858 = vmatpush1.msra.mxu0 %v7755
    %7859 = vmatprep.subr.mxu0 0.0
    %7860 = vmatpush1.msra.mxu0 %v7756
    %7861 = vmatprep.subr.mxu0 0.0
    %7862 = vmatpush1.msra.mxu0 %v7757
    %7863 = vmatprep.subr.mxu0 0.0
    %7864 = vmatpush1.msra.mxu0 %v7758
    %7865 = vmatprep.subr.mxu0 0.0
    %7866 = vmatpush1.msra.mxu0 %v7759
    %7867 = vmatprep.subr.mxu0 0.0
    %7868 = vmatpush1.msra.mxu0 %v7760
    %7869 = vmatprep.subr.mxu0 0.0
    %7870 = vmatpush1.msra.mxu0 %v7761
    %7871 = vmatprep.subr.mxu0 0.0
    %7872 = vmatpush1.msra.mxu0 %v7762
    %7873 = vmatprep.subr.mxu0 0.0
    %7874 = vmatpush1.msra.mxu0 %v7763
    %7875 = vmatprep.subr.mxu0 0.0
    %7876 = vmatpush1.msra.mxu0 %v7764
    %7877 = vmatprep.subr.mxu0 0.0
    %7878 = vmatpush1.msra.mxu0 %v7765
    %7879 = vmatprep.subr.mxu0 0.0
    %7880 = vmatpush1.msra.mxu0 %v7766
    %7881 = vmatprep.subr.mxu0 0.0
    %7882 = vmatpush1.msra.mxu0 %v7767
    %7883 = vmatprep.subr.mxu0 0.0
    %7884 = vmatpush1.msra.mxu0 %v7768
    %7885 = vmatprep.subr.mxu0 0.0
    %7886 = vmatpush1.msra.mxu0 %v7769
    %7887 = vmatprep.subr.mxu0 0.0
    %7888 = vmatpush1.msra.mxu0 %v7770
    %7889 = vmatprep.subr.mxu0 0.0
    %7890 = vmatpush1.msra.mxu0 %v7771
    %7891 = vmatprep.subr.mxu0 0.0
    %7892 = vmatpush1.msra.mxu0 %v7772
    %7893 = vmatprep.subr.mxu0 0.0
    %7894 = vmatpush1.msra.mxu0 %v7773
    %7895 = vmatprep.subr.mxu0 0.0
    %7896 = vmatpush1.msra.mxu0 %v7774
    %7897 = vmatprep.subr.mxu0 0.0
    %7898 = vmatpush1.msra.mxu0 %v7775
    %7899 = vmatprep.subr.mxu0 0.0
    %7900 = vmatpush1.msra.mxu0 %v7776
    %7901 = vmatprep.subr.mxu0 0.0
    %7902 = vmatpush1.msra.mxu0 %v7777
    %7903 = vmatprep.subr.mxu0 0.0
    %7904 = vmatpush1.msra.mxu0 %v7778
    %7905 = vmatprep.subr.mxu0 0.0
    %7906 = vmatpush1.msra.mxu0 %v7779
    %7907 = vmatprep.subr.mxu0 0.0
    %7908 = vmatpush1.msra.mxu0 %v7780
    %7909 = vmatprep.mubr.f32.mxu0 %v7814
    %7910 = vmatmul.mubr.f32.gmra.mrb[0].mxu0 %v7813
    %v7911 = vpop.f32.mrb[0].mxu0
    %v7912 = vadd.f32 0.0, %v7911
    %v7913 = vpop.f32.mrb[0].mxu0
    %7914 = vmatprep.mubr.f32.mxu0 %v7818
    %7915 = vmatmul.mubr.f32.gmra.mrb[0].mxu0 %v7817
    %v7916 = vpop.f32.mrb[0].mxu0
    %v7917 = vadd.f32 0.0, %v7916
    %v7918 = vpop.f32.mrb[0].mxu0
    %7919 = vmatprep.mubr.f32.mxu0 %v7822
    %7920 = vmatmul.mubr.f32.gmra.mrb[0].mxu0 %v7821
    %v7921 = vpop.f32.mrb[0].mxu0
    %v7922 = vadd.f32 0.0, %v7921
    %v7923 = vpop.f32.mrb[0].mxu0
    %7924 = vmatprep.mubr.f32.mxu0 %v7826
    %7925 = vmatmul.mubr.f32.gmra.mrb[0].mxu0 %v7825
    %v7926 = vpop.f32.mrb[0].mxu0
    %v7927 = vadd.f32 0.0, %v7926
    %v7928 = vpop.f32.mrb[0].mxu0
    %7929 = vmatprep.mubr.f32.mxu0 %v7830
    %7930 = vmatmul.mubr.f32.gmra.mrb[0].mxu0 %v7829
    %v7931 = vpop.f32.mrb[0].mxu0
    %v7932 = vadd.f32 0.0, %v7931
    %v7933 = vpop.f32.mrb[0].mxu0
    %7934 = vmatprep.mubr.f32.mxu0 %v7834
    %7935 = vmatmul.mubr.f32.gmra.mrb[0].mxu0 %v7833
    %v7936 = vpop.f32.mrb[0].mxu0
    %v7937 = vadd.f32 0.0, %v7936
    %v7938 = vpop.f32.mrb[0].mxu0
    %7939 = vmatprep.mubr.f32.mxu0 %v7838
    %7940 = vmatmul.mubr.f32.gmra.mrb[0].mxu0 %v7837
    %v7941 = vpop.f32.mrb[0].mxu0
    %v7942 = vadd.f32 0.0, %v7941
    %v7943 = vpop.f32.mrb[0].mxu0
    %7944 = vmatprep.mubr.f32.mxu0 %v7842
    %7945 = vmatmul.mubr.f32.gmra.mrb[0].mxu0 %v7841
    %v7946 = vpop.f32.mrb[0].mxu0
    %v7947 = vadd.f32 0.0, %v7946
    %v7948 = vpop.f32.mrb[0].mxu0
    %7949 = vdwg.mxu0
    %7950 = vmatprep.subr.mxu0 0.0
    %7951 = vmatpush1.msra.mxu0 %v7781
    %7952 = vmatprep.subr.mxu0 0.0
    %7953 = vmatpush1.msra.mxu0 %v7782
    %7954 = vmatprep.subr.mxu0 0.0
    %7955 = vmatpush1.msra.mxu0 %v7783
    %7956 = vmatprep.subr.mxu0 0.0
    %7957 = vmatpush1.msra.mxu0 %v7784
    %7958 = vmatprep.subr.mxu0 0.0
    %7959 = vmatpush1.msra.mxu0 %v7785
    %7960 = vmatprep.subr.mxu0 0.0
    %7961 = vmatpush1.msra.mxu0 %v7786
    %7962 = vmatprep.subr.mxu0 0.0
    %7963 = vmatpush1.msra.mxu0 %v7787
    %7964 = vmatprep.subr.mxu0 0.0
    %7965 = vmatpush1.msra.mxu0 %v7788
    %7966 = vmatprep.subr.mxu0 0.0
    %7967 = vmatpush1.msra.mxu0 %v7789
    %7968 = vmatprep.subr.mxu0 0.0
    %7969 = vmatpush1.msra.mxu0 %v7790
    %7970 = vmatprep.subr.mxu0 0.0
    %7971 = vmatpush1.msra.mxu0 %v7791
    %7972 = vmatprep.subr.mxu0 0.0
    %7973 = vmatpush1.msra.mxu0 %v7792
    %7974 = vmatprep.subr.mxu0 0.0
    %7975 = vmatpush1.msra.mxu0 %v7793
    %7976 = vmatprep.subr.mxu0 0.0
    %7977 = vmatpush1.msra.mxu0 %v7794
    %7978 = vmatprep.subr.mxu0 0.0
    %7979 = vmatpush1.msra.mxu0 %v7795
    %7980 = vmatprep.subr.mxu0 0.0
    %7981 = vmatpush1.msra.mxu0 %v7796
    %7982 = vmatprep.subr.mxu0 0.0
    %7983 = vmatpush1.msra.mxu0 %v7797
    %7984 = vmatprep.subr.mxu0 0.0
    %7985 = vmatpush1.msra.mxu0 %v7798
    %7986 = vmatprep.subr.mxu0 0.0
    %7987 = vmatpush1.msra.mxu0 %v7799
    %7988 = vmatprep.subr.mxu0 0.0
    %7989 = vmatpush1.msra.mxu0 %v7800
    %7990 = vmatprep.subr.mxu0 0.0
    %7991 = vmatpush1.msra.mxu0 %v7801
    %7992 = vmatprep.subr.mxu0 0.0
    %7993 = vmatpush1.msra.mxu0 %v7802
    %7994 = vmatprep.subr.mxu0 0.0
    %7995 = vmatpush1.msra.mxu0 %v7803
    %7996 = vmatprep.subr.mxu0 0.0
    %7997 = vmatpush1.msra.mxu0 %v7804
    %7998 = vmatprep.subr.mxu0 0.0
    %7999 = vmatpush1.msra.mxu0 %v7805
    %8000 = vmatprep.subr.mxu0 0.0
    %8001 = vmatpush1.msra.mxu0 %v7806
    %8002 = vmatprep.subr.mxu0 0.0
    %8003 = vmatpush1.msra.mxu0 %v7807
    %8004 = vmatprep.subr.mxu0 0.0
    %8005 = vmatpush1.msra.mxu0 %v7808
    %8006 = vmatprep.subr.mxu0 0.0
    %8007 = vmatpush1.msra.mxu0 %v7809
    %8008 = vmatprep.subr.mxu0 0.0
    %8009 = vmatpush1.msra.mxu0 %v7810
    %8010 = vmatprep.subr.mxu0 0.0
    %8011 = vmatpush1.msra.mxu0 %v7811
    %8012 = vmatprep.subr.mxu0 0.0
    %8013 = vmatpush1.msra.mxu0 %v7812
    %8014 = vmatprep.mubr.f32.mxu0 %v7816
    %8015 = vmatmul.mubr.f32.gmra.mrb[0].mxu0 %v7815
    %v8016 = vpop.f32.mrb[0].mxu0
    %v8017 = vadd.f32 %v7912, %v8016
    %v8018 = vpop.f32.mrb[0].mxu0
    %8019 = vmatprep.mubr.f32.mxu0 %v7820
    %8020 = vmatmul.mubr.f32.gmra.mrb[0].mxu0 %v7819
    %v8021 = vpop.f32.mrb[0].mxu0
    %v8022 = vadd.f32 %v7917, %v8021
    %v8023 = vpop.f32.mrb[0].mxu0
    %8024 = vmatprep.mubr.f32.mxu0 %v7824
    %8025 = vmatmul.mubr.f32.gmra.mrb[0].mxu0 %v7823
    %v8026 = vpop.f32.mrb[0].mxu0
    %v8027 = vadd.f32 %v7922, %v8026
    %v8028 = vpop.f32.mrb[0].mxu0
    %8029 = vmatprep.mubr.f32.mxu0 %v7828
    %8030 = vmatmul.mubr.f32.gmra.mrb[0].mxu0 %v7827
    %v8031 = vpop.f32.mrb[0].mxu0
    %v8032 = vadd.f32 %v7927, %v8031
    %v8033 = vpop.f32.mrb[0].mxu0
    %8034 = vmatprep.mubr.f32.mxu0 %v7832
    %8035 = vmatmul.mubr.f32.gmra.mrb[0].mxu0 %v7831
    %v8036 = vpop.f32.mrb[0].mxu0
    %v8037 = vadd.f32 %v7932, %v8036
    %v8038 = vpop.f32.mrb[0].mxu0
    %8039 = vmatprep.mubr.f32.mxu0 %v7836
    %8040 = vmatmul.mubr.f32.gmra.mrb[0].mxu0 %v7835
    %v8041 = vpop.f32.mrb[0].mxu0
    %v8042 = vadd.f32 %v7937, %v8041
    %v8043 = vpop.f32.mrb[0].mxu0
    %8044 = vmatprep.mubr.f32.mxu0 %v7840
    %8045 = vmatmul.mubr.f32.gmra.mrb[0].mxu0 %v7839
    %v8046 = vpop.f32.mrb[0].mxu0
    %v8047 = vadd.f32 %v7942, %v8046
    %v8048 = vpop.f32.mrb[0].mxu0
    %8049 = vmatprep.mubr.f32.mxu0 %v7844
    %8050 = vmatmul.mubr.f32.gmra.mrb[0].mxu0 %v7843
    %v8051 = vpop.f32.mrb[0].mxu0
    %v8052 = vadd.f32 %v7947, %v8051
    %v8053 = vpop.f32.mrb[0].mxu0
    %8054 = vdwg.mxu0
    %v8055 = vld [vmem:[%s6] sm:$0xff]
    %v8056 = vld [vmem:[%s6 + $0x8] sm:$0xff]
    %v8057 = vld [vmem:[%s6 + $0x10] sm:$0xff]
    %v8058 = vld [vmem:[%s6 + $0x18] sm:$0xff]
    %v8059 = vmul.f32 %v8017, %v8055
    %v8060 = vmul.f32 %v8022, %v8056
    %v8061 = vmul.f32 %v8027, %v8057
    %v8062 = vmul.f32 %v8032, %v8058
    %v8063 = vmul.f32 %v8037, %v8055
    %v8064 = vmul.f32 %v8042, %v8056
    %v8065 = vmul.f32 %v8047, %v8057
    %v8066 = vmul.f32 %v8052, %v8058
    %v8067 = vsel %vm6422, %v8059, 0.0
    %8068 = vadd.xlane.f32.xlu0 %v8067
    %v8069 = vpop.xlane.xlu0 %8068
    %v8070 = vsel %vm6422, %v8060, 0.0
    %8071 = vadd.xlane.f32.xlu0 %v8070
    %v8072 = vpop.xlane.xlu0 %8071
    %v8073 = vsel %vm6422, %v8061, 0.0
    %8074 = vadd.xlane.f32.xlu0 %v8073
    %v8075 = vpop.xlane.xlu0 %8074
    %v8076 = vsel %vm6422, %v8062, 0.0
    %8077 = vadd.xlane.f32.xlu0 %v8076
    %v8078 = vpop.xlane.xlu0 %8077
    %v8079 = vsel %vm6422, %v8063, 0.0
    %8080 = vadd.xlane.f32.xlu0 %v8079
    %v8081 = vpop.xlane.xlu0 %8080
    %v8082 = vsel %vm6422, %v8064, 0.0
    %8083 = vadd.xlane.f32.xlu0 %v8082
    %v8084 = vpop.xlane.xlu0 %8083
    %v8085 = vsel %vm6422, %v8065, 0.0
    %8086 = vadd.xlane.f32.xlu0 %v8085
    %v8087 = vpop.xlane.xlu0 %8086
    %v8088 = vsel %vm6422, %v8066, 0.0
    %8089 = vadd.xlane.f32.xlu0 %v8088
    %v8090 = vpop.xlane.xlu0 %8089
    %v8099 = vlaneseq
    %v8100 = vand.u32 %v8099, 127
    %v8101 = vlaneseq
    %v8102 = vshrl.u32 %v8101, 7
    %v8103 = vsub.s32 %v8100, %v8102
    %v8104 = vrot.slane %v8069, %v8103
    %v8105 = vadd.s32 %v8100, 4294967288
    %v8106 = vlaneseq
    %v8107 = vshrl.u32 %v8106, 7
    %v8108 = vsub.s32 %v8105, %v8107
    %v8109 = vrot.slane %v8072, %v8108
    %vm8110 = vcmask 130112
    %v8111 = vsel %vm8110, %v8109, %v8104
    %v8112 = vadd.s32 %v8100, 4294967280
    %v8113 = vlaneseq
    %v8114 = vshrl.u32 %v8113, 7
    %v8115 = vsub.s32 %v8112, %v8114
    %v8116 = vrot.slane %v8075, %v8115
    %vm8117 = vcmask 195712
    %v8118 = vsel %vm8117, %v8116, %v8111
    %v8119 = vadd.s32 %v8100, 4294967272
    %v8120 = vlaneseq
    %v8121 = vshrl.u32 %v8120, 7
    %v8122 = vsub.s32 %v8119, %v8121
    %v8123 = vrot.slane %v8078, %v8122
    %vm8124 = vcmask 261312
    %v8125 = vsel %vm8124, %v8123, %v8118
    %v8126 = vlaneseq
    %v8127 = vshrl.u32 %v8126, 7
    %v8128 = vsub.s32 %v8100, %v8127
    %v8129 = vrot.slane %v8081, %v8128
    %v8130 = vlaneseq
    %v8131 = vshrl.u32 %v8130, 7
    %v8132 = vsub.s32 %v8105, %v8131
    %v8133 = vrot.slane %v8084, %v8132
    %v8134 = vsel %vm8110, %v8133, %v8129
    %v8135 = vlaneseq
    %v8136 = vshrl.u32 %v8135, 7
    %v8137 = vsub.s32 %v8112, %v8136
    %v8138 = vrot.slane %v8087, %v8137
    %v8139 = vsel %vm8117, %v8138, %v8134
    %v8140 = vlaneseq
    %v8141 = vshrl.u32 %v8140, 7
    %v8142 = vsub.s32 %v8119, %v8141
    %v8143 = vrot.slane %v8090, %v8142
    %v8144 = vsel %vm8124, %v8143, %v8139
    %vm8145 = vcmask 1041409
    %v8146 = vsel %vm8145, %v8144, %v8125
    %v8148 = vsel %vm4073, %v8146, 0.0
    %8149 = vadd.xlane.f32.xlu0 %v8148
    %v8150 = vpop.xlane.xlu0 %8149
    %s8151 = scalar_lea.vmem %s6, 32
    %v8152 = vld [vmem:[%s8151] sm:$0xff]
    %v8153 = vld [vmem:[%s8151 + $0x8] sm:$0xff]
    %v8154 = vld [vmem:[%s8151 + $0x10] sm:$0xff]
    %v8155 = vld [vmem:[%s8151 + $0x18] sm:$0xff]
    %v8156 = vmul.f32 %v8017, %v8152
    %v8157 = vmul.f32 %v8022, %v8153
    %v8158 = vmul.f32 %v8027, %v8154
    %v8159 = vmul.f32 %v8032, %v8155
    %v8160 = vmul.f32 %v8037, %v8152
    %v8161 = vmul.f32 %v8042, %v8153
    %v8162 = vmul.f32 %v8047, %v8154
    %v8163 = vmul.f32 %v8052, %v8155
    %v8164 = vsel %vm6422, %v8156, 0.0
    %8165 = vadd.xlane.f32.xlu0 %v8164
    %v8166 = vpop.xlane.xlu0 %8165
    %v8167 = vsel %vm6422, %v8157, 0.0
    %8168 = vadd.xlane.f32.xlu0 %v8167
    %v8169 = vpop.xlane.xlu0 %8168
    %v8170 = vsel %vm6422, %v8158, 0.0
    %8171 = vadd.xlane.f32.xlu0 %v8170
    %v8172 = vpop.xlane.xlu0 %8171
    %v8173 = vsel %vm6422, %v8159, 0.0
    %8174 = vadd.xlane.f32.xlu0 %v8173
    %v8175 = vpop.xlane.xlu0 %8174
    %v8176 = vsel %vm6422, %v8160, 0.0
    %8177 = vadd.xlane.f32.xlu0 %v8176
    %v8178 = vpop.xlane.xlu0 %8177
    %v8179 = vsel %vm6422, %v8161, 0.0
    %8180 = vadd.xlane.f32.xlu0 %v8179
    %v8181 = vpop.xlane.xlu0 %8180
    %v8182 = vsel %vm6422, %v8162, 0.0
    %8183 = vadd.xlane.f32.xlu0 %v8182
    %v8184 = vpop.xlane.xlu0 %8183
    %v8185 = vsel %vm6422, %v8163, 0.0
    %8186 = vadd.xlane.f32.xlu0 %v8185
    %v8187 = vpop.xlane.xlu0 %8186
    %v8196 = vlaneseq
    %v8197 = vshrl.u32 %v8196, 7
    %v8198 = vsub.s32 %v8100, %v8197
    %v8199 = vrot.slane %v8166, %v8198
    %v8200 = vlaneseq
    %v8201 = vshrl.u32 %v8200, 7
    %v8202 = vsub.s32 %v8105, %v8201
    %v8203 = vrot.slane %v8169, %v8202
    %v8204 = vsel %vm8110, %v8203, %v8199
    %v8205 = vlaneseq
    %v8206 = vshrl.u32 %v8205, 7
    %v8207 = vsub.s32 %v8112, %v8206
    %v8208 = vrot.slane %v8172, %v8207
    %v8209 = vsel %vm8117, %v8208, %v8204
    %v8210 = vlaneseq
    %v8211 = vshrl.u32 %v8210, 7
    %v8212 = vsub.s32 %v8119, %v8211
    %v8213 = vrot.slane %v8175, %v8212
    %v8214 = vsel %vm8124, %v8213, %v8209
    %v8215 = vlaneseq
    %v8216 = vshrl.u32 %v8215, 7
    %v8217 = vsub.s32 %v8100, %v8216
    %v8218 = vrot.slane %v8178, %v8217
    %v8219 = vlaneseq
    %v8220 = vshrl.u32 %v8219, 7
    %v8221 = vsub.s32 %v8105, %v8220
    %v8222 = vrot.slane %v8181, %v8221
    %v8223 = vsel %vm8110, %v8222, %v8218
    %v8224 = vlaneseq
    %v8225 = vshrl.u32 %v8224, 7
    %v8226 = vsub.s32 %v8112, %v8225
    %v8227 = vrot.slane %v8184, %v8226
    %v8228 = vsel %vm8117, %v8227, %v8223
    %v8229 = vlaneseq
    %v8230 = vshrl.u32 %v8229, 7
    %v8231 = vsub.s32 %v8119, %v8230
    %v8232 = vrot.slane %v8187, %v8231
    %v8233 = vsel %vm8124, %v8232, %v8228
    %v8234 = vsel %vm8145, %v8233, %v8214
    %v8236 = vsel %vm4073, %v8234, 0.0
    %8237 = vadd.xlane.f32.xlu0 %v8236
    %v8238 = vpop.xlane.xlu0 %8237
    %s8239 = scalar_lea.vmem %s6, 64
    %v8240 = vld [vmem:[%s8239] sm:$0xff]
    %v8241 = vld [vmem:[%s8239 + $0x8] sm:$0xff]
    %v8242 = vld [vmem:[%s8239 + $0x10] sm:$0xff]
    %v8243 = vld [vmem:[%s8239 + $0x18] sm:$0xff]
    %v8244 = vmul.f32 %v8017, %v8240
    %v8245 = vmul.f32 %v8022, %v8241
    %v8246 = vmul.f32 %v8027, %v8242
    %v8247 = vmul.f32 %v8032, %v8243
    %v8248 = vmul.f32 %v8037, %v8240
    %v8249 = vmul.f32 %v8042, %v8241
    %v8250 = vmul.f32 %v8047, %v8242
    %v8251 = vmul.f32 %v8052, %v8243
    %v8252 = vsel %vm6422, %v8244, 0.0
    %8253 = vadd.xlane.f32.xlu0 %v8252
    %v8254 = vpop.xlane.xlu0 %8253
    %v8255 = vsel %vm6422, %v8245, 0.0
    %8256 = vadd.xlane.f32.xlu0 %v8255
    %v8257 = vpop.xlane.xlu0 %8256
    %v8258 = vsel %vm6422, %v8246, 0.0
    %8259 = vadd.xlane.f32.xlu0 %v8258
    %v8260 = vpop.xlane.xlu0 %8259
    %v8261 = vsel %vm6422, %v8247, 0.0
    %8262 = vadd.xlane.f32.xlu0 %v8261
    %v8263 = vpop.xlane.xlu0 %8262
    %v8264 = vsel %vm6422, %v8248, 0.0
    %8265 = vadd.xlane.f32.xlu0 %v8264
    %v8266 = vpop.xlane.xlu0 %8265
    %v8267 = vsel %vm6422, %v8249, 0.0
    %8268 = vadd.xlane.f32.xlu0 %v8267
    %v8269 = vpop.xlane.xlu0 %8268
    %v8270 = vsel %vm6422, %v8250, 0.0
    %8271 = vadd.xlane.f32.xlu0 %v8270
    %v8272 = vpop.xlane.xlu0 %8271
    %v8273 = vsel %vm6422, %v8251, 0.0
    %8274 = vadd.xlane.f32.xlu0 %v8273
    %v8275 = vpop.xlane.xlu0 %8274
    %v8284 = vlaneseq
    %v8285 = vshrl.u32 %v8284, 7
    %v8286 = vsub.s32 %v8100, %v8285
    %v8287 = vrot.slane %v8254, %v8286
    %v8288 = vlaneseq
    %v8289 = vshrl.u32 %v8288, 7
    %v8290 = vsub.s32 %v8105, %v8289
    %v8291 = vrot.slane %v8257, %v8290
    %v8292 = vsel %vm8110, %v8291, %v8287
    %v8293 = vlaneseq
    %v8294 = vshrl.u32 %v8293, 7
    %v8295 = vsub.s32 %v8112, %v8294
    %v8296 = vrot.slane %v8260, %v8295
    %v8297 = vsel %vm8117, %v8296, %v8292
    %v8298 = vlaneseq
    %v8299 = vshrl.u32 %v8298, 7
    %v8300 = vsub.s32 %v8119, %v8299
    %v8301 = vrot.slane %v8263, %v8300
    %v8302 = vsel %vm8124, %v8301, %v8297
    %v8303 = vlaneseq
    %v8304 = vshrl.u32 %v8303, 7
    %v8305 = vsub.s32 %v8100, %v8304
    %v8306 = vrot.slane %v8266, %v8305
    %v8307 = vlaneseq
    %v8308 = vshrl.u32 %v8307, 7
    %v8309 = vsub.s32 %v8105, %v8308
    %v8310 = vrot.slane %v8269, %v8309
    %v8311 = vsel %vm8110, %v8310, %v8306
    %v8312 = vlaneseq
    %v8313 = vshrl.u32 %v8312, 7
    %v8314 = vsub.s32 %v8112, %v8313
    %v8315 = vrot.slane %v8272, %v8314
    %v8316 = vsel %vm8117, %v8315, %v8311
    %v8317 = vlaneseq
    %v8318 = vshrl.u32 %v8317, 7
    %v8319 = vsub.s32 %v8119, %v8318
    %v8320 = vrot.slane %v8275, %v8319
    %v8321 = vsel %vm8124, %v8320, %v8316
    %v8322 = vsel %vm8145, %v8321, %v8302
    %v8324 = vsel %vm4073, %v8322, 0.0
    %8325 = vadd.xlane.f32.xlu0 %v8324
    %v8326 = vpop.xlane.xlu0 %8325
    %s8327 = scalar_lea.vmem %s6, 96
    %v8328 = vld [vmem:[%s8327] sm:$0xff]
    %v8329 = vld [vmem:[%s8327 + $0x8] sm:$0xff]
    %v8330 = vld [vmem:[%s8327 + $0x10] sm:$0xff]
    %v8331 = vld [vmem:[%s8327 + $0x18] sm:$0xff]
    %v8332 = vmul.f32 %v8017, %v8328
    %v8333 = vmul.f32 %v8022, %v8329
    %v8334 = vmul.f32 %v8027, %v8330
    %v8335 = vmul.f32 %v8032, %v8331
    %v8336 = vmul.f32 %v8037, %v8328
    %v8337 = vmul.f32 %v8042, %v8329
    %v8338 = vmul.f32 %v8047, %v8330
    %v8339 = vmul.f32 %v8052, %v8331
    %v8340 = vsel %vm6422, %v8332, 0.0
    %8341 = vadd.xlane.f32.xlu0 %v8340
    %v8342 = vpop.xlane.xlu0 %8341
    %v8343 = vsel %vm6422, %v8333, 0.0
    %8344 = vadd.xlane.f32.xlu0 %v8343
    %v8345 = vpop.xlane.xlu0 %8344
    %v8346 = vsel %vm6422, %v8334, 0.0
    %8347 = vadd.xlane.f32.xlu0 %v8346
    %v8348 = vpop.xlane.xlu0 %8347
    %v8349 = vsel %vm6422, %v8335, 0.0
    %8350 = vadd.xlane.f32.xlu0 %v8349
    %v8351 = vpop.xlane.xlu0 %8350
    %v8352 = vsel %vm6422, %v8336, 0.0
    %8353 = vadd.xlane.f32.xlu0 %v8352
    %v8354 = vpop.xlane.xlu0 %8353
    %v8355 = vsel %vm6422, %v8337, 0.0
    %8356 = vadd.xlane.f32.xlu0 %v8355
    %v8357 = vpop.xlane.xlu0 %8356
    %v8358 = vsel %vm6422, %v8338, 0.0
    %8359 = vadd.xlane.f32.xlu0 %v8358
    %v8360 = vpop.xlane.xlu0 %8359
    %v8361 = vsel %vm6422, %v8339, 0.0
    %8362 = vadd.xlane.f32.xlu0 %v8361
    %v8363 = vpop.xlane.xlu0 %8362
    %v8372 = vlaneseq
    %v8373 = vshrl.u32 %v8372, 7
    %v8374 = vsub.s32 %v8100, %v8373
    %v8375 = vrot.slane %v8342, %v8374
    %v8376 = vlaneseq
    %v8377 = vshrl.u32 %v8376, 7
    %v8378 = vsub.s32 %v8105, %v8377
    %v8379 = vrot.slane %v8345, %v8378
    %v8380 = vsel %vm8110, %v8379, %v8375
    %v8381 = vlaneseq
    %v8382 = vshrl.u32 %v8381, 7
    %v8383 = vsub.s32 %v8112, %v8382
    %v8384 = vrot.slane %v8348, %v8383
    %v8385 = vsel %vm8117, %v8384, %v8380
    %v8386 = vlaneseq
    %v8387 = vshrl.u32 %v8386, 7
    %v8388 = vsub.s32 %v8119, %v8387
    %v8389 = vrot.slane %v8351, %v8388
    %v8390 = vsel %vm8124, %v8389, %v8385
    %v8391 = vlaneseq
    %v8392 = vshrl.u32 %v8391, 7
    %v8393 = vsub.s32 %v8100, %v8392
    %v8394 = vrot.slane %v8354, %v8393
    %v8395 = vlaneseq
    %v8396 = vshrl.u32 %v8395, 7
    %v8397 = vsub.s32 %v8105, %v8396
    %v8398 = vrot.slane %v8357, %v8397
    %v8399 = vsel %vm8110, %v8398, %v8394
    %v8400 = vlaneseq
    %v8401 = vshrl.u32 %v8400, 7
    %v8402 = vsub.s32 %v8112, %v8401
    %v8403 = vrot.slane %v8360, %v8402
    %v8404 = vsel %vm8117, %v8403, %v8399
    %v8405 = vlaneseq
    %v8406 = vshrl.u32 %v8405, 7
    %v8407 = vsub.s32 %v8119, %v8406
    %v8408 = vrot.slane %v8363, %v8407
    %v8409 = vsel %vm8124, %v8408, %v8404
    %v8410 = vsel %vm8145, %v8409, %v8390
    %v8412 = vsel %vm4073, %v8410, 0.0
    %8413 = vadd.xlane.f32.xlu0 %v8412
    %v8414 = vpop.xlane.xlu0 %8413
    %s8415 = scalar_lea.vmem %s6, 128
    %v8416 = vld [vmem:[%s8415] sm:$0xff]
    %v8417 = vld [vmem:[%s8415 + $0x8] sm:$0xff]
    %v8418 = vld [vmem:[%s8415 + $0x10] sm:$0xff]
    %v8419 = vld [vmem:[%s8415 + $0x18] sm:$0xff]
    %v8420 = vmul.f32 %v8017, %v8416
    %v8421 = vmul.f32 %v8022, %v8417
    %v8422 = vmul.f32 %v8027, %v8418
    %v8423 = vmul.f32 %v8032, %v8419
    %v8424 = vmul.f32 %v8037, %v8416
    %v8425 = vmul.f32 %v8042, %v8417
    %v8426 = vmul.f32 %v8047, %v8418
    %v8427 = vmul.f32 %v8052, %v8419
    %v8428 = vsel %vm6422, %v8420, 0.0
    %8429 = vadd.xlane.f32.xlu0 %v8428
    %v8430 = vpop.xlane.xlu0 %8429
    %v8431 = vsel %vm6422, %v8421, 0.0
    %8432 = vadd.xlane.f32.xlu0 %v8431
    %v8433 = vpop.xlane.xlu0 %8432
    %v8434 = vsel %vm6422, %v8422, 0.0
    %8435 = vadd.xlane.f32.xlu0 %v8434
    %v8436 = vpop.xlane.xlu0 %8435
    %v8437 = vsel %vm6422, %v8423, 0.0
    %8438 = vadd.xlane.f32.xlu0 %v8437
    %v8439 = vpop.xlane.xlu0 %8438
    %v8440 = vsel %vm6422, %v8424, 0.0
    %8441 = vadd.xlane.f32.xlu0 %v8440
    %v8442 = vpop.xlane.xlu0 %8441
    %v8443 = vsel %vm6422, %v8425, 0.0
    %8444 = vadd.xlane.f32.xlu0 %v8443
    %v8445 = vpop.xlane.xlu0 %8444
    %v8446 = vsel %vm6422, %v8426, 0.0
    %8447 = vadd.xlane.f32.xlu0 %v8446
    %v8448 = vpop.xlane.xlu0 %8447
    %v8449 = vsel %vm6422, %v8427, 0.0
    %8450 = vadd.xlane.f32.xlu0 %v8449
    %v8451 = vpop.xlane.xlu0 %8450
    %v8460 = vlaneseq
    %v8461 = vshrl.u32 %v8460, 7
    %v8462 = vsub.s32 %v8100, %v8461
    %v8463 = vrot.slane %v8430, %v8462
    %v8464 = vlaneseq
    %v8465 = vshrl.u32 %v8464, 7
    %v8466 = vsub.s32 %v8105, %v8465
    %v8467 = vrot.slane %v8433, %v8466
    %v8468 = vsel %vm8110, %v8467, %v8463
    %v8469 = vlaneseq
    %v8470 = vshrl.u32 %v8469, 7
    %v8471 = vsub.s32 %v8112, %v8470
    %v8472 = vrot.slane %v8436, %v8471
    %v8473 = vsel %vm8117, %v8472, %v8468
    %v8474 = vlaneseq
    %v8475 = vshrl.u32 %v8474, 7
    %v8476 = vsub.s32 %v8119, %v8475
    %v8477 = vrot.slane %v8439, %v8476
    %v8478 = vsel %vm8124, %v8477, %v8473
    %v8479 = vlaneseq
    %v8480 = vshrl.u32 %v8479, 7
    %v8481 = vsub.s32 %v8100, %v8480
    %v8482 = vrot.slane %v8442, %v8481
    %v8483 = vlaneseq
    %v8484 = vshrl.u32 %v8483, 7
    %v8485 = vsub.s32 %v8105, %v8484
    %v8486 = vrot.slane %v8445, %v8485
    %v8487 = vsel %vm8110, %v8486, %v8482
    %v8488 = vlaneseq
    %v8489 = vshrl.u32 %v8488, 7
    %v8490 = vsub.s32 %v8112, %v8489
    %v8491 = vrot.slane %v8448, %v8490
    %v8492 = vsel %vm8117, %v8491, %v8487
    %v8493 = vlaneseq
    %v8494 = vshrl.u32 %v8493, 7
    %v8495 = vsub.s32 %v8119, %v8494
    %v8496 = vrot.slane %v8451, %v8495
    %v8497 = vsel %vm8124, %v8496, %v8492
    %v8498 = vsel %vm8145, %v8497, %v8478
    %v8500 = vsel %vm4073, %v8498, 0.0
    %8501 = vadd.xlane.f32.xlu0 %v8500
    %v8502 = vpop.xlane.xlu0 %8501
    %vm8503 = vcmask 7168
    %v8504 = vsel %vm8503, %v8150, %v8238
    %vm8505 = vcmask 15360
    %v8506 = vsel %vm8505, %v8504, %v8326
    %vm8507 = vcmask 23552
    %v8508 = vsel %vm8507, %v8506, %v8414
    %v8509 = vsel %vm30, %v8508, %v8502
    %v8510 = vld [vmem:[%s7] sm:$0x1]
    %v8512 = vlaneseq
    %v8513 = vshrl.u32 %v8512, 7
    %v8514 = vsub.s32 0, %v8513
    %v8515 = vrot.slane %v8510, %v8514
    %v8517 = vadd.f32 %v8509, %v8515
    %vm8518 = vcmask 33792
    %8519 = vst.msk [vmem:[#allocation4] sm:$0x3] %vm8518, %v8517
    // Predicated region
    $region34: #{cnn_decoder_forward.1} parent=1 // pred_check
      _
    $region35: #{cnn_decoder_forward.1} parent=1 // pred_check_branch
      %8521 = sbr.rel (0) target = $region37
    $region36: #{cnn_decoder_forward.1} parent=1 // pred_region
      %s8523 = ssub.s32 32, 32
      %8524 = vsyncadd [#allocation5], %s8523
      %s8526 = sshll.u32 [#allocation4], 4
      %s8527 = int_to_ptr.vmem [resolvable:$true] %s8526
      %8529 = dma.vmem_to_hbm [thread:$0]  %s8527, 32, %s8, [#allocation5]
    $region37: #{cnn_decoder_forward.1} parent=1 // pred_fallthru
      _
    // Predicated region
    $region38: #{cnn_decoder_forward.1} parent=1 // pred_check
      _
    $region39: #{cnn_decoder_forward.1} parent=1 // pred_check_branch
      %8531 = sbr.rel (0) target = $region41
    $region40: #{cnn_decoder_forward.1} parent=1 // pred_region
      %8532 = dma.done [#allocation5], 32
    $region41: #{cnn_decoder_forward.1} parent=1 // pred_fallthru
      _
    %8533 = vsyncpa [#allocation5], 1

</llo_original>
